<compile_context>
chip_gen: v6e
topology: v6e:2x2x1
jax: 0.10.0
libtpu: 0.0.40
codegen_flags: <defaults>
</compile_context>

<pallas_src>
import functools

import jax
import jax.numpy as jnp
from jax import lax
from jax.experimental import pallas as pl
from jax.experimental.pallas import tpu as pltpu

_LANES = 128
_VMEM_LIMIT = 32 * 1024 * 1024  # explicit scoped-VMEM budget (fits all gens)


# ----------------------------------------------------------------------------
# Small helpers
# ----------------------------------------------------------------------------
def _round_up(x, m):
    return (x + m - 1) // m * m


def _lane_pad(c):
    return max(_LANES, _round_up(c, _LANES))


def _pad_axis(a, axis, target):
    pad = target - a.shape[axis]
    if pad == 0:
        return a
    widths = [(0, 0)] * a.ndim
    widths[axis] = (0, pad)
    return jnp.pad(a, widths)


def _pad_rows(a, rows):
    if a.shape[0] == rows:
        return a
    return jnp.pad(a, ((0, rows - a.shape[0]), (0, 0)))


def _pick_tile_m(m):
    # Prefer large row tiles, but keep >= 2 grid steps when possible so both
    # TensorCores (v7x) get work and the pipeline has something to overlap.
    for tm in (512, 256, 128, 64, 32, 16, 8):
        if m >= 2 * tm:
            return tm
    return 8


def _pick_row_chunk(h, w):
    # Largest divisor of H whose chunk (TH*W rows) stays ~vreg-sized.
    th = 1
    for cand in range(1, h + 1):
        if h % cand == 0 and cand * w <= 128:
            th = cand
    return th


def _cparams(n_parallel_axes):
    return pltpu.CompilerParams(
        dimension_semantics=("parallel",) * n_parallel_axes,
        vmem_limit_bytes=_VMEM_LIMIT)


# ----------------------------------------------------------------------------
# Kernels
# ----------------------------------------------------------------------------
def _mm_bn_kernel(x_ref, w_ref, s_ref, b_ref, o_ref, *, relu):
    """1x1 conv (matmul, bf16 MXU) + folded BN (+ optional ReLU), one M tile."""
    xb = x_ref[...].astype(jnp.bfloat16)
    acc = jnp.dot(xb, w_ref[...], preferred_element_type=jnp.float32)
    out = acc * s_ref[...] + b_ref[...]
    if relu:
        out = jnp.maximum(out, 0.0)
    o_ref[...] = out.astype(o_ref.dtype)


def _final_proj_kernel(m_ref, x_ref, w3_ref, ws_ref, s3_ref, b3_ref,
                       ss_ref, bs_ref, o_ref):
    """conv3 (1x1) + BN3 + fused projection shortcut (1x1 + BN) + add + ReLU."""
    mb = m_ref[...].astype(jnp.bfloat16)
    xb = x_ref[...].astype(jnp.bfloat16)
    main = jnp.dot(mb, w3_ref[...], preferred_element_type=jnp.float32)
    sc = jnp.dot(xb, ws_ref[...], preferred_element_type=jnp.float32)
    out = main * s3_ref[...] + b3_ref[...] + sc * ss_ref[...] + bs_ref[...]
    o_ref[...] = jnp.maximum(out, 0.0).astype(o_ref.dtype)


def _final_identity_kernel(m_ref, r_ref, w3_ref, s3_ref, b3_ref, o_ref):
    """conv3 (1x1) + BN3 + identity-shortcut add + ReLU."""
    mb = m_ref[...].astype(jnp.bfloat16)
    main = jnp.dot(mb, w3_ref[...], preferred_element_type=jnp.float32)
    out = main * s3_ref[...] + b3_ref[...] + r_ref[...]
    o_ref[...] = jnp.maximum(out, 0.0).astype(o_ref.dtype)


def _conv3x3_bn_relu_kernel(x_ref, w_ref, s_ref, b_ref, o_ref, xpad_ref,
                            *, H, W, TH, OFF):
    """3x3 conv (stride 1, pad 1) + folded BN + ReLU for one batch element.

    The image arrives flattened as (H*W, C).  It is placed at row OFF of a
    zero-bordered VMEM scratch, so the 3x3 zero padding never touches HBM.
    Each of the 9 taps becomes an aligned-stride-W / +-1 row-shifted slice of
    the scratch feeding the MXU; the two column-wrap cases are fixed with
    output-side masks on the kw partial sums.  Output rows are produced in
    TH*W chunks so the f32 accumulator stays vreg-sized.
    """
    HW = H * W
    CHUNK = TH * W
    C = xpad_ref.shape[1]
    Cout = o_ref.shape[-1]

    # Zero the halo rows (everything outside [OFF, OFF+HW)), then place image.
    tail = xpad_ref.shape[0] - (OFF + HW)
    xpad_ref[pl.ds(0, OFF), :] = jnp.zeros((OFF, C), xpad_ref.dtype)
    xpad_ref[pl.ds(OFF + HW, tail), :] = jnp.zeros((tail, C), xpad_ref.dtype)
    xpad_ref[pl.ds(OFF, HW), :] = x_ref[0]

    # Column-validity masks (dest column 0 invalid for kw=0 taps, dest column
    # W-1 invalid for kw=2 taps).  Same pattern for every chunk.
    col = lax.broadcasted_iota(jnp.int32, (CHUNK, Cout), 0) % W
    mask_l = col != 0
    mask_r = col != (W - 1)

    scale = s_ref[...]
    bias = b_ref[...]

    for hc in range(H // TH):
        start = hc * CHUNK
        parts = []
        for kw in range(3):
            part = jnp.zeros((CHUNK, Cout), jnp.float32)
            for kh in range(3):
                base = start + (kh - 1) * W + (kw - 1) + OFF
                patch = xpad_ref[pl.ds(base, CHUNK), :].astype(jnp.bfloat16)
                part = part + jnp.dot(patch, w_ref[kh * 3 + kw],
                                      preferred_element_type=jnp.float32)
            parts.append(part)
        acc = (jnp.where(mask_l, parts[0], 0.0) + parts[1]
               + jnp.where(mask_r, parts[2], 0.0))
        out = jnp.maximum(acc * scale + bias, 0.0)
        o_ref[0, pl.ds(start, CHUNK), :] = out.astype(o_ref.dtype)


# ----------------------------------------------------------------------------
# Pallas wrappers
# ----------------------------------------------------------------------------
def conv1x1_bn(x_flat, w_bf16, scale, bias, relu):
    M, Cin = x_flat.shape
    Cout = w_bf16.shape[1]
    TM = _pick_tile_m(M)
    Mp = _round_up(M, TM)
    xp = _pad_rows(x_flat, Mp)
    out = pl.pallas_call(
        functools.partial(_mm_bn_kernel, relu=relu),
        out_shape=jax.ShapeDtypeStruct((Mp, Cout), jnp.float32),
        grid=(Mp // TM,),
        in_specs=[
            pl.BlockSpec((TM, Cin), lambda i: (i, 0)),
            pl.BlockSpec((Cin, Cout), lambda i: (0, 0)),
            pl.BlockSpec((1, Cout), lambda i: (0, 0)),
            pl.BlockSpec((1, Cout), lambda i: (0, 0)),
        ],
        out_specs=pl.BlockSpec((TM, Cout), lambda i: (i, 0)),
        compiler_params=_cparams(1),
    )(xp, w_bf16, scale, bias)
    return out[:M] if Mp != M else out


def conv1x1_proj_add_relu(mid_flat, x_flat, w3, ws, s3, b3, ss, bs):
    M, Cmid = mid_flat.shape
    Cin = x_flat.shape[1]
    Cout = w3.shape[1]
    TM = _pick_tile_m(M)
    Mp = _round_up(M, TM)
    midp = _pad_rows(mid_flat, Mp)
    xp = _pad_rows(x_flat, Mp)
    out = pl.pallas_call(
        _final_proj_kernel,
        out_shape=jax.ShapeDtypeStruct((Mp, Cout), jnp.float32),
        grid=(Mp // TM,),
        in_specs=[
            pl.BlockSpec((TM, Cmid), lambda i: (i, 0)),
            pl.BlockSpec((TM, Cin), lambda i: (i, 0)),
            pl.BlockSpec((Cmid, Cout), lambda i: (0, 0)),
            pl.BlockSpec((Cin, Cout), lambda i: (0, 0)),
            pl.BlockSpec((1, Cout), lambda i: (0, 0)),
            pl.BlockSpec((1, Cout), lambda i: (0, 0)),
            pl.BlockSpec((1, Cout), lambda i: (0, 0)),
            pl.BlockSpec((1, Cout), lambda i: (0, 0)),
        ],
        out_specs=pl.BlockSpec((TM, Cout), lambda i: (i, 0)),
        compiler_params=_cparams(1),
    )(midp, xp, w3, ws, s3, b3, ss, bs)
    return out[:M] if Mp != M else out


def conv1x1_identity_add_relu(mid_flat, res_flat, w3, s3, b3):
    M, Cmid = mid_flat.shape
    Cout = w3.shape[1]
    TM = _pick_tile_m(M)
    Mp = _round_up(M, TM)
    midp = _pad_rows(mid_flat, Mp)
    resp = _pad_rows(res_flat, Mp)
    out = pl.pallas_call(
        _final_identity_kernel,
        out_shape=jax.ShapeDtypeStruct((Mp, Cout), jnp.float32),
        grid=(Mp // TM,),
        in_specs=[
            pl.BlockSpec((TM, Cmid), lambda i: (i, 0)),
            pl.BlockSpec((TM, Cout), lambda i: (i, 0)),
            pl.BlockSpec((Cmid, Cout), lambda i: (0, 0)),
            pl.BlockSpec((1, Cout), lambda i: (0, 0)),
            pl.BlockSpec((1, Cout), lambda i: (0, 0)),
        ],
        out_specs=pl.BlockSpec((TM, Cout), lambda i: (i, 0)),
        compiler_params=_cparams(1),
    )(midp, resp, w3, s3, b3)
    return out[:M] if Mp != M else out


def conv3x3_bn_relu(x_nhw, w9_bf16, scale, bias, H, W):
    # x_nhw: (N, H*W, C) f32 (channel-padded); w9_bf16: (9, C, Cout) bf16.
    N, HW, C = x_nhw.shape
    Cout = w9_bf16.shape[-1]
    TH = _pick_row_chunk(H, W)
    OFF = _round_up(W + 1, 8)
    SIZE = _round_up(OFF + HW + W + 1, 8)
    return pl.pallas_call(
        functools.partial(_conv3x3_bn_relu_kernel, H=H, W=W, TH=TH, OFF=OFF),
        out_shape=jax.ShapeDtypeStruct((N, HW, Cout), jnp.float32),
        grid=(N,),
        in_specs=[
            pl.BlockSpec((1, HW, C), lambda n: (n, 0, 0)),
            pl.BlockSpec((9, C, Cout), lambda n: (0, 0, 0)),
            pl.BlockSpec((1, Cout), lambda n: (0, 0)),
            pl.BlockSpec((1, Cout), lambda n: (0, 0)),
        ],
        out_specs=pl.BlockSpec((1, HW, Cout), lambda n: (n, 0, 0)),
        scratch_shapes=[pltpu.VMEM((SIZE, C), jnp.float32)],
        compiler_params=_cparams(1),
    )(x_nhw, w9_bf16, scale, bias)


# ----------------------------------------------------------------------------
# Bottleneck forward (glue in plain JAX, hot paths in Pallas)
# ----------------------------------------------------------------------------
def bottleneck_forward(x_nchw, params, stride=1):
    # TODO(synk): stride > 1 path (strided 3x3 / strided shortcut) not implemented.
    assert stride == 1, "only stride=1 is implemented in this synthetic kernel"

    x = jnp.transpose(x_nchw, (0, 2, 3, 1)).astype(jnp.float32)  # NHWC
    N, H, W, Cin = x.shape
    planes = params["w1"].shape[1]
    outc = params["w3"].shape[1]
    Cin_p, Cmid_p, Cout_p = _lane_pad(Cin), _lane_pad(planes), _lane_pad(outc)

    # Lane-dense channel padding (zeros) + bf16 weights for the MXU.
    xp = _pad_axis(x, 3, Cin_p).reshape(N * H * W, Cin_p)                  # f32
    w1 = _pad_axis(_pad_axis(params["w1"], 0, Cin_p), 1, Cmid_p).astype(jnp.bfloat16)
    w2 = _pad_axis(_pad_axis(params["w2"], 2, Cmid_p), 3, Cmid_p)
    w2 = w2.reshape(9, Cmid_p, Cmid_p).astype(jnp.bfloat16)
    w3 = _pad_axis(_pad_axis(params["w3"], 0, Cmid_p), 1, Cout_p).astype(jnp.bfloat16)
    s1, b1 = _pad_axis(params["s1"], 1, Cmid_p), _pad_axis(params["b1"], 1, Cmid_p)
    s2, b2 = _pad_axis(params["s2"], 1, Cmid_p), _pad_axis(params["b2"], 1, Cmid_p)
    s3, b3 = _pad_axis(params["s3"], 1, Cout_p), _pad_axis(params["b3"], 1, Cout_p)

    # Stage 1: 1x1 conv + BN + ReLU (M-tiled, pipelined).
    out = conv1x1_bn(xp, w1, s1, b1, relu=True)                  # (M, Cmid_p)

    # Stage 2: 3x3 conv + BN + ReLU (zero padding handled in VMEM, no HBM pad).
    out = conv3x3_bn_relu(out.reshape(N, H * W, Cmid_p), w2, s2, b2, H, W)
    out = out.reshape(N * H * W, Cmid_p)

    # Stage 3: 1x1 conv + BN + shortcut + ReLU, shortcut fused into the kernel.
    if "ws" in params:
        ws = _pad_axis(_pad_axis(params["ws"], 0, Cin_p), 1, Cout_p).astype(jnp.bfloat16)
        ss = _pad_axis(params["ss"], 1, Cout_p)
        bs = _pad_axis(params["bs"], 1, Cout_p)
        out = conv1x1_proj_add_relu(out, xp, w3, ws, s3, b3, ss, bs)
    else:
        # identity shortcut (in_planes == expansion*planes)
        out = conv1x1_identity_add_relu(out, xp, w3, s3, b3)

    out = out.reshape(N, H, W, Cout_p)[..., :outc]
    return jnp.transpose(out, (0, 3, 1, 2))  # back to NCHW


# ----------------------------------------------------------------------------
# Pure-JAX reference (mirrors the bf16-matmul / f32-epilogue quantization)
# ----------------------------------------------------------------------------
def bottleneck_reference(x_nchw, params):
    x = jnp.transpose(x_nchw, (0, 2, 3, 1)).astype(jnp.float32)
    bf = lambda a: a.astype(jnp.bfloat16)

    def bn(y, s, b):
        return y * s.reshape(1, 1, 1, -1) + b.reshape(1, 1, 1, -1)

    out = jnp.einsum("nhwc,co->nhwo", bf(x), bf(params["w1"]),
                     preferred_element_type=jnp.float32)
    out = jnp.maximum(bn(out, params["s1"], params["b1"]), 0.0)
    out = lax.conv_general_dilated(
        bf(out), bf(params["w2"]), window_strides=(1, 1),
        padding=((1, 1), (1, 1)),
        dimension_numbers=("NHWC", "HWIO", "NHWC"),
        preferred_element_type=jnp.float32)
    out = jnp.maximum(bn(out, params["s2"], params["b2"]), 0.0)
    main = jnp.einsum("nhwc,co->nhwo", bf(out), bf(params["w3"]),
                      preferred_element_type=jnp.float32)
    main = bn(main, params["s3"], params["b3"])
    sc = jnp.einsum("nhwc,co->nhwo", bf(x), bf(params["ws"]),
                    preferred_element_type=jnp.float32)
    sc = bn(sc, params["ss"], params["bs"])
    out = jnp.maximum(main + sc, 0.0)
    return jnp.transpose(out, (0, 3, 1, 2))


# ----------------------------------------------------------------------------
# Deterministic parameter construction (inference-mode BN folded to scale/bias)
# ----------------------------------------------------------------------------
def make_params(key, in_planes, planes, expansion=4):
    eps = 1e-5
    keys = jax.random.split(key, 8)

    def fold_bn(k, c):
        k1, k2, k3, k4 = jax.random.split(k, 4)
        gamma = 1.0 + 0.1 * jax.random.normal(k1, (c,), jnp.float32)
        beta = 0.1 * jax.random.normal(k2, (c,), jnp.float32)
        mean = 0.1 * jax.random.normal(k3, (c,), jnp.float32)
        var = jnp.abs(jax.random.normal(k4, (c,), jnp.float32)) + 0.5
        scale = gamma / jnp.sqrt(var + eps)
        bias = beta - mean * scale
        return scale.reshape(1, c), bias.reshape(1, c)

    out_planes = expansion * planes
    p = {}
    p["w1"] = 0.1 * jax.random.normal(keys[0], (in_planes, planes), jnp.float32)
    p["w2"] = 0.1 * jax.random.normal(keys[1], (3, 3, planes, planes), jnp.float32)
    p["w3"] = 0.1 * jax.random.normal(keys[2], (planes, out_planes), jnp.float32)
    p["s1"], p["b1"] = fold_bn(keys[3], planes)
    p["s2"], p["b2"] = fold_bn(keys[4], planes)
    p["s3"], p["b3"] = fold_bn(keys[5], out_planes)
    # projection shortcut (in_planes != expansion*planes)
    p["ws"] = 0.1 * jax.random.normal(keys[6], (in_planes, out_planes), jnp.float32)
    p["ss"], p["bs"] = fold_bn(keys[7], out_planes)
    return p


# ----------------------------------------------------------------------------
if __name__ == "__main__":
    key = jax.random.PRNGKey(0)
    k_x, k_p = jax.random.split(key)

    in_planes, planes = 4, 4          # expansion*planes = 16 -> projection shortcut
    N, H, W = 2, 16, 16
    x = jax.random.normal(k_x, (N, in_planes, H, W), jnp.float32)  # NCHW input
    params = make_params(k_p, in_planes, planes)

    fwd = jax.jit(functools.partial(bottleneck_forward, stride=1))
    out = jax.block_until_ready(fwd(x, params))

    ref = jax.block_until_ready(bottleneck_reference(x, params))
    assert out.shape == (N, 4 * planes, H, W), out.shape
    max_err = float(jnp.max(jnp.abs(out - ref)))
    # bf16 MXU inputs with f32 accumulation; tolerance sized for bf16 rounding.
    assert jnp.allclose(out, ref, rtol=1e-2, atol=1e-2), max_err

    print("KERNEL_OK")
</pallas_src>

<mosaic_0001>
module attributes {stable_mosaic.version = 11 : i64} {
  func.func @_mm_bn_kernel(%arg0: i32, %arg1: memref<256x128xf32, #tpu.memory_space<vmem>>, %arg2: memref<128x128xbf16, #tpu.memory_space<vmem>>, %arg3: memref<1x128xf32, #tpu.memory_space<vmem>>, %arg4: memref<1x128xf32, #tpu.memory_space<vmem>>, %arg5: memref<256x128xf32, #tpu.memory_space<vmem>>) attributes {dimension_semantics = [#tpu.dimension_semantics<parallel>], iteration_bounds = array<i64: 2>, scalar_prefetch = 0 : i64, scratch_operands = 0 : i64, tpu.core_type = #tpu.core_type<tc>, window_params = [{transform_indices = @transform_0, window_bounds = array<i64: 256, 128>}, {pipeline_mode = #tpu.pipeline_mode<synchronous>, transform_indices = @transform_1, window_bounds = array<i64: 128, 128>}, {pipeline_mode = #tpu.pipeline_mode<synchronous>, transform_indices = @transform_2, window_bounds = array<i64: 1, 128>}, {pipeline_mode = #tpu.pipeline_mode<synchronous>, transform_indices = @transform_3, window_bounds = array<i64: 1, 128>}, {transform_indices = @transform_4, window_bounds = array<i64: 256, 128>}]} {
    %c0 = arith.constant 0 : index
    %c0_0 = arith.constant 0 : index
    %0 = vector.load %arg1[%c0, %c0_0] : memref<256x128xf32, #tpu.memory_space<vmem>>, vector<256x128xf32>
    %1 = arith.truncf %0 : vector<256x128xf32> to vector<256x128xbf16>
    %c0_1 = arith.constant 0 : index
    %c0_2 = arith.constant 0 : index
    %2 = vector.load %arg2[%c0_1, %c0_2] : memref<128x128xbf16, #tpu.memory_space<vmem>>, vector<128x128xbf16>
    %cst = arith.constant dense<0.000000e+00> : vector<256x128xf32>
    %3 = tpu.matmul %1, %2, %cst {dimension_numbers = #tpu.dot_dimension_numbers<[1], [0], [0], [1], [0, 0, 1, 1], [], []>} : vector<256x128xbf16>, vector<128x128xbf16>, vector<256x128xf32> -> vector<256x128xf32>
    %c0_3 = arith.constant 0 : index
    %c0_4 = arith.constant 0 : index
    %4 = vector.load %arg3[%c0_3, %c0_4] : memref<1x128xf32, #tpu.memory_space<vmem>>, vector<1x128xf32>
    %5 = vector.broadcast %4 : vector<1x128xf32> to vector<256x128xf32>
    %6 = arith.mulf %3, %5 : vector<256x128xf32>
    %c0_5 = arith.constant 0 : index
    %c0_6 = arith.constant 0 : index
    %7 = vector.load %arg4[%c0_5, %c0_6] : memref<1x128xf32, #tpu.memory_space<vmem>>, vector<1x128xf32>
    %8 = vector.broadcast %7 : vector<1x128xf32> to vector<256x128xf32>
    %9 = arith.addf %6, %8 : vector<256x128xf32>
    %cst_7 = arith.constant 0.000000e+00 : f32
    %10 = vector.broadcast %cst_7 : f32 to vector<256x128xf32>
    %11 = arith.maximumf %9, %10 : vector<256x128xf32>
    %c0_8 = arith.constant 0 : index
    %c0_9 = arith.constant 0 : index
    %12 = vector.load %arg5[%c0_8, %c0_9] : memref<256x128xf32, #tpu.memory_space<vmem>>, vector<256x128xf32>
    tpu.vector_store %arg5[%c0_8, %c0_9], %11 {strides = array<i32>} : memref<256x128xf32, #tpu.memory_space<vmem>>, vector<256x128xf32>,
    return
  }
  func.func @transform_0(%arg0: i32) -> (i32, i32) {
    %c0_i32 = arith.constant 0 : i32
    %c0_i32_0 = arith.constant 0 : i32
    return %arg0, %c0_i32 : i32, i32
  }
  func.func @transform_1(%arg0: i32) -> (i32, i32) {
    %c0_i32 = arith.constant 0 : i32
    %c0_i32_0 = arith.constant 0 : i32
    %c0_i32_1 = arith.constant 0 : i32
    return %c0_i32, %c0_i32_0 : i32, i32
  }
  func.func @transform_2(%arg0: i32) -> (i32, i32) {
    %c0_i32 = arith.constant 0 : i32
    %c0_i32_0 = arith.constant 0 : i32
    %c0_i32_1 = arith.constant 0 : i32
    return %c0_i32, %c0_i32_0 : i32, i32
  }
  func.func @transform_3(%arg0: i32) -> (i32, i32) {
    %c0_i32 = arith.constant 0 : i32
    %c0_i32_0 = arith.constant 0 : i32
    %c0_i32_1 = arith.constant 0 : i32
    return %c0_i32, %c0_i32_0 : i32, i32
  }
  func.func @transform_4(%arg0: i32) -> (i32, i32) {
    %c0_i32 = arith.constant 0 : i32
    %c0_i32_0 = arith.constant 0 : i32
    return %arg0, %c0_i32 : i32, i32
  }
}

module attributes {stable_mosaic.version = 11 : i64} {
  func.func @_conv3x3_bn_relu_kernel(%arg0: i32, %arg1: memref<1x256x128xf32, #tpu.memory_space<vmem>>, %arg2: memref<9x128x128xbf16, #tpu.memory_space<vmem>>, %arg3: memref<1x128xf32, #tpu.memory_space<vmem>>, %arg4: memref<1x128xf32, #tpu.memory_space<vmem>>, %arg5: memref<1x256x128xf32, #tpu.memory_space<vmem>>, %arg6: memref<304x128xf32, #tpu.memory_space<vmem>>) attributes {dimension_semantics = [#tpu.dimension_semantics<parallel>], iteration_bounds = array<i64: 2>, scalar_prefetch = 0 : i64, scratch_operands = 1 : i64, tpu.core_type = #tpu.core_type<tc>, window_params = [{transform_indices = @transform_0, window_bounds = array<i64: 1, 256, 128>}, {pipeline_mode = #tpu.pipeline_mode<synchronous>, transform_indices = @transform_1, window_bounds = array<i64: 9, 128, 128>}, {pipeline_mode = #tpu.pipeline_mode<synchronous>, transform_indices = @transform_2, window_bounds = array<i64: 1, 128>}, {pipeline_mode = #tpu.pipeline_mode<synchronous>, transform_indices = @transform_3, window_bounds = array<i64: 1, 128>}, {transform_indices = @transform_4, window_bounds = array<i64: 1, 256, 128>}]} {
    %cst = arith.constant 0.000000e+00 : f32
    %0 = vector.broadcast %cst : f32 to vector<24x128xf32>
    %c0 = arith.constant 0 : index
    %c0_0 = arith.constant 0 : index
    %1 = vector.load %arg6[%c0, %c0_0] : memref<304x128xf32, #tpu.memory_space<vmem>>, vector<24x128xf32>
    tpu.vector_store %arg6[%c0, %c0_0], %0 {strides = array<i32>} : memref<304x128xf32, #tpu.memory_space<vmem>>, vector<24x128xf32>,
    %cst_1 = arith.constant 0.000000e+00 : f32
    %2 = vector.broadcast %cst_1 : f32 to vector<24x128xf32>
    %c280 = arith.constant 280 : index
    %c0_2 = arith.constant 0 : index
    %3 = vector.load %arg6[%c280, %c0_2] : memref<304x128xf32, #tpu.memory_space<vmem>>, vector<24x128xf32>
    tpu.vector_store %arg6[%c280, %c0_2], %2 {strides = array<i32>} : memref<304x128xf32, #tpu.memory_space<vmem>>, vector<24x128xf32>,
    %c0_3 = arith.constant 0 : index
    %c0_4 = arith.constant 0 : index
    %c0_5 = arith.constant 0 : index
    %4 = vector.load %arg1[%c0_3, %c0_4, %c0_5] : memref<1x256x128xf32, #tpu.memory_space<vmem>>, vector<1x256x128xf32>
    %5 = vector.shape_cast %4 : vector<1x256x128xf32> to vector<256x128xf32>
    %c24 = arith.constant 24 : index
    %c0_6 = arith.constant 0 : index
    %6 = vector.load %arg6[%c24, %c0_6] : memref<304x128xf32, #tpu.memory_space<vmem>>, vector<256x128xf32>
    tpu.vector_store %arg6[%c24, %c0_6], %5 {strides = array<i32>} : memref<304x128xf32, #tpu.memory_space<vmem>>, vector<256x128xf32>,
    %7 = tpu.iota {dimensions = array<i32: 0>} : vector<128x128xi32>
    %c16_i32 = arith.constant 16 : i32
    %c0_i32 = arith.constant 0 : i32
    %8 = arith.cmpi eq, %c16_i32, %c0_i32 : i32
    %c1_i32 = arith.constant 1 : i32
    %9 = arith.select %8, %c1_i32, %c16_i32 : i32
    %10 = vector.broadcast %9 : i32 to vector<128x128xi32>
    %11 = arith.remsi %7, %10 : vector<128x128xi32>
    %c0_i32_7 = arith.constant 0 : i32
    %12 = vector.broadcast %c0_i32_7 : i32 to vector<128x128xi32>
    %13 = arith.cmpi ne, %11, %12 : vector<128x128xi32>
    %c0_i32_8 = arith.constant 0 : i32
    %14 = vector.broadcast %c0_i32_8 : i32 to vector<128x128xi32>
    %15 = arith.cmpi slt, %11, %14 : vector<128x128xi32>
    %c0_i32_9 = arith.constant 0 : i32
    %16 = arith.cmpi slt, %9, %c0_i32_9 : i32
    %17 = vector.broadcast %16 : i1 to vector<128x128xi1>
    %18 = vector.broadcast %17 : vector<128x128xi1> to vector<128x128xi1>
    %19 = arith.xori %15, %18 : vector<128x128xi1>
    %20 = arith.andi %19, %13 : vector<128x128xi1>
    %21 = vector.broadcast %9 : i32 to vector<128x128xi32>
    %22 = arith.addi %11, %21 : vector<128x128xi32>
    %23 = arith.select %20, %22, %11 : vector<128x128xi1>, vector<128x128xi32>
    %c0_i32_10 = arith.constant 0 : i32
    %24 = vector.broadcast %c0_i32_10 : i32 to vector<128x128xi32>
    %25 = arith.cmpi ne, %23, %24 : vector<128x128xi32>
    %c15_i32 = arith.constant 15 : i32
    %26 = vector.broadcast %c15_i32 : i32 to vector<128x128xi32>
    %27 = arith.cmpi ne, %23, %26 : vector<128x128xi32>
    %c0_11 = arith.constant 0 : index
    %c0_12 = arith.constant 0 : index
    %28 = vector.load %arg3[%c0_11, %c0_12] : memref<1x128xf32, #tpu.memory_space<vmem>>, vector<1x128xf32>
    %c0_13 = arith.constant 0 : index
    %c0_14 = arith.constant 0 : index
    %29 = vector.load %arg4[%c0_13, %c0_14] : memref<1x128xf32, #tpu.memory_space<vmem>>, vector<1x128xf32>
    %cst_15 = arith.constant 0.000000e+00 : f32
    %30 = vector.broadcast %cst_15 : f32 to vector<128x128xf32>
    %c7 = arith.constant 7 : index
    %c0_16 = arith.constant 0 : index
    %31 = vector.load %arg6[%c7, %c0_16] : memref<304x128xf32, #tpu.memory_space<vmem>>, vector<128x128xf32>
    %32 = arith.truncf %31 : vector<128x128xf32> to vector<128x128xbf16>
    %c0_17 = arith.constant 0 : index
    %c0_18 = arith.constant 0 : index
    %c0_19 = arith.constant 0 : index
    %33 = vector.load %arg2[%c0_17, %c0_18, %c0_19] : memref<9x128x128xbf16, #tpu.memory_space<vmem>>, vector<1x128x128xbf16>
    %34 = vector.shape_cast %33 : vector<1x128x128xbf16> to vector<128x128xbf16>
    %cst_20 = arith.constant dense<0.000000e+00> : vector<128x128xf32>
    %35 = tpu.matmul %32, %34, %cst_20 {dimension_numbers = #tpu.dot_dimension_numbers<[1], [0], [0], [1], [0, 0, 1, 1], [], []>} : vector<128x128xbf16>, vector<128x128xbf16>, vector<128x128xf32> -> vector<128x128xf32>
    %36 = arith.addf %30, %35 : vector<128x128xf32>
    %c23 = arith.constant 23 : index
    %c0_21 = arith.constant 0 : index
    %37 = vector.load %arg6[%c23, %c0_21] : memref<304x128xf32, #tpu.memory_space<vmem>>, vector<128x128xf32>
    %38 = arith.truncf %37 : vector<128x128xf32> to vector<128x128xbf16>
    %c3 = arith.constant 3 : index
    %c0_22 = arith.constant 0 : index
    %c0_23 = arith.constant 0 : index
    %39 = vector.load %arg2[%c3, %c0_22, %c0_23] : memref<9x128x128xbf16, #tpu.memory_space<vmem>>, vector<1x128x128xbf16>
    %40 = vector.shape_cast %39 : vector<1x128x128xbf16> to vector<128x128xbf16>
    %cst_24 = arith.constant dense<0.000000e+00> : vector<128x128xf32>
    %41 = tpu.matmul %38, %40, %cst_24 {dimension_numbers = #tpu.dot_dimension_numbers<[1], [0], [0], [1], [0, 0, 1, 1], [], []>} : vector<128x128xbf16>, vector<128x128xbf16>, vector<128x128xf32> -> vector<128x128xf32>
    %42 = arith.addf %36, %41 : vector<128x128xf32>
    %c39 = arith.constant 39 : index
    %c0_25 = arith.constant 0 : index
    %43 = vector.load %arg6[%c39, %c0_25] : memref<304x128xf32, #tpu.memory_space<vmem>>, vector<128x128xf32>
    %44 = arith.truncf %43 : vector<128x128xf32> to vector<128x128xbf16>
    %c6 = arith.constant 6 : index
    %c0_26 = arith.constant 0 : index
    %c0_27 = arith.constant 0 : index
    %45 = vector.load %arg2[%c6, %c0_26, %c0_27] : memref<9x128x128xbf16, #tpu.memory_space<vmem>>, vector<1x128x128xbf16>
    %46 = vector.shape_cast %45 : vector<1x128x128xbf16> to vector<128x128xbf16>
    %cst_28 = arith.constant dense<0.000000e+00> : vector<128x128xf32>
    %47 = tpu.matmul %44, %46, %cst_28 {dimension_numbers = #tpu.dot_dimension_numbers<[1], [0], [0], [1], [0, 0, 1, 1], [], []>} : vector<128x128xbf16>, vector<128x128xbf16>, vector<128x128xf32> -> vector<128x128xf32>
    %48 = arith.addf %42, %47 : vector<128x128xf32>
    %cst_29 = arith.constant 0.000000e+00 : f32
    %49 = vector.broadcast %cst_29 : f32 to vector<128x128xf32>
    %c8 = arith.constant 8 : index
    %c0_30 = arith.constant 0 : index
    %50 = vector.load %arg6[%c8, %c0_30] : memref<304x128xf32, #tpu.memory_space<vmem>>, vector<128x128xf32>
    %51 = arith.truncf %50 : vector<128x128xf32> to vector<128x128xbf16>
    %c1 = arith.constant 1 : index
    %c0_31 = arith.constant 0 : index
    %c0_32 = arith.constant 0 : index
    %52 = vector.load %arg2[%c1, %c0_31, %c0_32] : memref<9x128x128xbf16, #tpu.memory_space<vmem>>, vector<1x128x128xbf16>
    %53 = vector.shape_cast %52 : vector<1x128x128xbf16> to vector<128x128xbf16>
    %cst_33 = arith.constant dense<0.000000e+00> : vector<128x128xf32>
    %54 = tpu.matmul %51, %53, %cst_33 {dimension_numbers = #tpu.dot_dimension_numbers<[1], [0], [0], [1], [0, 0, 1, 1], [], []>} : vector<128x128xbf16>, vector<128x128xbf16>, vector<128x128xf32> -> vector<128x128xf32>
    %55 = arith.addf %49, %54 : vector<128x128xf32>
    %c24_34 = arith.constant 24 : index
    %c0_35 = arith.constant 0 : index
    %56 = vector.load %arg6[%c24_34, %c0_35] : memref<304x128xf32, #tpu.memory_space<vmem>>, vector<128x128xf32>
    %57 = arith.truncf %56 : vector<128x128xf32> to vector<128x128xbf16>
    %c4 = arith.constant 4 : index
    %c0_36 = arith.constant 0 : index
    %c0_37 = arith.constant 0 : index
    %58 = vector.load %arg2[%c4, %c0_36, %c0_37] : memref<9x128x128xbf16, #tpu.memory_space<vmem>>, vector<1x128x128xbf16>
    %59 = vector.shape_cast %58 : vector<1x128x128xbf16> to vector<128x128xbf16>
    %cst_38 = arith.constant dense<0.000000e+00> : vector<128x128xf32>
    %60 = tpu.matmul %57, %59, %cst_38 {dimension_numbers = #tpu.dot_dimension_numbers<[1], [0], [0], [1], [0, 0, 1, 1], [], []>} : vector<128x128xbf16>, vector<128x128xbf16>, vector<128x128xf32> -> vector<128x128xf32>
    %61 = arith.addf %55, %60 : vector<128x128xf32>
    %c40 = arith.constant 40 : index
    %c0_39 = arith.constant 0 : index
    %62 = vector.load %arg6[%c40, %c0_39] : memref<304x128xf32, #tpu.memory_space<vmem>>, vector<128x128xf32>
    %63 = arith.truncf %62 : vector<128x128xf32> to vector<128x128xbf16>
    %c7_40 = arith.constant 7 : index
    %c0_41 = arith.constant 0 : index
    %c0_42 = arith.constant 0 : index
    %64 = vector.load %arg2[%c7_40, %c0_41, %c0_42] : memref<9x128x128xbf16, #tpu.memory_space<vmem>>, vector<1x128x128xbf16>
    %65 = vector.shape_cast %64 : vector<1x128x128xbf16> to vector<128x128xbf16>
    %cst_43 = arith.constant dense<0.000000e+00> : vector<128x128xf32>
    %66 = tpu.matmul %63, %65, %cst_43 {dimension_numbers = #tpu.dot_dimension_numbers<[1], [0], [0], [1], [0, 0, 1, 1], [], []>} : vector<128x128xbf16>, vector<128x128xbf16>, vector<128x128xf32> -> vector<128x128xf32>
    %67 = arith.addf %61, %66 : vector<128x128xf32>
    %cst_44 = arith.constant 0.000000e+00 : f32
    %68 = vector.broadcast %cst_44 : f32 to vector<128x128xf32>
    %c9 = arith.constant 9 : index
    %c0_45 = arith.constant 0 : index
    %69 = vector.load %arg6[%c9, %c0_45] : memref<304x128xf32, #tpu.memory_space<vmem>>, vector<128x128xf32>
    %70 = arith.truncf %69 : vector<128x128xf32> to vector<128x128xbf16>
    %c2 = arith.constant 2 : index
    %c0_46 = arith.constant 0 : index
    %c0_47 = arith.constant 0 : index
    %71 = vector.load %arg2[%c2, %c0_46, %c0_47] : memref<9x128x128xbf16, #tpu.memory_space<vmem>>, vector<1x128x128xbf16>
    %72 = vector.shape_cast %71 : vector<1x128x128xbf16> to vector<128x128xbf16>
    %cst_48 = arith.constant dense<0.000000e+00> : vector<128x128xf32>
    %73 = tpu.matmul %70, %72, %cst_48 {dimension_numbers = #tpu.dot_dimension_numbers<[1], [0], [0], [1], [0, 0, 1, 1], [], []>} : vector<128x128xbf16>, vector<128x128xbf16>, vector<128x128xf32> -> vector<128x128xf32>
    %74 = arith.addf %68, %73 : vector<128x128xf32>
    %c25 = arith.constant 25 : index
    %c0_49 = arith.constant 0 : index
    %75 = vector.load %arg6[%c25, %c0_49] : memref<304x128xf32, #tpu.memory_space<vmem>>, vector<128x128xf32>
    %76 = arith.truncf %75 : vector<128x128xf32> to vector<128x128xbf16>
    %c5 = arith.constant 5 : index
    %c0_50 = arith.constant 0 : index
    %c0_51 = arith.constant 0 : index
    %77 = vector.load %arg2[%c5, %c0_50, %c0_51] : memref<9x128x128xbf16, #tpu.memory_space<vmem>>, vector<1x128x128xbf16>
    %78 = vector.shape_cast %77 : vector<1x128x128xbf16> to vector<128x128xbf16>
    %cst_52 = arith.constant dense<0.000000e+00> : vector<128x128xf32>
    %79 = tpu.matmul %76, %78, %cst_52 {dimension_numbers = #tpu.dot_dimension_numbers<[1], [0], [0], [1], [0, 0, 1, 1], [], []>} : vector<128x128xbf16>, vector<128x128xbf16>, vector<128x128xf32> -> vector<128x128xf32>
    %80 = arith.addf %74, %79 : vector<128x128xf32>
    %c41 = arith.constant 41 : index
    %c0_53 = arith.constant 0 : index
    %81 = vector.load %arg6[%c41, %c0_53] : memref<304x128xf32, #tpu.memory_space<vmem>>, vector<128x128xf32>
    %82 = arith.truncf %81 : vector<128x128xf32> to vector<128x128xbf16>
    %c8_54 = arith.constant 8 : index
    %c0_55 = arith.constant 0 : index
    %c0_56 = arith.constant 0 : index
    %83 = vector.load %arg2[%c8_54, %c0_55, %c0_56] : memref<9x128x128xbf16, #tpu.memory_space<vmem>>, vector<1x128x128xbf16>
    %84 = vector.shape_cast %83 : vector<1x128x128xbf16> to vector<128x128xbf16>
    %cst_57 = arith.constant dense<0.000000e+00> : vector<128x128xf32>
    %85 = tpu.matmul %82, %84, %cst_57 {dimension_numbers = #tpu.dot_dimension_numbers<[1], [0], [0], [1], [0, 0, 1, 1], [], []>} : vector<128x128xbf16>, vector<128x128xbf16>, vector<128x128xf32> -> vector<128x128xf32>
    %86 = arith.addf %80, %85 : vector<128x128xf32>
    %cst_58 = arith.constant 0.000000e+00 : f32
    %87 = vector.broadcast %cst_58 : f32 to vector<128x128xf32>
    %88 = arith.select %25, %48, %87 : vector<128x128xi1>, vector<128x128xf32>
    %89 = arith.addf %88, %67 : vector<128x128xf32>
    %cst_59 = arith.constant 0.000000e+00 : f32
    %90 = vector.broadcast %cst_59 : f32 to vector<128x128xf32>
    %91 = arith.select %27, %86, %90 : vector<128x128xi1>, vector<128x128xf32>
    %92 = arith.addf %89, %91 : vector<128x128xf32>
    %93 = vector.broadcast %28 : vector<1x128xf32> to vector<128x128xf32>
    %94 = arith.mulf %92, %93 : vector<128x128xf32>
    %95 = vector.broadcast %29 : vector<1x128xf32> to vector<128x128xf32>
    %96 = arith.addf %94, %95 : vector<128x128xf32>
    %cst_60 = arith.constant 0.000000e+00 : f32
    %97 = vector.broadcast %cst_60 : f32 to vector<128x128xf32>
    %98 = arith.maximumf %96, %97 : vector<128x128xf32>
    %c0_61 = arith.constant 0 : index
    %c0_62 = arith.constant 0 : index
    %c0_63 = arith.constant 0 : index
    %99 = vector.load %arg5[%c0_61, %c0_62, %c0_63] : memref<1x256x128xf32, #tpu.memory_space<vmem>>, vector<1x128x128xf32>
    %100 = vector.shape_cast %99 : vector<1x128x128xf32> to vector<128x128xf32>
    %101 = vector.shape_cast %98 : vector<128x128xf32> to vector<1x128x128xf32>
    tpu.vector_store %arg5[%c0_61, %c0_62, %c0_63], %101 {strides = array<i32>} : memref<1x256x128xf32, #tpu.memory_space<vmem>>, vector<1x128x128xf32>,
    %cst_64 = arith.constant 0.000000e+00 : f32
    %102 = vector.broadcast %cst_64 : f32 to vector<128x128xf32>
    %c135 = arith.constant 135 : index
    %c0_65 = arith.constant 0 : index
    %103 = vector.load %arg6[%c135, %c0_65] : memref<304x128xf32, #tpu.memory_space<vmem>>, vector<128x128xf32>
    %104 = arith.truncf %103 : vector<128x128xf32> to vector<128x128xbf16>
    %c0_66 = arith.constant 0 : index
    %c0_67 = arith.constant 0 : index
    %c0_68 = arith.constant 0 : index
    %105 = vector.load %arg2[%c0_66, %c0_67, %c0_68] : memref<9x128x128xbf16, #tpu.memory_space<vmem>>, vector<1x128x128xbf16>
    %106 = vector.shape_cast %105 : vector<1x128x128xbf16> to vector<128x128xbf16>
    %cst_69 = arith.constant dense<0.000000e+00> : vector<128x128xf32>
    %107 = tpu.matmul %104, %106, %cst_69 {dimension_numbers = #tpu.dot_dimension_numbers<[1], [0], [0], [1], [0, 0, 1, 1], [], []>} : vector<128x128xbf16>, vector<128x128xbf16>, vector<128x128xf32> -> vector<128x128xf32>
    %108 = arith.addf %102, %107 : vector<128x128xf32>
    %c151 = arith.constant 151 : index
    %c0_70 = arith.constant 0 : index
    %109 = vector.load %arg6[%c151, %c0_70] : memref<304x128xf32, #tpu.memory_space<vmem>>, vector<128x128xf32>
    %110 = arith.truncf %109 : vector<128x128xf32> to vector<128x128xbf16>
    %c3_71 = arith.constant 3 : index
    %c0_72 = arith.constant 0 : index
    %c0_73 = arith.constant 0 : index
    %111 = vector.load %arg2[%c3_71, %c0_72, %c0_73] : memref<9x128x128xbf16, #tpu.memory_space<vmem>>, vector<1x128x128xbf16>
    %112 = vector.shape_cast %111 : vector<1x128x128xbf16> to vector<128x128xbf16>
    %cst_74 = arith.constant dense<0.000000e+00> : vector<128x128xf32>
    %113 = tpu.matmul %110, %112, %cst_74 {dimension_numbers = #tpu.dot_dimension_numbers<[1], [0], [0], [1], [0, 0, 1, 1], [], []>} : vector<128x128xbf16>, vector<128x128xbf16>, vector<128x128xf32> -> vector<128x128xf32>
    %114 = arith.addf %108, %113 : vector<128x128xf32>
    %c167 = arith.constant 167 : index
    %c0_75 = arith.constant 0 : index
    %115 = vector.load %arg6[%c167, %c0_75] : memref<304x128xf32, #tpu.memory_space<vmem>>, vector<128x128xf32>
    %116 = arith.truncf %115 : vector<128x128xf32> to vector<128x128xbf16>
    %c6_76 = arith.constant 6 : index
    %c0_77 = arith.constant 0 : index
    %c0_78 = arith.constant 0 : index
    %117 = vector.load %arg2[%c6_76, %c0_77, %c0_78] : memref<9x128x128xbf16, #tpu.memory_space<vmem>>, vector<1x128x128xbf16>
    %118 = vector.shape_cast %117 : vector<1x128x128xbf16> to vector<128x128xbf16>
    %cst_79 = arith.constant dense<0.000000e+00> : vector<128x128xf32>
    %119 = tpu.matmul %116, %118, %cst_79 {dimension_numbers = #tpu.dot_dimension_numbers<[1], [0], [0], [1], [0, 0, 1, 1], [], []>} : vector<128x128xbf16>, vector<128x128xbf16>, vector<128x128xf32> -> vector<128x128xf32>
    %120 = arith.addf %114, %119 : vector<128x128xf32>
    %cst_80 = arith.constant 0.000000e+00 : f32
    %121 = vector.broadcast %cst_80 : f32 to vector<128x128xf32>
    %c136 = arith.constant 136 : index
    %c0_81 = arith.constant 0 : index
    %122 = vector.load %arg6[%c136, %c0_81] : memref<304x128xf32, #tpu.memory_space<vmem>>, vector<128x128xf32>
    %123 = arith.truncf %122 : vector<128x128xf32> to vector<128x128xbf16>
    %c1_82 = arith.constant 1 : index
    %c0_83 = arith.constant 0 : index
    %c0_84 = arith.constant 0 : index
    %124 = vector.load %arg2[%c1_82, %c0_83, %c0_84] : memref<9x128x128xbf16, #tpu.memory_space<vmem>>, vector<1x128x128xbf16>
    %125 = vector.shape_cast %124 : vector<1x128x128xbf16> to vector<128x128xbf16>
    %cst_85 = arith.constant dense<0.000000e+00> : vector<128x128xf32>
    %126 = tpu.matmul %123, %125, %cst_85 {dimension_numbers = #tpu.dot_dimension_numbers<[1], [0], [0], [1], [0, 0, 1, 1], [], []>} : vector<128x128xbf16>, vector<128x128xbf16>, vector<128x128xf32> -> vector<128x128xf32>
    %127 = arith.addf %121, %126 : vector<128x128xf32>
    %c152 = arith.constant 152 : index
    %c0_86 = arith.constant 0 : index
    %128 = vector.load %arg6[%c152, %c0_86] : memref<304x128xf32, #tpu.memory_space<vmem>>, vector<128x128xf32>
    %129 = arith.truncf %128 : vector<128x128xf32> to vector<128x128xbf16>
    %c4_87 = arith.constant 4 : index
    %c0_88 = arith.constant 0 : index
    %c0_89 = arith.constant 0 : index
    %130 = vector.load %arg2[%c4_87, %c0_88, %c0_89] : memref<9x128x128xbf16, #tpu.memory_space<vmem>>, vector<1x128x128xbf16>
    %131 = vector.shape_cast %130 : vector<1x128x128xbf16> to vector<128x128xbf16>
    %cst_90 = arith.constant dense<0.000000e+00> : vector<128x128xf32>
    %132 = tpu.matmul %129, %131, %cst_90 {dimension_numbers = #tpu.dot_dimension_numbers<[1], [0], [0], [1], [0, 0, 1, 1], [], []>} : vector<128x128xbf16>, vector<128x128xbf16>, vector<128x128xf32> -> vector<128x128xf32>
    %133 = arith.addf %127, %132 : vector<128x128xf32>
    %c168 = arith.constant 168 : index
    %c0_91 = arith.constant 0 : index
    %134 = vector.load %arg6[%c168, %c0_91] : memref<304x128xf32, #tpu.memory_space<vmem>>, vector<128x128xf32>
    %135 = arith.truncf %134 : vector<128x128xf32> to vector<128x128xbf16>
    %c7_92 = arith.constant 7 : index
    %c0_93 = arith.constant 0 : index
    %c0_94 = arith.constant 0 : index
    %136 = vector.load %arg2[%c7_92, %c0_93, %c0_94] : memref<9x128x128xbf16, #tpu.memory_space<vmem>>, vector<1x128x128xbf16>
    %137 = vector.shape_cast %136 : vector<1x128x128xbf16> to vector<128x128xbf16>
    %cst_95 = arith.constant dense<0.000000e+00> : vector<128x128xf32>
    %138 = tpu.matmul %135, %137, %cst_95 {dimension_numbers = #tpu.dot_dimension_numbers<[1], [0], [0], [1], [0, 0, 1, 1], [], []>} : vector<128x128xbf16>, vector<128x128xbf16>, vector<128x128xf32> -> vector<128x128xf32>
    %139 = arith.addf %133, %138 : vector<128x128xf32>
    %cst_96 = arith.constant 0.000000e+00 : f32
    %140 = vector.broadcast %cst_96 : f32 to vector<128x128xf32>
    %c137 = arith.constant 137 : index
    %c0_97 = arith.constant 0 : index
    %141 = vector.load %arg6[%c137, %c0_97] : memref<304x128xf32, #tpu.memory_space<vmem>>, vector<128x128xf32>
    %142 = arith.truncf %141 : vector<128x128xf32> to vector<128x128xbf16>
    %c2_98 = arith.constant 2 : index
    %c0_99 = arith.constant 0 : index
    %c0_100 = arith.constant 0 : index
    %143 = vector.load %arg2[%c2_98, %c0_99, %c0_100] : memref<9x128x128xbf16, #tpu.memory_space<vmem>>, vector<1x128x128xbf16>
    %144 = vector.shape_cast %143 : vector<1x128x128xbf16> to vector<128x128xbf16>
    %cst_101 = arith.constant dense<0.000000e+00> : vector<128x128xf32>
    %145 = tpu.matmul %142, %144, %cst_101 {dimension_numbers = #tpu.dot_dimension_numbers<[1], [0], [0], [1], [0, 0, 1, 1], [], []>} : vector<128x128xbf16>, vector<128x128xbf16>, vector<128x128xf32> -> vector<128x128xf32>
    %146 = arith.addf %140, %145 : vector<128x128xf32>
    %c153 = arith.constant 153 : index
    %c0_102 = arith.constant 0 : index
    %147 = vector.load %arg6[%c153, %c0_102] : memref<304x128xf32, #tpu.memory_space<vmem>>, vector<128x128xf32>
    %148 = arith.truncf %147 : vector<128x128xf32> to vector<128x128xbf16>
    %c5_103 = arith.constant 5 : index
    %c0_104 = arith.constant 0 : index
    %c0_105 = arith.constant 0 : index
    %149 = vector.load %arg2[%c5_103, %c0_104, %c0_105] : memref<9x128x128xbf16, #tpu.memory_space<vmem>>, vector<1x128x128xbf16>
    %150 = vector.shape_cast %149 : vector<1x128x128xbf16> to vector<128x128xbf16>
    %cst_106 = arith.constant dense<0.000000e+00> : vector<128x128xf32>
    %151 = tpu.matmul %148, %150, %cst_106 {dimension_numbers = #tpu.dot_dimension_numbers<[1], [0], [0], [1], [0, 0, 1, 1], [], []>} : vector<128x128xbf16>, vector<128x128xbf16>, vector<128x128xf32> -> vector<128x128xf32>
    %152 = arith.addf %146, %151 : vector<128x128xf32>
    %c169 = arith.constant 169 : index
    %c0_107 = arith.constant 0 : index
    %153 = vector.load %arg6[%c169, %c0_107] : memref<304x128xf32, #tpu.memory_space<vmem>>, vector<128x128xf32>
    %154 = arith.truncf %153 : vector<128x128xf32> to vector<128x128xbf16>
    %c8_108 = arith.constant 8 : index
    %c0_109 = arith.constant 0 : index
    %c0_110 = arith.constant 0 : index
    %155 = vector.load %arg2[%c8_108, %c0_109, %c0_110] : memref<9x128x128xbf16, #tpu.memory_space<vmem>>, vector<1x128x128xbf16>
    %156 = vector.shape_cast %155 : vector<1x128x128xbf16> to vector<128x128xbf16>
    %cst_111 = arith.constant dense<0.000000e+00> : vector<128x128xf32>
    %157 = tpu.matmul %154, %156, %cst_111 {dimension_numbers = #tpu.dot_dimension_numbers<[1], [0], [0], [1], [0, 0, 1, 1], [], []>} : vector<128x128xbf16>, vector<128x128xbf16>, vector<128x128xf32> -> vector<128x128xf32>
    %158 = arith.addf %152, %157 : vector<128x128xf32>
    %cst_112 = arith.constant 0.000000e+00 : f32
    %159 = vector.broadcast %cst_112 : f32 to vector<128x128xf32>
    %160 = arith.select %25, %120, %159 : vector<128x128xi1>, vector<128x128xf32>
    %161 = arith.addf %160, %139 : vector<128x128xf32>
    %cst_113 = arith.constant 0.000000e+00 : f32
    %162 = vector.broadcast %cst_113 : f32 to vector<128x128xf32>
    %163 = arith.select %27, %158, %162 : vector<128x128xi1>, vector<128x128xf32>
    %164 = arith.addf %161, %163 : vector<128x128xf32>
    %165 = vector.broadcast %28 : vector<1x128xf32> to vector<128x128xf32>
    %166 = arith.mulf %164, %165 : vector<128x128xf32>
    %167 = vector.broadcast %29 : vector<1x128xf32> to vector<128x128xf32>
    %168 = arith.addf %166, %167 : vector<128x128xf32>
    %cst_114 = arith.constant 0.000000e+00 : f32
    %169 = vector.broadcast %cst_114 : f32 to vector<128x128xf32>
    %170 = arith.maximumf %168, %169 : vector<128x128xf32>
    %c0_115 = arith.constant 0 : index
    %c128 = arith.constant 128 : index
    %c0_116 = arith.constant 0 : index
    %171 = vector.load %arg5[%c0_115, %c128, %c0_116] : memref<1x256x128xf32, #tpu.memory_space<vmem>>, vector<1x128x128xf32>
    %172 = vector.shape_cast %171 : vector<1x128x128xf32> to vector<128x128xf32>
    %173 = vector.shape_cast %170 : vector<128x128xf32> to vector<1x128x128xf32>
    tpu.vector_store %arg5[%c0_115, %c128, %c0_116], %173 {strides = array<i32>} : memref<1x256x128xf32, #tpu.memory_space<vmem>>, vector<1x128x128xf32>,
    return
  }
  func.func @transform_0(%arg0: i32) -> (i32, i32, i32) {
    %c0_i32 = arith.constant 0 : i32
    %c0_i32_0 = arith.constant 0 : i32
    %c0_i32_1 = arith.constant 0 : i32
    return %arg0, %c0_i32, %c0_i32_0 : i32, i32, i32
  }
  func.func @transform_1(%arg0: i32) -> (i32, i32, i32) {
    %c0_i32 = arith.constant 0 : i32
    %c0_i32_0 = arith.constant 0 : i32
    %c0_i32_1 = arith.constant 0 : i32
    %c0_i32_2 = arith.constant 0 : i32
    return %c0_i32, %c0_i32_0, %c0_i32_1 : i32, i32, i32
  }
  func.func @transform_2(%arg0: i32) -> (i32, i32) {
    %c0_i32 = arith.constant 0 : i32
    %c0_i32_0 = arith.constant 0 : i32
    %c0_i32_1 = arith.constant 0 : i32
    return %c0_i32, %c0_i32_0 : i32, i32
  }
  func.func @transform_3(%arg0: i32) -> (i32, i32) {
    %c0_i32 = arith.constant 0 : i32
    %c0_i32_0 = arith.constant 0 : i32
    %c0_i32_1 = arith.constant 0 : i32
    return %c0_i32, %c0_i32_0 : i32, i32
  }
  func.func @transform_4(%arg0: i32) -> (i32, i32, i32) {
    %c0_i32 = arith.constant 0 : i32
    %c0_i32_0 = arith.constant 0 : i32
    %c0_i32_1 = arith.constant 0 : i32
    return %arg0, %c0_i32, %c0_i32_0 : i32, i32, i32
  }
}

module attributes {stable_mosaic.version = 11 : i64} {
  func.func @_final_proj_kernel(%arg0: i32, %arg1: memref<256x128xf32, #tpu.memory_space<vmem>>, %arg2: memref<256x128xf32, #tpu.memory_space<vmem>>, %arg3: memref<128x128xbf16, #tpu.memory_space<vmem>>, %arg4: memref<128x128xbf16, #tpu.memory_space<vmem>>, %arg5: memref<1x128xf32, #tpu.memory_space<vmem>>, %arg6: memref<1x128xf32, #tpu.memory_space<vmem>>, %arg7: memref<1x128xf32, #tpu.memory_space<vmem>>, %arg8: memref<1x128xf32, #tpu.memory_space<vmem>>, %arg9: memref<256x128xf32, #tpu.memory_space<vmem>>) attributes {dimension_semantics = [#tpu.dimension_semantics<parallel>], iteration_bounds = array<i64: 2>, scalar_prefetch = 0 : i64, scratch_operands = 0 : i64, tpu.core_type = #tpu.core_type<tc>, window_params = [{transform_indices = @transform_0, window_bounds = array<i64: 256, 128>}, {transform_indices = @transform_1, window_bounds = array<i64: 256, 128>}, {pipeline_mode = #tpu.pipeline_mode<synchronous>, transform_indices = @transform_2, window_bounds = array<i64: 128, 128>}, {pipeline_mode = #tpu.pipeline_mode<synchronous>, transform_indices = @transform_3, window_bounds = array<i64: 128, 128>}, {pipeline_mode = #tpu.pipeline_mode<synchronous>, transform_indices = @transform_4, window_bounds = array<i64: 1, 128>}, {pipeline_mode = #tpu.pipeline_mode<synchronous>, transform_indices = @transform_5, window_bounds = array<i64: 1, 128>}, {pipeline_mode = #tpu.pipeline_mode<synchronous>, transform_indices = @transform_6, window_bounds = array<i64: 1, 128>}, {pipeline_mode = #tpu.pipeline_mode<synchronous>, transform_indices = @transform_7, window_bounds = array<i64: 1, 128>}, {transform_indices = @transform_8, window_bounds = array<i64: 256, 128>}]} {
    %c0 = arith.constant 0 : index
    %c0_0 = arith.constant 0 : index
    %0 = vector.load %arg1[%c0, %c0_0] : memref<256x128xf32, #tpu.memory_space<vmem>>, vector<256x128xf32>
    %1 = arith.truncf %0 : vector<256x128xf32> to vector<256x128xbf16>
    %c0_1 = arith.constant 0 : index
    %c0_2 = arith.constant 0 : index
    %2 = vector.load %arg2[%c0_1, %c0_2] : memref<256x128xf32, #tpu.memory_space<vmem>>, vector<256x128xf32>
    %3 = arith.truncf %2 : vector<256x128xf32> to vector<256x128xbf16>
    %c0_3 = arith.constant 0 : index
    %c0_4 = arith.constant 0 : index
    %4 = vector.load %arg3[%c0_3, %c0_4] : memref<128x128xbf16, #tpu.memory_space<vmem>>, vector<128x128xbf16>
    %cst = arith.constant dense<0.000000e+00> : vector<256x128xf32>
    %5 = tpu.matmul %1, %4, %cst {dimension_numbers = #tpu.dot_dimension_numbers<[1], [0], [0], [1], [0, 0, 1, 1], [], []>} : vector<256x128xbf16>, vector<128x128xbf16>, vector<256x128xf32> -> vector<256x128xf32>
    %c0_5 = arith.constant 0 : index
    %c0_6 = arith.constant 0 : index
    %6 = vector.load %arg4[%c0_5, %c0_6] : memref<128x128xbf16, #tpu.memory_space<vmem>>, vector<128x128xbf16>
    %cst_7 = arith.constant dense<0.000000e+00> : vector<256x128xf32>
    %7 = tpu.matmul %3, %6, %cst_7 {dimension_numbers = #tpu.dot_dimension_numbers<[1], [0], [0], [1], [0, 0, 1, 1], [], []>} : vector<256x128xbf16>, vector<128x128xbf16>, vector<256x128xf32> -> vector<256x128xf32>
    %c0_8 = arith.constant 0 : index
    %c0_9 = arith.constant 0 : index
    %8 = vector.load %arg5[%c0_8, %c0_9] : memref<1x128xf32, #tpu.memory_space<vmem>>, vector<1x128xf32>
    %9 = vector.broadcast %8 : vector<1x128xf32> to vector<256x128xf32>
    %10 = arith.mulf %5, %9 : vector<256x128xf32>
    %c0_10 = arith.constant 0 : index
    %c0_11 = arith.constant 0 : index
    %11 = vector.load %arg6[%c0_10, %c0_11] : memref<1x128xf32, #tpu.memory_space<vmem>>, vector<1x128xf32>
    %12 = vector.broadcast %11 : vector<1x128xf32> to vector<256x128xf32>
    %13 = arith.addf %10, %12 : vector<256x128xf32>
    %c0_12 = arith.constant 0 : index
    %c0_13 = arith.constant 0 : index
    %14 = vector.load %arg7[%c0_12, %c0_13] : memref<1x128xf32, #tpu.memory_space<vmem>>, vector<1x128xf32>
    %15 = vector.broadcast %14 : vector<1x128xf32> to vector<256x128xf32>
    %16 = arith.mulf %7, %15 : vector<256x128xf32>
    %17 = arith.addf %13, %16 : vector<256x128xf32>
    %c0_14 = arith.constant 0 : index
    %c0_15 = arith.constant 0 : index
    %18 = vector.load %arg8[%c0_14, %c0_15] : memref<1x128xf32, #tpu.memory_space<vmem>>, vector<1x128xf32>
    %19 = vector.broadcast %18 : vector<1x128xf32> to vector<256x128xf32>
    %20 = arith.addf %17, %19 : vector<256x128xf32>
    %cst_16 = arith.constant 0.000000e+00 : f32
    %21 = vector.broadcast %cst_16 : f32 to vector<256x128xf32>
    %22 = arith.maximumf %20, %21 : vector<256x128xf32>
    %c0_17 = arith.constant 0 : index
    %c0_18 = arith.constant 0 : index
    %23 = vector.load %arg9[%c0_17, %c0_18] : memref<256x128xf32, #tpu.memory_space<vmem>>, vector<256x128xf32>
    tpu.vector_store %arg9[%c0_17, %c0_18], %22 {strides = array<i32>} : memref<256x128xf32, #tpu.memory_space<vmem>>, vector<256x128xf32>,
    return
  }
  func.func @transform_0(%arg0: i32) -> (i32, i32) {
    %c0_i32 = arith.constant 0 : i32
    %c0_i32_0 = arith.constant 0 : i32
    return %arg0, %c0_i32 : i32, i32
  }
  func.func @transform_1(%arg0: i32) -> (i32, i32) {
    %c0_i32 = arith.constant 0 : i32
    %c0_i32_0 = arith.constant 0 : i32
    return %arg0, %c0_i32 : i32, i32
  }
  func.func @transform_2(%arg0: i32) -> (i32, i32) {
    %c0_i32 = arith.constant 0 : i32
    %c0_i32_0 = arith.constant 0 : i32
    %c0_i32_1 = arith.constant 0 : i32
    return %c0_i32, %c0_i32_0 : i32, i32
  }
  func.func @transform_3(%arg0: i32) -> (i32, i32) {
    %c0_i32 = arith.constant 0 : i32
    %c0_i32_0 = arith.constant 0 : i32
    %c0_i32_1 = arith.constant 0 : i32
    return %c0_i32, %c0_i32_0 : i32, i32
  }
  func.func @transform_4(%arg0: i32) -> (i32, i32) {
    %c0_i32 = arith.constant 0 : i32
    %c0_i32_0 = arith.constant 0 : i32
    %c0_i32_1 = arith.constant 0 : i32
    return %c0_i32, %c0_i32_0 : i32, i32
  }
  func.func @transform_5(%arg0: i32) -> (i32, i32) {
    %c0_i32 = arith.constant 0 : i32
    %c0_i32_0 = arith.constant 0 : i32
    %c0_i32_1 = arith.constant 0 : i32
    return %c0_i32, %c0_i32_0 : i32, i32
  }
  func.func @transform_6(%arg0: i32) -> (i32, i32) {
    %c0_i32 = arith.constant 0 : i32
    %c0_i32_0 = arith.constant 0 : i32
    %c0_i32_1 = arith.constant 0 : i32
    return %c0_i32, %c0_i32_0 : i32, i32
  }
  func.func @transform_7(%arg0: i32) -> (i32, i32) {
    %c0_i32 = arith.constant 0 : i32
    %c0_i32_0 = arith.constant 0 : i32
    %c0_i32_1 = arith.constant 0 : i32
    return %c0_i32, %c0_i32_0 : i32, i32
  }
  func.func @transform_8(%arg0: i32) -> (i32, i32) {
    %c0_i32 = arith.constant 0 : i32
    %c0_i32_0 = arith.constant 0 : i32
    return %arg0, %c0_i32 : i32, i32
  }
}

</mosaic_0001>

<llo_original>
// kernel: bottleneck_forward.3
$region0: #{bottleneck_forward.3}
  #allocation0 [shape = 'u32[]', space=smem, size = 0x4, offset = 0x4, fixed_abs, tag = 'smem constant byte address 0x4 - core index']
  #allocation1 [shape = 'u32[144,128]{1,0:T(1,128)}', space=vmem, size = 0x12000, scoped, tag = 'internal scratch']
  %s0 = inlined_call_operand.vmem [shape: f32[512,128], index: 0, kind: input, shape index: {}]
  %s1 = inlined_call_operand.vmem [shape: bf16[128,128], index: 1, kind: input, shape index: {}]
  %s2 = inlined_call_operand.vmem [shape: f32[1,128], index: 2, kind: input, shape index: {}]
  %s3 = inlined_call_operand.vmem [shape: f32[1,128], index: 3, kind: input, shape index: {}]
  %s4 = inlined_call_operand.vmem [shape: f32[512,128], index: 4, kind: output, shape index: {}]
  %s5 = sld [smem:[#allocation0]]
  $region49: #{bottleneck_forward.3} parent=0
    _
  %s7 = ssub.s32 1, %s5
  %s8 = scalar_select 0, %s7, %s5
  loop: start=0, step=1, limit=4
  $region2: #{bottleneck_forward.3} parent=0 // loop_pre_header
    _
  $region3: #{bottleneck_forward.3} parent=0 // loop_header
    %s10 = sphi 0, %s14
    %p11 = scmp.ge.s32.totalorder %s10, 4
    %s20 = sphi 0, %s22
    %s23 = sphi 0, %s20
    %s24 = sphi 0, %s23
    %s40 = sphi 0, %s24
    %s44 = sphi 0, %s44
    %s46 = sphi 0, %s44
    %s47 = sphi 0, %s46
    %s61 = sphi 0, %s47
    %s65 = sphi 0, %s65
    %s67 = sphi 0, %s65
    %s68 = sphi 0, %s67
    %s82 = sphi 0, %s68
    %s86 = sphi 0, %s86
    %s88 = sphi 0, %s86
    %s89 = sphi 0, %s88
    %s103 = sphi 0, %s89
    %s109 = sphi 0, %s111
    %s112 = sphi 0, %s109
    %s113 = sphi 0, %s112
    %s129 = sphi 0, %s113
  $region4: #{bottleneck_forward.3} parent=0 // loop_header_branch
    %13 = sbr.rel (%p11) target = $region8
  $region5: #{bottleneck_forward.3} parent=0 // loop_body
    %s15 = ssub.s32 %s10, 1
    %s16 = ssub.s32 %s10, 2
    %s17 = sadd.s32 %s10, 1
    %s18 = ssub.s32 %s10, %s17
    %p19 = scmp.eq.s32.totalorder %s18, 0
    %s21 = sadd.s32 %s20, 1
    %s22 = scalar_select %p19, %s20, %s21
    %p25 = pneg %p19
    %p26 = scmp.eq.s32.totalorder %s10, 1
    %p27 = por %p25, %p26
    %p28 = scmp.ne.s32.totalorder %s20, %s23
    %p29 = scmp.eq.s32.totalorder %s10, 0
    %p30 = por %p28, %p29
    %p31 = scmp.ne.s32.totalorder %s20, %s23
    %p32 = scmp.eq.s32.totalorder %s15, 1
    %p33 = por %p31, %p32
    %p34 = scmp.ne.s32.totalorder %s23, %s24
    %p35 = scmp.eq.s32.totalorder %s15, 0
    %p36 = por %p34, %p35
    %p37 = scmp.ne.s32.totalorder %s23, %s24
    %p38 = scmp.eq.s32.totalorder %s16, 1
    %p39 = por %p37, %p38
    %p41 = scmp.ne.s32.totalorder %s24, %s40
    %p42 = scmp.eq.s32.totalorder %s16, 0
    %p43 = por %p41, %p42
    %s45 = sadd.s32 %s44, 1
    %p48 = scmp.eq.s32.totalorder %s10, 1
    %p49 = scmp.ne.s32.totalorder %s44, %s46
    %p50 = scmp.eq.s32.totalorder %s10, 0
    %p51 = por %p49, %p50
    %p52 = scmp.ne.s32.totalorder %s44, %s46
    %p53 = scmp.eq.s32.totalorder %s15, 1
    %p54 = por %p52, %p53
    %p55 = scmp.ne.s32.totalorder %s46, %s47
    %p56 = scmp.eq.s32.totalorder %s15, 0
    %p57 = por %p55, %p56
    %p58 = scmp.ne.s32.totalorder %s46, %s47
    %p59 = scmp.eq.s32.totalorder %s16, 1
    %p60 = por %p58, %p59
    %p62 = scmp.ne.s32.totalorder %s47, %s61
    %p63 = scmp.eq.s32.totalorder %s16, 0
    %p64 = por %p62, %p63
    %s66 = sadd.s32 %s65, 1
    %p69 = scmp.eq.s32.totalorder %s10, 1
    %p70 = scmp.ne.s32.totalorder %s65, %s67
    %p71 = scmp.eq.s32.totalorder %s10, 0
    %p72 = por %p70, %p71
    %p73 = scmp.ne.s32.totalorder %s65, %s67
    %p74 = scmp.eq.s32.totalorder %s15, 1
    %p75 = por %p73, %p74
    %p76 = scmp.ne.s32.totalorder %s67, %s68
    %p77 = scmp.eq.s32.totalorder %s15, 0
    %p78 = por %p76, %p77
    %p79 = scmp.ne.s32.totalorder %s67, %s68
    %p80 = scmp.eq.s32.totalorder %s16, 1
    %p81 = por %p79, %p80
    %p83 = scmp.ne.s32.totalorder %s68, %s82
    %p84 = scmp.eq.s32.totalorder %s16, 0
    %p85 = por %p83, %p84
    %s87 = sadd.s32 %s86, 1
    %p90 = scmp.eq.s32.totalorder %s10, 1
    %p91 = scmp.ne.s32.totalorder %s86, %s88
    %p92 = scmp.eq.s32.totalorder %s10, 0
    %p93 = por %p91, %p92
    %p94 = scmp.ne.s32.totalorder %s86, %s88
    %p95 = scmp.eq.s32.totalorder %s15, 1
    %p96 = por %p94, %p95
    %p97 = scmp.ne.s32.totalorder %s88, %s89
    %p98 = scmp.eq.s32.totalorder %s15, 0
    %p99 = por %p97, %p98
    %p100 = scmp.ne.s32.totalorder %s88, %s89
    %p101 = scmp.eq.s32.totalorder %s16, 1
    %p102 = por %p100, %p101
    %p104 = scmp.ne.s32.totalorder %s89, %s103
    %p105 = scmp.eq.s32.totalorder %s16, 0
    %p106 = por %p104, %p105
    %s107 = ssub.s32 %s10, %s17
    %p108 = scmp.eq.s32.totalorder %s107, 0
    %s110 = sadd.s32 %s109, 1
    %s111 = scalar_select %p108, %s109, %s110
    %p114 = pneg %p108
    %p115 = scmp.eq.s32.totalorder %s10, 1
    %p116 = por %p114, %p115
    %p117 = scmp.ne.s32.totalorder %s109, %s112
    %p118 = scmp.eq.s32.totalorder %s10, 0
    %p119 = por %p117, %p118
    %p120 = scmp.ne.s32.totalorder %s109, %s112
    %p121 = scmp.eq.s32.totalorder %s15, 1
    %p122 = por %p120, %p121
    %p123 = scmp.ne.s32.totalorder %s112, %s113
    %p124 = scmp.eq.s32.totalorder %s15, 0
    %p125 = por %p123, %p124
    %p126 = scmp.ne.s32.totalorder %s112, %s113
    %p127 = scmp.eq.s32.totalorder %s16, 1
    %p128 = por %p126, %p127
    %p130 = scmp.ne.s32.totalorder %s113, %s129
    %p131 = scmp.eq.s32.totalorder %s16, 0
    %p132 = por %p130, %p131
    %p133 = scmp.le.s32.totalorder 1, %s10
    %p134 = scmp.lt.s32.totalorder %s10, 3
    %p135 = pnand %p133, %p134
    %p136 = pneg %p135
    // Predicated region
    $region9: #{bottleneck_forward.3} parent=5 // pred_check
      _
    $region10: #{bottleneck_forward.3} parent=5 // pred_check_branch
      %138 = sbr.rel (%p135) target = $region12
    $region11: #{bottleneck_forward.3} parent=5 // pred_region
      %s139 = ssub.s32 %s10, 1
      // Predicated region
      $region13: #{bottleneck_forward.3} parent=11 // pred_check
        %p140 = pneg %p57
      $region14: #{bottleneck_forward.3} parent=11 // pred_check_branch
        %142 = sbr.rel (%p140) target = $region16
      $region15: #{bottleneck_forward.3} parent=11 // pred_region
        _
      $region16: #{bottleneck_forward.3} parent=11 // pred_fallthru
        _
      // Predicated region
      $region17: #{bottleneck_forward.3} parent=11 // pred_check
        %p143 = pneg %p78
      $region18: #{bottleneck_forward.3} parent=11 // pred_check_branch
        %145 = sbr.rel (%p143) target = $region20
      $region19: #{bottleneck_forward.3} parent=11 // pred_region
        _
      $region20: #{bottleneck_forward.3} parent=11 // pred_fallthru
        _
      // Predicated region
      $region21: #{bottleneck_forward.3} parent=11 // pred_check
        %p146 = pneg %p99
      $region22: #{bottleneck_forward.3} parent=11 // pred_check_branch
        %148 = sbr.rel (%p146) target = $region24
      $region23: #{bottleneck_forward.3} parent=11 // pred_region
        _
      $region24: #{bottleneck_forward.3} parent=11 // pred_fallthru
        _
    $region12: #{bottleneck_forward.3} parent=5 // pred_fallthru
      _
    %p149 = scmp.lt.s32.totalorder %s10, 2
    // Predicated region
    $region25: #{bottleneck_forward.3} parent=5 // pred_check
      %p150 = pneg %p149
    $region26: #{bottleneck_forward.3} parent=5 // pred_check_branch
      %152 = sbr.rel (%p150) target = $region28
    $region27: #{bottleneck_forward.3} parent=5 // pred_region
      // Predicated region
      $region29: #{bottleneck_forward.3} parent=27 // pred_check
        %p153 = pneg %p30
      $region30: #{bottleneck_forward.3} parent=27 // pred_check_branch
        %155 = sbr.rel (%p153) target = $region32
      $region31: #{bottleneck_forward.3} parent=27 // pred_region
        %s156 = smul.u32 32, %s10
        %p157 = scmp.lt.s32.totalorder %s156, 63
        %s158 = scalar_select %p157, %s156, 63
        %s159 = smul.addr %s158, 8
        %s160 = scalar_lea.vmem %s0, %s159
        %s161 = smul.u32 32, %s10
      $region32: #{bottleneck_forward.3} parent=27 // pred_fallthru
        _
    $region28: #{bottleneck_forward.3} parent=5 // pred_fallthru
      _
    %p162 = scmp.le.s32.totalorder 1, %s10
    %p163 = scmp.lt.s32.totalorder %s10, 3
    %p164 = pnand %p162, %p163
    %p165 = pneg %p164
    // Predicated region
    $region33: #{bottleneck_forward.3} parent=5 // pred_check
      _
    $region34: #{bottleneck_forward.3} parent=5 // pred_check_branch
      %167 = sbr.rel (%p164) target = $region36
    $region35: #{bottleneck_forward.3} parent=5 // pred_region
      %s168 = ssub.s32 %s10, 1
      %s169 = smul.u32 32, %s15
      %p170 = scmp.lt.s32.totalorder %s169, 63
      %s171 = scalar_select %p170, %s169, 63
      %s172 = smul.addr %s171, 8
      %s173 = scalar_lea.vmem %s0, %s172
      %p174 = pneg %p36
      %p175 = pneg %p33
      %p176 = pneg %p57
      %p177 = pneg %p54
      %p178 = pneg %p78
      %p179 = pneg %p75
      %p180 = pneg %p99
      %p181 = pneg %p96
      %p182 = pneg %p125
      %p183 = pneg %p122
      %s184 = smul.u32 32, %s15
      %p185 = scmp.lt.s32.totalorder %s184, 63
      %s186 = scalar_select %p185, %s184, 63
      %s187 = smul.addr %s186, 8
      %s188 = scalar_lea.vmem %s4, %s187
      %s189 = smul.u32 32, %s15
      %p190 = scmp.lt.s32.totalorder %s189, 63
      %s191 = scalar_select %p190, %s189, 63
      %s192 = smul.addr %s191, 8
      %s193 = scalar_lea.vmem %s0, %s192
      %s194 = smul.u32 32, %s15
      %s195 = smul.u32 32, %s15
      %p196 = scmp.lt.s32.totalorder %s195, 63
      %s197 = scalar_select %p196, %s195, 63
      %s198 = smul.addr %s197, 8
      %s199 = scalar_lea.vmem %s4, %s198
      %s200 = smul.u32 32, %s15
      %v202 = vld [vmem:[%s193] sm:$0xff]
      %v203 = vld [vmem:[%s193 + $0x8] sm:$0xff]
      %v204 = vld [vmem:[%s193 + $0x10] sm:$0xff]
      %v205 = vld [vmem:[%s193 + $0x18] sm:$0xff]
      %v206 = vld [vmem:[%s193 + $0x20] sm:$0xff]
      %v207 = vld [vmem:[%s193 + $0x28] sm:$0xff]
      %v208 = vld [vmem:[%s193 + $0x30] sm:$0xff]
      %v209 = vld [vmem:[%s193 + $0x38] sm:$0xff]
      %v210 = vld [vmem:[%s193 + $0x40] sm:$0xff]
      %v211 = vld [vmem:[%s193 + $0x48] sm:$0xff]
      %v212 = vld [vmem:[%s193 + $0x50] sm:$0xff]
      %v213 = vld [vmem:[%s193 + $0x58] sm:$0xff]
      %v214 = vld [vmem:[%s193 + $0x60] sm:$0xff]
      %v215 = vld [vmem:[%s193 + $0x68] sm:$0xff]
      %v216 = vld [vmem:[%s193 + $0x70] sm:$0xff]
      %v217 = vld [vmem:[%s193 + $0x78] sm:$0xff]
      %v218 = vld [vmem:[%s193 + $0x80] sm:$0xff]
      %v219 = vld [vmem:[%s193 + $0x88] sm:$0xff]
      %v220 = vld [vmem:[%s193 + $0x90] sm:$0xff]
      %v221 = vld [vmem:[%s193 + $0x98] sm:$0xff]
      %v222 = vld [vmem:[%s193 + $0xa0] sm:$0xff]
      %v223 = vld [vmem:[%s193 + $0xa8] sm:$0xff]
      %v224 = vld [vmem:[%s193 + $0xb0] sm:$0xff]
      %v225 = vld [vmem:[%s193 + $0xb8] sm:$0xff]
      %v226 = vld [vmem:[%s193 + $0xc0] sm:$0xff]
      %v227 = vld [vmem:[%s193 + $0xc8] sm:$0xff]
      %v228 = vld [vmem:[%s193 + $0xd0] sm:$0xff]
      %v229 = vld [vmem:[%s193 + $0xd8] sm:$0xff]
      %v230 = vld [vmem:[%s193 + $0xe0] sm:$0xff]
      %v231 = vld [vmem:[%s193 + $0xe8] sm:$0xff]
      %v232 = vld [vmem:[%s193 + $0xf0] sm:$0xff]
      %v233 = vld [vmem:[%s193 + $0xf8] sm:$0xff]
      %v234 = vpack.c.bf16 %v203, %v202
      %v235 = vpack.c.bf16 %v205, %v204
      %v236 = vpack.c.bf16 %v207, %v206
      %v237 = vpack.c.bf16 %v209, %v208
      %v238 = vpack.c.bf16 %v211, %v210
      %v239 = vpack.c.bf16 %v213, %v212
      %v240 = vpack.c.bf16 %v215, %v214
      %v241 = vpack.c.bf16 %v217, %v216
      %v242 = vpack.c.bf16 %v219, %v218
      %v243 = vpack.c.bf16 %v221, %v220
      %v244 = vpack.c.bf16 %v223, %v222
      %v245 = vpack.c.bf16 %v225, %v224
      %v246 = vpack.c.bf16 %v227, %v226
      %v247 = vpack.c.bf16 %v229, %v228
      %v248 = vpack.c.bf16 %v231, %v230
      %v249 = vpack.c.bf16 %v233, %v232
      %v250 = vld [vmem:[%s1] sm:$0xf]
      %v251 = vld [vmem:[%s1 + $0x4] sm:$0xf]
      %v252 = vld [vmem:[%s1 + $0x8] sm:$0xf]
      %v253 = vld [vmem:[%s1 + $0xc] sm:$0xf]
      %v254 = vld [vmem:[%s1 + $0x10] sm:$0xf]
      %v255 = vld [vmem:[%s1 + $0x14] sm:$0xf]
      %v256 = vld [vmem:[%s1 + $0x18] sm:$0xf]
      %v257 = vld [vmem:[%s1 + $0x1c] sm:$0xf]
      %v258 = vld [vmem:[%s1 + $0x20] sm:$0xf]
      %v259 = vld [vmem:[%s1 + $0x24] sm:$0xf]
      %v260 = vld [vmem:[%s1 + $0x28] sm:$0xf]
      %v261 = vld [vmem:[%s1 + $0x2c] sm:$0xf]
      %v262 = vld [vmem:[%s1 + $0x30] sm:$0xf]
      %v263 = vld [vmem:[%s1 + $0x34] sm:$0xf]
      %v264 = vld [vmem:[%s1 + $0x38] sm:$0xf]
      %v265 = vld [vmem:[%s1 + $0x3c] sm:$0xf]
      %v282 = vunpack.c.l.b16 %v250
      %v283 = vunpack.c.l.b16 %v251
      %v284 = vunpack.c.l.b16 %v252
      %v285 = vunpack.c.l.b16 %v253
      %v286 = vunpack.c.l.b16 %v254
      %v287 = vunpack.c.l.b16 %v255
      %v288 = vunpack.c.l.b16 %v256
      %v289 = vunpack.c.l.b16 %v257
      %v290 = vunpack.c.l.b16 %v258
      %v291 = vunpack.c.l.b16 %v259
      %v292 = vunpack.c.l.b16 %v260
      %v293 = vunpack.c.l.b16 %v261
      %v294 = vunpack.c.l.b16 %v262
      %v295 = vunpack.c.l.b16 %v263
      %v296 = vunpack.c.l.b16 %v264
      %v297 = vunpack.c.l.b16 %v265
      %v298 = vpack.c.b16 %v283, %v282
      %v299 = vpack.c.b16 %v285, %v284
      %v300 = vpack.c.b16 %v287, %v286
      %v301 = vpack.c.b16 %v289, %v288
      %v302 = vpack.c.b16 %v291, %v290
      %v303 = vpack.c.b16 %v293, %v292
      %v304 = vpack.c.b16 %v295, %v294
      %v305 = vpack.c.b16 %v297, %v296
      %314 = vmatprep.subr.bf16.mxu0 0
      %315 = vmatpush1.bf16.msra.mxu0 %v305
      %316 = vmatprep.subr.bf16.mxu0 0
      %317 = vmatpush1.bf16.msra.mxu0 %v304
      %318 = vmatprep.subr.bf16.mxu0 0
      %319 = vmatpush1.bf16.msra.mxu0 %v303
      %320 = vmatprep.subr.bf16.mxu0 0
      %321 = vmatpush1.bf16.msra.mxu0 %v302
      %322 = vmatprep.subr.bf16.mxu0 0
      %323 = vmatpush1.bf16.msra.mxu0 %v301
      %324 = vmatprep.subr.bf16.mxu0 0
      %325 = vmatpush1.bf16.msra.mxu0 %v300
      %326 = vmatprep.subr.bf16.mxu0 0
      %327 = vmatpush1.bf16.msra.mxu0 %v299
      %328 = vmatprep.subr.bf16.mxu0 0
      %329 = vmatpush1.bf16.msra.mxu0 %v298
      %330 = vmatprep.subr.bf16.mxu0 0
      %331 = vmatpush2.bf16.msra.mxu0 0
      %332 = vmatprep.subr.bf16.mxu0 0
      %333 = vmatpush2.bf16.msra.mxu0 0
      %334 = vmatprep.subr.bf16.mxu0 0
      %335 = vmatpush2.bf16.msra.mxu0 0
      %336 = vmatprep.subr.bf16.mxu0 0
      %337 = vmatpush2.bf16.msra.mxu0 0
      %338 = vmatprep.subr.bf16.mxu0 0
      %339 = vmatpush2.bf16.msra.mxu0 0
      %340 = vmatprep.subr.bf16.mxu0 0
      %341 = vmatpush2.bf16.msra.mxu0 0
      %342 = vmatprep.subr.bf16.mxu0 0
      %343 = vmatpush2.bf16.msra.mxu0 0
      %344 = vmatprep.subr.bf16.mxu0 0
      %345 = vmatpush2.bf16.msra.mxu0 0
      %346 = vmatprep.mubr.bf16.mxu0 0
      %347 = vmatmul.mubr.bf16.gmra.mxu0 %v234
      %v348 = vpop.f32.mrf.mxu0
      %v349 = vadd.f32 0.0, %v348
      %v350 = vpop.f32.mrf.mxu0
      %v351 = vpop.f32.mrf.mxu0
      %v352 = vadd.f32 0.0, %v351
      %v353 = vpop.f32.mrf.mxu0
      %354 = vmatprep.mubr.bf16.mxu0 0
      %355 = vmatmul.mubr.bf16.gmra.mxu0 %v235
      %v356 = vpop.f32.mrf.mxu0
      %v357 = vadd.f32 0.0, %v356
      %v358 = vpop.f32.mrf.mxu0
      %v359 = vpop.f32.mrf.mxu0
      %v360 = vadd.f32 0.0, %v359
      %v361 = vpop.f32.mrf.mxu0
      %362 = vmatprep.mubr.bf16.mxu0 0
      %363 = vmatmul.mubr.bf16.gmra.mxu0 %v236
      %v364 = vpop.f32.mrf.mxu0
      %v365 = vadd.f32 0.0, %v364
      %v366 = vpop.f32.mrf.mxu0
      %v367 = vpop.f32.mrf.mxu0
      %v368 = vadd.f32 0.0, %v367
      %v369 = vpop.f32.mrf.mxu0
      %370 = vmatprep.mubr.bf16.mxu0 0
      %371 = vmatmul.mubr.bf16.gmra.mxu0 %v237
      %v372 = vpop.f32.mrf.mxu0
      %v373 = vadd.f32 0.0, %v372
      %v374 = vpop.f32.mrf.mxu0
      %v375 = vpop.f32.mrf.mxu0
      %v376 = vadd.f32 0.0, %v375
      %v377 = vpop.f32.mrf.mxu0
      %378 = vmatprep.mubr.bf16.mxu0 0
      %379 = vmatmul.mubr.bf16.gmra.mxu0 %v238
      %v380 = vpop.f32.mrf.mxu0
      %v381 = vadd.f32 0.0, %v380
      %v382 = vpop.f32.mrf.mxu0
      %v383 = vpop.f32.mrf.mxu0
      %v384 = vadd.f32 0.0, %v383
      %v385 = vpop.f32.mrf.mxu0
      %386 = vmatprep.mubr.bf16.mxu0 0
      %387 = vmatmul.mubr.bf16.gmra.mxu0 %v239
      %v388 = vpop.f32.mrf.mxu0
      %v389 = vadd.f32 0.0, %v388
      %v390 = vpop.f32.mrf.mxu0
      %v391 = vpop.f32.mrf.mxu0
      %v392 = vadd.f32 0.0, %v391
      %v393 = vpop.f32.mrf.mxu0
      %394 = vmatprep.mubr.bf16.mxu0 0
      %395 = vmatmul.mubr.bf16.gmra.mxu0 %v240
      %v396 = vpop.f32.mrf.mxu0
      %v397 = vadd.f32 0.0, %v396
      %v398 = vpop.f32.mrf.mxu0
      %v399 = vpop.f32.mrf.mxu0
      %v400 = vadd.f32 0.0, %v399
      %v401 = vpop.f32.mrf.mxu0
      %402 = vmatprep.mubr.bf16.mxu0 0
      %403 = vmatmul.mubr.bf16.gmra.mxu0 %v241
      %v404 = vpop.f32.mrf.mxu0
      %v405 = vadd.f32 0.0, %v404
      %v406 = vpop.f32.mrf.mxu0
      %v407 = vpop.f32.mrf.mxu0
      %v408 = vadd.f32 0.0, %v407
      %v409 = vpop.f32.mrf.mxu0
      %410 = vmatprep.mubr.bf16.mxu0 0
      %411 = vmatmul.mubr.bf16.gmra.mxu0 %v242
      %v412 = vpop.f32.mrf.mxu0
      %v413 = vadd.f32 0.0, %v412
      %v414 = vpop.f32.mrf.mxu0
      %v415 = vpop.f32.mrf.mxu0
      %v416 = vadd.f32 0.0, %v415
      %v417 = vpop.f32.mrf.mxu0
      %418 = vmatprep.mubr.bf16.mxu0 0
      %419 = vmatmul.mubr.bf16.gmra.mxu0 %v243
      %v420 = vpop.f32.mrf.mxu0
      %v421 = vadd.f32 0.0, %v420
      %v422 = vpop.f32.mrf.mxu0
      %v423 = vpop.f32.mrf.mxu0
      %v424 = vadd.f32 0.0, %v423
      %v425 = vpop.f32.mrf.mxu0
      %426 = vmatprep.mubr.bf16.mxu0 0
      %427 = vmatmul.mubr.bf16.gmra.mxu0 %v244
      %v428 = vpop.f32.mrf.mxu0
      %v429 = vadd.f32 0.0, %v428
      %v430 = vpop.f32.mrf.mxu0
      %v431 = vpop.f32.mrf.mxu0
      %v432 = vadd.f32 0.0, %v431
      %v433 = vpop.f32.mrf.mxu0
      %434 = vmatprep.mubr.bf16.mxu0 0
      %435 = vmatmul.mubr.bf16.gmra.mxu0 %v245
      %v436 = vpop.f32.mrf.mxu0
      %v437 = vadd.f32 0.0, %v436
      %v438 = vpop.f32.mrf.mxu0
      %v439 = vpop.f32.mrf.mxu0
      %v440 = vadd.f32 0.0, %v439
      %v441 = vpop.f32.mrf.mxu0
      %442 = vmatprep.mubr.bf16.mxu0 0
      %443 = vmatmul.mubr.bf16.gmra.mxu0 %v246
      %v444 = vpop.f32.mrf.mxu0
      %v445 = vadd.f32 0.0, %v444
      %v446 = vpop.f32.mrf.mxu0
      %v447 = vpop.f32.mrf.mxu0
      %v448 = vadd.f32 0.0, %v447
      %v449 = vpop.f32.mrf.mxu0
      %450 = vmatprep.mubr.bf16.mxu0 0
      %451 = vmatmul.mubr.bf16.gmra.mxu0 %v247
      %v452 = vpop.f32.mrf.mxu0
      %v453 = vadd.f32 0.0, %v452
      %v454 = vpop.f32.mrf.mxu0
      %v455 = vpop.f32.mrf.mxu0
      %v456 = vadd.f32 0.0, %v455
      %v457 = vpop.f32.mrf.mxu0
      %458 = vmatprep.mubr.bf16.mxu0 0
      %459 = vmatmul.mubr.bf16.gmra.mxu0 %v248
      %v460 = vpop.f32.mrf.mxu0
      %v461 = vadd.f32 0.0, %v460
      %v462 = vpop.f32.mrf.mxu0
      %v463 = vpop.f32.mrf.mxu0
      %v464 = vadd.f32 0.0, %v463
      %v465 = vpop.f32.mrf.mxu0
      %466 = vmatprep.mubr.bf16.mxu0 0
      %467 = vmatmul.mubr.bf16.gmra.mxu0 %v249
      %v468 = vpop.f32.mrf.mxu0
      %v469 = vadd.f32 0.0, %v468
      %v470 = vpop.f32.mrf.mxu0
      %v471 = vpop.f32.mrf.mxu0
      %v472 = vadd.f32 0.0, %v471
      %v473 = vpop.f32.mrf.mxu0
      %474 = vdwg.mxu0
      %v475 = vld [vmem:[%s2] sm:$0x1]
      %v477 = vlaneseq
      %v478 = vshrl.u32 %v477, 7
      %v479 = vsub.s32 0, %v478
      %v480 = vrot.slane %v475, %v479
      %v482 = vmul.f32 %v349, %v480
      %v483 = vmul.f32 %v352, %v480
      %v484 = vmul.f32 %v357, %v480
      %v485 = vmul.f32 %v360, %v480
      %v486 = vmul.f32 %v365, %v480
      %v487 = vmul.f32 %v368, %v480
      %v488 = vmul.f32 %v373, %v480
      %v489 = vmul.f32 %v376, %v480
      %v490 = vmul.f32 %v381, %v480
      %v491 = vmul.f32 %v384, %v480
      %v492 = vmul.f32 %v389, %v480
      %v493 = vmul.f32 %v392, %v480
      %v494 = vmul.f32 %v397, %v480
      %v495 = vmul.f32 %v400, %v480
      %v496 = vmul.f32 %v405, %v480
      %v497 = vmul.f32 %v408, %v480
      %v498 = vmul.f32 %v413, %v480
      %v499 = vmul.f32 %v416, %v480
      %v500 = vmul.f32 %v421, %v480
      %v501 = vmul.f32 %v424, %v480
      %v502 = vmul.f32 %v429, %v480
      %v503 = vmul.f32 %v432, %v480
      %v504 = vmul.f32 %v437, %v480
      %v505 = vmul.f32 %v440, %v480
      %v506 = vmul.f32 %v445, %v480
      %v507 = vmul.f32 %v448, %v480
      %v508 = vmul.f32 %v453, %v480
      %v509 = vmul.f32 %v456, %v480
      %v510 = vmul.f32 %v461, %v480
      %v511 = vmul.f32 %v464, %v480
      %v512 = vmul.f32 %v469, %v480
      %v513 = vmul.f32 %v472, %v480
      %v514 = vld [vmem:[%s3] sm:$0x1]
      %v516 = vlaneseq
      %v517 = vshrl.u32 %v516, 7
      %v518 = vsub.s32 0, %v517
      %v519 = vrot.slane %v514, %v518
      %v521 = vadd.f32 %v482, %v519
      %v522 = vadd.f32 %v483, %v519
      %v523 = vadd.f32 %v484, %v519
      %v524 = vadd.f32 %v485, %v519
      %v525 = vadd.f32 %v486, %v519
      %v526 = vadd.f32 %v487, %v519
      %v527 = vadd.f32 %v488, %v519
      %v528 = vadd.f32 %v489, %v519
      %v529 = vadd.f32 %v490, %v519
      %v530 = vadd.f32 %v491, %v519
      %v531 = vadd.f32 %v492, %v519
      %v532 = vadd.f32 %v493, %v519
      %v533 = vadd.f32 %v494, %v519
      %v534 = vadd.f32 %v495, %v519
      %v535 = vadd.f32 %v496, %v519
      %v536 = vadd.f32 %v497, %v519
      %v537 = vadd.f32 %v498, %v519
      %v538 = vadd.f32 %v499, %v519
      %v539 = vadd.f32 %v500, %v519
      %v540 = vadd.f32 %v501, %v519
      %v541 = vadd.f32 %v502, %v519
      %v542 = vadd.f32 %v503, %v519
      %v543 = vadd.f32 %v504, %v519
      %v544 = vadd.f32 %v505, %v519
      %v545 = vadd.f32 %v506, %v519
      %v546 = vadd.f32 %v507, %v519
      %v547 = vadd.f32 %v508, %v519
      %v548 = vadd.f32 %v509, %v519
      %v549 = vadd.f32 %v510, %v519
      %v550 = vadd.f32 %v511, %v519
      %v551 = vadd.f32 %v512, %v519
      %v552 = vadd.f32 %v513, %v519
      %v553 = vmax.f32 %v521, 0.0
      %v554 = vmax.f32 %v522, 0.0
      %v555 = vmax.f32 %v523, 0.0
      %v556 = vmax.f32 %v524, 0.0
      %v557 = vmax.f32 %v525, 0.0
      %v558 = vmax.f32 %v526, 0.0
      %v559 = vmax.f32 %v527, 0.0
      %v560 = vmax.f32 %v528, 0.0
      %v561 = vmax.f32 %v529, 0.0
      %v562 = vmax.f32 %v530, 0.0
      %v563 = vmax.f32 %v531, 0.0
      %v564 = vmax.f32 %v532, 0.0
      %v565 = vmax.f32 %v533, 0.0
      %v566 = vmax.f32 %v534, 0.0
      %v567 = vmax.f32 %v535, 0.0
      %v568 = vmax.f32 %v536, 0.0
      %v569 = vmax.f32 %v537, 0.0
      %v570 = vmax.f32 %v538, 0.0
      %v571 = vmax.f32 %v539, 0.0
      %v572 = vmax.f32 %v540, 0.0
      %v573 = vmax.f32 %v541, 0.0
      %v574 = vmax.f32 %v542, 0.0
      %v575 = vmax.f32 %v543, 0.0
      %v576 = vmax.f32 %v544, 0.0
      %v577 = vmax.f32 %v545, 0.0
      %v578 = vmax.f32 %v546, 0.0
      %v579 = vmax.f32 %v547, 0.0
      %v580 = vmax.f32 %v548, 0.0
      %v581 = vmax.f32 %v549, 0.0
      %v582 = vmax.f32 %v550, 0.0
      %v583 = vmax.f32 %v551, 0.0
      %v584 = vmax.f32 %v552, 0.0
      %585 = vst [vmem:[%s199] sm:$0xff] %v553
      %586 = vst [vmem:[%s199 + $0x8] sm:$0xff] %v554
      %587 = vst [vmem:[%s199 + $0x10] sm:$0xff] %v555
      %588 = vst [vmem:[%s199 + $0x18] sm:$0xff] %v556
      %589 = vst [vmem:[%s199 + $0x20] sm:$0xff] %v557
      %590 = vst [vmem:[%s199 + $0x28] sm:$0xff] %v558
      %591 = vst [vmem:[%s199 + $0x30] sm:$0xff] %v559
      %592 = vst [vmem:[%s199 + $0x38] sm:$0xff] %v560
      %593 = vst [vmem:[%s199 + $0x40] sm:$0xff] %v561
      %594 = vst [vmem:[%s199 + $0x48] sm:$0xff] %v562
      %595 = vst [vmem:[%s199 + $0x50] sm:$0xff] %v563
      %596 = vst [vmem:[%s199 + $0x58] sm:$0xff] %v564
      %597 = vst [vmem:[%s199 + $0x60] sm:$0xff] %v565
      %598 = vst [vmem:[%s199 + $0x68] sm:$0xff] %v566
      %599 = vst [vmem:[%s199 + $0x70] sm:$0xff] %v567
      %600 = vst [vmem:[%s199 + $0x78] sm:$0xff] %v568
      %601 = vst [vmem:[%s199 + $0x80] sm:$0xff] %v569
      %602 = vst [vmem:[%s199 + $0x88] sm:$0xff] %v570
      %603 = vst [vmem:[%s199 + $0x90] sm:$0xff] %v571
      %604 = vst [vmem:[%s199 + $0x98] sm:$0xff] %v572
      %605 = vst [vmem:[%s199 + $0xa0] sm:$0xff] %v573
      %606 = vst [vmem:[%s199 + $0xa8] sm:$0xff] %v574
      %607 = vst [vmem:[%s199 + $0xb0] sm:$0xff] %v575
      %608 = vst [vmem:[%s199 + $0xb8] sm:$0xff] %v576
      %609 = vst [vmem:[%s199 + $0xc0] sm:$0xff] %v577
      %610 = vst [vmem:[%s199 + $0xc8] sm:$0xff] %v578
      %611 = vst [vmem:[%s199 + $0xd0] sm:$0xff] %v579
      %612 = vst [vmem:[%s199 + $0xd8] sm:$0xff] %v580
      %613 = vst [vmem:[%s199 + $0xe0] sm:$0xff] %v581
      %614 = vst [vmem:[%s199 + $0xe8] sm:$0xff] %v582
      %615 = vst [vmem:[%s199 + $0xf0] sm:$0xff] %v583
      %616 = vst [vmem:[%s199 + $0xf8] sm:$0xff] %v584
      %s617 = smul.u32 32, %s15
      %p618 = scmp.lt.s32.totalorder %s617, 63
      %s619 = scalar_select %p618, %s617, 63
      %s620 = smul.addr %s619, 8
      %s621 = scalar_lea.vmem %s4, %s620
      // Predicated region
      $region37: #{bottleneck_forward.3} parent=35 // pred_check
        %p622 = pneg %p122
      $region38: #{bottleneck_forward.3} parent=35 // pred_check_branch
        %624 = sbr.rel (%p622) target = $region40
      $region39: #{bottleneck_forward.3} parent=35 // pred_region
        %s625 = smul.u32 32, %s15
      $region40: #{bottleneck_forward.3} parent=35 // pred_fallthru
        _
    $region36: #{bottleneck_forward.3} parent=5 // pred_fallthru
      _
    %p626 = scmp.le.s32.totalorder 2, %s10
    // Predicated region
    $region41: #{bottleneck_forward.3} parent=5 // pred_check
      %p627 = pneg %p626
    $region42: #{bottleneck_forward.3} parent=5 // pred_check_branch
      %629 = sbr.rel (%p627) target = $region44
    $region43: #{bottleneck_forward.3} parent=5 // pred_region
      %s630 = ssub.s32 %s10, 2
      // Predicated region
      $region45: #{bottleneck_forward.3} parent=43 // pred_check
        %p631 = pneg %p128
      $region46: #{bottleneck_forward.3} parent=43 // pred_check_branch
        %633 = sbr.rel (%p631) target = $region48
      $region47: #{bottleneck_forward.3} parent=43 // pred_region
        %s634 = smul.u32 32, %s16
        %p635 = scmp.lt.s32.totalorder %s634, 63
        %s636 = scalar_select %p635, %s634, 63
        %s637 = smul.addr %s636, 8
        %s638 = scalar_lea.vmem %s4, %s637
      $region48: #{bottleneck_forward.3} parent=43 // pred_fallthru
        _
    $region44: #{bottleneck_forward.3} parent=5 // pred_fallthru
      _
  $region6: #{bottleneck_forward.3} parent=0 // loop_footer
    %s14 = sadd.s32 1, %s10
  $region7: #{bottleneck_forward.3} parent=0 // loop_footer_branch
    %9 = sbr.rel target = $region3
  $region8: #{bottleneck_forward.3} parent=0 // loop_exit
    _

// kernel: bottleneck_forward.5
$region0: #{bottleneck_forward.5}
  #allocation0 [shape = 'u32[]', space=smem, size = 0x4, offset = 0x4, fixed_abs, tag = 'smem constant byte address 0x4 - core index']
  #allocation1 [shape = 'u32[144,128]{1,0:T(1,128)}', space=vmem, size = 0x12000, scoped, tag = 'internal scratch']
  %s0 = inlined_call_operand.vmem [shape: f32[512,128], index: 0, kind: input, shape index: {}]
  %s1 = inlined_call_operand.vmem [shape: f32[512,128], index: 1, kind: input, shape index: {}]
  %s2 = inlined_call_operand.vmem [shape: bf16[128,128], index: 2, kind: input, shape index: {}]
  %s3 = inlined_call_operand.vmem [shape: bf16[128,128], index: 3, kind: input, shape index: {}]
  %s4 = inlined_call_operand.vmem [shape: f32[1,128], index: 4, kind: input, shape index: {}]
  %s5 = inlined_call_operand.vmem [shape: f32[1,128], index: 5, kind: input, shape index: {}]
  %s6 = inlined_call_operand.vmem [shape: f32[1,128], index: 6, kind: input, shape index: {}]
  %s7 = inlined_call_operand.vmem [shape: f32[1,128], index: 7, kind: input, shape index: {}]
  %s8 = inlined_call_operand.vmem [shape: f32[512,128], index: 8, kind: output, shape index: {}]
  %s9 = sld [smem:[#allocation0]]
  $region65: #{bottleneck_forward.5} parent=0
    _
  %s11 = ssub.s32 1, %s9
  %s12 = scalar_select 0, %s11, %s9
  loop: start=0, step=1, limit=4
  $region2: #{bottleneck_forward.5} parent=0 // loop_pre_header
    _
  $region3: #{bottleneck_forward.5} parent=0 // loop_header
    %s14 = sphi 0, %s18
    %p15 = scmp.ge.s32.totalorder %s14, 4
    %s24 = sphi 0, %s26
    %s27 = sphi 0, %s24
    %s28 = sphi 0, %s27
    %s44 = sphi 0, %s28
    %s50 = sphi 0, %s52
    %s53 = sphi 0, %s50
    %s54 = sphi 0, %s53
    %s70 = sphi 0, %s54
    %s74 = sphi 0, %s74
    %s76 = sphi 0, %s74
    %s77 = sphi 0, %s76
    %s91 = sphi 0, %s77
    %s95 = sphi 0, %s95
    %s97 = sphi 0, %s95
    %s98 = sphi 0, %s97
    %s112 = sphi 0, %s98
    %s116 = sphi 0, %s116
    %s118 = sphi 0, %s116
    %s119 = sphi 0, %s118
    %s133 = sphi 0, %s119
    %s137 = sphi 0, %s137
    %s139 = sphi 0, %s137
    %s140 = sphi 0, %s139
    %s154 = sphi 0, %s140
    %s158 = sphi 0, %s158
    %s160 = sphi 0, %s158
    %s161 = sphi 0, %s160
    %s175 = sphi 0, %s161
    %s179 = sphi 0, %s179
    %s181 = sphi 0, %s179
    %s182 = sphi 0, %s181
    %s196 = sphi 0, %s182
    %s202 = sphi 0, %s204
    %s205 = sphi 0, %s202
    %s206 = sphi 0, %s205
    %s222 = sphi 0, %s206
  $region4: #{bottleneck_forward.5} parent=0 // loop_header_branch
    %17 = sbr.rel (%p15) target = $region8
  $region5: #{bottleneck_forward.5} parent=0 // loop_body
    %s19 = ssub.s32 %s14, 1
    %s20 = ssub.s32 %s14, 2
    %s21 = sadd.s32 %s14, 1
    %s22 = ssub.s32 %s14, %s21
    %p23 = scmp.eq.s32.totalorder %s22, 0
    %s25 = sadd.s32 %s24, 1
    %s26 = scalar_select %p23, %s24, %s25
    %p29 = pneg %p23
    %p30 = scmp.eq.s32.totalorder %s14, 1
    %p31 = por %p29, %p30
    %p32 = scmp.ne.s32.totalorder %s24, %s27
    %p33 = scmp.eq.s32.totalorder %s14, 0
    %p34 = por %p32, %p33
    %p35 = scmp.ne.s32.totalorder %s24, %s27
    %p36 = scmp.eq.s32.totalorder %s19, 1
    %p37 = por %p35, %p36
    %p38 = scmp.ne.s32.totalorder %s27, %s28
    %p39 = scmp.eq.s32.totalorder %s19, 0
    %p40 = por %p38, %p39
    %p41 = scmp.ne.s32.totalorder %s27, %s28
    %p42 = scmp.eq.s32.totalorder %s20, 1
    %p43 = por %p41, %p42
    %p45 = scmp.ne.s32.totalorder %s28, %s44
    %p46 = scmp.eq.s32.totalorder %s20, 0
    %p47 = por %p45, %p46
    %s48 = ssub.s32 %s14, %s21
    %p49 = scmp.eq.s32.totalorder %s48, 0
    %s51 = sadd.s32 %s50, 1
    %s52 = scalar_select %p49, %s50, %s51
    %p55 = pneg %p49
    %p56 = scmp.eq.s32.totalorder %s14, 1
    %p57 = por %p55, %p56
    %p58 = scmp.ne.s32.totalorder %s50, %s53
    %p59 = scmp.eq.s32.totalorder %s14, 0
    %p60 = por %p58, %p59
    %p61 = scmp.ne.s32.totalorder %s50, %s53
    %p62 = scmp.eq.s32.totalorder %s19, 1
    %p63 = por %p61, %p62
    %p64 = scmp.ne.s32.totalorder %s53, %s54
    %p65 = scmp.eq.s32.totalorder %s19, 0
    %p66 = por %p64, %p65
    %p67 = scmp.ne.s32.totalorder %s53, %s54
    %p68 = scmp.eq.s32.totalorder %s20, 1
    %p69 = por %p67, %p68
    %p71 = scmp.ne.s32.totalorder %s54, %s70
    %p72 = scmp.eq.s32.totalorder %s20, 0
    %p73 = por %p71, %p72
    %s75 = sadd.s32 %s74, 1
    %p78 = scmp.eq.s32.totalorder %s14, 1
    %p79 = scmp.ne.s32.totalorder %s74, %s76
    %p80 = scmp.eq.s32.totalorder %s14, 0
    %p81 = por %p79, %p80
    %p82 = scmp.ne.s32.totalorder %s74, %s76
    %p83 = scmp.eq.s32.totalorder %s19, 1
    %p84 = por %p82, %p83
    %p85 = scmp.ne.s32.totalorder %s76, %s77
    %p86 = scmp.eq.s32.totalorder %s19, 0
    %p87 = por %p85, %p86
    %p88 = scmp.ne.s32.totalorder %s76, %s77
    %p89 = scmp.eq.s32.totalorder %s20, 1
    %p90 = por %p88, %p89
    %p92 = scmp.ne.s32.totalorder %s77, %s91
    %p93 = scmp.eq.s32.totalorder %s20, 0
    %p94 = por %p92, %p93
    %s96 = sadd.s32 %s95, 1
    %p99 = scmp.eq.s32.totalorder %s14, 1
    %p100 = scmp.ne.s32.totalorder %s95, %s97
    %p101 = scmp.eq.s32.totalorder %s14, 0
    %p102 = por %p100, %p101
    %p103 = scmp.ne.s32.totalorder %s95, %s97
    %p104 = scmp.eq.s32.totalorder %s19, 1
    %p105 = por %p103, %p104
    %p106 = scmp.ne.s32.totalorder %s97, %s98
    %p107 = scmp.eq.s32.totalorder %s19, 0
    %p108 = por %p106, %p107
    %p109 = scmp.ne.s32.totalorder %s97, %s98
    %p110 = scmp.eq.s32.totalorder %s20, 1
    %p111 = por %p109, %p110
    %p113 = scmp.ne.s32.totalorder %s98, %s112
    %p114 = scmp.eq.s32.totalorder %s20, 0
    %p115 = por %p113, %p114
    %s117 = sadd.s32 %s116, 1
    %p120 = scmp.eq.s32.totalorder %s14, 1
    %p121 = scmp.ne.s32.totalorder %s116, %s118
    %p122 = scmp.eq.s32.totalorder %s14, 0
    %p123 = por %p121, %p122
    %p124 = scmp.ne.s32.totalorder %s116, %s118
    %p125 = scmp.eq.s32.totalorder %s19, 1
    %p126 = por %p124, %p125
    %p127 = scmp.ne.s32.totalorder %s118, %s119
    %p128 = scmp.eq.s32.totalorder %s19, 0
    %p129 = por %p127, %p128
    %p130 = scmp.ne.s32.totalorder %s118, %s119
    %p131 = scmp.eq.s32.totalorder %s20, 1
    %p132 = por %p130, %p131
    %p134 = scmp.ne.s32.totalorder %s119, %s133
    %p135 = scmp.eq.s32.totalorder %s20, 0
    %p136 = por %p134, %p135
    %s138 = sadd.s32 %s137, 1
    %p141 = scmp.eq.s32.totalorder %s14, 1
    %p142 = scmp.ne.s32.totalorder %s137, %s139
    %p143 = scmp.eq.s32.totalorder %s14, 0
    %p144 = por %p142, %p143
    %p145 = scmp.ne.s32.totalorder %s137, %s139
    %p146 = scmp.eq.s32.totalorder %s19, 1
    %p147 = por %p145, %p146
    %p148 = scmp.ne.s32.totalorder %s139, %s140
    %p149 = scmp.eq.s32.totalorder %s19, 0
    %p150 = por %p148, %p149
    %p151 = scmp.ne.s32.totalorder %s139, %s140
    %p152 = scmp.eq.s32.totalorder %s20, 1
    %p153 = por %p151, %p152
    %p155 = scmp.ne.s32.totalorder %s140, %s154
    %p156 = scmp.eq.s32.totalorder %s20, 0
    %p157 = por %p155, %p156
    %s159 = sadd.s32 %s158, 1
    %p162 = scmp.eq.s32.totalorder %s14, 1
    %p163 = scmp.ne.s32.totalorder %s158, %s160
    %p164 = scmp.eq.s32.totalorder %s14, 0
    %p165 = por %p163, %p164
    %p166 = scmp.ne.s32.totalorder %s158, %s160
    %p167 = scmp.eq.s32.totalorder %s19, 1
    %p168 = por %p166, %p167
    %p169 = scmp.ne.s32.totalorder %s160, %s161
    %p170 = scmp.eq.s32.totalorder %s19, 0
    %p171 = por %p169, %p170
    %p172 = scmp.ne.s32.totalorder %s160, %s161
    %p173 = scmp.eq.s32.totalorder %s20, 1
    %p174 = por %p172, %p173
    %p176 = scmp.ne.s32.totalorder %s161, %s175
    %p177 = scmp.eq.s32.totalorder %s20, 0
    %p178 = por %p176, %p177
    %s180 = sadd.s32 %s179, 1
    %p183 = scmp.eq.s32.totalorder %s14, 1
    %p184 = scmp.ne.s32.totalorder %s179, %s181
    %p185 = scmp.eq.s32.totalorder %s14, 0
    %p186 = por %p184, %p185
    %p187 = scmp.ne.s32.totalorder %s179, %s181
    %p188 = scmp.eq.s32.totalorder %s19, 1
    %p189 = por %p187, %p188
    %p190 = scmp.ne.s32.totalorder %s181, %s182
    %p191 = scmp.eq.s32.totalorder %s19, 0
    %p192 = por %p190, %p191
    %p193 = scmp.ne.s32.totalorder %s181, %s182
    %p194 = scmp.eq.s32.totalorder %s20, 1
    %p195 = por %p193, %p194
    %p197 = scmp.ne.s32.totalorder %s182, %s196
    %p198 = scmp.eq.s32.totalorder %s20, 0
    %p199 = por %p197, %p198
    %s200 = ssub.s32 %s14, %s21
    %p201 = scmp.eq.s32.totalorder %s200, 0
    %s203 = sadd.s32 %s202, 1
    %s204 = scalar_select %p201, %s202, %s203
    %p207 = pneg %p201
    %p208 = scmp.eq.s32.totalorder %s14, 1
    %p209 = por %p207, %p208
    %p210 = scmp.ne.s32.totalorder %s202, %s205
    %p211 = scmp.eq.s32.totalorder %s14, 0
    %p212 = por %p210, %p211
    %p213 = scmp.ne.s32.totalorder %s202, %s205
    %p214 = scmp.eq.s32.totalorder %s19, 1
    %p215 = por %p213, %p214
    %p216 = scmp.ne.s32.totalorder %s205, %s206
    %p217 = scmp.eq.s32.totalorder %s19, 0
    %p218 = por %p216, %p217
    %p219 = scmp.ne.s32.totalorder %s205, %s206
    %p220 = scmp.eq.s32.totalorder %s20, 1
    %p221 = por %p219, %p220
    %p223 = scmp.ne.s32.totalorder %s206, %s222
    %p224 = scmp.eq.s32.totalorder %s20, 0
    %p225 = por %p223, %p224
    %p226 = scmp.le.s32.totalorder 1, %s14
    %p227 = scmp.lt.s32.totalorder %s14, 3
    %p228 = pnand %p226, %p227
    %p229 = pneg %p228
    // Predicated region
    $region9: #{bottleneck_forward.5} parent=5 // pred_check
      _
    $region10: #{bottleneck_forward.5} parent=5 // pred_check_branch
      %231 = sbr.rel (%p228) target = $region12
    $region11: #{bottleneck_forward.5} parent=5 // pred_region
      %s232 = ssub.s32 %s14, 1
      // Predicated region
      $region13: #{bottleneck_forward.5} parent=11 // pred_check
        %p233 = pneg %p87
      $region14: #{bottleneck_forward.5} parent=11 // pred_check_branch
        %235 = sbr.rel (%p233) target = $region16
      $region15: #{bottleneck_forward.5} parent=11 // pred_region
        _
      $region16: #{bottleneck_forward.5} parent=11 // pred_fallthru
        _
      // Predicated region
      $region17: #{bottleneck_forward.5} parent=11 // pred_check
        %p236 = pneg %p108
      $region18: #{bottleneck_forward.5} parent=11 // pred_check_branch
        %238 = sbr.rel (%p236) target = $region20
      $region19: #{bottleneck_forward.5} parent=11 // pred_region
        _
      $region20: #{bottleneck_forward.5} parent=11 // pred_fallthru
        _
      // Predicated region
      $region21: #{bottleneck_forward.5} parent=11 // pred_check
        %p239 = pneg %p129
      $region22: #{bottleneck_forward.5} parent=11 // pred_check_branch
        %241 = sbr.rel (%p239) target = $region24
      $region23: #{bottleneck_forward.5} parent=11 // pred_region
        _
      $region24: #{bottleneck_forward.5} parent=11 // pred_fallthru
        _
      // Predicated region
      $region25: #{bottleneck_forward.5} parent=11 // pred_check
        %p242 = pneg %p150
      $region26: #{bottleneck_forward.5} parent=11 // pred_check_branch
        %244 = sbr.rel (%p242) target = $region28
      $region27: #{bottleneck_forward.5} parent=11 // pred_region
        _
      $region28: #{bottleneck_forward.5} parent=11 // pred_fallthru
        _
      // Predicated region
      $region29: #{bottleneck_forward.5} parent=11 // pred_check
        %p245 = pneg %p171
      $region30: #{bottleneck_forward.5} parent=11 // pred_check_branch
        %247 = sbr.rel (%p245) target = $region32
      $region31: #{bottleneck_forward.5} parent=11 // pred_region
        _
      $region32: #{bottleneck_forward.5} parent=11 // pred_fallthru
        _
      // Predicated region
      $region33: #{bottleneck_forward.5} parent=11 // pred_check
        %p248 = pneg %p192
      $region34: #{bottleneck_forward.5} parent=11 // pred_check_branch
        %250 = sbr.rel (%p248) target = $region36
      $region35: #{bottleneck_forward.5} parent=11 // pred_region
        _
      $region36: #{bottleneck_forward.5} parent=11 // pred_fallthru
        _
    $region12: #{bottleneck_forward.5} parent=5 // pred_fallthru
      _
    %p251 = scmp.lt.s32.totalorder %s14, 2
    // Predicated region
    $region37: #{bottleneck_forward.5} parent=5 // pred_check
      %p252 = pneg %p251
    $region38: #{bottleneck_forward.5} parent=5 // pred_check_branch
      %254 = sbr.rel (%p252) target = $region40
    $region39: #{bottleneck_forward.5} parent=5 // pred_region
      // Predicated region
      $region41: #{bottleneck_forward.5} parent=39 // pred_check
        %p255 = pneg %p34
      $region42: #{bottleneck_forward.5} parent=39 // pred_check_branch
        %257 = sbr.rel (%p255) target = $region44
      $region43: #{bottleneck_forward.5} parent=39 // pred_region
        %s258 = smul.u32 32, %s14
        %p259 = scmp.lt.s32.totalorder %s258, 63
        %s260 = scalar_select %p259, %s258, 63
        %s261 = smul.addr %s260, 8
        %s262 = scalar_lea.vmem %s0, %s261
        %s263 = smul.u32 32, %s14
      $region44: #{bottleneck_forward.5} parent=39 // pred_fallthru
        _
      // Predicated region
      $region45: #{bottleneck_forward.5} parent=39 // pred_check
        %p264 = pneg %p60
      $region46: #{bottleneck_forward.5} parent=39 // pred_check_branch
        %266 = sbr.rel (%p264) target = $region48
      $region47: #{bottleneck_forward.5} parent=39 // pred_region
        %s267 = smul.u32 32, %s14
        %p268 = scmp.lt.s32.totalorder %s267, 63
        %s269 = scalar_select %p268, %s267, 63
        %s270 = smul.addr %s269, 8
        %s271 = scalar_lea.vmem %s1, %s270
        %s272 = smul.u32 32, %s14
      $region48: #{bottleneck_forward.5} parent=39 // pred_fallthru
        _
    $region40: #{bottleneck_forward.5} parent=5 // pred_fallthru
      _
    %p273 = scmp.le.s32.totalorder 1, %s14
    %p274 = scmp.lt.s32.totalorder %s14, 3
    %p275 = pnand %p273, %p274
    %p276 = pneg %p275
    // Predicated region
    $region49: #{bottleneck_forward.5} parent=5 // pred_check
      _
    $region50: #{bottleneck_forward.5} parent=5 // pred_check_branch
      %278 = sbr.rel (%p275) target = $region52
    $region51: #{bottleneck_forward.5} parent=5 // pred_region
      %s279 = ssub.s32 %s14, 1
      %s280 = smul.u32 32, %s19
      %p281 = scmp.lt.s32.totalorder %s280, 63
      %s282 = scalar_select %p281, %s280, 63
      %s283 = smul.addr %s282, 8
      %s284 = scalar_lea.vmem %s0, %s283
      %p285 = pneg %p40
      %p286 = pneg %p37
      %s287 = smul.u32 32, %s19
      %p288 = scmp.lt.s32.totalorder %s287, 63
      %s289 = scalar_select %p288, %s287, 63
      %s290 = smul.addr %s289, 8
      %s291 = scalar_lea.vmem %s1, %s290
      %p292 = pneg %p66
      %p293 = pneg %p63
      %p294 = pneg %p87
      %p295 = pneg %p84
      %p296 = pneg %p108
      %p297 = pneg %p105
      %p298 = pneg %p129
      %p299 = pneg %p126
      %p300 = pneg %p150
      %p301 = pneg %p147
      %p302 = pneg %p171
      %p303 = pneg %p168
      %p304 = pneg %p192
      %p305 = pneg %p189
      %p306 = pneg %p218
      %p307 = pneg %p215
      %s308 = smul.u32 32, %s19
      %p309 = scmp.lt.s32.totalorder %s308, 63
      %s310 = scalar_select %p309, %s308, 63
      %s311 = smul.addr %s310, 8
      %s312 = scalar_lea.vmem %s8, %s311
      %s313 = smul.u32 32, %s19
      %p314 = scmp.lt.s32.totalorder %s313, 63
      %s315 = scalar_select %p314, %s313, 63
      %s316 = smul.addr %s315, 8
      %s317 = scalar_lea.vmem %s0, %s316
      %s318 = smul.u32 32, %s19
      %s319 = smul.u32 32, %s19
      %p320 = scmp.lt.s32.totalorder %s319, 63
      %s321 = scalar_select %p320, %s319, 63
      %s322 = smul.addr %s321, 8
      %s323 = scalar_lea.vmem %s1, %s322
      %s324 = smul.u32 32, %s19
      %s325 = smul.u32 32, %s19
      %p326 = scmp.lt.s32.totalorder %s325, 63
      %s327 = scalar_select %p326, %s325, 63
      %s328 = smul.addr %s327, 8
      %s329 = scalar_lea.vmem %s8, %s328
      %s330 = smul.u32 32, %s19
      %v332 = vld [vmem:[%s317] sm:$0xff]
      %v333 = vld [vmem:[%s317 + $0x8] sm:$0xff]
      %v334 = vld [vmem:[%s317 + $0x10] sm:$0xff]
      %v335 = vld [vmem:[%s317 + $0x18] sm:$0xff]
      %v336 = vld [vmem:[%s317 + $0x20] sm:$0xff]
      %v337 = vld [vmem:[%s317 + $0x28] sm:$0xff]
      %v338 = vld [vmem:[%s317 + $0x30] sm:$0xff]
      %v339 = vld [vmem:[%s317 + $0x38] sm:$0xff]
      %v340 = vld [vmem:[%s317 + $0x40] sm:$0xff]
      %v341 = vld [vmem:[%s317 + $0x48] sm:$0xff]
      %v342 = vld [vmem:[%s317 + $0x50] sm:$0xff]
      %v343 = vld [vmem:[%s317 + $0x58] sm:$0xff]
      %v344 = vld [vmem:[%s317 + $0x60] sm:$0xff]
      %v345 = vld [vmem:[%s317 + $0x68] sm:$0xff]
      %v346 = vld [vmem:[%s317 + $0x70] sm:$0xff]
      %v347 = vld [vmem:[%s317 + $0x78] sm:$0xff]
      %v348 = vld [vmem:[%s317 + $0x80] sm:$0xff]
      %v349 = vld [vmem:[%s317 + $0x88] sm:$0xff]
      %v350 = vld [vmem:[%s317 + $0x90] sm:$0xff]
      %v351 = vld [vmem:[%s317 + $0x98] sm:$0xff]
      %v352 = vld [vmem:[%s317 + $0xa0] sm:$0xff]
      %v353 = vld [vmem:[%s317 + $0xa8] sm:$0xff]
      %v354 = vld [vmem:[%s317 + $0xb0] sm:$0xff]
      %v355 = vld [vmem:[%s317 + $0xb8] sm:$0xff]
      %v356 = vld [vmem:[%s317 + $0xc0] sm:$0xff]
      %v357 = vld [vmem:[%s317 + $0xc8] sm:$0xff]
      %v358 = vld [vmem:[%s317 + $0xd0] sm:$0xff]
      %v359 = vld [vmem:[%s317 + $0xd8] sm:$0xff]
      %v360 = vld [vmem:[%s317 + $0xe0] sm:$0xff]
      %v361 = vld [vmem:[%s317 + $0xe8] sm:$0xff]
      %v362 = vld [vmem:[%s317 + $0xf0] sm:$0xff]
      %v363 = vld [vmem:[%s317 + $0xf8] sm:$0xff]
      %v364 = vpack.c.bf16 %v333, %v332
      %v365 = vpack.c.bf16 %v335, %v334
      %v366 = vpack.c.bf16 %v337, %v336
      %v367 = vpack.c.bf16 %v339, %v338
      %v368 = vpack.c.bf16 %v341, %v340
      %v369 = vpack.c.bf16 %v343, %v342
      %v370 = vpack.c.bf16 %v345, %v344
      %v371 = vpack.c.bf16 %v347, %v346
      %v372 = vpack.c.bf16 %v349, %v348
      %v373 = vpack.c.bf16 %v351, %v350
      %v374 = vpack.c.bf16 %v353, %v352
      %v375 = vpack.c.bf16 %v355, %v354
      %v376 = vpack.c.bf16 %v357, %v356
      %v377 = vpack.c.bf16 %v359, %v358
      %v378 = vpack.c.bf16 %v361, %v360
      %v379 = vpack.c.bf16 %v363, %v362
      %v380 = vld [vmem:[%s323] sm:$0xff]
      %v381 = vld [vmem:[%s323 + $0x8] sm:$0xff]
      %v382 = vld [vmem:[%s323 + $0x10] sm:$0xff]
      %v383 = vld [vmem:[%s323 + $0x18] sm:$0xff]
      %v384 = vld [vmem:[%s323 + $0x20] sm:$0xff]
      %v385 = vld [vmem:[%s323 + $0x28] sm:$0xff]
      %v386 = vld [vmem:[%s323 + $0x30] sm:$0xff]
      %v387 = vld [vmem:[%s323 + $0x38] sm:$0xff]
      %v388 = vld [vmem:[%s323 + $0x40] sm:$0xff]
      %v389 = vld [vmem:[%s323 + $0x48] sm:$0xff]
      %v390 = vld [vmem:[%s323 + $0x50] sm:$0xff]
      %v391 = vld [vmem:[%s323 + $0x58] sm:$0xff]
      %v392 = vld [vmem:[%s323 + $0x60] sm:$0xff]
      %v393 = vld [vmem:[%s323 + $0x68] sm:$0xff]
      %v394 = vld [vmem:[%s323 + $0x70] sm:$0xff]
      %v395 = vld [vmem:[%s323 + $0x78] sm:$0xff]
      %v396 = vld [vmem:[%s323 + $0x80] sm:$0xff]
      %v397 = vld [vmem:[%s323 + $0x88] sm:$0xff]
      %v398 = vld [vmem:[%s323 + $0x90] sm:$0xff]
      %v399 = vld [vmem:[%s323 + $0x98] sm:$0xff]
      %v400 = vld [vmem:[%s323 + $0xa0] sm:$0xff]
      %v401 = vld [vmem:[%s323 + $0xa8] sm:$0xff]
      %v402 = vld [vmem:[%s323 + $0xb0] sm:$0xff]
      %v403 = vld [vmem:[%s323 + $0xb8] sm:$0xff]
      %v404 = vld [vmem:[%s323 + $0xc0] sm:$0xff]
      %v405 = vld [vmem:[%s323 + $0xc8] sm:$0xff]
      %v406 = vld [vmem:[%s323 + $0xd0] sm:$0xff]
      %v407 = vld [vmem:[%s323 + $0xd8] sm:$0xff]
      %v408 = vld [vmem:[%s323 + $0xe0] sm:$0xff]
      %v409 = vld [vmem:[%s323 + $0xe8] sm:$0xff]
      %v410 = vld [vmem:[%s323 + $0xf0] sm:$0xff]
      %v411 = vld [vmem:[%s323 + $0xf8] sm:$0xff]
      %v412 = vpack.c.bf16 %v381, %v380
      %v413 = vpack.c.bf16 %v383, %v382
      %v414 = vpack.c.bf16 %v385, %v384
      %v415 = vpack.c.bf16 %v387, %v386
      %v416 = vpack.c.bf16 %v389, %v388
      %v417 = vpack.c.bf16 %v391, %v390
      %v418 = vpack.c.bf16 %v393, %v392
      %v419 = vpack.c.bf16 %v395, %v394
      %v420 = vpack.c.bf16 %v397, %v396
      %v421 = vpack.c.bf16 %v399, %v398
      %v422 = vpack.c.bf16 %v401, %v400
      %v423 = vpack.c.bf16 %v403, %v402
      %v424 = vpack.c.bf16 %v405, %v404
      %v425 = vpack.c.bf16 %v407, %v406
      %v426 = vpack.c.bf16 %v409, %v408
      %v427 = vpack.c.bf16 %v411, %v410
      %v428 = vld [vmem:[%s2] sm:$0xf]
      %v429 = vld [vmem:[%s2 + $0x4] sm:$0xf]
      %v430 = vld [vmem:[%s2 + $0x8] sm:$0xf]
      %v431 = vld [vmem:[%s2 + $0xc] sm:$0xf]
      %v432 = vld [vmem:[%s2 + $0x10] sm:$0xf]
      %v433 = vld [vmem:[%s2 + $0x14] sm:$0xf]
      %v434 = vld [vmem:[%s2 + $0x18] sm:$0xf]
      %v435 = vld [vmem:[%s2 + $0x1c] sm:$0xf]
      %v436 = vld [vmem:[%s2 + $0x20] sm:$0xf]
      %v437 = vld [vmem:[%s2 + $0x24] sm:$0xf]
      %v438 = vld [vmem:[%s2 + $0x28] sm:$0xf]
      %v439 = vld [vmem:[%s2 + $0x2c] sm:$0xf]
      %v440 = vld [vmem:[%s2 + $0x30] sm:$0xf]
      %v441 = vld [vmem:[%s2 + $0x34] sm:$0xf]
      %v442 = vld [vmem:[%s2 + $0x38] sm:$0xf]
      %v443 = vld [vmem:[%s2 + $0x3c] sm:$0xf]
      %v460 = vunpack.c.l.b16 %v428
      %v461 = vunpack.c.l.b16 %v429
      %v462 = vunpack.c.l.b16 %v430
      %v463 = vunpack.c.l.b16 %v431
      %v464 = vunpack.c.l.b16 %v432
      %v465 = vunpack.c.l.b16 %v433
      %v466 = vunpack.c.l.b16 %v434
      %v467 = vunpack.c.l.b16 %v435
      %v468 = vunpack.c.l.b16 %v436
      %v469 = vunpack.c.l.b16 %v437
      %v470 = vunpack.c.l.b16 %v438
      %v471 = vunpack.c.l.b16 %v439
      %v472 = vunpack.c.l.b16 %v440
      %v473 = vunpack.c.l.b16 %v441
      %v474 = vunpack.c.l.b16 %v442
      %v475 = vunpack.c.l.b16 %v443
      %v476 = vpack.c.b16 %v461, %v460
      %v477 = vpack.c.b16 %v463, %v462
      %v478 = vpack.c.b16 %v465, %v464
      %v479 = vpack.c.b16 %v467, %v466
      %v480 = vpack.c.b16 %v469, %v468
      %v481 = vpack.c.b16 %v471, %v470
      %v482 = vpack.c.b16 %v473, %v472
      %v483 = vpack.c.b16 %v475, %v474
      %492 = vmatprep.subr.bf16.mxu0 0
      %493 = vmatpush1.bf16.msra.mxu0 %v483
      %494 = vmatprep.subr.bf16.mxu0 0
      %495 = vmatpush1.bf16.msra.mxu0 %v482
      %496 = vmatprep.subr.bf16.mxu0 0
      %497 = vmatpush1.bf16.msra.mxu0 %v481
      %498 = vmatprep.subr.bf16.mxu0 0
      %499 = vmatpush1.bf16.msra.mxu0 %v480
      %500 = vmatprep.subr.bf16.mxu0 0
      %501 = vmatpush1.bf16.msra.mxu0 %v479
      %502 = vmatprep.subr.bf16.mxu0 0
      %503 = vmatpush1.bf16.msra.mxu0 %v478
      %504 = vmatprep.subr.bf16.mxu0 0
      %505 = vmatpush1.bf16.msra.mxu0 %v477
      %506 = vmatprep.subr.bf16.mxu0 0
      %507 = vmatpush1.bf16.msra.mxu0 %v476
      %508 = vmatprep.subr.bf16.mxu0 0
      %509 = vmatpush2.bf16.msra.mxu0 0
      %510 = vmatprep.subr.bf16.mxu0 0
      %511 = vmatpush2.bf16.msra.mxu0 0
      %512 = vmatprep.subr.bf16.mxu0 0
      %513 = vmatpush2.bf16.msra.mxu0 0
      %514 = vmatprep.subr.bf16.mxu0 0
      %515 = vmatpush2.bf16.msra.mxu0 0
      %516 = vmatprep.subr.bf16.mxu0 0
      %517 = vmatpush2.bf16.msra.mxu0 0
      %518 = vmatprep.subr.bf16.mxu0 0
      %519 = vmatpush2.bf16.msra.mxu0 0
      %520 = vmatprep.subr.bf16.mxu0 0
      %521 = vmatpush2.bf16.msra.mxu0 0
      %522 = vmatprep.subr.bf16.mxu0 0
      %523 = vmatpush2.bf16.msra.mxu0 0
      %524 = vmatprep.mubr.bf16.mxu0 0
      %525 = vmatmul.mubr.bf16.gmra.mxu0 %v364
      %v526 = vpop.f32.mrf.mxu0
      %v527 = vadd.f32 0.0, %v526
      %v528 = vpop.f32.mrf.mxu0
      %v529 = vpop.f32.mrf.mxu0
      %v530 = vadd.f32 0.0, %v529
      %v531 = vpop.f32.mrf.mxu0
      %532 = vmatprep.mubr.bf16.mxu0 0
      %533 = vmatmul.mubr.bf16.gmra.mxu0 %v365
      %v534 = vpop.f32.mrf.mxu0
      %v535 = vadd.f32 0.0, %v534
      %v536 = vpop.f32.mrf.mxu0
      %v537 = vpop.f32.mrf.mxu0
      %v538 = vadd.f32 0.0, %v537
      %v539 = vpop.f32.mrf.mxu0
      %540 = vmatprep.mubr.bf16.mxu0 0
      %541 = vmatmul.mubr.bf16.gmra.mxu0 %v366
      %v542 = vpop.f32.mrf.mxu0
      %v543 = vadd.f32 0.0, %v542
      %v544 = vpop.f32.mrf.mxu0
      %v545 = vpop.f32.mrf.mxu0
      %v546 = vadd.f32 0.0, %v545
      %v547 = vpop.f32.mrf.mxu0
      %548 = vmatprep.mubr.bf16.mxu0 0
      %549 = vmatmul.mubr.bf16.gmra.mxu0 %v367
      %v550 = vpop.f32.mrf.mxu0
      %v551 = vadd.f32 0.0, %v550
      %v552 = vpop.f32.mrf.mxu0
      %v553 = vpop.f32.mrf.mxu0
      %v554 = vadd.f32 0.0, %v553
      %v555 = vpop.f32.mrf.mxu0
      %556 = vmatprep.mubr.bf16.mxu0 0
      %557 = vmatmul.mubr.bf16.gmra.mxu0 %v368
      %v558 = vpop.f32.mrf.mxu0
      %v559 = vadd.f32 0.0, %v558
      %v560 = vpop.f32.mrf.mxu0
      %v561 = vpop.f32.mrf.mxu0
      %v562 = vadd.f32 0.0, %v561
      %v563 = vpop.f32.mrf.mxu0
      %564 = vmatprep.mubr.bf16.mxu0 0
      %565 = vmatmul.mubr.bf16.gmra.mxu0 %v369
      %v566 = vpop.f32.mrf.mxu0
      %v567 = vadd.f32 0.0, %v566
      %v568 = vpop.f32.mrf.mxu0
      %v569 = vpop.f32.mrf.mxu0
      %v570 = vadd.f32 0.0, %v569
      %v571 = vpop.f32.mrf.mxu0
      %572 = vmatprep.mubr.bf16.mxu0 0
      %573 = vmatmul.mubr.bf16.gmra.mxu0 %v370
      %v574 = vpop.f32.mrf.mxu0
      %v575 = vadd.f32 0.0, %v574
      %v576 = vpop.f32.mrf.mxu0
      %v577 = vpop.f32.mrf.mxu0
      %v578 = vadd.f32 0.0, %v577
      %v579 = vpop.f32.mrf.mxu0
      %580 = vmatprep.mubr.bf16.mxu0 0
      %581 = vmatmul.mubr.bf16.gmra.mxu0 %v371
      %v582 = vpop.f32.mrf.mxu0
      %v583 = vadd.f32 0.0, %v582
      %v584 = vpop.f32.mrf.mxu0
      %v585 = vpop.f32.mrf.mxu0
      %v586 = vadd.f32 0.0, %v585
      %v587 = vpop.f32.mrf.mxu0
      %588 = vmatprep.mubr.bf16.mxu0 0
      %589 = vmatmul.mubr.bf16.gmra.mxu0 %v372
      %v590 = vpop.f32.mrf.mxu0
      %v591 = vadd.f32 0.0, %v590
      %v592 = vpop.f32.mrf.mxu0
      %v593 = vpop.f32.mrf.mxu0
      %v594 = vadd.f32 0.0, %v593
      %v595 = vpop.f32.mrf.mxu0
      %596 = vmatprep.mubr.bf16.mxu0 0
      %597 = vmatmul.mubr.bf16.gmra.mxu0 %v373
      %v598 = vpop.f32.mrf.mxu0
      %v599 = vadd.f32 0.0, %v598
      %v600 = vpop.f32.mrf.mxu0
      %v601 = vpop.f32.mrf.mxu0
      %v602 = vadd.f32 0.0, %v601
      %v603 = vpop.f32.mrf.mxu0
      %604 = vmatprep.mubr.bf16.mxu0 0
      %605 = vmatmul.mubr.bf16.gmra.mxu0 %v374
      %v606 = vpop.f32.mrf.mxu0
      %v607 = vadd.f32 0.0, %v606
      %v608 = vpop.f32.mrf.mxu0
      %v609 = vpop.f32.mrf.mxu0
      %v610 = vadd.f32 0.0, %v609
      %v611 = vpop.f32.mrf.mxu0
      %612 = vmatprep.mubr.bf16.mxu0 0
      %613 = vmatmul.mubr.bf16.gmra.mxu0 %v375
      %v614 = vpop.f32.mrf.mxu0
      %v615 = vadd.f32 0.0, %v614
      %v616 = vpop.f32.mrf.mxu0
      %v617 = vpop.f32.mrf.mxu0
      %v618 = vadd.f32 0.0, %v617
      %v619 = vpop.f32.mrf.mxu0
      %620 = vmatprep.mubr.bf16.mxu0 0
      %621 = vmatmul.mubr.bf16.gmra.mxu0 %v376
      %v622 = vpop.f32.mrf.mxu0
      %v623 = vadd.f32 0.0, %v622
      %v624 = vpop.f32.mrf.mxu0
      %v625 = vpop.f32.mrf.mxu0
      %v626 = vadd.f32 0.0, %v625
      %v627 = vpop.f32.mrf.mxu0
      %628 = vmatprep.mubr.bf16.mxu0 0
      %629 = vmatmul.mubr.bf16.gmra.mxu0 %v377
      %v630 = vpop.f32.mrf.mxu0
      %v631 = vadd.f32 0.0, %v630
      %v632 = vpop.f32.mrf.mxu0
      %v633 = vpop.f32.mrf.mxu0
      %v634 = vadd.f32 0.0, %v633
      %v635 = vpop.f32.mrf.mxu0
      %636 = vmatprep.mubr.bf16.mxu0 0
      %637 = vmatmul.mubr.bf16.gmra.mxu0 %v378
      %v638 = vpop.f32.mrf.mxu0
      %v639 = vadd.f32 0.0, %v638
      %v640 = vpop.f32.mrf.mxu0
      %v641 = vpop.f32.mrf.mxu0
      %v642 = vadd.f32 0.0, %v641
      %v643 = vpop.f32.mrf.mxu0
      %644 = vmatprep.mubr.bf16.mxu0 0
      %645 = vmatmul.mubr.bf16.gmra.mxu0 %v379
      %v646 = vpop.f32.mrf.mxu0
      %v647 = vadd.f32 0.0, %v646
      %v648 = vpop.f32.mrf.mxu0
      %v649 = vpop.f32.mrf.mxu0
      %v650 = vadd.f32 0.0, %v649
      %v651 = vpop.f32.mrf.mxu0
      %652 = vdwg.mxu0
      %v653 = vld [vmem:[%s3] sm:$0xf]
      %v654 = vld [vmem:[%s3 + $0x4] sm:$0xf]
      %v655 = vld [vmem:[%s3 + $0x8] sm:$0xf]
      %v656 = vld [vmem:[%s3 + $0xc] sm:$0xf]
      %v657 = vld [vmem:[%s3 + $0x10] sm:$0xf]
      %v658 = vld [vmem:[%s3 + $0x14] sm:$0xf]
      %v659 = vld [vmem:[%s3 + $0x18] sm:$0xf]
      %v660 = vld [vmem:[%s3 + $0x1c] sm:$0xf]
      %v661 = vld [vmem:[%s3 + $0x20] sm:$0xf]
      %v662 = vld [vmem:[%s3 + $0x24] sm:$0xf]
      %v663 = vld [vmem:[%s3 + $0x28] sm:$0xf]
      %v664 = vld [vmem:[%s3 + $0x2c] sm:$0xf]
      %v665 = vld [vmem:[%s3 + $0x30] sm:$0xf]
      %v666 = vld [vmem:[%s3 + $0x34] sm:$0xf]
      %v667 = vld [vmem:[%s3 + $0x38] sm:$0xf]
      %v668 = vld [vmem:[%s3 + $0x3c] sm:$0xf]
      %v685 = vunpack.c.l.b16 %v653
      %v686 = vunpack.c.l.b16 %v654
      %v687 = vunpack.c.l.b16 %v655
      %v688 = vunpack.c.l.b16 %v656
      %v689 = vunpack.c.l.b16 %v657
      %v690 = vunpack.c.l.b16 %v658
      %v691 = vunpack.c.l.b16 %v659
      %v692 = vunpack.c.l.b16 %v660
      %v693 = vunpack.c.l.b16 %v661
      %v694 = vunpack.c.l.b16 %v662
      %v695 = vunpack.c.l.b16 %v663
      %v696 = vunpack.c.l.b16 %v664
      %v697 = vunpack.c.l.b16 %v665
      %v698 = vunpack.c.l.b16 %v666
      %v699 = vunpack.c.l.b16 %v667
      %v700 = vunpack.c.l.b16 %v668
      %v701 = vpack.c.b16 %v686, %v685
      %v702 = vpack.c.b16 %v688, %v687
      %v703 = vpack.c.b16 %v690, %v689
      %v704 = vpack.c.b16 %v692, %v691
      %v705 = vpack.c.b16 %v694, %v693
      %v706 = vpack.c.b16 %v696, %v695
      %v707 = vpack.c.b16 %v698, %v697
      %v708 = vpack.c.b16 %v700, %v699
      %717 = vmatprep.subr.bf16.mxu0 0
      %718 = vmatpush1.bf16.msra.mxu0 %v708
      %719 = vmatprep.subr.bf16.mxu0 0
      %720 = vmatpush1.bf16.msra.mxu0 %v707
      %721 = vmatprep.subr.bf16.mxu0 0
      %722 = vmatpush1.bf16.msra.mxu0 %v706
      %723 = vmatprep.subr.bf16.mxu0 0
      %724 = vmatpush1.bf16.msra.mxu0 %v705
      %725 = vmatprep.subr.bf16.mxu0 0
      %726 = vmatpush1.bf16.msra.mxu0 %v704
      %727 = vmatprep.subr.bf16.mxu0 0
      %728 = vmatpush1.bf16.msra.mxu0 %v703
      %729 = vmatprep.subr.bf16.mxu0 0
      %730 = vmatpush1.bf16.msra.mxu0 %v702
      %731 = vmatprep.subr.bf16.mxu0 0
      %732 = vmatpush1.bf16.msra.mxu0 %v701
      %733 = vmatprep.subr.bf16.mxu0 0
      %734 = vmatpush2.bf16.msra.mxu0 0
      %735 = vmatprep.subr.bf16.mxu0 0
      %736 = vmatpush2.bf16.msra.mxu0 0
      %737 = vmatprep.subr.bf16.mxu0 0
      %738 = vmatpush2.bf16.msra.mxu0 0
      %739 = vmatprep.subr.bf16.mxu0 0
      %740 = vmatpush2.bf16.msra.mxu0 0
      %741 = vmatprep.subr.bf16.mxu0 0
      %742 = vmatpush2.bf16.msra.mxu0 0
      %743 = vmatprep.subr.bf16.mxu0 0
      %744 = vmatpush2.bf16.msra.mxu0 0
      %745 = vmatprep.subr.bf16.mxu0 0
      %746 = vmatpush2.bf16.msra.mxu0 0
      %747 = vmatprep.subr.bf16.mxu0 0
      %748 = vmatpush2.bf16.msra.mxu0 0
      %749 = vmatprep.mubr.bf16.mxu0 0
      %750 = vmatmul.mubr.bf16.gmra.mxu0 %v412
      %v751 = vpop.f32.mrf.mxu0
      %v752 = vadd.f32 0.0, %v751
      %v753 = vpop.f32.mrf.mxu0
      %v754 = vpop.f32.mrf.mxu0
      %v755 = vadd.f32 0.0, %v754
      %v756 = vpop.f32.mrf.mxu0
      %757 = vmatprep.mubr.bf16.mxu0 0
      %758 = vmatmul.mubr.bf16.gmra.mxu0 %v413
      %v759 = vpop.f32.mrf.mxu0
      %v760 = vadd.f32 0.0, %v759
      %v761 = vpop.f32.mrf.mxu0
      %v762 = vpop.f32.mrf.mxu0
      %v763 = vadd.f32 0.0, %v762
      %v764 = vpop.f32.mrf.mxu0
      %765 = vmatprep.mubr.bf16.mxu0 0
      %766 = vmatmul.mubr.bf16.gmra.mxu0 %v414
      %v767 = vpop.f32.mrf.mxu0
      %v768 = vadd.f32 0.0, %v767
      %v769 = vpop.f32.mrf.mxu0
      %v770 = vpop.f32.mrf.mxu0
      %v771 = vadd.f32 0.0, %v770
      %v772 = vpop.f32.mrf.mxu0
      %773 = vmatprep.mubr.bf16.mxu0 0
      %774 = vmatmul.mubr.bf16.gmra.mxu0 %v415
      %v775 = vpop.f32.mrf.mxu0
      %v776 = vadd.f32 0.0, %v775
      %v777 = vpop.f32.mrf.mxu0
      %v778 = vpop.f32.mrf.mxu0
      %v779 = vadd.f32 0.0, %v778
      %v780 = vpop.f32.mrf.mxu0
      %781 = vmatprep.mubr.bf16.mxu0 0
      %782 = vmatmul.mubr.bf16.gmra.mxu0 %v416
      %v783 = vpop.f32.mrf.mxu0
      %v784 = vadd.f32 0.0, %v783
      %v785 = vpop.f32.mrf.mxu0
      %v786 = vpop.f32.mrf.mxu0
      %v787 = vadd.f32 0.0, %v786
      %v788 = vpop.f32.mrf.mxu0
      %789 = vmatprep.mubr.bf16.mxu0 0
      %790 = vmatmul.mubr.bf16.gmra.mxu0 %v417
      %v791 = vpop.f32.mrf.mxu0
      %v792 = vadd.f32 0.0, %v791
      %v793 = vpop.f32.mrf.mxu0
      %v794 = vpop.f32.mrf.mxu0
      %v795 = vadd.f32 0.0, %v794
      %v796 = vpop.f32.mrf.mxu0
      %797 = vmatprep.mubr.bf16.mxu0 0
      %798 = vmatmul.mubr.bf16.gmra.mxu0 %v418
      %v799 = vpop.f32.mrf.mxu0
      %v800 = vadd.f32 0.0, %v799
      %v801 = vpop.f32.mrf.mxu0
      %v802 = vpop.f32.mrf.mxu0
      %v803 = vadd.f32 0.0, %v802
      %v804 = vpop.f32.mrf.mxu0
      %805 = vmatprep.mubr.bf16.mxu0 0
      %806 = vmatmul.mubr.bf16.gmra.mxu0 %v419
      %v807 = vpop.f32.mrf.mxu0
      %v808 = vadd.f32 0.0, %v807
      %v809 = vpop.f32.mrf.mxu0
      %v810 = vpop.f32.mrf.mxu0
      %v811 = vadd.f32 0.0, %v810
      %v812 = vpop.f32.mrf.mxu0
      %813 = vmatprep.mubr.bf16.mxu0 0
      %814 = vmatmul.mubr.bf16.gmra.mxu0 %v420
      %v815 = vpop.f32.mrf.mxu0
      %v816 = vadd.f32 0.0, %v815
      %v817 = vpop.f32.mrf.mxu0
      %v818 = vpop.f32.mrf.mxu0
      %v819 = vadd.f32 0.0, %v818
      %v820 = vpop.f32.mrf.mxu0
      %821 = vmatprep.mubr.bf16.mxu0 0
      %822 = vmatmul.mubr.bf16.gmra.mxu0 %v421
      %v823 = vpop.f32.mrf.mxu0
      %v824 = vadd.f32 0.0, %v823
      %v825 = vpop.f32.mrf.mxu0
      %v826 = vpop.f32.mrf.mxu0
      %v827 = vadd.f32 0.0, %v826
      %v828 = vpop.f32.mrf.mxu0
      %829 = vmatprep.mubr.bf16.mxu0 0
      %830 = vmatmul.mubr.bf16.gmra.mxu0 %v422
      %v831 = vpop.f32.mrf.mxu0
      %v832 = vadd.f32 0.0, %v831
      %v833 = vpop.f32.mrf.mxu0
      %v834 = vpop.f32.mrf.mxu0
      %v835 = vadd.f32 0.0, %v834
      %v836 = vpop.f32.mrf.mxu0
      %837 = vmatprep.mubr.bf16.mxu0 0
      %838 = vmatmul.mubr.bf16.gmra.mxu0 %v423
      %v839 = vpop.f32.mrf.mxu0
      %v840 = vadd.f32 0.0, %v839
      %v841 = vpop.f32.mrf.mxu0
      %v842 = vpop.f32.mrf.mxu0
      %v843 = vadd.f32 0.0, %v842
      %v844 = vpop.f32.mrf.mxu0
      %845 = vmatprep.mubr.bf16.mxu0 0
      %846 = vmatmul.mubr.bf16.gmra.mxu0 %v424
      %v847 = vpop.f32.mrf.mxu0
      %v848 = vadd.f32 0.0, %v847
      %v849 = vpop.f32.mrf.mxu0
      %v850 = vpop.f32.mrf.mxu0
      %v851 = vadd.f32 0.0, %v850
      %v852 = vpop.f32.mrf.mxu0
      %853 = vmatprep.mubr.bf16.mxu0 0
      %854 = vmatmul.mubr.bf16.gmra.mxu0 %v425
      %v855 = vpop.f32.mrf.mxu0
      %v856 = vadd.f32 0.0, %v855
      %v857 = vpop.f32.mrf.mxu0
      %v858 = vpop.f32.mrf.mxu0
      %v859 = vadd.f32 0.0, %v858
      %v860 = vpop.f32.mrf.mxu0
      %861 = vmatprep.mubr.bf16.mxu0 0
      %862 = vmatmul.mubr.bf16.gmra.mxu0 %v426
      %v863 = vpop.f32.mrf.mxu0
      %v864 = vadd.f32 0.0, %v863
      %v865 = vpop.f32.mrf.mxu0
      %v866 = vpop.f32.mrf.mxu0
      %v867 = vadd.f32 0.0, %v866
      %v868 = vpop.f32.mrf.mxu0
      %869 = vmatprep.mubr.bf16.mxu0 0
      %870 = vmatmul.mubr.bf16.gmra.mxu0 %v427
      %v871 = vpop.f32.mrf.mxu0
      %v872 = vadd.f32 0.0, %v871
      %v873 = vpop.f32.mrf.mxu0
      %v874 = vpop.f32.mrf.mxu0
      %v875 = vadd.f32 0.0, %v874
      %v876 = vpop.f32.mrf.mxu0
      %877 = vdwg.mxu0
      %v878 = vld [vmem:[%s4] sm:$0x1]
      %v880 = vlaneseq
      %v881 = vshrl.u32 %v880, 7
      %v882 = vsub.s32 0, %v881
      %v883 = vrot.slane %v878, %v882
      %v885 = vmul.f32 %v527, %v883
      %v886 = vmul.f32 %v530, %v883
      %v887 = vmul.f32 %v535, %v883
      %v888 = vmul.f32 %v538, %v883
      %v889 = vmul.f32 %v543, %v883
      %v890 = vmul.f32 %v546, %v883
      %v891 = vmul.f32 %v551, %v883
      %v892 = vmul.f32 %v554, %v883
      %v893 = vmul.f32 %v559, %v883
      %v894 = vmul.f32 %v562, %v883
      %v895 = vmul.f32 %v567, %v883
      %v896 = vmul.f32 %v570, %v883
      %v897 = vmul.f32 %v575, %v883
      %v898 = vmul.f32 %v578, %v883
      %v899 = vmul.f32 %v583, %v883
      %v900 = vmul.f32 %v586, %v883
      %v901 = vmul.f32 %v591, %v883
      %v902 = vmul.f32 %v594, %v883
      %v903 = vmul.f32 %v599, %v883
      %v904 = vmul.f32 %v602, %v883
      %v905 = vmul.f32 %v607, %v883
      %v906 = vmul.f32 %v610, %v883
      %v907 = vmul.f32 %v615, %v883
      %v908 = vmul.f32 %v618, %v883
      %v909 = vmul.f32 %v623, %v883
      %v910 = vmul.f32 %v626, %v883
      %v911 = vmul.f32 %v631, %v883
      %v912 = vmul.f32 %v634, %v883
      %v913 = vmul.f32 %v639, %v883
      %v914 = vmul.f32 %v642, %v883
      %v915 = vmul.f32 %v647, %v883
      %v916 = vmul.f32 %v650, %v883
      %v917 = vld [vmem:[%s5] sm:$0x1]
      %v919 = vlaneseq
      %v920 = vshrl.u32 %v919, 7
      %v921 = vsub.s32 0, %v920
      %v922 = vrot.slane %v917, %v921
      %v924 = vadd.f32 %v885, %v922
      %v925 = vadd.f32 %v886, %v922
      %v926 = vadd.f32 %v887, %v922
      %v927 = vadd.f32 %v888, %v922
      %v928 = vadd.f32 %v889, %v922
      %v929 = vadd.f32 %v890, %v922
      %v930 = vadd.f32 %v891, %v922
      %v931 = vadd.f32 %v892, %v922
      %v932 = vadd.f32 %v893, %v922
      %v933 = vadd.f32 %v894, %v922
      %v934 = vadd.f32 %v895, %v922
      %v935 = vadd.f32 %v896, %v922
      %v936 = vadd.f32 %v897, %v922
      %v937 = vadd.f32 %v898, %v922
      %v938 = vadd.f32 %v899, %v922
      %v939 = vadd.f32 %v900, %v922
      %v940 = vadd.f32 %v901, %v922
      %v941 = vadd.f32 %v902, %v922
      %v942 = vadd.f32 %v903, %v922
      %v943 = vadd.f32 %v904, %v922
      %v944 = vadd.f32 %v905, %v922
      %v945 = vadd.f32 %v906, %v922
      %v946 = vadd.f32 %v907, %v922
      %v947 = vadd.f32 %v908, %v922
      %v948 = vadd.f32 %v909, %v922
      %v949 = vadd.f32 %v910, %v922
      %v950 = vadd.f32 %v911, %v922
      %v951 = vadd.f32 %v912, %v922
      %v952 = vadd.f32 %v913, %v922
      %v953 = vadd.f32 %v914, %v922
      %v954 = vadd.f32 %v915, %v922
      %v955 = vadd.f32 %v916, %v922
      %v956 = vld [vmem:[%s6] sm:$0x1]
      %v958 = vlaneseq
      %v959 = vshrl.u32 %v958, 7
      %v960 = vsub.s32 0, %v959
      %v961 = vrot.slane %v956, %v960
      %v963 = vmul.f32 %v752, %v961
      %v964 = vmul.f32 %v755, %v961
      %v965 = vmul.f32 %v760, %v961
      %v966 = vmul.f32 %v763, %v961
      %v967 = vmul.f32 %v768, %v961
      %v968 = vmul.f32 %v771, %v961
      %v969 = vmul.f32 %v776, %v961
      %v970 = vmul.f32 %v779, %v961
      %v971 = vmul.f32 %v784, %v961
      %v972 = vmul.f32 %v787, %v961
      %v973 = vmul.f32 %v792, %v961
      %v974 = vmul.f32 %v795, %v961
      %v975 = vmul.f32 %v800, %v961
      %v976 = vmul.f32 %v803, %v961
      %v977 = vmul.f32 %v808, %v961
      %v978 = vmul.f32 %v811, %v961
      %v979 = vmul.f32 %v816, %v961
      %v980 = vmul.f32 %v819, %v961
      %v981 = vmul.f32 %v824, %v961
      %v982 = vmul.f32 %v827, %v961
      %v983 = vmul.f32 %v832, %v961
      %v984 = vmul.f32 %v835, %v961
      %v985 = vmul.f32 %v840, %v961
      %v986 = vmul.f32 %v843, %v961
      %v987 = vmul.f32 %v848, %v961
      %v988 = vmul.f32 %v851, %v961
      %v989 = vmul.f32 %v856, %v961
      %v990 = vmul.f32 %v859, %v961
      %v991 = vmul.f32 %v864, %v961
      %v992 = vmul.f32 %v867, %v961
      %v993 = vmul.f32 %v872, %v961
      %v994 = vmul.f32 %v875, %v961
      %v995 = vadd.f32 %v924, %v963
      %v996 = vadd.f32 %v925, %v964
      %v997 = vadd.f32 %v926, %v965
      %v998 = vadd.f32 %v927, %v966
      %v999 = vadd.f32 %v928, %v967
      %v1000 = vadd.f32 %v929, %v968
      %v1001 = vadd.f32 %v930, %v969
      %v1002 = vadd.f32 %v931, %v970
      %v1003 = vadd.f32 %v932, %v971
      %v1004 = vadd.f32 %v933, %v972
      %v1005 = vadd.f32 %v934, %v973
      %v1006 = vadd.f32 %v935, %v974
      %v1007 = vadd.f32 %v936, %v975
      %v1008 = vadd.f32 %v937, %v976
      %v1009 = vadd.f32 %v938, %v977
      %v1010 = vadd.f32 %v939, %v978
      %v1011 = vadd.f32 %v940, %v979
      %v1012 = vadd.f32 %v941, %v980
      %v1013 = vadd.f32 %v942, %v981
      %v1014 = vadd.f32 %v943, %v982
      %v1015 = vadd.f32 %v944, %v983
      %v1016 = vadd.f32 %v945, %v984
      %v1017 = vadd.f32 %v946, %v985
      %v1018 = vadd.f32 %v947, %v986
      %v1019 = vadd.f32 %v948, %v987
      %v1020 = vadd.f32 %v949, %v988
      %v1021 = vadd.f32 %v950, %v989
      %v1022 = vadd.f32 %v951, %v990
      %v1023 = vadd.f32 %v952, %v991
      %v1024 = vadd.f32 %v953, %v992
      %v1025 = vadd.f32 %v954, %v993
      %v1026 = vadd.f32 %v955, %v994
      %v1027 = vld [vmem:[%s7] sm:$0x1]
      %v1029 = vlaneseq
      %v1030 = vshrl.u32 %v1029, 7
      %v1031 = vsub.s32 0, %v1030
      %v1032 = vrot.slane %v1027, %v1031
      %v1034 = vadd.f32 %v995, %v1032
      %v1035 = vadd.f32 %v996, %v1032
      %v1036 = vadd.f32 %v997, %v1032
      %v1037 = vadd.f32 %v998, %v1032
      %v1038 = vadd.f32 %v999, %v1032
      %v1039 = vadd.f32 %v1000, %v1032
      %v1040 = vadd.f32 %v1001, %v1032
      %v1041 = vadd.f32 %v1002, %v1032
      %v1042 = vadd.f32 %v1003, %v1032
      %v1043 = vadd.f32 %v1004, %v1032
      %v1044 = vadd.f32 %v1005, %v1032
      %v1045 = vadd.f32 %v1006, %v1032
      %v1046 = vadd.f32 %v1007, %v1032
      %v1047 = vadd.f32 %v1008, %v1032
      %v1048 = vadd.f32 %v1009, %v1032
      %v1049 = vadd.f32 %v1010, %v1032
      %v1050 = vadd.f32 %v1011, %v1032
      %v1051 = vadd.f32 %v1012, %v1032
      %v1052 = vadd.f32 %v1013, %v1032
      %v1053 = vadd.f32 %v1014, %v1032
      %v1054 = vadd.f32 %v1015, %v1032
      %v1055 = vadd.f32 %v1016, %v1032
      %v1056 = vadd.f32 %v1017, %v1032
      %v1057 = vadd.f32 %v1018, %v1032
      %v1058 = vadd.f32 %v1019, %v1032
      %v1059 = vadd.f32 %v1020, %v1032
      %v1060 = vadd.f32 %v1021, %v1032
      %v1061 = vadd.f32 %v1022, %v1032
      %v1062 = vadd.f32 %v1023, %v1032
      %v1063 = vadd.f32 %v1024, %v1032
      %v1064 = vadd.f32 %v1025, %v1032
      %v1065 = vadd.f32 %v1026, %v1032
      %v1066 = vmax.f32 %v1034, 0.0
      %v1067 = vmax.f32 %v1035, 0.0
      %v1068 = vmax.f32 %v1036, 0.0
      %v1069 = vmax.f32 %v1037, 0.0
      %v1070 = vmax.f32 %v1038, 0.0
      %v1071 = vmax.f32 %v1039, 0.0
      %v1072 = vmax.f32 %v1040, 0.0
      %v1073 = vmax.f32 %v1041, 0.0
      %v1074 = vmax.f32 %v1042, 0.0
      %v1075 = vmax.f32 %v1043, 0.0
      %v1076 = vmax.f32 %v1044, 0.0
      %v1077 = vmax.f32 %v1045, 0.0
      %v1078 = vmax.f32 %v1046, 0.0
      %v1079 = vmax.f32 %v1047, 0.0
      %v1080 = vmax.f32 %v1048, 0.0
      %v1081 = vmax.f32 %v1049, 0.0
      %v1082 = vmax.f32 %v1050, 0.0
      %v1083 = vmax.f32 %v1051, 0.0
      %v1084 = vmax.f32 %v1052, 0.0
      %v1085 = vmax.f32 %v1053, 0.0
      %v1086 = vmax.f32 %v1054, 0.0
      %v1087 = vmax.f32 %v1055, 0.0
      %v1088 = vmax.f32 %v1056, 0.0
      %v1089 = vmax.f32 %v1057, 0.0
      %v1090 = vmax.f32 %v1058, 0.0
      %v1091 = vmax.f32 %v1059, 0.0
      %v1092 = vmax.f32 %v1060, 0.0
      %v1093 = vmax.f32 %v1061, 0.0
      %v1094 = vmax.f32 %v1062, 0.0
      %v1095 = vmax.f32 %v1063, 0.0
      %v1096 = vmax.f32 %v1064, 0.0
      %v1097 = vmax.f32 %v1065, 0.0
      %1098 = vst [vmem:[%s329] sm:$0xff] %v1066
      %1099 = vst [vmem:[%s329 + $0x8] sm:$0xff] %v1067
      %1100 = vst [vmem:[%s329 + $0x10] sm:$0xff] %v1068
      %1101 = vst [vmem:[%s329 + $0x18] sm:$0xff] %v1069
      %1102 = vst [vmem:[%s329 + $0x20] sm:$0xff] %v1070
      %1103 = vst [vmem:[%s329 + $0x28] sm:$0xff] %v1071
      %1104 = vst [vmem:[%s329 + $0x30] sm:$0xff] %v1072
      %1105 = vst [vmem:[%s329 + $0x38] sm:$0xff] %v1073
      %1106 = vst [vmem:[%s329 + $0x40] sm:$0xff] %v1074
      %1107 = vst [vmem:[%s329 + $0x48] sm:$0xff] %v1075
      %1108 = vst [vmem:[%s329 + $0x50] sm:$0xff] %v1076
      %1109 = vst [vmem:[%s329 + $0x58] sm:$0xff] %v1077
      %1110 = vst [vmem:[%s329 + $0x60] sm:$0xff] %v1078
      %1111 = vst [vmem:[%s329 + $0x68] sm:$0xff] %v1079
      %1112 = vst [vmem:[%s329 + $0x70] sm:$0xff] %v1080
      %1113 = vst [vmem:[%s329 + $0x78] sm:$0xff] %v1081
      %1114 = vst [vmem:[%s329 + $0x80] sm:$0xff] %v1082
      %1115 = vst [vmem:[%s329 + $0x88] sm:$0xff] %v1083
      %1116 = vst [vmem:[%s329 + $0x90] sm:$0xff] %v1084
      %1117 = vst [vmem:[%s329 + $0x98] sm:$0xff] %v1085
      %1118 = vst [vmem:[%s329 + $0xa0] sm:$0xff] %v1086
      %1119 = vst [vmem:[%s329 + $0xa8] sm:$0xff] %v1087
      %1120 = vst [vmem:[%s329 + $0xb0] sm:$0xff] %v1088
      %1121 = vst [vmem:[%s329 + $0xb8] sm:$0xff] %v1089
      %1122 = vst [vmem:[%s329 + $0xc0] sm:$0xff] %v1090
      %1123 = vst [vmem:[%s329 + $0xc8] sm:$0xff] %v1091
      %1124 = vst [vmem:[%s329 + $0xd0] sm:$0xff] %v1092
      %1125 = vst [vmem:[%s329 + $0xd8] sm:$0xff] %v1093
      %1126 = vst [vmem:[%s329 + $0xe0] sm:$0xff] %v1094
      %1127 = vst [vmem:[%s329 + $0xe8] sm:$0xff] %v1095
      %1128 = vst [vmem:[%s329 + $0xf0] sm:$0xff] %v1096
      %1129 = vst [vmem:[%s329 + $0xf8] sm:$0xff] %v1097
      %s1130 = smul.u32 32, %s19
      %p1131 = scmp.lt.s32.totalorder %s1130, 63
      %s1132 = scalar_select %p1131, %s1130, 63
      %s1133 = smul.addr %s1132, 8
      %s1134 = scalar_lea.vmem %s8, %s1133
      // Predicated region
      $region53: #{bottleneck_forward.5} parent=51 // pred_check
        %p1135 = pneg %p215
      $region54: #{bottleneck_forward.5} parent=51 // pred_check_branch
        %1137 = sbr.rel (%p1135) target = $region56
      $region55: #{bottleneck_forward.5} parent=51 // pred_region
        %s1138 = smul.u32 32, %s19
      $region56: #{bottleneck_forward.5} parent=51 // pred_fallthru
        _
    $region52: #{bottleneck_forward.5} parent=5 // pred_fallthru
      _
    %p1139 = scmp.le.s32.totalorder 2, %s14
    // Predicated region
    $region57: #{bottleneck_forward.5} parent=5 // pred_check
      %p1140 = pneg %p1139
    $region58: #{bottleneck_forward.5} parent=5 // pred_check_branch
      %1142 = sbr.rel (%p1140) target = $region60
    $region59: #{bottleneck_forward.5} parent=5 // pred_region
      %s1143 = ssub.s32 %s14, 2
      // Predicated region
      $region61: #{bottleneck_forward.5} parent=59 // pred_check
        %p1144 = pneg %p221
      $region62: #{bottleneck_forward.5} parent=59 // pred_check_branch
        %1146 = sbr.rel (%p1144) target = $region64
      $region63: #{bottleneck_forward.5} parent=59 // pred_region
        %s1147 = smul.u32 32, %s20
        %p1148 = scmp.lt.s32.totalorder %s1147, 63
        %s1149 = scalar_select %p1148, %s1147, 63
        %s1150 = smul.addr %s1149, 8
        %s1151 = scalar_lea.vmem %s8, %s1150
      $region64: #{bottleneck_forward.5} parent=59 // pred_fallthru
        _
    $region60: #{bottleneck_forward.5} parent=5 // pred_fallthru
      _
  $region6: #{bottleneck_forward.5} parent=0 // loop_footer
    %s18 = sadd.s32 1, %s14
  $region7: #{bottleneck_forward.5} parent=0 // loop_footer_branch
    %13 = sbr.rel target = $region3
  $region8: #{bottleneck_forward.5} parent=0 // loop_exit
    _

// kernel: bottleneck_forward.4
$region0: #{bottleneck_forward.4}
  #allocation0 [shape = 'u32[]', space=smem, size = 0x4, offset = 0x4, fixed_abs, tag = 'smem constant byte address 0x4 - core index']
  #allocation1 [shape = 'u32[144,128]{1,0:T(1,128)}', space=vmem, size = 0x12000, scoped, tag = 'internal scratch']
  #allocation2 [shape = 'f32[304,128]{1,0:T(8,128)}', space=vmem, size = 0x26000, scoped, tag = 'scratch operand']
  %s0 = inlined_call_operand.vmem [shape: f32[2,256,128], index: 0, kind: input, shape index: {}]
  %s1 = inlined_call_operand.vmem [shape: bf16[9,128,128], index: 1, kind: input, shape index: {}]
  %s2 = inlined_call_operand.vmem [shape: f32[1,128], index: 2, kind: input, shape index: {}]
  %s3 = inlined_call_operand.vmem [shape: f32[1,128], index: 3, kind: input, shape index: {}]
  %s4 = inlined_call_operand.vmem [shape: f32[2,256,128], index: 4, kind: output, shape index: {}]
  %s5 = sld [smem:[#allocation0]]
  $region49: #{bottleneck_forward.4} parent=0
    _
  %s7 = ssub.s32 1, %s5
  %s8 = scalar_select 0, %s7, %s5
  loop: start=0, step=1, limit=4
  $region2: #{bottleneck_forward.4} parent=0 // loop_pre_header
    _
  $region3: #{bottleneck_forward.4} parent=0 // loop_header
    %s10 = sphi 0, %s14
    %p11 = scmp.ge.s32.totalorder %s10, 4
    %s20 = sphi 0, %s22
    %s23 = sphi 0, %s20
    %s24 = sphi 0, %s23
    %s40 = sphi 0, %s24
    %s44 = sphi 0, %s44
    %s46 = sphi 0, %s44
    %s47 = sphi 0, %s46
    %s61 = sphi 0, %s47
    %s65 = sphi 0, %s65
    %s67 = sphi 0, %s65
    %s68 = sphi 0, %s67
    %s82 = sphi 0, %s68
    %s86 = sphi 0, %s86
    %s88 = sphi 0, %s86
    %s89 = sphi 0, %s88
    %s103 = sphi 0, %s89
    %s109 = sphi 0, %s111
    %s112 = sphi 0, %s109
    %s113 = sphi 0, %s112
    %s129 = sphi 0, %s113
  $region4: #{bottleneck_forward.4} parent=0 // loop_header_branch
    %13 = sbr.rel (%p11) target = $region8
  $region5: #{bottleneck_forward.4} parent=0 // loop_body
    %s15 = ssub.s32 %s10, 1
    %s16 = ssub.s32 %s10, 2
    %s17 = sadd.s32 %s10, 1
    %s18 = ssub.s32 %s10, %s17
    %p19 = scmp.eq.s32.totalorder %s18, 0
    %s21 = sadd.s32 %s20, 1
    %s22 = scalar_select %p19, %s20, %s21
    %p25 = pneg %p19
    %p26 = scmp.eq.s32.totalorder %s10, 1
    %p27 = por %p25, %p26
    %p28 = scmp.ne.s32.totalorder %s20, %s23
    %p29 = scmp.eq.s32.totalorder %s10, 0
    %p30 = por %p28, %p29
    %p31 = scmp.ne.s32.totalorder %s20, %s23
    %p32 = scmp.eq.s32.totalorder %s15, 1
    %p33 = por %p31, %p32
    %p34 = scmp.ne.s32.totalorder %s23, %s24
    %p35 = scmp.eq.s32.totalorder %s15, 0
    %p36 = por %p34, %p35
    %p37 = scmp.ne.s32.totalorder %s23, %s24
    %p38 = scmp.eq.s32.totalorder %s16, 1
    %p39 = por %p37, %p38
    %p41 = scmp.ne.s32.totalorder %s24, %s40
    %p42 = scmp.eq.s32.totalorder %s16, 0
    %p43 = por %p41, %p42
    %s45 = sadd.s32 %s44, 1
    %p48 = scmp.eq.s32.totalorder %s10, 1
    %p49 = scmp.ne.s32.totalorder %s44, %s46
    %p50 = scmp.eq.s32.totalorder %s10, 0
    %p51 = por %p49, %p50
    %p52 = scmp.ne.s32.totalorder %s44, %s46
    %p53 = scmp.eq.s32.totalorder %s15, 1
    %p54 = por %p52, %p53
    %p55 = scmp.ne.s32.totalorder %s46, %s47
    %p56 = scmp.eq.s32.totalorder %s15, 0
    %p57 = por %p55, %p56
    %p58 = scmp.ne.s32.totalorder %s46, %s47
    %p59 = scmp.eq.s32.totalorder %s16, 1
    %p60 = por %p58, %p59
    %p62 = scmp.ne.s32.totalorder %s47, %s61
    %p63 = scmp.eq.s32.totalorder %s16, 0
    %p64 = por %p62, %p63
    %s66 = sadd.s32 %s65, 1
    %p69 = scmp.eq.s32.totalorder %s10, 1
    %p70 = scmp.ne.s32.totalorder %s65, %s67
    %p71 = scmp.eq.s32.totalorder %s10, 0
    %p72 = por %p70, %p71
    %p73 = scmp.ne.s32.totalorder %s65, %s67
    %p74 = scmp.eq.s32.totalorder %s15, 1
    %p75 = por %p73, %p74
    %p76 = scmp.ne.s32.totalorder %s67, %s68
    %p77 = scmp.eq.s32.totalorder %s15, 0
    %p78 = por %p76, %p77
    %p79 = scmp.ne.s32.totalorder %s67, %s68
    %p80 = scmp.eq.s32.totalorder %s16, 1
    %p81 = por %p79, %p80
    %p83 = scmp.ne.s32.totalorder %s68, %s82
    %p84 = scmp.eq.s32.totalorder %s16, 0
    %p85 = por %p83, %p84
    %s87 = sadd.s32 %s86, 1
    %p90 = scmp.eq.s32.totalorder %s10, 1
    %p91 = scmp.ne.s32.totalorder %s86, %s88
    %p92 = scmp.eq.s32.totalorder %s10, 0
    %p93 = por %p91, %p92
    %p94 = scmp.ne.s32.totalorder %s86, %s88
    %p95 = scmp.eq.s32.totalorder %s15, 1
    %p96 = por %p94, %p95
    %p97 = scmp.ne.s32.totalorder %s88, %s89
    %p98 = scmp.eq.s32.totalorder %s15, 0
    %p99 = por %p97, %p98
    %p100 = scmp.ne.s32.totalorder %s88, %s89
    %p101 = scmp.eq.s32.totalorder %s16, 1
    %p102 = por %p100, %p101
    %p104 = scmp.ne.s32.totalorder %s89, %s103
    %p105 = scmp.eq.s32.totalorder %s16, 0
    %p106 = por %p104, %p105
    %s107 = ssub.s32 %s10, %s17
    %p108 = scmp.eq.s32.totalorder %s107, 0
    %s110 = sadd.s32 %s109, 1
    %s111 = scalar_select %p108, %s109, %s110
    %p114 = pneg %p108
    %p115 = scmp.eq.s32.totalorder %s10, 1
    %p116 = por %p114, %p115
    %p117 = scmp.ne.s32.totalorder %s109, %s112
    %p118 = scmp.eq.s32.totalorder %s10, 0
    %p119 = por %p117, %p118
    %p120 = scmp.ne.s32.totalorder %s109, %s112
    %p121 = scmp.eq.s32.totalorder %s15, 1
    %p122 = por %p120, %p121
    %p123 = scmp.ne.s32.totalorder %s112, %s113
    %p124 = scmp.eq.s32.totalorder %s15, 0
    %p125 = por %p123, %p124
    %p126 = scmp.ne.s32.totalorder %s112, %s113
    %p127 = scmp.eq.s32.totalorder %s16, 1
    %p128 = por %p126, %p127
    %p130 = scmp.ne.s32.totalorder %s113, %s129
    %p131 = scmp.eq.s32.totalorder %s16, 0
    %p132 = por %p130, %p131
    %p133 = scmp.le.s32.totalorder 1, %s10
    %p134 = scmp.lt.s32.totalorder %s10, 3
    %p135 = pnand %p133, %p134
    %p136 = pneg %p135
    // Predicated region
    $region9: #{bottleneck_forward.4} parent=5 // pred_check
      _
    $region10: #{bottleneck_forward.4} parent=5 // pred_check_branch
      %138 = sbr.rel (%p135) target = $region12
    $region11: #{bottleneck_forward.4} parent=5 // pred_region
      %s139 = ssub.s32 %s10, 1
      // Predicated region
      $region13: #{bottleneck_forward.4} parent=11 // pred_check
        %p140 = pneg %p57
      $region14: #{bottleneck_forward.4} parent=11 // pred_check_branch
        %142 = sbr.rel (%p140) target = $region16
      $region15: #{bottleneck_forward.4} parent=11 // pred_region
        _
      $region16: #{bottleneck_forward.4} parent=11 // pred_fallthru
        _
      // Predicated region
      $region17: #{bottleneck_forward.4} parent=11 // pred_check
        %p143 = pneg %p78
      $region18: #{bottleneck_forward.4} parent=11 // pred_check_branch
        %145 = sbr.rel (%p143) target = $region20
      $region19: #{bottleneck_forward.4} parent=11 // pred_region
        _
      $region20: #{bottleneck_forward.4} parent=11 // pred_fallthru
        _
      // Predicated region
      $region21: #{bottleneck_forward.4} parent=11 // pred_check
        %p146 = pneg %p99
      $region22: #{bottleneck_forward.4} parent=11 // pred_check_branch
        %148 = sbr.rel (%p146) target = $region24
      $region23: #{bottleneck_forward.4} parent=11 // pred_region
        _
      $region24: #{bottleneck_forward.4} parent=11 // pred_fallthru
        _
    $region12: #{bottleneck_forward.4} parent=5 // pred_fallthru
      _
    %p149 = scmp.lt.s32.totalorder %s10, 2
    // Predicated region
    $region25: #{bottleneck_forward.4} parent=5 // pred_check
      %p150 = pneg %p149
    $region26: #{bottleneck_forward.4} parent=5 // pred_check_branch
      %152 = sbr.rel (%p150) target = $region28
    $region27: #{bottleneck_forward.4} parent=5 // pred_region
      // Predicated region
      $region29: #{bottleneck_forward.4} parent=27 // pred_check
        %p153 = pneg %p30
      $region30: #{bottleneck_forward.4} parent=27 // pred_check_branch
        %155 = sbr.rel (%p153) target = $region32
      $region31: #{bottleneck_forward.4} parent=27 // pred_region
        %p156 = scmp.lt.s32.totalorder %s10, 1
        %s157 = scalar_select %p156, %s10, 1
        %s158 = smul.addr %s157, 32
        %s159 = smul.addr %s158, 8
        %s160 = scalar_lea.vmem %s0, %s159
      $region32: #{bottleneck_forward.4} parent=27 // pred_fallthru
        _
    $region28: #{bottleneck_forward.4} parent=5 // pred_fallthru
      _
    %p161 = scmp.le.s32.totalorder 1, %s10
    %p162 = scmp.lt.s32.totalorder %s10, 3
    %p163 = pnand %p161, %p162
    %p164 = pneg %p163
    // Predicated region
    $region33: #{bottleneck_forward.4} parent=5 // pred_check
      _
    $region34: #{bottleneck_forward.4} parent=5 // pred_check_branch
      %166 = sbr.rel (%p163) target = $region36
    $region35: #{bottleneck_forward.4} parent=5 // pred_region
      %s167 = ssub.s32 %s10, 1
      %p168 = scmp.lt.s32.totalorder %s15, 1
      %s169 = scalar_select %p168, %s15, 1
      %s170 = smul.addr %s169, 32
      %s171 = smul.addr %s170, 8
      %s172 = scalar_lea.vmem %s0, %s171
      %p173 = pneg %p36
      %p174 = pneg %p33
      %p175 = pneg %p57
      %p176 = pneg %p54
      %p177 = pneg %p78
      %p178 = pneg %p75
      %p179 = pneg %p99
      %p180 = pneg %p96
      %p181 = pneg %p125
      %p182 = pneg %p122
      %p183 = scmp.lt.s32.totalorder %s15, 1
      %s184 = scalar_select %p183, %s15, 1
      %s185 = smul.addr %s184, 32
      %s186 = smul.addr %s185, 8
      %s187 = scalar_lea.vmem %s4, %s186
      %p188 = scmp.lt.s32.totalorder %s15, 1
      %s189 = scalar_select %p188, %s15, 1
      %s190 = smul.addr %s189, 32
      %s191 = smul.addr %s190, 8
      %s192 = scalar_lea.vmem %s0, %s191
      %p193 = scmp.lt.s32.totalorder %s15, 1
      %s194 = scalar_select %p193, %s15, 1
      %s195 = smul.addr %s194, 32
      %s196 = smul.addr %s195, 8
      %s197 = scalar_lea.vmem %s4, %s196
      %199 = vst [vmem:[#allocation2] sm:$0xff] 0.0
      %200 = vst [vmem:[#allocation2 + $0x8] sm:$0xff] 0.0
      %201 = vst [vmem:[#allocation2 + $0x10] sm:$0xff] 0.0
      %202 = vst [vmem:[#allocation2 + $0x118] sm:$0xff] 0.0
      %203 = vst [vmem:[#allocation2 + $0x120] sm:$0xff] 0.0
      %204 = vst [vmem:[#allocation2 + $0x128] sm:$0xff] 0.0
      %v205 = vld [vmem:[%s192] sm:$0xff]
      %v206 = vld [vmem:[%s192 + $0x8] sm:$0xff]
      %v207 = vld [vmem:[%s192 + $0x10] sm:$0xff]
      %v208 = vld [vmem:[%s192 + $0x18] sm:$0xff]
      %v209 = vld [vmem:[%s192 + $0x20] sm:$0xff]
      %v210 = vld [vmem:[%s192 + $0x28] sm:$0xff]
      %v211 = vld [vmem:[%s192 + $0x30] sm:$0xff]
      %v212 = vld [vmem:[%s192 + $0x38] sm:$0xff]
      %v213 = vld [vmem:[%s192 + $0x40] sm:$0xff]
      %v214 = vld [vmem:[%s192 + $0x48] sm:$0xff]
      %v215 = vld [vmem:[%s192 + $0x50] sm:$0xff]
      %v216 = vld [vmem:[%s192 + $0x58] sm:$0xff]
      %v217 = vld [vmem:[%s192 + $0x60] sm:$0xff]
      %v218 = vld [vmem:[%s192 + $0x68] sm:$0xff]
      %v219 = vld [vmem:[%s192 + $0x70] sm:$0xff]
      %v220 = vld [vmem:[%s192 + $0x78] sm:$0xff]
      %v221 = vld [vmem:[%s192 + $0x80] sm:$0xff]
      %v222 = vld [vmem:[%s192 + $0x88] sm:$0xff]
      %v223 = vld [vmem:[%s192 + $0x90] sm:$0xff]
      %v224 = vld [vmem:[%s192 + $0x98] sm:$0xff]
      %v225 = vld [vmem:[%s192 + $0xa0] sm:$0xff]
      %v226 = vld [vmem:[%s192 + $0xa8] sm:$0xff]
      %v227 = vld [vmem:[%s192 + $0xb0] sm:$0xff]
      %v228 = vld [vmem:[%s192 + $0xb8] sm:$0xff]
      %v229 = vld [vmem:[%s192 + $0xc0] sm:$0xff]
      %v230 = vld [vmem:[%s192 + $0xc8] sm:$0xff]
      %v231 = vld [vmem:[%s192 + $0xd0] sm:$0xff]
      %v232 = vld [vmem:[%s192 + $0xd8] sm:$0xff]
      %v233 = vld [vmem:[%s192 + $0xe0] sm:$0xff]
      %v234 = vld [vmem:[%s192 + $0xe8] sm:$0xff]
      %v235 = vld [vmem:[%s192 + $0xf0] sm:$0xff]
      %v236 = vld [vmem:[%s192 + $0xf8] sm:$0xff]
      %237 = vst [vmem:[#allocation2 + $0x18] sm:$0xff] %v205
      %238 = vst [vmem:[#allocation2 + $0x20] sm:$0xff] %v206
      %239 = vst [vmem:[#allocation2 + $0x28] sm:$0xff] %v207
      %240 = vst [vmem:[#allocation2 + $0x30] sm:$0xff] %v208
      %241 = vst [vmem:[#allocation2 + $0x38] sm:$0xff] %v209
      %242 = vst [vmem:[#allocation2 + $0x40] sm:$0xff] %v210
      %243 = vst [vmem:[#allocation2 + $0x48] sm:$0xff] %v211
      %244 = vst [vmem:[#allocation2 + $0x50] sm:$0xff] %v212
      %245 = vst [vmem:[#allocation2 + $0x58] sm:$0xff] %v213
      %246 = vst [vmem:[#allocation2 + $0x60] sm:$0xff] %v214
      %247 = vst [vmem:[#allocation2 + $0x68] sm:$0xff] %v215
      %248 = vst [vmem:[#allocation2 + $0x70] sm:$0xff] %v216
      %249 = vst [vmem:[#allocation2 + $0x78] sm:$0xff] %v217
      %250 = vst [vmem:[#allocation2 + $0x80] sm:$0xff] %v218
      %251 = vst [vmem:[#allocation2 + $0x88] sm:$0xff] %v219
      %252 = vst [vmem:[#allocation2 + $0x90] sm:$0xff] %v220
      %253 = vst [vmem:[#allocation2 + $0x98] sm:$0xff] %v221
      %254 = vst [vmem:[#allocation2 + $0xa0] sm:$0xff] %v222
      %255 = vst [vmem:[#allocation2 + $0xa8] sm:$0xff] %v223
      %256 = vst [vmem:[#allocation2 + $0xb0] sm:$0xff] %v224
      %257 = vst [vmem:[#allocation2 + $0xb8] sm:$0xff] %v225
      %258 = vst [vmem:[#allocation2 + $0xc0] sm:$0xff] %v226
      %259 = vst [vmem:[#allocation2 + $0xc8] sm:$0xff] %v227
      %260 = vst [vmem:[#allocation2 + $0xd0] sm:$0xff] %v228
      %261 = vst [vmem:[#allocation2 + $0xd8] sm:$0xff] %v229
      %262 = vst [vmem:[#allocation2 + $0xe0] sm:$0xff] %v230
      %263 = vst [vmem:[#allocation2 + $0xe8] sm:$0xff] %v231
      %264 = vst [vmem:[#allocation2 + $0xf0] sm:$0xff] %v232
      %265 = vst [vmem:[#allocation2 + $0xf8] sm:$0xff] %v233
      %266 = vst [vmem:[#allocation2 + $0x100] sm:$0xff] %v234
      %267 = vst [vmem:[#allocation2 + $0x108] sm:$0xff] %v235
      %268 = vst [vmem:[#allocation2 + $0x110] sm:$0xff] %v236
      %v269 = vlaneseq
      %v270 = vshrl.u32 %v269, 7
      %v271 = vadd.s32 %v270, 8
      %v272 = vadd.s32 %v270, 16
      %v273 = vadd.s32 %v270, 24
      %v274 = vadd.s32 %v270, 32
      %v275 = vadd.s32 %v270, 40
      %v276 = vadd.s32 %v270, 48
      %v277 = vadd.s32 %v270, 56
      %v278 = vadd.s32 %v270, 64
      %v279 = vadd.s32 %v270, 72
      %v280 = vadd.s32 %v270, 80
      %v281 = vadd.s32 %v270, 88
      %v282 = vadd.s32 %v270, 96
      %v283 = vadd.s32 %v270, 104
      %v284 = vadd.s32 %v270, 112
      %v285 = vadd.s32 %v270, 120
      %vm286 = vcmp.lt.s32.totalorder %v270, 0
      %v287 = vsub.s32 0, %v270
      %v288 = vsel %vm286, %v287, %v270
      %v289 = vshrl.u32 %v288, 4
      %v290 = vand.u32 %v288, 15
      %v291 = vsub.s32 0, %v290
      %v292 = vsel %vm286, %v291, %v290
      %vm293 = vcmp.lt.s32.totalorder %v271, 0
      %v294 = vsub.s32 0, %v271
      %v295 = vsel %vm293, %v294, %v271
      %v296 = vshrl.u32 %v295, 4
      %v297 = vand.u32 %v295, 15
      %v298 = vsub.s32 0, %v297
      %v299 = vsel %vm293, %v298, %v297
      %vm300 = vcmp.lt.s32.totalorder %v272, 0
      %v301 = vsub.s32 0, %v272
      %v302 = vsel %vm300, %v301, %v272
      %v303 = vshrl.u32 %v302, 4
      %v304 = vand.u32 %v302, 15
      %v305 = vsub.s32 0, %v304
      %v306 = vsel %vm300, %v305, %v304
      %vm307 = vcmp.lt.s32.totalorder %v273, 0
      %v308 = vsub.s32 0, %v273
      %v309 = vsel %vm307, %v308, %v273
      %v310 = vshrl.u32 %v309, 4
      %v311 = vand.u32 %v309, 15
      %v312 = vsub.s32 0, %v311
      %v313 = vsel %vm307, %v312, %v311
      %vm314 = vcmp.lt.s32.totalorder %v274, 0
      %v315 = vsub.s32 0, %v274
      %v316 = vsel %vm314, %v315, %v274
      %v317 = vshrl.u32 %v316, 4
      %v318 = vand.u32 %v316, 15
      %v319 = vsub.s32 0, %v318
      %v320 = vsel %vm314, %v319, %v318
      %vm321 = vcmp.lt.s32.totalorder %v275, 0
      %v322 = vsub.s32 0, %v275
      %v323 = vsel %vm321, %v322, %v275
      %v324 = vshrl.u32 %v323, 4
      %v325 = vand.u32 %v323, 15
      %v326 = vsub.s32 0, %v325
      %v327 = vsel %vm321, %v326, %v325
      %vm328 = vcmp.lt.s32.totalorder %v276, 0
      %v329 = vsub.s32 0, %v276
      %v330 = vsel %vm328, %v329, %v276
      %v331 = vshrl.u32 %v330, 4
      %v332 = vand.u32 %v330, 15
      %v333 = vsub.s32 0, %v332
      %v334 = vsel %vm328, %v333, %v332
      %vm335 = vcmp.lt.s32.totalorder %v277, 0
      %v336 = vsub.s32 0, %v277
      %v337 = vsel %vm335, %v336, %v277
      %v338 = vshrl.u32 %v337, 4
      %v339 = vand.u32 %v337, 15
      %v340 = vsub.s32 0, %v339
      %v341 = vsel %vm335, %v340, %v339
      %vm342 = vcmp.lt.s32.totalorder %v278, 0
      %v343 = vsub.s32 0, %v278
      %v344 = vsel %vm342, %v343, %v278
      %v345 = vshrl.u32 %v344, 4
      %v346 = vand.u32 %v344, 15
      %v347 = vsub.s32 0, %v346
      %v348 = vsel %vm342, %v347, %v346
      %vm349 = vcmp.lt.s32.totalorder %v279, 0
      %v350 = vsub.s32 0, %v279
      %v351 = vsel %vm349, %v350, %v279
      %v352 = vshrl.u32 %v351, 4
      %v353 = vand.u32 %v351, 15
      %v354 = vsub.s32 0, %v353
      %v355 = vsel %vm349, %v354, %v353
      %vm356 = vcmp.lt.s32.totalorder %v280, 0
      %v357 = vsub.s32 0, %v280
      %v358 = vsel %vm356, %v357, %v280
      %v359 = vshrl.u32 %v358, 4
      %v360 = vand.u32 %v358, 15
      %v361 = vsub.s32 0, %v360
      %v362 = vsel %vm356, %v361, %v360
      %vm363 = vcmp.lt.s32.totalorder %v281, 0
      %v364 = vsub.s32 0, %v281
      %v365 = vsel %vm363, %v364, %v281
      %v366 = vshrl.u32 %v365, 4
      %v367 = vand.u32 %v365, 15
      %v368 = vsub.s32 0, %v367
      %v369 = vsel %vm363, %v368, %v367
      %vm370 = vcmp.lt.s32.totalorder %v282, 0
      %v371 = vsub.s32 0, %v282
      %v372 = vsel %vm370, %v371, %v282
      %v373 = vshrl.u32 %v372, 4
      %v374 = vand.u32 %v372, 15
      %v375 = vsub.s32 0, %v374
      %v376 = vsel %vm370, %v375, %v374
      %vm377 = vcmp.lt.s32.totalorder %v283, 0
      %v378 = vsub.s32 0, %v283
      %v379 = vsel %vm377, %v378, %v283
      %v380 = vshrl.u32 %v379, 4
      %v381 = vand.u32 %v379, 15
      %v382 = vsub.s32 0, %v381
      %v383 = vsel %vm377, %v382, %v381
      %vm384 = vcmp.lt.s32.totalorder %v284, 0
      %v385 = vsub.s32 0, %v284
      %v386 = vsel %vm384, %v385, %v284
      %v387 = vshrl.u32 %v386, 4
      %v388 = vand.u32 %v386, 15
      %v389 = vsub.s32 0, %v388
      %v390 = vsel %vm384, %v389, %v388
      %vm391 = vcmp.lt.s32.totalorder %v285, 0
      %v392 = vsub.s32 0, %v285
      %v393 = vsel %vm391, %v392, %v285
      %v394 = vshrl.u32 %v393, 4
      %v395 = vand.u32 %v393, 15
      %v396 = vsub.s32 0, %v395
      %v397 = vsel %vm391, %v396, %v395
      %vm398 = vcmp.ne.s32.totalorder %v292, 0
      %vm399 = vcmp.ne.s32.totalorder %v299, 0
      %vm400 = vcmp.ne.s32.totalorder %v306, 0
      %vm401 = vcmp.ne.s32.totalorder %v313, 0
      %vm402 = vcmp.ne.s32.totalorder %v320, 0
      %vm403 = vcmp.ne.s32.totalorder %v327, 0
      %vm404 = vcmp.ne.s32.totalorder %v334, 0
      %vm405 = vcmp.ne.s32.totalorder %v341, 0
      %vm406 = vcmp.ne.s32.totalorder %v348, 0
      %vm407 = vcmp.ne.s32.totalorder %v355, 0
      %vm408 = vcmp.ne.s32.totalorder %v362, 0
      %vm409 = vcmp.ne.s32.totalorder %v369, 0
      %vm410 = vcmp.ne.s32.totalorder %v376, 0
      %vm411 = vcmp.ne.s32.totalorder %v383, 0
      %vm412 = vcmp.ne.s32.totalorder %v390, 0
      %vm413 = vcmp.ne.s32.totalorder %v397, 0
      %vm414 = vcmp.lt.s32.totalorder %v292, 0
      %vm415 = vcmp.lt.s32.totalorder %v299, 0
      %vm416 = vcmp.lt.s32.totalorder %v306, 0
      %vm417 = vcmp.lt.s32.totalorder %v313, 0
      %vm418 = vcmp.lt.s32.totalorder %v320, 0
      %vm419 = vcmp.lt.s32.totalorder %v327, 0
      %vm420 = vcmp.lt.s32.totalorder %v334, 0
      %vm421 = vcmp.lt.s32.totalorder %v341, 0
      %vm422 = vcmp.lt.s32.totalorder %v348, 0
      %vm423 = vcmp.lt.s32.totalorder %v355, 0
      %vm424 = vcmp.lt.s32.totalorder %v362, 0
      %vm425 = vcmp.lt.s32.totalorder %v369, 0
      %vm426 = vcmp.lt.s32.totalorder %v376, 0
      %vm427 = vcmp.lt.s32.totalorder %v383, 0
      %vm428 = vcmp.lt.s32.totalorder %v390, 0
      %vm429 = vcmp.lt.s32.totalorder %v397, 0
      %vm430 = vmand %vm414, %vm398
      %vm431 = vmand %vm415, %vm399
      %vm432 = vmand %vm416, %vm400
      %vm433 = vmand %vm417, %vm401
      %vm434 = vmand %vm418, %vm402
      %vm435 = vmand %vm419, %vm403
      %vm436 = vmand %vm420, %vm404
      %vm437 = vmand %vm421, %vm405
      %vm438 = vmand %vm422, %vm406
      %vm439 = vmand %vm423, %vm407
      %vm440 = vmand %vm424, %vm408
      %vm441 = vmand %vm425, %vm409
      %vm442 = vmand %vm426, %vm410
      %vm443 = vmand %vm427, %vm411
      %vm444 = vmand %vm428, %vm412
      %vm445 = vmand %vm429, %vm413
      %v446 = vadd.s32 %v292, 16
      %v447 = vadd.s32 %v299, 16
      %v448 = vadd.s32 %v306, 16
      %v449 = vadd.s32 %v313, 16
      %v450 = vadd.s32 %v320, 16
      %v451 = vadd.s32 %v327, 16
      %v452 = vadd.s32 %v334, 16
      %v453 = vadd.s32 %v341, 16
      %v454 = vadd.s32 %v348, 16
      %v455 = vadd.s32 %v355, 16
      %v456 = vadd.s32 %v362, 16
      %v457 = vadd.s32 %v369, 16
      %v458 = vadd.s32 %v376, 16
      %v459 = vadd.s32 %v383, 16
      %v460 = vadd.s32 %v390, 16
      %v461 = vadd.s32 %v397, 16
      %v462 = vsel %vm430, %v446, %v292
      %v463 = vsel %vm431, %v447, %v299
      %v464 = vsel %vm432, %v448, %v306
      %v465 = vsel %vm433, %v449, %v313
      %v466 = vsel %vm434, %v450, %v320
      %v467 = vsel %vm435, %v451, %v327
      %v468 = vsel %vm436, %v452, %v334
      %v469 = vsel %vm437, %v453, %v341
      %v470 = vsel %vm438, %v454, %v348
      %v471 = vsel %vm439, %v455, %v355
      %v472 = vsel %vm440, %v456, %v362
      %v473 = vsel %vm441, %v457, %v369
      %v474 = vsel %vm442, %v458, %v376
      %v475 = vsel %vm443, %v459, %v383
      %v476 = vsel %vm444, %v460, %v390
      %v477 = vsel %vm445, %v461, %v397
      %vm478 = vcmp.ne.s32.totalorder %v462, 0
      %vm479 = vcmp.ne.s32.totalorder %v463, 0
      %vm480 = vcmp.ne.s32.totalorder %v464, 0
      %vm481 = vcmp.ne.s32.totalorder %v465, 0
      %vm482 = vcmp.ne.s32.totalorder %v466, 0
      %vm483 = vcmp.ne.s32.totalorder %v467, 0
      %vm484 = vcmp.ne.s32.totalorder %v468, 0
      %vm485 = vcmp.ne.s32.totalorder %v469, 0
      %vm486 = vcmp.ne.s32.totalorder %v470, 0
      %vm487 = vcmp.ne.s32.totalorder %v471, 0
      %vm488 = vcmp.ne.s32.totalorder %v472, 0
      %vm489 = vcmp.ne.s32.totalorder %v473, 0
      %vm490 = vcmp.ne.s32.totalorder %v474, 0
      %vm491 = vcmp.ne.s32.totalorder %v475, 0
      %vm492 = vcmp.ne.s32.totalorder %v476, 0
      %vm493 = vcmp.ne.s32.totalorder %v477, 0
      %vm494 = vcmp.ne.s32.totalorder %v462, 15
      %vm495 = vcmp.ne.s32.totalorder %v463, 15
      %vm496 = vcmp.ne.s32.totalorder %v464, 15
      %vm497 = vcmp.ne.s32.totalorder %v465, 15
      %vm498 = vcmp.ne.s32.totalorder %v466, 15
      %vm499 = vcmp.ne.s32.totalorder %v467, 15
      %vm500 = vcmp.ne.s32.totalorder %v468, 15
      %vm501 = vcmp.ne.s32.totalorder %v469, 15
      %vm502 = vcmp.ne.s32.totalorder %v470, 15
      %vm503 = vcmp.ne.s32.totalorder %v471, 15
      %vm504 = vcmp.ne.s32.totalorder %v472, 15
      %vm505 = vcmp.ne.s32.totalorder %v473, 15
      %vm506 = vcmp.ne.s32.totalorder %v474, 15
      %vm507 = vcmp.ne.s32.totalorder %v475, 15
      %vm508 = vcmp.ne.s32.totalorder %v476, 15
      %vm509 = vcmp.ne.s32.totalorder %v477, 15
      %v510 = vld [vmem:[%s2] sm:$0x1]
      %v511 = vld [vmem:[%s3] sm:$0x1]
      %v512 = vld [vmem:[#allocation2 + $0x7] sm:$0xff]
      %v513 = vld [vmem:[#allocation2 + $0xf] sm:$0xff]
      %v514 = vld [vmem:[#allocation2 + $0x17] sm:$0xff]
      %v515 = vld [vmem:[#allocation2 + $0x1f] sm:$0xff]
      %v516 = vld [vmem:[#allocation2 + $0x27] sm:$0xff]
      %v517 = vld [vmem:[#allocation2 + $0x2f] sm:$0xff]
      %v518 = vld [vmem:[#allocation2 + $0x37] sm:$0xff]
      %v519 = vld [vmem:[#allocation2 + $0x3f] sm:$0xff]
      %v520 = vld [vmem:[#allocation2 + $0x47] sm:$0xff]
      %v521 = vld [vmem:[#allocation2 + $0x4f] sm:$0xff]
      %v522 = vld [vmem:[#allocation2 + $0x57] sm:$0xff]
      %v523 = vld [vmem:[#allocation2 + $0x5f] sm:$0xff]
      %v524 = vld [vmem:[#allocation2 + $0x67] sm:$0xff]
      %v525 = vld [vmem:[#allocation2 + $0x6f] sm:$0xff]
      %v526 = vld [vmem:[#allocation2 + $0x77] sm:$0xff]
      %v527 = vld [vmem:[#allocation2 + $0x7f] sm:$0xff]
      %v528 = vpack.c.bf16 %v513, %v512
      %v529 = vpack.c.bf16 %v515, %v514
      %v530 = vpack.c.bf16 %v517, %v516
      %v531 = vpack.c.bf16 %v519, %v518
      %v532 = vpack.c.bf16 %v521, %v520
      %v533 = vpack.c.bf16 %v523, %v522
      %v534 = vpack.c.bf16 %v525, %v524
      %v535 = vpack.c.bf16 %v527, %v526
      %v536 = vld [vmem:[%s1] sm:$0xf]
      %v537 = vld [vmem:[%s1 + $0x4] sm:$0xf]
      %v538 = vld [vmem:[%s1 + $0x8] sm:$0xf]
      %v539 = vld [vmem:[%s1 + $0xc] sm:$0xf]
      %v540 = vld [vmem:[%s1 + $0x10] sm:$0xf]
      %v541 = vld [vmem:[%s1 + $0x14] sm:$0xf]
      %v542 = vld [vmem:[%s1 + $0x18] sm:$0xf]
      %v543 = vld [vmem:[%s1 + $0x1c] sm:$0xf]
      %v544 = vld [vmem:[%s1 + $0x20] sm:$0xf]
      %v545 = vld [vmem:[%s1 + $0x24] sm:$0xf]
      %v546 = vld [vmem:[%s1 + $0x28] sm:$0xf]
      %v547 = vld [vmem:[%s1 + $0x2c] sm:$0xf]
      %v548 = vld [vmem:[%s1 + $0x30] sm:$0xf]
      %v549 = vld [vmem:[%s1 + $0x34] sm:$0xf]
      %v550 = vld [vmem:[%s1 + $0x38] sm:$0xf]
      %v551 = vld [vmem:[%s1 + $0x3c] sm:$0xf]
      %v552 = vld [vmem:[#allocation2 + $0x87] sm:$0xff]
      %v553 = vld [vmem:[#allocation2 + $0x8f] sm:$0xff]
      %v554 = vpack.c.bf16 %v553, %v552
      %s555 = scalar_lea.vmem %s1, 192
      %v556 = vld [vmem:[%s555] sm:$0xf]
      %v557 = vld [vmem:[%s555 + $0x4] sm:$0xf]
      %v558 = vld [vmem:[%s555 + $0x8] sm:$0xf]
      %v559 = vld [vmem:[%s555 + $0xc] sm:$0xf]
      %v560 = vld [vmem:[%s555 + $0x10] sm:$0xf]
      %v561 = vld [vmem:[%s555 + $0x14] sm:$0xf]
      %v562 = vld [vmem:[%s555 + $0x18] sm:$0xf]
      %v563 = vld [vmem:[%s555 + $0x1c] sm:$0xf]
      %v564 = vld [vmem:[%s555 + $0x20] sm:$0xf]
      %v565 = vld [vmem:[%s555 + $0x24] sm:$0xf]
      %v566 = vld [vmem:[%s555 + $0x28] sm:$0xf]
      %v567 = vld [vmem:[%s555 + $0x2c] sm:$0xf]
      %v568 = vld [vmem:[%s555 + $0x30] sm:$0xf]
      %v569 = vld [vmem:[%s555 + $0x34] sm:$0xf]
      %v570 = vld [vmem:[%s555 + $0x38] sm:$0xf]
      %v571 = vld [vmem:[%s555 + $0x3c] sm:$0xf]
      %v588 = vunpack.c.l.b16 %v556
      %v589 = vunpack.c.l.b16 %v557
      %v590 = vunpack.c.l.b16 %v558
      %v591 = vunpack.c.l.b16 %v559
      %v592 = vunpack.c.l.b16 %v560
      %v593 = vunpack.c.l.b16 %v561
      %v594 = vunpack.c.l.b16 %v562
      %v595 = vunpack.c.l.b16 %v563
      %v596 = vunpack.c.l.b16 %v564
      %v597 = vunpack.c.l.b16 %v565
      %v598 = vunpack.c.l.b16 %v566
      %v599 = vunpack.c.l.b16 %v567
      %v600 = vunpack.c.l.b16 %v568
      %v601 = vunpack.c.l.b16 %v569
      %v602 = vunpack.c.l.b16 %v570
      %v603 = vunpack.c.l.b16 %v571
      %v604 = vpack.c.b16 %v589, %v588
      %v605 = vpack.c.b16 %v591, %v590
      %v606 = vpack.c.b16 %v593, %v592
      %v607 = vpack.c.b16 %v595, %v594
      %v608 = vpack.c.b16 %v597, %v596
      %v609 = vpack.c.b16 %v599, %v598
      %v610 = vpack.c.b16 %v601, %v600
      %v611 = vpack.c.b16 %v603, %v602
      %620 = vmatprep.subr.bf16.mxu0 0
      %621 = vmatpush1.bf16.msra.mxu0 %v611
      %622 = vmatprep.subr.bf16.mxu0 0
      %623 = vmatpush1.bf16.msra.mxu0 %v610
      %624 = vmatprep.subr.bf16.mxu0 0
      %625 = vmatpush1.bf16.msra.mxu0 %v609
      %626 = vmatprep.subr.bf16.mxu0 0
      %627 = vmatpush1.bf16.msra.mxu0 %v608
      %628 = vmatprep.subr.bf16.mxu0 0
      %629 = vmatpush1.bf16.msra.mxu0 %v607
      %630 = vmatprep.subr.bf16.mxu0 0
      %631 = vmatpush1.bf16.msra.mxu0 %v606
      %632 = vmatprep.subr.bf16.mxu0 0
      %633 = vmatpush1.bf16.msra.mxu0 %v605
      %634 = vmatprep.subr.bf16.mxu0 0
      %635 = vmatpush1.bf16.msra.mxu0 %v604
      %636 = vmatprep.subr.bf16.mxu0 0
      %637 = vmatpush2.bf16.msra.mxu0 0
      %638 = vmatprep.subr.bf16.mxu0 0
      %639 = vmatpush2.bf16.msra.mxu0 0
      %640 = vmatprep.subr.bf16.mxu0 0
      %641 = vmatpush2.bf16.msra.mxu0 0
      %642 = vmatprep.subr.bf16.mxu0 0
      %643 = vmatpush2.bf16.msra.mxu0 0
      %644 = vmatprep.subr.bf16.mxu0 0
      %645 = vmatpush2.bf16.msra.mxu0 0
      %646 = vmatprep.subr.bf16.mxu0 0
      %647 = vmatpush2.bf16.msra.mxu0 0
      %648 = vmatprep.subr.bf16.mxu0 0
      %649 = vmatpush2.bf16.msra.mxu0 0
      %650 = vmatprep.subr.bf16.mxu0 0
      %651 = vmatpush2.bf16.msra.mxu0 0
      %652 = vmatprep.mubr.bf16.mxu0 0
      %653 = vmatmul.mubr.bf16.gmra.mxu0 %v529
      %v654 = vpop.f32.mrf.mxu0
      %v655 = vadd.f32 0.0, %v654
      %v656 = vpop.f32.mrf.mxu0
      %v657 = vpop.f32.mrf.mxu0
      %v658 = vadd.f32 0.0, %v657
      %v659 = vpop.f32.mrf.mxu0
      %660 = vmatprep.mubr.bf16.mxu0 0
      %661 = vmatmul.mubr.bf16.gmra.mxu0 %v530
      %v662 = vpop.f32.mrf.mxu0
      %v663 = vadd.f32 0.0, %v662
      %v664 = vpop.f32.mrf.mxu0
      %v665 = vpop.f32.mrf.mxu0
      %v666 = vadd.f32 0.0, %v665
      %v667 = vpop.f32.mrf.mxu0
      %668 = vmatprep.mubr.bf16.mxu0 0
      %669 = vmatmul.mubr.bf16.gmra.mxu0 %v531
      %v670 = vpop.f32.mrf.mxu0
      %v671 = vadd.f32 0.0, %v670
      %v672 = vpop.f32.mrf.mxu0
      %v673 = vpop.f32.mrf.mxu0
      %v674 = vadd.f32 0.0, %v673
      %v675 = vpop.f32.mrf.mxu0
      %676 = vmatprep.mubr.bf16.mxu0 0
      %677 = vmatmul.mubr.bf16.gmra.mxu0 %v532
      %v678 = vpop.f32.mrf.mxu0
      %v679 = vadd.f32 0.0, %v678
      %v680 = vpop.f32.mrf.mxu0
      %v681 = vpop.f32.mrf.mxu0
      %v682 = vadd.f32 0.0, %v681
      %v683 = vpop.f32.mrf.mxu0
      %684 = vmatprep.mubr.bf16.mxu0 0
      %685 = vmatmul.mubr.bf16.gmra.mxu0 %v533
      %v686 = vpop.f32.mrf.mxu0
      %v687 = vadd.f32 0.0, %v686
      %v688 = vpop.f32.mrf.mxu0
      %v689 = vpop.f32.mrf.mxu0
      %v690 = vadd.f32 0.0, %v689
      %v691 = vpop.f32.mrf.mxu0
      %692 = vmatprep.mubr.bf16.mxu0 0
      %693 = vmatmul.mubr.bf16.gmra.mxu0 %v534
      %v694 = vpop.f32.mrf.mxu0
      %v695 = vadd.f32 0.0, %v694
      %v696 = vpop.f32.mrf.mxu0
      %v697 = vpop.f32.mrf.mxu0
      %v698 = vadd.f32 0.0, %v697
      %v699 = vpop.f32.mrf.mxu0
      %700 = vmatprep.mubr.bf16.mxu0 0
      %701 = vmatmul.mubr.bf16.gmra.mxu0 %v535
      %v702 = vpop.f32.mrf.mxu0
      %v703 = vadd.f32 0.0, %v702
      %v704 = vpop.f32.mrf.mxu0
      %v705 = vpop.f32.mrf.mxu0
      %v706 = vadd.f32 0.0, %v705
      %v707 = vpop.f32.mrf.mxu0
      %708 = vmatprep.mubr.bf16.mxu0 0
      %709 = vmatmul.mubr.bf16.gmra.mxu0 %v554
      %v710 = vpop.f32.mrf.mxu0
      %v711 = vadd.f32 0.0, %v710
      %v712 = vpop.f32.mrf.mxu0
      %v713 = vpop.f32.mrf.mxu0
      %v714 = vadd.f32 0.0, %v713
      %v715 = vpop.f32.mrf.mxu0
      %716 = vdwg.mxu0
      %v733 = vunpack.c.l.b16 %v536
      %v734 = vunpack.c.l.b16 %v537
      %v735 = vunpack.c.l.b16 %v538
      %v736 = vunpack.c.l.b16 %v539
      %v737 = vunpack.c.l.b16 %v540
      %v738 = vunpack.c.l.b16 %v541
      %v739 = vunpack.c.l.b16 %v542
      %v740 = vunpack.c.l.b16 %v543
      %v741 = vunpack.c.l.b16 %v544
      %v742 = vunpack.c.l.b16 %v545
      %v743 = vunpack.c.l.b16 %v546
      %v744 = vunpack.c.l.b16 %v547
      %v745 = vunpack.c.l.b16 %v548
      %v746 = vunpack.c.l.b16 %v549
      %v747 = vunpack.c.l.b16 %v550
      %v748 = vunpack.c.l.b16 %v551
      %v749 = vpack.c.b16 %v734, %v733
      %v750 = vpack.c.b16 %v736, %v735
      %v751 = vpack.c.b16 %v738, %v737
      %v752 = vpack.c.b16 %v740, %v739
      %v753 = vpack.c.b16 %v742, %v741
      %v754 = vpack.c.b16 %v744, %v743
      %v755 = vpack.c.b16 %v746, %v745
      %v756 = vpack.c.b16 %v748, %v747
      %765 = vmatprep.subr.bf16.mxu0 0
      %766 = vmatpush1.bf16.msra.mxu0 %v756
      %767 = vmatprep.subr.bf16.mxu0 0
      %768 = vmatpush1.bf16.msra.mxu0 %v755
      %769 = vmatprep.subr.bf16.mxu0 0
      %770 = vmatpush1.bf16.msra.mxu0 %v754
      %771 = vmatprep.subr.bf16.mxu0 0
      %772 = vmatpush1.bf16.msra.mxu0 %v753
      %773 = vmatprep.subr.bf16.mxu0 0
      %774 = vmatpush1.bf16.msra.mxu0 %v752
      %775 = vmatprep.subr.bf16.mxu0 0
      %776 = vmatpush1.bf16.msra.mxu0 %v751
      %777 = vmatprep.subr.bf16.mxu0 0
      %778 = vmatpush1.bf16.msra.mxu0 %v750
      %779 = vmatprep.subr.bf16.mxu0 0
      %780 = vmatpush1.bf16.msra.mxu0 %v749
      %781 = vmatprep.subr.bf16.mxu0 0
      %782 = vmatpush2.bf16.msra.mxu0 0
      %783 = vmatprep.subr.bf16.mxu0 0
      %784 = vmatpush2.bf16.msra.mxu0 0
      %785 = vmatprep.subr.bf16.mxu0 0
      %786 = vmatpush2.bf16.msra.mxu0 0
      %787 = vmatprep.subr.bf16.mxu0 0
      %788 = vmatpush2.bf16.msra.mxu0 0
      %789 = vmatprep.subr.bf16.mxu0 0
      %790 = vmatpush2.bf16.msra.mxu0 0
      %791 = vmatprep.subr.bf16.mxu0 0
      %792 = vmatpush2.bf16.msra.mxu0 0
      %793 = vmatprep.subr.bf16.mxu0 0
      %794 = vmatpush2.bf16.msra.mxu0 0
      %795 = vmatprep.subr.bf16.mxu0 0
      %796 = vmatpush2.bf16.msra.mxu0 0
      %797 = vmatprep.mubr.bf16.mxu0 0
      %798 = vmatmul.mubr.bf16.gmra.mxu0 %v528
      %v799 = vpop.f32.mrf.mxu0
      %v800 = vadd.f32 %v655, %v799
      %v801 = vpop.f32.mrf.mxu0
      %v802 = vpop.f32.mrf.mxu0
      %v803 = vadd.f32 %v658, %v802
      %v804 = vpop.f32.mrf.mxu0
      %805 = vmatprep.mubr.bf16.mxu0 0
      %806 = vmatmul.mubr.bf16.gmra.mxu0 %v529
      %v807 = vpop.f32.mrf.mxu0
      %v808 = vadd.f32 %v663, %v807
      %v809 = vpop.f32.mrf.mxu0
      %v810 = vpop.f32.mrf.mxu0
      %v811 = vadd.f32 %v666, %v810
      %v812 = vpop.f32.mrf.mxu0
      %813 = vmatprep.mubr.bf16.mxu0 0
      %814 = vmatmul.mubr.bf16.gmra.mxu0 %v530
      %v815 = vpop.f32.mrf.mxu0
      %v816 = vadd.f32 %v671, %v815
      %v817 = vpop.f32.mrf.mxu0
      %v818 = vpop.f32.mrf.mxu0
      %v819 = vadd.f32 %v674, %v818
      %v820 = vpop.f32.mrf.mxu0
      %821 = vmatprep.mubr.bf16.mxu0 0
      %822 = vmatmul.mubr.bf16.gmra.mxu0 %v531
      %v823 = vpop.f32.mrf.mxu0
      %v824 = vadd.f32 %v679, %v823
      %v825 = vpop.f32.mrf.mxu0
      %v826 = vpop.f32.mrf.mxu0
      %v827 = vadd.f32 %v682, %v826
      %v828 = vpop.f32.mrf.mxu0
      %829 = vmatprep.mubr.bf16.mxu0 0
      %830 = vmatmul.mubr.bf16.gmra.mxu0 %v532
      %v831 = vpop.f32.mrf.mxu0
      %v832 = vadd.f32 %v687, %v831
      %v833 = vpop.f32.mrf.mxu0
      %v834 = vpop.f32.mrf.mxu0
      %v835 = vadd.f32 %v690, %v834
      %v836 = vpop.f32.mrf.mxu0
      %837 = vmatprep.mubr.bf16.mxu0 0
      %838 = vmatmul.mubr.bf16.gmra.mxu0 %v533
      %v839 = vpop.f32.mrf.mxu0
      %v840 = vadd.f32 %v695, %v839
      %v841 = vpop.f32.mrf.mxu0
      %v842 = vpop.f32.mrf.mxu0
      %v843 = vadd.f32 %v698, %v842
      %v844 = vpop.f32.mrf.mxu0
      %845 = vmatprep.mubr.bf16.mxu0 0
      %846 = vmatmul.mubr.bf16.gmra.mxu0 %v534
      %v847 = vpop.f32.mrf.mxu0
      %v848 = vadd.f32 %v703, %v847
      %v849 = vpop.f32.mrf.mxu0
      %v850 = vpop.f32.mrf.mxu0
      %v851 = vadd.f32 %v706, %v850
      %v852 = vpop.f32.mrf.mxu0
      %853 = vmatprep.mubr.bf16.mxu0 0
      %854 = vmatmul.mubr.bf16.gmra.mxu0 %v535
      %v855 = vpop.f32.mrf.mxu0
      %v856 = vadd.f32 %v711, %v855
      %v857 = vpop.f32.mrf.mxu0
      %v858 = vpop.f32.mrf.mxu0
      %v859 = vadd.f32 %v714, %v858
      %v860 = vpop.f32.mrf.mxu0
      %861 = vdwg.mxu0
      %v862 = vld [vmem:[#allocation2 + $0x27] sm:$0xff]
      %v863 = vld [vmem:[#allocation2 + $0x2f] sm:$0xff]
      %v864 = vld [vmem:[#allocation2 + $0x37] sm:$0xff]
      %v865 = vld [vmem:[#allocation2 + $0x3f] sm:$0xff]
      %v866 = vld [vmem:[#allocation2 + $0x47] sm:$0xff]
      %v867 = vld [vmem:[#allocation2 + $0x4f] sm:$0xff]
      %v868 = vld [vmem:[#allocation2 + $0x57] sm:$0xff]
      %v869 = vld [vmem:[#allocation2 + $0x5f] sm:$0xff]
      %v870 = vld [vmem:[#allocation2 + $0x67] sm:$0xff]
      %v871 = vld [vmem:[#allocation2 + $0x6f] sm:$0xff]
      %v872 = vld [vmem:[#allocation2 + $0x77] sm:$0xff]
      %v873 = vld [vmem:[#allocation2 + $0x7f] sm:$0xff]
      %v874 = vld [vmem:[#allocation2 + $0x87] sm:$0xff]
      %v875 = vld [vmem:[#allocation2 + $0x8f] sm:$0xff]
      %v876 = vld [vmem:[#allocation2 + $0x97] sm:$0xff]
      %v877 = vld [vmem:[#allocation2 + $0x9f] sm:$0xff]
      %v878 = vpack.c.bf16 %v863, %v862
      %v879 = vpack.c.bf16 %v865, %v864
      %v880 = vpack.c.bf16 %v867, %v866
      %v881 = vpack.c.bf16 %v869, %v868
      %v882 = vpack.c.bf16 %v871, %v870
      %v883 = vpack.c.bf16 %v873, %v872
      %v884 = vpack.c.bf16 %v875, %v874
      %v885 = vpack.c.bf16 %v877, %v876
      %s886 = scalar_lea.vmem %s1, 384
      %v887 = vld [vmem:[%s886] sm:$0xf]
      %v888 = vld [vmem:[%s886 + $0x4] sm:$0xf]
      %v889 = vld [vmem:[%s886 + $0x8] sm:$0xf]
      %v890 = vld [vmem:[%s886 + $0xc] sm:$0xf]
      %v891 = vld [vmem:[%s886 + $0x10] sm:$0xf]
      %v892 = vld [vmem:[%s886 + $0x14] sm:$0xf]
      %v893 = vld [vmem:[%s886 + $0x18] sm:$0xf]
      %v894 = vld [vmem:[%s886 + $0x1c] sm:$0xf]
      %v895 = vld [vmem:[%s886 + $0x20] sm:$0xf]
      %v896 = vld [vmem:[%s886 + $0x24] sm:$0xf]
      %v897 = vld [vmem:[%s886 + $0x28] sm:$0xf]
      %v898 = vld [vmem:[%s886 + $0x2c] sm:$0xf]
      %v899 = vld [vmem:[%s886 + $0x30] sm:$0xf]
      %v900 = vld [vmem:[%s886 + $0x34] sm:$0xf]
      %v901 = vld [vmem:[%s886 + $0x38] sm:$0xf]
      %v902 = vld [vmem:[%s886 + $0x3c] sm:$0xf]
      %v919 = vunpack.c.l.b16 %v887
      %v920 = vunpack.c.l.b16 %v888
      %v921 = vunpack.c.l.b16 %v889
      %v922 = vunpack.c.l.b16 %v890
      %v923 = vunpack.c.l.b16 %v891
      %v924 = vunpack.c.l.b16 %v892
      %v925 = vunpack.c.l.b16 %v893
      %v926 = vunpack.c.l.b16 %v894
      %v927 = vunpack.c.l.b16 %v895
      %v928 = vunpack.c.l.b16 %v896
      %v929 = vunpack.c.l.b16 %v897
      %v930 = vunpack.c.l.b16 %v898
      %v931 = vunpack.c.l.b16 %v899
      %v932 = vunpack.c.l.b16 %v900
      %v933 = vunpack.c.l.b16 %v901
      %v934 = vunpack.c.l.b16 %v902
      %v935 = vpack.c.b16 %v920, %v919
      %v936 = vpack.c.b16 %v922, %v921
      %v937 = vpack.c.b16 %v924, %v923
      %v938 = vpack.c.b16 %v926, %v925
      %v939 = vpack.c.b16 %v928, %v927
      %v940 = vpack.c.b16 %v930, %v929
      %v941 = vpack.c.b16 %v932, %v931
      %v942 = vpack.c.b16 %v934, %v933
      %951 = vmatprep.subr.bf16.mxu0 0
      %952 = vmatpush1.bf16.msra.mxu0 %v942
      %953 = vmatprep.subr.bf16.mxu0 0
      %954 = vmatpush1.bf16.msra.mxu0 %v941
      %955 = vmatprep.subr.bf16.mxu0 0
      %956 = vmatpush1.bf16.msra.mxu0 %v940
      %957 = vmatprep.subr.bf16.mxu0 0
      %958 = vmatpush1.bf16.msra.mxu0 %v939
      %959 = vmatprep.subr.bf16.mxu0 0
      %960 = vmatpush1.bf16.msra.mxu0 %v938
      %961 = vmatprep.subr.bf16.mxu0 0
      %962 = vmatpush1.bf16.msra.mxu0 %v937
      %963 = vmatprep.subr.bf16.mxu0 0
      %964 = vmatpush1.bf16.msra.mxu0 %v936
      %965 = vmatprep.subr.bf16.mxu0 0
      %966 = vmatpush1.bf16.msra.mxu0 %v935
      %967 = vmatprep.subr.bf16.mxu0 0
      %968 = vmatpush2.bf16.msra.mxu0 0
      %969 = vmatprep.subr.bf16.mxu0 0
      %970 = vmatpush2.bf16.msra.mxu0 0
      %971 = vmatprep.subr.bf16.mxu0 0
      %972 = vmatpush2.bf16.msra.mxu0 0
      %973 = vmatprep.subr.bf16.mxu0 0
      %974 = vmatpush2.bf16.msra.mxu0 0
      %975 = vmatprep.subr.bf16.mxu0 0
      %976 = vmatpush2.bf16.msra.mxu0 0
      %977 = vmatprep.subr.bf16.mxu0 0
      %978 = vmatpush2.bf16.msra.mxu0 0
      %979 = vmatprep.subr.bf16.mxu0 0
      %980 = vmatpush2.bf16.msra.mxu0 0
      %981 = vmatprep.subr.bf16.mxu0 0
      %982 = vmatpush2.bf16.msra.mxu0 0
      %983 = vmatprep.mubr.bf16.mxu0 0
      %984 = vmatmul.mubr.bf16.gmra.mxu0 %v878
      %v985 = vpop.f32.mrf.mxu0
      %v986 = vadd.f32 0.0, %v985
      %v987 = vpop.f32.mrf.mxu0
      %v988 = vpop.f32.mrf.mxu0
      %v989 = vadd.f32 0.0, %v988
      %v990 = vpop.f32.mrf.mxu0
      %991 = vmatprep.mubr.bf16.mxu0 0
      %992 = vmatmul.mubr.bf16.gmra.mxu0 %v879
      %v993 = vpop.f32.mrf.mxu0
      %v994 = vadd.f32 0.0, %v993
      %v995 = vpop.f32.mrf.mxu0
      %v996 = vpop.f32.mrf.mxu0
      %v997 = vadd.f32 0.0, %v996
      %v998 = vpop.f32.mrf.mxu0
      %999 = vmatprep.mubr.bf16.mxu0 0
      %1000 = vmatmul.mubr.bf16.gmra.mxu0 %v880
      %v1001 = vpop.f32.mrf.mxu0
      %v1002 = vadd.f32 0.0, %v1001
      %v1003 = vpop.f32.mrf.mxu0
      %v1004 = vpop.f32.mrf.mxu0
      %v1005 = vadd.f32 0.0, %v1004
      %v1006 = vpop.f32.mrf.mxu0
      %1007 = vmatprep.mubr.bf16.mxu0 0
      %1008 = vmatmul.mubr.bf16.gmra.mxu0 %v881
      %v1009 = vpop.f32.mrf.mxu0
      %v1010 = vadd.f32 0.0, %v1009
      %v1011 = vpop.f32.mrf.mxu0
      %v1012 = vpop.f32.mrf.mxu0
      %v1013 = vadd.f32 0.0, %v1012
      %v1014 = vpop.f32.mrf.mxu0
      %1015 = vmatprep.mubr.bf16.mxu0 0
      %1016 = vmatmul.mubr.bf16.gmra.mxu0 %v882
      %v1017 = vpop.f32.mrf.mxu0
      %v1018 = vadd.f32 0.0, %v1017
      %v1019 = vpop.f32.mrf.mxu0
      %v1020 = vpop.f32.mrf.mxu0
      %v1021 = vadd.f32 0.0, %v1020
      %v1022 = vpop.f32.mrf.mxu0
      %1023 = vmatprep.mubr.bf16.mxu0 0
      %1024 = vmatmul.mubr.bf16.gmra.mxu0 %v883
      %v1025 = vpop.f32.mrf.mxu0
      %v1026 = vadd.f32 0.0, %v1025
      %v1027 = vpop.f32.mrf.mxu0
      %v1028 = vpop.f32.mrf.mxu0
      %v1029 = vadd.f32 0.0, %v1028
      %v1030 = vpop.f32.mrf.mxu0
      %1031 = vmatprep.mubr.bf16.mxu0 0
      %1032 = vmatmul.mubr.bf16.gmra.mxu0 %v884
      %v1033 = vpop.f32.mrf.mxu0
      %v1034 = vadd.f32 0.0, %v1033
      %v1035 = vpop.f32.mrf.mxu0
      %v1036 = vpop.f32.mrf.mxu0
      %v1037 = vadd.f32 0.0, %v1036
      %v1038 = vpop.f32.mrf.mxu0
      %1039 = vmatprep.mubr.bf16.mxu0 0
      %1040 = vmatmul.mubr.bf16.gmra.mxu0 %v885
      %v1041 = vpop.f32.mrf.mxu0
      %v1042 = vadd.f32 0.0, %v1041
      %v1043 = vpop.f32.mrf.mxu0
      %v1044 = vpop.f32.mrf.mxu0
      %v1045 = vadd.f32 0.0, %v1044
      %v1046 = vpop.f32.mrf.mxu0
      %1047 = vdwg.mxu0
      %v1048 = vadd.f32 %v800, %v986
      %v1049 = vadd.f32 %v803, %v989
      %v1050 = vadd.f32 %v808, %v994
      %v1051 = vadd.f32 %v811, %v997
      %v1052 = vadd.f32 %v816, %v1002
      %v1053 = vadd.f32 %v819, %v1005
      %v1054 = vadd.f32 %v824, %v1010
      %v1055 = vadd.f32 %v827, %v1013
      %v1056 = vadd.f32 %v832, %v1018
      %v1057 = vadd.f32 %v835, %v1021
      %v1058 = vadd.f32 %v840, %v1026
      %v1059 = vadd.f32 %v843, %v1029
      %v1060 = vadd.f32 %v848, %v1034
      %v1061 = vadd.f32 %v851, %v1037
      %v1062 = vadd.f32 %v856, %v1042
      %v1063 = vadd.f32 %v859, %v1045
      %v1064 = vld [vmem:[#allocation2 + $0x8] sm:$0xff]
      %v1065 = vld [vmem:[#allocation2 + $0x10] sm:$0xff]
      %v1066 = vld [vmem:[#allocation2 + $0x18] sm:$0xff]
      %v1067 = vld [vmem:[#allocation2 + $0x20] sm:$0xff]
      %v1068 = vld [vmem:[#allocation2 + $0x28] sm:$0xff]
      %v1069 = vld [vmem:[#allocation2 + $0x30] sm:$0xff]
      %v1070 = vld [vmem:[#allocation2 + $0x38] sm:$0xff]
      %v1071 = vld [vmem:[#allocation2 + $0x40] sm:$0xff]
      %v1072 = vld [vmem:[#allocation2 + $0x48] sm:$0xff]
      %v1073 = vld [vmem:[#allocation2 + $0x50] sm:$0xff]
      %v1074 = vld [vmem:[#allocation2 + $0x58] sm:$0xff]
      %v1075 = vld [vmem:[#allocation2 + $0x60] sm:$0xff]
      %v1076 = vld [vmem:[#allocation2 + $0x68] sm:$0xff]
      %v1077 = vld [vmem:[#allocation2 + $0x70] sm:$0xff]
      %v1078 = vld [vmem:[#allocation2 + $0x78] sm:$0xff]
      %v1079 = vld [vmem:[#allocation2 + $0x80] sm:$0xff]
      %v1080 = vpack.c.bf16 %v1065, %v1064
      %v1081 = vpack.c.bf16 %v1067, %v1066
      %v1082 = vpack.c.bf16 %v1069, %v1068
      %v1083 = vpack.c.bf16 %v1071, %v1070
      %v1084 = vpack.c.bf16 %v1073, %v1072
      %v1085 = vpack.c.bf16 %v1075, %v1074
      %v1086 = vpack.c.bf16 %v1077, %v1076
      %v1087 = vpack.c.bf16 %v1079, %v1078
      %s1088 = scalar_lea.vmem %s1, 64
      %v1089 = vld [vmem:[%s1088] sm:$0xf]
      %v1090 = vld [vmem:[%s1088 + $0x4] sm:$0xf]
      %v1091 = vld [vmem:[%s1088 + $0x8] sm:$0xf]
      %v1092 = vld [vmem:[%s1088 + $0xc] sm:$0xf]
      %v1093 = vld [vmem:[%s1088 + $0x10] sm:$0xf]
      %v1094 = vld [vmem:[%s1088 + $0x14] sm:$0xf]
      %v1095 = vld [vmem:[%s1088 + $0x18] sm:$0xf]
      %v1096 = vld [vmem:[%s1088 + $0x1c] sm:$0xf]
      %v1097 = vld [vmem:[%s1088 + $0x20] sm:$0xf]
      %v1098 = vld [vmem:[%s1088 + $0x24] sm:$0xf]
      %v1099 = vld [vmem:[%s1088 + $0x28] sm:$0xf]
      %v1100 = vld [vmem:[%s1088 + $0x2c] sm:$0xf]
      %v1101 = vld [vmem:[%s1088 + $0x30] sm:$0xf]
      %v1102 = vld [vmem:[%s1088 + $0x34] sm:$0xf]
      %v1103 = vld [vmem:[%s1088 + $0x38] sm:$0xf]
      %v1104 = vld [vmem:[%s1088 + $0x3c] sm:$0xf]
      %v1105 = vld [vmem:[#allocation2 + $0x88] sm:$0xff]
      %v1106 = vld [vmem:[#allocation2 + $0x90] sm:$0xff]
      %v1107 = vpack.c.bf16 %v1106, %v1105
      %s1108 = scalar_lea.vmem %s1, 256
      %v1109 = vld [vmem:[%s1108] sm:$0xf]
      %v1110 = vld [vmem:[%s1108 + $0x4] sm:$0xf]
      %v1111 = vld [vmem:[%s1108 + $0x8] sm:$0xf]
      %v1112 = vld [vmem:[%s1108 + $0xc] sm:$0xf]
      %v1113 = vld [vmem:[%s1108 + $0x10] sm:$0xf]
      %v1114 = vld [vmem:[%s1108 + $0x14] sm:$0xf]
      %v1115 = vld [vmem:[%s1108 + $0x18] sm:$0xf]
      %v1116 = vld [vmem:[%s1108 + $0x1c] sm:$0xf]
      %v1117 = vld [vmem:[%s1108 + $0x20] sm:$0xf]
      %v1118 = vld [vmem:[%s1108 + $0x24] sm:$0xf]
      %v1119 = vld [vmem:[%s1108 + $0x28] sm:$0xf]
      %v1120 = vld [vmem:[%s1108 + $0x2c] sm:$0xf]
      %v1121 = vld [vmem:[%s1108 + $0x30] sm:$0xf]
      %v1122 = vld [vmem:[%s1108 + $0x34] sm:$0xf]
      %v1123 = vld [vmem:[%s1108 + $0x38] sm:$0xf]
      %v1124 = vld [vmem:[%s1108 + $0x3c] sm:$0xf]
      %v1141 = vunpack.c.l.b16 %v1109
      %v1142 = vunpack.c.l.b16 %v1110
      %v1143 = vunpack.c.l.b16 %v1111
      %v1144 = vunpack.c.l.b16 %v1112
      %v1145 = vunpack.c.l.b16 %v1113
      %v1146 = vunpack.c.l.b16 %v1114
      %v1147 = vunpack.c.l.b16 %v1115
      %v1148 = vunpack.c.l.b16 %v1116
      %v1149 = vunpack.c.l.b16 %v1117
      %v1150 = vunpack.c.l.b16 %v1118
      %v1151 = vunpack.c.l.b16 %v1119
      %v1152 = vunpack.c.l.b16 %v1120
      %v1153 = vunpack.c.l.b16 %v1121
      %v1154 = vunpack.c.l.b16 %v1122
      %v1155 = vunpack.c.l.b16 %v1123
      %v1156 = vunpack.c.l.b16 %v1124
      %v1157 = vpack.c.b16 %v1142, %v1141
      %v1158 = vpack.c.b16 %v1144, %v1143
      %v1159 = vpack.c.b16 %v1146, %v1145
      %v1160 = vpack.c.b16 %v1148, %v1147
      %v1161 = vpack.c.b16 %v1150, %v1149
      %v1162 = vpack.c.b16 %v1152, %v1151
      %v1163 = vpack.c.b16 %v1154, %v1153
      %v1164 = vpack.c.b16 %v1156, %v1155
      %1173 = vmatprep.subr.bf16.mxu0 0
      %1174 = vmatpush1.bf16.msra.mxu0 %v1164
      %1175 = vmatprep.subr.bf16.mxu0 0
      %1176 = vmatpush1.bf16.msra.mxu0 %v1163
      %1177 = vmatprep.subr.bf16.mxu0 0
      %1178 = vmatpush1.bf16.msra.mxu0 %v1162
      %1179 = vmatprep.subr.bf16.mxu0 0
      %1180 = vmatpush1.bf16.msra.mxu0 %v1161
      %1181 = vmatprep.subr.bf16.mxu0 0
      %1182 = vmatpush1.bf16.msra.mxu0 %v1160
      %1183 = vmatprep.subr.bf16.mxu0 0
      %1184 = vmatpush1.bf16.msra.mxu0 %v1159
      %1185 = vmatprep.subr.bf16.mxu0 0
      %1186 = vmatpush1.bf16.msra.mxu0 %v1158
      %1187 = vmatprep.subr.bf16.mxu0 0
      %1188 = vmatpush1.bf16.msra.mxu0 %v1157
      %1189 = vmatprep.subr.bf16.mxu0 0
      %1190 = vmatpush2.bf16.msra.mxu0 0
      %1191 = vmatprep.subr.bf16.mxu0 0
      %1192 = vmatpush2.bf16.msra.mxu0 0
      %1193 = vmatprep.subr.bf16.mxu0 0
      %1194 = vmatpush2.bf16.msra.mxu0 0
      %1195 = vmatprep.subr.bf16.mxu0 0
      %1196 = vmatpush2.bf16.msra.mxu0 0
      %1197 = vmatprep.subr.bf16.mxu0 0
      %1198 = vmatpush2.bf16.msra.mxu0 0
      %1199 = vmatprep.subr.bf16.mxu0 0
      %1200 = vmatpush2.bf16.msra.mxu0 0
      %1201 = vmatprep.subr.bf16.mxu0 0
      %1202 = vmatpush2.bf16.msra.mxu0 0
      %1203 = vmatprep.subr.bf16.mxu0 0
      %1204 = vmatpush2.bf16.msra.mxu0 0
      %1205 = vmatprep.mubr.bf16.mxu0 0
      %1206 = vmatmul.mubr.bf16.gmra.mxu0 %v1081
      %v1207 = vpop.f32.mrf.mxu0
      %v1208 = vadd.f32 0.0, %v1207
      %v1209 = vpop.f32.mrf.mxu0
      %v1210 = vpop.f32.mrf.mxu0
      %v1211 = vadd.f32 0.0, %v1210
      %v1212 = vpop.f32.mrf.mxu0
      %1213 = vmatprep.mubr.bf16.mxu0 0
      %1214 = vmatmul.mubr.bf16.gmra.mxu0 %v1082
      %v1215 = vpop.f32.mrf.mxu0
      %v1216 = vadd.f32 0.0, %v1215
      %v1217 = vpop.f32.mrf.mxu0
      %v1218 = vpop.f32.mrf.mxu0
      %v1219 = vadd.f32 0.0, %v1218
      %v1220 = vpop.f32.mrf.mxu0
      %1221 = vmatprep.mubr.bf16.mxu0 0
      %1222 = vmatmul.mubr.bf16.gmra.mxu0 %v1083
      %v1223 = vpop.f32.mrf.mxu0
      %v1224 = vadd.f32 0.0, %v1223
      %v1225 = vpop.f32.mrf.mxu0
      %v1226 = vpop.f32.mrf.mxu0
      %v1227 = vadd.f32 0.0, %v1226
      %v1228 = vpop.f32.mrf.mxu0
      %1229 = vmatprep.mubr.bf16.mxu0 0
      %1230 = vmatmul.mubr.bf16.gmra.mxu0 %v1084
      %v1231 = vpop.f32.mrf.mxu0
      %v1232 = vadd.f32 0.0, %v1231
      %v1233 = vpop.f32.mrf.mxu0
      %v1234 = vpop.f32.mrf.mxu0
      %v1235 = vadd.f32 0.0, %v1234
      %v1236 = vpop.f32.mrf.mxu0
      %1237 = vmatprep.mubr.bf16.mxu0 0
      %1238 = vmatmul.mubr.bf16.gmra.mxu0 %v1085
      %v1239 = vpop.f32.mrf.mxu0
      %v1240 = vadd.f32 0.0, %v1239
      %v1241 = vpop.f32.mrf.mxu0
      %v1242 = vpop.f32.mrf.mxu0
      %v1243 = vadd.f32 0.0, %v1242
      %v1244 = vpop.f32.mrf.mxu0
      %1245 = vmatprep.mubr.bf16.mxu0 0
      %1246 = vmatmul.mubr.bf16.gmra.mxu0 %v1086
      %v1247 = vpop.f32.mrf.mxu0
      %v1248 = vadd.f32 0.0, %v1247
      %v1249 = vpop.f32.mrf.mxu0
      %v1250 = vpop.f32.mrf.mxu0
      %v1251 = vadd.f32 0.0, %v1250
      %v1252 = vpop.f32.mrf.mxu0
      %1253 = vmatprep.mubr.bf16.mxu0 0
      %1254 = vmatmul.mubr.bf16.gmra.mxu0 %v1087
      %v1255 = vpop.f32.mrf.mxu0
      %v1256 = vadd.f32 0.0, %v1255
      %v1257 = vpop.f32.mrf.mxu0
      %v1258 = vpop.f32.mrf.mxu0
      %v1259 = vadd.f32 0.0, %v1258
      %v1260 = vpop.f32.mrf.mxu0
      %1261 = vmatprep.mubr.bf16.mxu0 0
      %1262 = vmatmul.mubr.bf16.gmra.mxu0 %v1107
      %v1263 = vpop.f32.mrf.mxu0
      %v1264 = vadd.f32 0.0, %v1263
      %v1265 = vpop.f32.mrf.mxu0
      %v1266 = vpop.f32.mrf.mxu0
      %v1267 = vadd.f32 0.0, %v1266
      %v1268 = vpop.f32.mrf.mxu0
      %1269 = vdwg.mxu0
      %v1286 = vunpack.c.l.b16 %v1089
      %v1287 = vunpack.c.l.b16 %v1090
      %v1288 = vunpack.c.l.b16 %v1091
      %v1289 = vunpack.c.l.b16 %v1092
      %v1290 = vunpack.c.l.b16 %v1093
      %v1291 = vunpack.c.l.b16 %v1094
      %v1292 = vunpack.c.l.b16 %v1095
      %v1293 = vunpack.c.l.b16 %v1096
      %v1294 = vunpack.c.l.b16 %v1097
      %v1295 = vunpack.c.l.b16 %v1098
      %v1296 = vunpack.c.l.b16 %v1099
      %v1297 = vunpack.c.l.b16 %v1100
      %v1298 = vunpack.c.l.b16 %v1101
      %v1299 = vunpack.c.l.b16 %v1102
      %v1300 = vunpack.c.l.b16 %v1103
      %v1301 = vunpack.c.l.b16 %v1104
      %v1302 = vpack.c.b16 %v1287, %v1286
      %v1303 = vpack.c.b16 %v1289, %v1288
      %v1304 = vpack.c.b16 %v1291, %v1290
      %v1305 = vpack.c.b16 %v1293, %v1292
      %v1306 = vpack.c.b16 %v1295, %v1294
      %v1307 = vpack.c.b16 %v1297, %v1296
      %v1308 = vpack.c.b16 %v1299, %v1298
      %v1309 = vpack.c.b16 %v1301, %v1300
      %1318 = vmatprep.subr.bf16.mxu0 0
      %1319 = vmatpush1.bf16.msra.mxu0 %v1309
      %1320 = vmatprep.subr.bf16.mxu0 0
      %1321 = vmatpush1.bf16.msra.mxu0 %v1308
      %1322 = vmatprep.subr.bf16.mxu0 0
      %1323 = vmatpush1.bf16.msra.mxu0 %v1307
      %1324 = vmatprep.subr.bf16.mxu0 0
      %1325 = vmatpush1.bf16.msra.mxu0 %v1306
      %1326 = vmatprep.subr.bf16.mxu0 0
      %1327 = vmatpush1.bf16.msra.mxu0 %v1305
      %1328 = vmatprep.subr.bf16.mxu0 0
      %1329 = vmatpush1.bf16.msra.mxu0 %v1304
      %1330 = vmatprep.subr.bf16.mxu0 0
      %1331 = vmatpush1.bf16.msra.mxu0 %v1303
      %1332 = vmatprep.subr.bf16.mxu0 0
      %1333 = vmatpush1.bf16.msra.mxu0 %v1302
      %1334 = vmatprep.subr.bf16.mxu0 0
      %1335 = vmatpush2.bf16.msra.mxu0 0
      %1336 = vmatprep.subr.bf16.mxu0 0
      %1337 = vmatpush2.bf16.msra.mxu0 0
      %1338 = vmatprep.subr.bf16.mxu0 0
      %1339 = vmatpush2.bf16.msra.mxu0 0
      %1340 = vmatprep.subr.bf16.mxu0 0
      %1341 = vmatpush2.bf16.msra.mxu0 0
      %1342 = vmatprep.subr.bf16.mxu0 0
      %1343 = vmatpush2.bf16.msra.mxu0 0
      %1344 = vmatprep.subr.bf16.mxu0 0
      %1345 = vmatpush2.bf16.msra.mxu0 0
      %1346 = vmatprep.subr.bf16.mxu0 0
      %1347 = vmatpush2.bf16.msra.mxu0 0
      %1348 = vmatprep.subr.bf16.mxu0 0
      %1349 = vmatpush2.bf16.msra.mxu0 0
      %1350 = vmatprep.mubr.bf16.mxu0 0
      %1351 = vmatmul.mubr.bf16.gmra.mxu0 %v1080
      %v1352 = vpop.f32.mrf.mxu0
      %v1353 = vadd.f32 %v1208, %v1352
      %v1354 = vpop.f32.mrf.mxu0
      %v1355 = vpop.f32.mrf.mxu0
      %v1356 = vadd.f32 %v1211, %v1355
      %v1357 = vpop.f32.mrf.mxu0
      %1358 = vmatprep.mubr.bf16.mxu0 0
      %1359 = vmatmul.mubr.bf16.gmra.mxu0 %v1081
      %v1360 = vpop.f32.mrf.mxu0
      %v1361 = vadd.f32 %v1216, %v1360
      %v1362 = vpop.f32.mrf.mxu0
      %v1363 = vpop.f32.mrf.mxu0
      %v1364 = vadd.f32 %v1219, %v1363
      %v1365 = vpop.f32.mrf.mxu0
      %1366 = vmatprep.mubr.bf16.mxu0 0
      %1367 = vmatmul.mubr.bf16.gmra.mxu0 %v1082
      %v1368 = vpop.f32.mrf.mxu0
      %v1369 = vadd.f32 %v1224, %v1368
      %v1370 = vpop.f32.mrf.mxu0
      %v1371 = vpop.f32.mrf.mxu0
      %v1372 = vadd.f32 %v1227, %v1371
      %v1373 = vpop.f32.mrf.mxu0
      %1374 = vmatprep.mubr.bf16.mxu0 0
      %1375 = vmatmul.mubr.bf16.gmra.mxu0 %v1083
      %v1376 = vpop.f32.mrf.mxu0
      %v1377 = vadd.f32 %v1232, %v1376
      %v1378 = vpop.f32.mrf.mxu0
      %v1379 = vpop.f32.mrf.mxu0
      %v1380 = vadd.f32 %v1235, %v1379
      %v1381 = vpop.f32.mrf.mxu0
      %1382 = vmatprep.mubr.bf16.mxu0 0
      %1383 = vmatmul.mubr.bf16.gmra.mxu0 %v1084
      %v1384 = vpop.f32.mrf.mxu0
      %v1385 = vadd.f32 %v1240, %v1384
      %v1386 = vpop.f32.mrf.mxu0
      %v1387 = vpop.f32.mrf.mxu0
      %v1388 = vadd.f32 %v1243, %v1387
      %v1389 = vpop.f32.mrf.mxu0
      %1390 = vmatprep.mubr.bf16.mxu0 0
      %1391 = vmatmul.mubr.bf16.gmra.mxu0 %v1085
      %v1392 = vpop.f32.mrf.mxu0
      %v1393 = vadd.f32 %v1248, %v1392
      %v1394 = vpop.f32.mrf.mxu0
      %v1395 = vpop.f32.mrf.mxu0
      %v1396 = vadd.f32 %v1251, %v1395
      %v1397 = vpop.f32.mrf.mxu0
      %1398 = vmatprep.mubr.bf16.mxu0 0
      %1399 = vmatmul.mubr.bf16.gmra.mxu0 %v1086
      %v1400 = vpop.f32.mrf.mxu0
      %v1401 = vadd.f32 %v1256, %v1400
      %v1402 = vpop.f32.mrf.mxu0
      %v1403 = vpop.f32.mrf.mxu0
      %v1404 = vadd.f32 %v1259, %v1403
      %v1405 = vpop.f32.mrf.mxu0
      %1406 = vmatprep.mubr.bf16.mxu0 0
      %1407 = vmatmul.mubr.bf16.gmra.mxu0 %v1087
      %v1408 = vpop.f32.mrf.mxu0
      %v1409 = vadd.f32 %v1264, %v1408
      %v1410 = vpop.f32.mrf.mxu0
      %v1411 = vpop.f32.mrf.mxu0
      %v1412 = vadd.f32 %v1267, %v1411
      %v1413 = vpop.f32.mrf.mxu0
      %1414 = vdwg.mxu0
      %v1415 = vld [vmem:[#allocation2 + $0x28] sm:$0xff]
      %v1416 = vld [vmem:[#allocation2 + $0x30] sm:$0xff]
      %v1417 = vld [vmem:[#allocation2 + $0x38] sm:$0xff]
      %v1418 = vld [vmem:[#allocation2 + $0x40] sm:$0xff]
      %v1419 = vld [vmem:[#allocation2 + $0x48] sm:$0xff]
      %v1420 = vld [vmem:[#allocation2 + $0x50] sm:$0xff]
      %v1421 = vld [vmem:[#allocation2 + $0x58] sm:$0xff]
      %v1422 = vld [vmem:[#allocation2 + $0x60] sm:$0xff]
      %v1423 = vld [vmem:[#allocation2 + $0x68] sm:$0xff]
      %v1424 = vld [vmem:[#allocation2 + $0x70] sm:$0xff]
      %v1425 = vld [vmem:[#allocation2 + $0x78] sm:$0xff]
      %v1426 = vld [vmem:[#allocation2 + $0x80] sm:$0xff]
      %v1427 = vld [vmem:[#allocation2 + $0x88] sm:$0xff]
      %v1428 = vld [vmem:[#allocation2 + $0x90] sm:$0xff]
      %v1429 = vld [vmem:[#allocation2 + $0x98] sm:$0xff]
      %v1430 = vld [vmem:[#allocation2 + $0xa0] sm:$0xff]
      %v1431 = vpack.c.bf16 %v1416, %v1415
      %v1432 = vpack.c.bf16 %v1418, %v1417
      %v1433 = vpack.c.bf16 %v1420, %v1419
      %v1434 = vpack.c.bf16 %v1422, %v1421
      %v1435 = vpack.c.bf16 %v1424, %v1423
      %v1436 = vpack.c.bf16 %v1426, %v1425
      %v1437 = vpack.c.bf16 %v1428, %v1427
      %v1438 = vpack.c.bf16 %v1430, %v1429
      %s1439 = scalar_lea.vmem %s1, 448
      %v1440 = vld [vmem:[%s1439] sm:$0xf]
      %v1441 = vld [vmem:[%s1439 + $0x4] sm:$0xf]
      %v1442 = vld [vmem:[%s1439 + $0x8] sm:$0xf]
      %v1443 = vld [vmem:[%s1439 + $0xc] sm:$0xf]
      %v1444 = vld [vmem:[%s1439 + $0x10] sm:$0xf]
      %v1445 = vld [vmem:[%s1439 + $0x14] sm:$0xf]
      %v1446 = vld [vmem:[%s1439 + $0x18] sm:$0xf]
      %v1447 = vld [vmem:[%s1439 + $0x1c] sm:$0xf]
      %v1448 = vld [vmem:[%s1439 + $0x20] sm:$0xf]
      %v1449 = vld [vmem:[%s1439 + $0x24] sm:$0xf]
      %v1450 = vld [vmem:[%s1439 + $0x28] sm:$0xf]
      %v1451 = vld [vmem:[%s1439 + $0x2c] sm:$0xf]
      %v1452 = vld [vmem:[%s1439 + $0x30] sm:$0xf]
      %v1453 = vld [vmem:[%s1439 + $0x34] sm:$0xf]
      %v1454 = vld [vmem:[%s1439 + $0x38] sm:$0xf]
      %v1455 = vld [vmem:[%s1439 + $0x3c] sm:$0xf]
      %v1472 = vunpack.c.l.b16 %v1440
      %v1473 = vunpack.c.l.b16 %v1441
      %v1474 = vunpack.c.l.b16 %v1442
      %v1475 = vunpack.c.l.b16 %v1443
      %v1476 = vunpack.c.l.b16 %v1444
      %v1477 = vunpack.c.l.b16 %v1445
      %v1478 = vunpack.c.l.b16 %v1446
      %v1479 = vunpack.c.l.b16 %v1447
      %v1480 = vunpack.c.l.b16 %v1448
      %v1481 = vunpack.c.l.b16 %v1449
      %v1482 = vunpack.c.l.b16 %v1450
      %v1483 = vunpack.c.l.b16 %v1451
      %v1484 = vunpack.c.l.b16 %v1452
      %v1485 = vunpack.c.l.b16 %v1453
      %v1486 = vunpack.c.l.b16 %v1454
      %v1487 = vunpack.c.l.b16 %v1455
      %v1488 = vpack.c.b16 %v1473, %v1472
      %v1489 = vpack.c.b16 %v1475, %v1474
      %v1490 = vpack.c.b16 %v1477, %v1476
      %v1491 = vpack.c.b16 %v1479, %v1478
      %v1492 = vpack.c.b16 %v1481, %v1480
      %v1493 = vpack.c.b16 %v1483, %v1482
      %v1494 = vpack.c.b16 %v1485, %v1484
      %v1495 = vpack.c.b16 %v1487, %v1486
      %1504 = vmatprep.subr.bf16.mxu0 0
      %1505 = vmatpush1.bf16.msra.mxu0 %v1495
      %1506 = vmatprep.subr.bf16.mxu0 0
      %1507 = vmatpush1.bf16.msra.mxu0 %v1494
      %1508 = vmatprep.subr.bf16.mxu0 0
      %1509 = vmatpush1.bf16.msra.mxu0 %v1493
      %1510 = vmatprep.subr.bf16.mxu0 0
      %1511 = vmatpush1.bf16.msra.mxu0 %v1492
      %1512 = vmatprep.subr.bf16.mxu0 0
      %1513 = vmatpush1.bf16.msra.mxu0 %v1491
      %1514 = vmatprep.subr.bf16.mxu0 0
      %1515 = vmatpush1.bf16.msra.mxu0 %v1490
      %1516 = vmatprep.subr.bf16.mxu0 0
      %1517 = vmatpush1.bf16.msra.mxu0 %v1489
      %1518 = vmatprep.subr.bf16.mxu0 0
      %1519 = vmatpush1.bf16.msra.mxu0 %v1488
      %1520 = vmatprep.subr.bf16.mxu0 0
      %1521 = vmatpush2.bf16.msra.mxu0 0
      %1522 = vmatprep.subr.bf16.mxu0 0
      %1523 = vmatpush2.bf16.msra.mxu0 0
      %1524 = vmatprep.subr.bf16.mxu0 0
      %1525 = vmatpush2.bf16.msra.mxu0 0
      %1526 = vmatprep.subr.bf16.mxu0 0
      %1527 = vmatpush2.bf16.msra.mxu0 0
      %1528 = vmatprep.subr.bf16.mxu0 0
      %1529 = vmatpush2.bf16.msra.mxu0 0
      %1530 = vmatprep.subr.bf16.mxu0 0
      %1531 = vmatpush2.bf16.msra.mxu0 0
      %1532 = vmatprep.subr.bf16.mxu0 0
      %1533 = vmatpush2.bf16.msra.mxu0 0
      %1534 = vmatprep.subr.bf16.mxu0 0
      %1535 = vmatpush2.bf16.msra.mxu0 0
      %1536 = vmatprep.mubr.bf16.mxu0 0
      %1537 = vmatmul.mubr.bf16.gmra.mxu0 %v1431
      %v1538 = vpop.f32.mrf.mxu0
      %v1539 = vadd.f32 0.0, %v1538
      %v1540 = vpop.f32.mrf.mxu0
      %v1541 = vpop.f32.mrf.mxu0
      %v1542 = vadd.f32 0.0, %v1541
      %v1543 = vpop.f32.mrf.mxu0
      %1544 = vmatprep.mubr.bf16.mxu0 0
      %1545 = vmatmul.mubr.bf16.gmra.mxu0 %v1432
      %v1546 = vpop.f32.mrf.mxu0
      %v1547 = vadd.f32 0.0, %v1546
      %v1548 = vpop.f32.mrf.mxu0
      %v1549 = vpop.f32.mrf.mxu0
      %v1550 = vadd.f32 0.0, %v1549
      %v1551 = vpop.f32.mrf.mxu0
      %1552 = vmatprep.mubr.bf16.mxu0 0
      %1553 = vmatmul.mubr.bf16.gmra.mxu0 %v1433
      %v1554 = vpop.f32.mrf.mxu0
      %v1555 = vadd.f32 0.0, %v1554
      %v1556 = vpop.f32.mrf.mxu0
      %v1557 = vpop.f32.mrf.mxu0
      %v1558 = vadd.f32 0.0, %v1557
      %v1559 = vpop.f32.mrf.mxu0
      %1560 = vmatprep.mubr.bf16.mxu0 0
      %1561 = vmatmul.mubr.bf16.gmra.mxu0 %v1434
      %v1562 = vpop.f32.mrf.mxu0
      %v1563 = vadd.f32 0.0, %v1562
      %v1564 = vpop.f32.mrf.mxu0
      %v1565 = vpop.f32.mrf.mxu0
      %v1566 = vadd.f32 0.0, %v1565
      %v1567 = vpop.f32.mrf.mxu0
      %1568 = vmatprep.mubr.bf16.mxu0 0
      %1569 = vmatmul.mubr.bf16.gmra.mxu0 %v1435
      %v1570 = vpop.f32.mrf.mxu0
      %v1571 = vadd.f32 0.0, %v1570
      %v1572 = vpop.f32.mrf.mxu0
      %v1573 = vpop.f32.mrf.mxu0
      %v1574 = vadd.f32 0.0, %v1573
      %v1575 = vpop.f32.mrf.mxu0
      %1576 = vmatprep.mubr.bf16.mxu0 0
      %1577 = vmatmul.mubr.bf16.gmra.mxu0 %v1436
      %v1578 = vpop.f32.mrf.mxu0
      %v1579 = vadd.f32 0.0, %v1578
      %v1580 = vpop.f32.mrf.mxu0
      %v1581 = vpop.f32.mrf.mxu0
      %v1582 = vadd.f32 0.0, %v1581
      %v1583 = vpop.f32.mrf.mxu0
      %1584 = vmatprep.mubr.bf16.mxu0 0
      %1585 = vmatmul.mubr.bf16.gmra.mxu0 %v1437
      %v1586 = vpop.f32.mrf.mxu0
      %v1587 = vadd.f32 0.0, %v1586
      %v1588 = vpop.f32.mrf.mxu0
      %v1589 = vpop.f32.mrf.mxu0
      %v1590 = vadd.f32 0.0, %v1589
      %v1591 = vpop.f32.mrf.mxu0
      %1592 = vmatprep.mubr.bf16.mxu0 0
      %1593 = vmatmul.mubr.bf16.gmra.mxu0 %v1438
      %v1594 = vpop.f32.mrf.mxu0
      %v1595 = vadd.f32 0.0, %v1594
      %v1596 = vpop.f32.mrf.mxu0
      %v1597 = vpop.f32.mrf.mxu0
      %v1598 = vadd.f32 0.0, %v1597
      %v1599 = vpop.f32.mrf.mxu0
      %1600 = vdwg.mxu0
      %v1601 = vadd.f32 %v1353, %v1539
      %v1602 = vadd.f32 %v1356, %v1542
      %v1603 = vadd.f32 %v1361, %v1547
      %v1604 = vadd.f32 %v1364, %v1550
      %v1605 = vadd.f32 %v1369, %v1555
      %v1606 = vadd.f32 %v1372, %v1558
      %v1607 = vadd.f32 %v1377, %v1563
      %v1608 = vadd.f32 %v1380, %v1566
      %v1609 = vadd.f32 %v1385, %v1571
      %v1610 = vadd.f32 %v1388, %v1574
      %v1611 = vadd.f32 %v1393, %v1579
      %v1612 = vadd.f32 %v1396, %v1582
      %v1613 = vadd.f32 %v1401, %v1587
      %v1614 = vadd.f32 %v1404, %v1590
      %v1615 = vadd.f32 %v1409, %v1595
      %v1616 = vadd.f32 %v1412, %v1598
      %v1617 = vld [vmem:[#allocation2 + $0x9] sm:$0xff]
      %v1618 = vld [vmem:[#allocation2 + $0x11] sm:$0xff]
      %v1619 = vld [vmem:[#allocation2 + $0x19] sm:$0xff]
      %v1620 = vld [vmem:[#allocation2 + $0x21] sm:$0xff]
      %v1621 = vld [vmem:[#allocation2 + $0x29] sm:$0xff]
      %v1622 = vld [vmem:[#allocation2 + $0x31] sm:$0xff]
      %v1623 = vld [vmem:[#allocation2 + $0x39] sm:$0xff]
      %v1624 = vld [vmem:[#allocation2 + $0x41] sm:$0xff]
      %v1625 = vld [vmem:[#allocation2 + $0x49] sm:$0xff]
      %v1626 = vld [vmem:[#allocation2 + $0x51] sm:$0xff]
      %v1627 = vld [vmem:[#allocation2 + $0x59] sm:$0xff]
      %v1628 = vld [vmem:[#allocation2 + $0x61] sm:$0xff]
      %v1629 = vld [vmem:[#allocation2 + $0x69] sm:$0xff]
      %v1630 = vld [vmem:[#allocation2 + $0x71] sm:$0xff]
      %v1631 = vld [vmem:[#allocation2 + $0x79] sm:$0xff]
      %v1632 = vld [vmem:[#allocation2 + $0x81] sm:$0xff]
      %v1633 = vpack.c.bf16 %v1618, %v1617
      %v1634 = vpack.c.bf16 %v1620, %v1619
      %v1635 = vpack.c.bf16 %v1622, %v1621
      %v1636 = vpack.c.bf16 %v1624, %v1623
      %v1637 = vpack.c.bf16 %v1626, %v1625
      %v1638 = vpack.c.bf16 %v1628, %v1627
      %v1639 = vpack.c.bf16 %v1630, %v1629
      %v1640 = vpack.c.bf16 %v1632, %v1631
      %s1641 = scalar_lea.vmem %s1, 128
      %v1642 = vld [vmem:[%s1641] sm:$0xf]
      %v1643 = vld [vmem:[%s1641 + $0x4] sm:$0xf]
      %v1644 = vld [vmem:[%s1641 + $0x8] sm:$0xf]
      %v1645 = vld [vmem:[%s1641 + $0xc] sm:$0xf]
      %v1646 = vld [vmem:[%s1641 + $0x10] sm:$0xf]
      %v1647 = vld [vmem:[%s1641 + $0x14] sm:$0xf]
      %v1648 = vld [vmem:[%s1641 + $0x18] sm:$0xf]
      %v1649 = vld [vmem:[%s1641 + $0x1c] sm:$0xf]
      %v1650 = vld [vmem:[%s1641 + $0x20] sm:$0xf]
      %v1651 = vld [vmem:[%s1641 + $0x24] sm:$0xf]
      %v1652 = vld [vmem:[%s1641 + $0x28] sm:$0xf]
      %v1653 = vld [vmem:[%s1641 + $0x2c] sm:$0xf]
      %v1654 = vld [vmem:[%s1641 + $0x30] sm:$0xf]
      %v1655 = vld [vmem:[%s1641 + $0x34] sm:$0xf]
      %v1656 = vld [vmem:[%s1641 + $0x38] sm:$0xf]
      %v1657 = vld [vmem:[%s1641 + $0x3c] sm:$0xf]
      %v1658 = vld [vmem:[#allocation2 + $0x89] sm:$0xff]
      %v1659 = vld [vmem:[#allocation2 + $0x91] sm:$0xff]
      %v1660 = vpack.c.bf16 %v1659, %v1658
      %s1661 = scalar_lea.vmem %s1, 320
      %v1662 = vld [vmem:[%s1661] sm:$0xf]
      %v1663 = vld [vmem:[%s1661 + $0x4] sm:$0xf]
      %v1664 = vld [vmem:[%s1661 + $0x8] sm:$0xf]
      %v1665 = vld [vmem:[%s1661 + $0xc] sm:$0xf]
      %v1666 = vld [vmem:[%s1661 + $0x10] sm:$0xf]
      %v1667 = vld [vmem:[%s1661 + $0x14] sm:$0xf]
      %v1668 = vld [vmem:[%s1661 + $0x18] sm:$0xf]
      %v1669 = vld [vmem:[%s1661 + $0x1c] sm:$0xf]
      %v1670 = vld [vmem:[%s1661 + $0x20] sm:$0xf]
      %v1671 = vld [vmem:[%s1661 + $0x24] sm:$0xf]
      %v1672 = vld [vmem:[%s1661 + $0x28] sm:$0xf]
      %v1673 = vld [vmem:[%s1661 + $0x2c] sm:$0xf]
      %v1674 = vld [vmem:[%s1661 + $0x30] sm:$0xf]
      %v1675 = vld [vmem:[%s1661 + $0x34] sm:$0xf]
      %v1676 = vld [vmem:[%s1661 + $0x38] sm:$0xf]
      %v1677 = vld [vmem:[%s1661 + $0x3c] sm:$0xf]
      %v1694 = vunpack.c.l.b16 %v1662
      %v1695 = vunpack.c.l.b16 %v1663
      %v1696 = vunpack.c.l.b16 %v1664
      %v1697 = vunpack.c.l.b16 %v1665
      %v1698 = vunpack.c.l.b16 %v1666
      %v1699 = vunpack.c.l.b16 %v1667
      %v1700 = vunpack.c.l.b16 %v1668
      %v1701 = vunpack.c.l.b16 %v1669
      %v1702 = vunpack.c.l.b16 %v1670
      %v1703 = vunpack.c.l.b16 %v1671
      %v1704 = vunpack.c.l.b16 %v1672
      %v1705 = vunpack.c.l.b16 %v1673
      %v1706 = vunpack.c.l.b16 %v1674
      %v1707 = vunpack.c.l.b16 %v1675
      %v1708 = vunpack.c.l.b16 %v1676
      %v1709 = vunpack.c.l.b16 %v1677
      %v1710 = vpack.c.b16 %v1695, %v1694
      %v1711 = vpack.c.b16 %v1697, %v1696
      %v1712 = vpack.c.b16 %v1699, %v1698
      %v1713 = vpack.c.b16 %v1701, %v1700
      %v1714 = vpack.c.b16 %v1703, %v1702
      %v1715 = vpack.c.b16 %v1705, %v1704
      %v1716 = vpack.c.b16 %v1707, %v1706
      %v1717 = vpack.c.b16 %v1709, %v1708
      %1726 = vmatprep.subr.bf16.mxu0 0
      %1727 = vmatpush1.bf16.msra.mxu0 %v1717
      %1728 = vmatprep.subr.bf16.mxu0 0
      %1729 = vmatpush1.bf16.msra.mxu0 %v1716
      %1730 = vmatprep.subr.bf16.mxu0 0
      %1731 = vmatpush1.bf16.msra.mxu0 %v1715
      %1732 = vmatprep.subr.bf16.mxu0 0
      %1733 = vmatpush1.bf16.msra.mxu0 %v1714
      %1734 = vmatprep.subr.bf16.mxu0 0
      %1735 = vmatpush1.bf16.msra.mxu0 %v1713
      %1736 = vmatprep.subr.bf16.mxu0 0
      %1737 = vmatpush1.bf16.msra.mxu0 %v1712
      %1738 = vmatprep.subr.bf16.mxu0 0
      %1739 = vmatpush1.bf16.msra.mxu0 %v1711
      %1740 = vmatprep.subr.bf16.mxu0 0
      %1741 = vmatpush1.bf16.msra.mxu0 %v1710
      %1742 = vmatprep.subr.bf16.mxu0 0
      %1743 = vmatpush2.bf16.msra.mxu0 0
      %1744 = vmatprep.subr.bf16.mxu0 0
      %1745 = vmatpush2.bf16.msra.mxu0 0
      %1746 = vmatprep.subr.bf16.mxu0 0
      %1747 = vmatpush2.bf16.msra.mxu0 0
      %1748 = vmatprep.subr.bf16.mxu0 0
      %1749 = vmatpush2.bf16.msra.mxu0 0
      %1750 = vmatprep.subr.bf16.mxu0 0
      %1751 = vmatpush2.bf16.msra.mxu0 0
      %1752 = vmatprep.subr.bf16.mxu0 0
      %1753 = vmatpush2.bf16.msra.mxu0 0
      %1754 = vmatprep.subr.bf16.mxu0 0
      %1755 = vmatpush2.bf16.msra.mxu0 0
      %1756 = vmatprep.subr.bf16.mxu0 0
      %1757 = vmatpush2.bf16.msra.mxu0 0
      %1758 = vmatprep.mubr.bf16.mxu0 0
      %1759 = vmatmul.mubr.bf16.gmra.mxu0 %v1634
      %v1760 = vpop.f32.mrf.mxu0
      %v1761 = vadd.f32 0.0, %v1760
      %v1762 = vpop.f32.mrf.mxu0
      %v1763 = vpop.f32.mrf.mxu0
      %v1764 = vadd.f32 0.0, %v1763
      %v1765 = vpop.f32.mrf.mxu0
      %1766 = vmatprep.mubr.bf16.mxu0 0
      %1767 = vmatmul.mubr.bf16.gmra.mxu0 %v1635
      %v1768 = vpop.f32.mrf.mxu0
      %v1769 = vadd.f32 0.0, %v1768
      %v1770 = vpop.f32.mrf.mxu0
      %v1771 = vpop.f32.mrf.mxu0
      %v1772 = vadd.f32 0.0, %v1771
      %v1773 = vpop.f32.mrf.mxu0
      %1774 = vmatprep.mubr.bf16.mxu0 0
      %1775 = vmatmul.mubr.bf16.gmra.mxu0 %v1636
      %v1776 = vpop.f32.mrf.mxu0
      %v1777 = vadd.f32 0.0, %v1776
      %v1778 = vpop.f32.mrf.mxu0
      %v1779 = vpop.f32.mrf.mxu0
      %v1780 = vadd.f32 0.0, %v1779
      %v1781 = vpop.f32.mrf.mxu0
      %1782 = vmatprep.mubr.bf16.mxu0 0
      %1783 = vmatmul.mubr.bf16.gmra.mxu0 %v1637
      %v1784 = vpop.f32.mrf.mxu0
      %v1785 = vadd.f32 0.0, %v1784
      %v1786 = vpop.f32.mrf.mxu0
      %v1787 = vpop.f32.mrf.mxu0
      %v1788 = vadd.f32 0.0, %v1787
      %v1789 = vpop.f32.mrf.mxu0
      %1790 = vmatprep.mubr.bf16.mxu0 0
      %1791 = vmatmul.mubr.bf16.gmra.mxu0 %v1638
      %v1792 = vpop.f32.mrf.mxu0
      %v1793 = vadd.f32 0.0, %v1792
      %v1794 = vpop.f32.mrf.mxu0
      %v1795 = vpop.f32.mrf.mxu0
      %v1796 = vadd.f32 0.0, %v1795
      %v1797 = vpop.f32.mrf.mxu0
      %1798 = vmatprep.mubr.bf16.mxu0 0
      %1799 = vmatmul.mubr.bf16.gmra.mxu0 %v1639
      %v1800 = vpop.f32.mrf.mxu0
      %v1801 = vadd.f32 0.0, %v1800
      %v1802 = vpop.f32.mrf.mxu0
      %v1803 = vpop.f32.mrf.mxu0
      %v1804 = vadd.f32 0.0, %v1803
      %v1805 = vpop.f32.mrf.mxu0
      %1806 = vmatprep.mubr.bf16.mxu0 0
      %1807 = vmatmul.mubr.bf16.gmra.mxu0 %v1640
      %v1808 = vpop.f32.mrf.mxu0
      %v1809 = vadd.f32 0.0, %v1808
      %v1810 = vpop.f32.mrf.mxu0
      %v1811 = vpop.f32.mrf.mxu0
      %v1812 = vadd.f32 0.0, %v1811
      %v1813 = vpop.f32.mrf.mxu0
      %1814 = vmatprep.mubr.bf16.mxu0 0
      %1815 = vmatmul.mubr.bf16.gmra.mxu0 %v1660
      %v1816 = vpop.f32.mrf.mxu0
      %v1817 = vadd.f32 0.0, %v1816
      %v1818 = vpop.f32.mrf.mxu0
      %v1819 = vpop.f32.mrf.mxu0
      %v1820 = vadd.f32 0.0, %v1819
      %v1821 = vpop.f32.mrf.mxu0
      %1822 = vdwg.mxu0
      %v1839 = vunpack.c.l.b16 %v1642
      %v1840 = vunpack.c.l.b16 %v1643
      %v1841 = vunpack.c.l.b16 %v1644
      %v1842 = vunpack.c.l.b16 %v1645
      %v1843 = vunpack.c.l.b16 %v1646
      %v1844 = vunpack.c.l.b16 %v1647
      %v1845 = vunpack.c.l.b16 %v1648
      %v1846 = vunpack.c.l.b16 %v1649
      %v1847 = vunpack.c.l.b16 %v1650
      %v1848 = vunpack.c.l.b16 %v1651
      %v1849 = vunpack.c.l.b16 %v1652
      %v1850 = vunpack.c.l.b16 %v1653
      %v1851 = vunpack.c.l.b16 %v1654
      %v1852 = vunpack.c.l.b16 %v1655
      %v1853 = vunpack.c.l.b16 %v1656
      %v1854 = vunpack.c.l.b16 %v1657
      %v1855 = vpack.c.b16 %v1840, %v1839
      %v1856 = vpack.c.b16 %v1842, %v1841
      %v1857 = vpack.c.b16 %v1844, %v1843
      %v1858 = vpack.c.b16 %v1846, %v1845
      %v1859 = vpack.c.b16 %v1848, %v1847
      %v1860 = vpack.c.b16 %v1850, %v1849
      %v1861 = vpack.c.b16 %v1852, %v1851
      %v1862 = vpack.c.b16 %v1854, %v1853
      %1871 = vmatprep.subr.bf16.mxu0 0
      %1872 = vmatpush1.bf16.msra.mxu0 %v1862
      %1873 = vmatprep.subr.bf16.mxu0 0
      %1874 = vmatpush1.bf16.msra.mxu0 %v1861
      %1875 = vmatprep.subr.bf16.mxu0 0
      %1876 = vmatpush1.bf16.msra.mxu0 %v1860
      %1877 = vmatprep.subr.bf16.mxu0 0
      %1878 = vmatpush1.bf16.msra.mxu0 %v1859
      %1879 = vmatprep.subr.bf16.mxu0 0
      %1880 = vmatpush1.bf16.msra.mxu0 %v1858
      %1881 = vmatprep.subr.bf16.mxu0 0
      %1882 = vmatpush1.bf16.msra.mxu0 %v1857
      %1883 = vmatprep.subr.bf16.mxu0 0
      %1884 = vmatpush1.bf16.msra.mxu0 %v1856
      %1885 = vmatprep.subr.bf16.mxu0 0
      %1886 = vmatpush1.bf16.msra.mxu0 %v1855
      %1887 = vmatprep.subr.bf16.mxu0 0
      %1888 = vmatpush2.bf16.msra.mxu0 0
      %1889 = vmatprep.subr.bf16.mxu0 0
      %1890 = vmatpush2.bf16.msra.mxu0 0
      %1891 = vmatprep.subr.bf16.mxu0 0
      %1892 = vmatpush2.bf16.msra.mxu0 0
      %1893 = vmatprep.subr.bf16.mxu0 0
      %1894 = vmatpush2.bf16.msra.mxu0 0
      %1895 = vmatprep.subr.bf16.mxu0 0
      %1896 = vmatpush2.bf16.msra.mxu0 0
      %1897 = vmatprep.subr.bf16.mxu0 0
      %1898 = vmatpush2.bf16.msra.mxu0 0
      %1899 = vmatprep.subr.bf16.mxu0 0
      %1900 = vmatpush2.bf16.msra.mxu0 0
      %1901 = vmatprep.subr.bf16.mxu0 0
      %1902 = vmatpush2.bf16.msra.mxu0 0
      %1903 = vmatprep.mubr.bf16.mxu0 0
      %1904 = vmatmul.mubr.bf16.gmra.mxu0 %v1633
      %v1905 = vpop.f32.mrf.mxu0
      %v1906 = vadd.f32 %v1761, %v1905
      %v1907 = vpop.f32.mrf.mxu0
      %v1908 = vpop.f32.mrf.mxu0
      %v1909 = vadd.f32 %v1764, %v1908
      %v1910 = vpop.f32.mrf.mxu0
      %1911 = vmatprep.mubr.bf16.mxu0 0
      %1912 = vmatmul.mubr.bf16.gmra.mxu0 %v1634
      %v1913 = vpop.f32.mrf.mxu0
      %v1914 = vadd.f32 %v1769, %v1913
      %v1915 = vpop.f32.mrf.mxu0
      %v1916 = vpop.f32.mrf.mxu0
      %v1917 = vadd.f32 %v1772, %v1916
      %v1918 = vpop.f32.mrf.mxu0
      %1919 = vmatprep.mubr.bf16.mxu0 0
      %1920 = vmatmul.mubr.bf16.gmra.mxu0 %v1635
      %v1921 = vpop.f32.mrf.mxu0
      %v1922 = vadd.f32 %v1777, %v1921
      %v1923 = vpop.f32.mrf.mxu0
      %v1924 = vpop.f32.mrf.mxu0
      %v1925 = vadd.f32 %v1780, %v1924
      %v1926 = vpop.f32.mrf.mxu0
      %1927 = vmatprep.mubr.bf16.mxu0 0
      %1928 = vmatmul.mubr.bf16.gmra.mxu0 %v1636
      %v1929 = vpop.f32.mrf.mxu0
      %v1930 = vadd.f32 %v1785, %v1929
      %v1931 = vpop.f32.mrf.mxu0
      %v1932 = vpop.f32.mrf.mxu0
      %v1933 = vadd.f32 %v1788, %v1932
      %v1934 = vpop.f32.mrf.mxu0
      %1935 = vmatprep.mubr.bf16.mxu0 0
      %1936 = vmatmul.mubr.bf16.gmra.mxu0 %v1637
      %v1937 = vpop.f32.mrf.mxu0
      %v1938 = vadd.f32 %v1793, %v1937
      %v1939 = vpop.f32.mrf.mxu0
      %v1940 = vpop.f32.mrf.mxu0
      %v1941 = vadd.f32 %v1796, %v1940
      %v1942 = vpop.f32.mrf.mxu0
      %1943 = vmatprep.mubr.bf16.mxu0 0
      %1944 = vmatmul.mubr.bf16.gmra.mxu0 %v1638
      %v1945 = vpop.f32.mrf.mxu0
      %v1946 = vadd.f32 %v1801, %v1945
      %v1947 = vpop.f32.mrf.mxu0
      %v1948 = vpop.f32.mrf.mxu0
      %v1949 = vadd.f32 %v1804, %v1948
      %v1950 = vpop.f32.mrf.mxu0
      %1951 = vmatprep.mubr.bf16.mxu0 0
      %1952 = vmatmul.mubr.bf16.gmra.mxu0 %v1639
      %v1953 = vpop.f32.mrf.mxu0
      %v1954 = vadd.f32 %v1809, %v1953
      %v1955 = vpop.f32.mrf.mxu0
      %v1956 = vpop.f32.mrf.mxu0
      %v1957 = vadd.f32 %v1812, %v1956
      %v1958 = vpop.f32.mrf.mxu0
      %1959 = vmatprep.mubr.bf16.mxu0 0
      %1960 = vmatmul.mubr.bf16.gmra.mxu0 %v1640
      %v1961 = vpop.f32.mrf.mxu0
      %v1962 = vadd.f32 %v1817, %v1961
      %v1963 = vpop.f32.mrf.mxu0
      %v1964 = vpop.f32.mrf.mxu0
      %v1965 = vadd.f32 %v1820, %v1964
      %v1966 = vpop.f32.mrf.mxu0
      %1967 = vdwg.mxu0
      %v1968 = vld [vmem:[#allocation2 + $0x29] sm:$0xff]
      %v1969 = vld [vmem:[#allocation2 + $0x31] sm:$0xff]
      %v1970 = vld [vmem:[#allocation2 + $0x39] sm:$0xff]
      %v1971 = vld [vmem:[#allocation2 + $0x41] sm:$0xff]
      %v1972 = vld [vmem:[#allocation2 + $0x49] sm:$0xff]
      %v1973 = vld [vmem:[#allocation2 + $0x51] sm:$0xff]
      %v1974 = vld [vmem:[#allocation2 + $0x59] sm:$0xff]
      %v1975 = vld [vmem:[#allocation2 + $0x61] sm:$0xff]
      %v1976 = vld [vmem:[#allocation2 + $0x69] sm:$0xff]
      %v1977 = vld [vmem:[#allocation2 + $0x71] sm:$0xff]
      %v1978 = vld [vmem:[#allocation2 + $0x79] sm:$0xff]
      %v1979 = vld [vmem:[#allocation2 + $0x81] sm:$0xff]
      %v1980 = vld [vmem:[#allocation2 + $0x89] sm:$0xff]
      %v1981 = vld [vmem:[#allocation2 + $0x91] sm:$0xff]
      %v1982 = vld [vmem:[#allocation2 + $0x99] sm:$0xff]
      %v1983 = vld [vmem:[#allocation2 + $0xa1] sm:$0xff]
      %v1984 = vpack.c.bf16 %v1969, %v1968
      %v1985 = vpack.c.bf16 %v1971, %v1970
      %v1986 = vpack.c.bf16 %v1973, %v1972
      %v1987 = vpack.c.bf16 %v1975, %v1974
      %v1988 = vpack.c.bf16 %v1977, %v1976
      %v1989 = vpack.c.bf16 %v1979, %v1978
      %v1990 = vpack.c.bf16 %v1981, %v1980
      %v1991 = vpack.c.bf16 %v1983, %v1982
      %s1992 = scalar_lea.vmem %s1, 512
      %v1993 = vld [vmem:[%s1992] sm:$0xf]
      %v1994 = vld [vmem:[%s1992 + $0x4] sm:$0xf]
      %v1995 = vld [vmem:[%s1992 + $0x8] sm:$0xf]
      %v1996 = vld [vmem:[%s1992 + $0xc] sm:$0xf]
      %v1997 = vld [vmem:[%s1992 + $0x10] sm:$0xf]
      %v1998 = vld [vmem:[%s1992 + $0x14] sm:$0xf]
      %v1999 = vld [vmem:[%s1992 + $0x18] sm:$0xf]
      %v2000 = vld [vmem:[%s1992 + $0x1c] sm:$0xf]
      %v2001 = vld [vmem:[%s1992 + $0x20] sm:$0xf]
      %v2002 = vld [vmem:[%s1992 + $0x24] sm:$0xf]
      %v2003 = vld [vmem:[%s1992 + $0x28] sm:$0xf]
      %v2004 = vld [vmem:[%s1992 + $0x2c] sm:$0xf]
      %v2005 = vld [vmem:[%s1992 + $0x30] sm:$0xf]
      %v2006 = vld [vmem:[%s1992 + $0x34] sm:$0xf]
      %v2007 = vld [vmem:[%s1992 + $0x38] sm:$0xf]
      %v2008 = vld [vmem:[%s1992 + $0x3c] sm:$0xf]
      %v2025 = vunpack.c.l.b16 %v1993
      %v2026 = vunpack.c.l.b16 %v1994
      %v2027 = vunpack.c.l.b16 %v1995
      %v2028 = vunpack.c.l.b16 %v1996
      %v2029 = vunpack.c.l.b16 %v1997
      %v2030 = vunpack.c.l.b16 %v1998
      %v2031 = vunpack.c.l.b16 %v1999
      %v2032 = vunpack.c.l.b16 %v2000
      %v2033 = vunpack.c.l.b16 %v2001
      %v2034 = vunpack.c.l.b16 %v2002
      %v2035 = vunpack.c.l.b16 %v2003
      %v2036 = vunpack.c.l.b16 %v2004
      %v2037 = vunpack.c.l.b16 %v2005
      %v2038 = vunpack.c.l.b16 %v2006
      %v2039 = vunpack.c.l.b16 %v2007
      %v2040 = vunpack.c.l.b16 %v2008
      %v2041 = vpack.c.b16 %v2026, %v2025
      %v2042 = vpack.c.b16 %v2028, %v2027
      %v2043 = vpack.c.b16 %v2030, %v2029
      %v2044 = vpack.c.b16 %v2032, %v2031
      %v2045 = vpack.c.b16 %v2034, %v2033
      %v2046 = vpack.c.b16 %v2036, %v2035
      %v2047 = vpack.c.b16 %v2038, %v2037
      %v2048 = vpack.c.b16 %v2040, %v2039
      %2057 = vmatprep.subr.bf16.mxu0 0
      %2058 = vmatpush1.bf16.msra.mxu0 %v2048
      %2059 = vmatprep.subr.bf16.mxu0 0
      %2060 = vmatpush1.bf16.msra.mxu0 %v2047
      %2061 = vmatprep.subr.bf16.mxu0 0
      %2062 = vmatpush1.bf16.msra.mxu0 %v2046
      %2063 = vmatprep.subr.bf16.mxu0 0
      %2064 = vmatpush1.bf16.msra.mxu0 %v2045
      %2065 = vmatprep.subr.bf16.mxu0 0
      %2066 = vmatpush1.bf16.msra.mxu0 %v2044
      %2067 = vmatprep.subr.bf16.mxu0 0
      %2068 = vmatpush1.bf16.msra.mxu0 %v2043
      %2069 = vmatprep.subr.bf16.mxu0 0
      %2070 = vmatpush1.bf16.msra.mxu0 %v2042
      %2071 = vmatprep.subr.bf16.mxu0 0
      %2072 = vmatpush1.bf16.msra.mxu0 %v2041
      %2073 = vmatprep.subr.bf16.mxu0 0
      %2074 = vmatpush2.bf16.msra.mxu0 0
      %2075 = vmatprep.subr.bf16.mxu0 0
      %2076 = vmatpush2.bf16.msra.mxu0 0
      %2077 = vmatprep.subr.bf16.mxu0 0
      %2078 = vmatpush2.bf16.msra.mxu0 0
      %2079 = vmatprep.subr.bf16.mxu0 0
      %2080 = vmatpush2.bf16.msra.mxu0 0
      %2081 = vmatprep.subr.bf16.mxu0 0
      %2082 = vmatpush2.bf16.msra.mxu0 0
      %2083 = vmatprep.subr.bf16.mxu0 0
      %2084 = vmatpush2.bf16.msra.mxu0 0
      %2085 = vmatprep.subr.bf16.mxu0 0
      %2086 = vmatpush2.bf16.msra.mxu0 0
      %2087 = vmatprep.subr.bf16.mxu0 0
      %2088 = vmatpush2.bf16.msra.mxu0 0
      %2089 = vmatprep.mubr.bf16.mxu0 0
      %2090 = vmatmul.mubr.bf16.gmra.mxu0 %v1984
      %v2091 = vpop.f32.mrf.mxu0
      %v2092 = vadd.f32 0.0, %v2091
      %v2093 = vpop.f32.mrf.mxu0
      %v2094 = vpop.f32.mrf.mxu0
      %v2095 = vadd.f32 0.0, %v2094
      %v2096 = vpop.f32.mrf.mxu0
      %2097 = vmatprep.mubr.bf16.mxu0 0
      %2098 = vmatmul.mubr.bf16.gmra.mxu0 %v1985
      %v2099 = vpop.f32.mrf.mxu0
      %v2100 = vadd.f32 0.0, %v2099
      %v2101 = vpop.f32.mrf.mxu0
      %v2102 = vpop.f32.mrf.mxu0
      %v2103 = vadd.f32 0.0, %v2102
      %v2104 = vpop.f32.mrf.mxu0
      %2105 = vmatprep.mubr.bf16.mxu0 0
      %2106 = vmatmul.mubr.bf16.gmra.mxu0 %v1986
      %v2107 = vpop.f32.mrf.mxu0
      %v2108 = vadd.f32 0.0, %v2107
      %v2109 = vpop.f32.mrf.mxu0
      %v2110 = vpop.f32.mrf.mxu0
      %v2111 = vadd.f32 0.0, %v2110
      %v2112 = vpop.f32.mrf.mxu0
      %2113 = vmatprep.mubr.bf16.mxu0 0
      %2114 = vmatmul.mubr.bf16.gmra.mxu0 %v1987
      %v2115 = vpop.f32.mrf.mxu0
      %v2116 = vadd.f32 0.0, %v2115
      %v2117 = vpop.f32.mrf.mxu0
      %v2118 = vpop.f32.mrf.mxu0
      %v2119 = vadd.f32 0.0, %v2118
      %v2120 = vpop.f32.mrf.mxu0
      %2121 = vmatprep.mubr.bf16.mxu0 0
      %2122 = vmatmul.mubr.bf16.gmra.mxu0 %v1988
      %v2123 = vpop.f32.mrf.mxu0
      %v2124 = vadd.f32 0.0, %v2123
      %v2125 = vpop.f32.mrf.mxu0
      %v2126 = vpop.f32.mrf.mxu0
      %v2127 = vadd.f32 0.0, %v2126
      %v2128 = vpop.f32.mrf.mxu0
      %2129 = vmatprep.mubr.bf16.mxu0 0
      %2130 = vmatmul.mubr.bf16.gmra.mxu0 %v1989
      %v2131 = vpop.f32.mrf.mxu0
      %v2132 = vadd.f32 0.0, %v2131
      %v2133 = vpop.f32.mrf.mxu0
      %v2134 = vpop.f32.mrf.mxu0
      %v2135 = vadd.f32 0.0, %v2134
      %v2136 = vpop.f32.mrf.mxu0
      %2137 = vmatprep.mubr.bf16.mxu0 0
      %2138 = vmatmul.mubr.bf16.gmra.mxu0 %v1990
      %v2139 = vpop.f32.mrf.mxu0
      %v2140 = vadd.f32 0.0, %v2139
      %v2141 = vpop.f32.mrf.mxu0
      %v2142 = vpop.f32.mrf.mxu0
      %v2143 = vadd.f32 0.0, %v2142
      %v2144 = vpop.f32.mrf.mxu0
      %2145 = vmatprep.mubr.bf16.mxu0 0
      %2146 = vmatmul.mubr.bf16.gmra.mxu0 %v1991
      %v2147 = vpop.f32.mrf.mxu0
      %v2148 = vadd.f32 0.0, %v2147
      %v2149 = vpop.f32.mrf.mxu0
      %v2150 = vpop.f32.mrf.mxu0
      %v2151 = vadd.f32 0.0, %v2150
      %v2152 = vpop.f32.mrf.mxu0
      %2153 = vdwg.mxu0
      %v2154 = vadd.f32 %v1906, %v2092
      %v2155 = vadd.f32 %v1909, %v2095
      %v2156 = vadd.f32 %v1914, %v2100
      %v2157 = vadd.f32 %v1917, %v2103
      %v2158 = vadd.f32 %v1922, %v2108
      %v2159 = vadd.f32 %v1925, %v2111
      %v2160 = vadd.f32 %v1930, %v2116
      %v2161 = vadd.f32 %v1933, %v2119
      %v2162 = vadd.f32 %v1938, %v2124
      %v2163 = vadd.f32 %v1941, %v2127
      %v2164 = vadd.f32 %v1946, %v2132
      %v2165 = vadd.f32 %v1949, %v2135
      %v2166 = vadd.f32 %v1954, %v2140
      %v2167 = vadd.f32 %v1957, %v2143
      %v2168 = vadd.f32 %v1962, %v2148
      %v2169 = vadd.f32 %v1965, %v2151
      %v2170 = vsel %vm478, %v1048, 0.0
      %v2171 = vsel %vm479, %v1049, 0.0
      %v2172 = vsel %vm480, %v1050, 0.0
      %v2173 = vsel %vm481, %v1051, 0.0
      %v2174 = vsel %vm482, %v1052, 0.0
      %v2175 = vsel %vm483, %v1053, 0.0
      %v2176 = vsel %vm484, %v1054, 0.0
      %v2177 = vsel %vm485, %v1055, 0.0
      %v2178 = vsel %vm486, %v1056, 0.0
      %v2179 = vsel %vm487, %v1057, 0.0
      %v2180 = vsel %vm488, %v1058, 0.0
      %v2181 = vsel %vm489, %v1059, 0.0
      %v2182 = vsel %vm490, %v1060, 0.0
      %v2183 = vsel %vm491, %v1061, 0.0
      %v2184 = vsel %vm492, %v1062, 0.0
      %v2185 = vsel %vm493, %v1063, 0.0
      %v2186 = vadd.f32 %v2170, %v1601
      %v2187 = vadd.f32 %v2171, %v1602
      %v2188 = vadd.f32 %v2172, %v1603
      %v2189 = vadd.f32 %v2173, %v1604
      %v2190 = vadd.f32 %v2174, %v1605
      %v2191 = vadd.f32 %v2175, %v1606
      %v2192 = vadd.f32 %v2176, %v1607
      %v2193 = vadd.f32 %v2177, %v1608
      %v2194 = vadd.f32 %v2178, %v1609
      %v2195 = vadd.f32 %v2179, %v1610
      %v2196 = vadd.f32 %v2180, %v1611
      %v2197 = vadd.f32 %v2181, %v1612
      %v2198 = vadd.f32 %v2182, %v1613
      %v2199 = vadd.f32 %v2183, %v1614
      %v2200 = vadd.f32 %v2184, %v1615
      %v2201 = vadd.f32 %v2185, %v1616
      %v2202 = vsel %vm494, %v2154, 0.0
      %v2203 = vsel %vm495, %v2155, 0.0
      %v2204 = vsel %vm496, %v2156, 0.0
      %v2205 = vsel %vm497, %v2157, 0.0
      %v2206 = vsel %vm498, %v2158, 0.0
      %v2207 = vsel %vm499, %v2159, 0.0
      %v2208 = vsel %vm500, %v2160, 0.0
      %v2209 = vsel %vm501, %v2161, 0.0
      %v2210 = vsel %vm502, %v2162, 0.0
      %v2211 = vsel %vm503, %v2163, 0.0
      %v2212 = vsel %vm504, %v2164, 0.0
      %v2213 = vsel %vm505, %v2165, 0.0
      %v2214 = vsel %vm506, %v2166, 0.0
      %v2215 = vsel %vm507, %v2167, 0.0
      %v2216 = vsel %vm508, %v2168, 0.0
      %v2217 = vsel %vm509, %v2169, 0.0
      %v2218 = vadd.f32 %v2186, %v2202
      %v2219 = vadd.f32 %v2187, %v2203
      %v2220 = vadd.f32 %v2188, %v2204
      %v2221 = vadd.f32 %v2189, %v2205
      %v2222 = vadd.f32 %v2190, %v2206
      %v2223 = vadd.f32 %v2191, %v2207
      %v2224 = vadd.f32 %v2192, %v2208
      %v2225 = vadd.f32 %v2193, %v2209
      %v2226 = vadd.f32 %v2194, %v2210
      %v2227 = vadd.f32 %v2195, %v2211
      %v2228 = vadd.f32 %v2196, %v2212
      %v2229 = vadd.f32 %v2197, %v2213
      %v2230 = vadd.f32 %v2198, %v2214
      %v2231 = vadd.f32 %v2199, %v2215
      %v2232 = vadd.f32 %v2200, %v2216
      %v2233 = vadd.f32 %v2201, %v2217
      %v2235 = vlaneseq
      %v2236 = vshrl.u32 %v2235, 7
      %v2237 = vsub.s32 0, %v2236
      %v2238 = vrot.slane %v510, %v2237
      %v2240 = vmul.f32 %v2218, %v2238
      %v2241 = vmul.f32 %v2219, %v2238
      %v2242 = vmul.f32 %v2220, %v2238
      %v2243 = vmul.f32 %v2221, %v2238
      %v2244 = vmul.f32 %v2222, %v2238
      %v2245 = vmul.f32 %v2223, %v2238
      %v2246 = vmul.f32 %v2224, %v2238
      %v2247 = vmul.f32 %v2225, %v2238
      %v2248 = vmul.f32 %v2226, %v2238
      %v2249 = vmul.f32 %v2227, %v2238
      %v2250 = vmul.f32 %v2228, %v2238
      %v2251 = vmul.f32 %v2229, %v2238
      %v2252 = vmul.f32 %v2230, %v2238
      %v2253 = vmul.f32 %v2231, %v2238
      %v2254 = vmul.f32 %v2232, %v2238
      %v2255 = vmul.f32 %v2233, %v2238
      %v2257 = vlaneseq
      %v2258 = vshrl.u32 %v2257, 7
      %v2259 = vsub.s32 0, %v2258
      %v2260 = vrot.slane %v511, %v2259
      %v2262 = vadd.f32 %v2240, %v2260
      %v2263 = vadd.f32 %v2241, %v2260
      %v2264 = vadd.f32 %v2242, %v2260
      %v2265 = vadd.f32 %v2243, %v2260
      %v2266 = vadd.f32 %v2244, %v2260
      %v2267 = vadd.f32 %v2245, %v2260
      %v2268 = vadd.f32 %v2246, %v2260
      %v2269 = vadd.f32 %v2247, %v2260
      %v2270 = vadd.f32 %v2248, %v2260
      %v2271 = vadd.f32 %v2249, %v2260
      %v2272 = vadd.f32 %v2250, %v2260
      %v2273 = vadd.f32 %v2251, %v2260
      %v2274 = vadd.f32 %v2252, %v2260
      %v2275 = vadd.f32 %v2253, %v2260
      %v2276 = vadd.f32 %v2254, %v2260
      %v2277 = vadd.f32 %v2255, %v2260
      %v2278 = vmax.f32 %v2262, 0.0
      %v2279 = vmax.f32 %v2263, 0.0
      %v2280 = vmax.f32 %v2264, 0.0
      %v2281 = vmax.f32 %v2265, 0.0
      %v2282 = vmax.f32 %v2266, 0.0
      %v2283 = vmax.f32 %v2267, 0.0
      %v2284 = vmax.f32 %v2268, 0.0
      %v2285 = vmax.f32 %v2269, 0.0
      %v2286 = vmax.f32 %v2270, 0.0
      %v2287 = vmax.f32 %v2271, 0.0
      %v2288 = vmax.f32 %v2272, 0.0
      %v2289 = vmax.f32 %v2273, 0.0
      %v2290 = vmax.f32 %v2274, 0.0
      %v2291 = vmax.f32 %v2275, 0.0
      %v2292 = vmax.f32 %v2276, 0.0
      %v2293 = vmax.f32 %v2277, 0.0
      %2294 = vst [vmem:[%s197] sm:$0xff] %v2278
      %2295 = vst [vmem:[%s197 + $0x8] sm:$0xff] %v2279
      %2296 = vst [vmem:[%s197 + $0x10] sm:$0xff] %v2280
      %2297 = vst [vmem:[%s197 + $0x18] sm:$0xff] %v2281
      %2298 = vst [vmem:[%s197 + $0x20] sm:$0xff] %v2282
      %2299 = vst [vmem:[%s197 + $0x28] sm:$0xff] %v2283
      %2300 = vst [vmem:[%s197 + $0x30] sm:$0xff] %v2284
      %2301 = vst [vmem:[%s197 + $0x38] sm:$0xff] %v2285
      %2302 = vst [vmem:[%s197 + $0x40] sm:$0xff] %v2286
      %2303 = vst [vmem:[%s197 + $0x48] sm:$0xff] %v2287
      %2304 = vst [vmem:[%s197 + $0x50] sm:$0xff] %v2288
      %2305 = vst [vmem:[%s197 + $0x58] sm:$0xff] %v2289
      %2306 = vst [vmem:[%s197 + $0x60] sm:$0xff] %v2290
      %2307 = vst [vmem:[%s197 + $0x68] sm:$0xff] %v2291
      %2308 = vst [vmem:[%s197 + $0x70] sm:$0xff] %v2292
      %2309 = vst [vmem:[%s197 + $0x78] sm:$0xff] %v2293
      %v2310 = vld [vmem:[#allocation2 + $0x87] sm:$0xff]
      %v2311 = vld [vmem:[#allocation2 + $0x8f] sm:$0xff]
      %v2312 = vld [vmem:[#allocation2 + $0x97] sm:$0xff]
      %v2313 = vld [vmem:[#allocation2 + $0x9f] sm:$0xff]
      %v2314 = vld [vmem:[#allocation2 + $0xa7] sm:$0xff]
      %v2315 = vld [vmem:[#allocation2 + $0xaf] sm:$0xff]
      %v2316 = vld [vmem:[#allocation2 + $0xb7] sm:$0xff]
      %v2317 = vld [vmem:[#allocation2 + $0xbf] sm:$0xff]
      %v2318 = vld [vmem:[#allocation2 + $0xc7] sm:$0xff]
      %v2319 = vld [vmem:[#allocation2 + $0xcf] sm:$0xff]
      %v2320 = vld [vmem:[#allocation2 + $0xd7] sm:$0xff]
      %v2321 = vld [vmem:[#allocation2 + $0xdf] sm:$0xff]
      %v2322 = vld [vmem:[#allocation2 + $0xe7] sm:$0xff]
      %v2323 = vld [vmem:[#allocation2 + $0xef] sm:$0xff]
      %v2324 = vld [vmem:[#allocation2 + $0xf7] sm:$0xff]
      %v2325 = vld [vmem:[#allocation2 + $0xff] sm:$0xff]
      %v2326 = vpack.c.bf16 %v2311, %v2310
      %v2327 = vpack.c.bf16 %v2313, %v2312
      %v2328 = vpack.c.bf16 %v2315, %v2314
      %v2329 = vpack.c.bf16 %v2317, %v2316
      %v2330 = vpack.c.bf16 %v2319, %v2318
      %v2331 = vpack.c.bf16 %v2321, %v2320
      %v2332 = vpack.c.bf16 %v2323, %v2322
      %v2333 = vpack.c.bf16 %v2325, %v2324
      %v2334 = vld [vmem:[%s1] sm:$0xf]
      %v2335 = vld [vmem:[%s1 + $0x4] sm:$0xf]
      %v2336 = vld [vmem:[%s1 + $0x8] sm:$0xf]
      %v2337 = vld [vmem:[%s1 + $0xc] sm:$0xf]
      %v2338 = vld [vmem:[%s1 + $0x10] sm:$0xf]
      %v2339 = vld [vmem:[%s1 + $0x14] sm:$0xf]
      %v2340 = vld [vmem:[%s1 + $0x18] sm:$0xf]
      %v2341 = vld [vmem:[%s1 + $0x1c] sm:$0xf]
      %v2342 = vld [vmem:[%s1 + $0x20] sm:$0xf]
      %v2343 = vld [vmem:[%s1 + $0x24] sm:$0xf]
      %v2344 = vld [vmem:[%s1 + $0x28] sm:$0xf]
      %v2345 = vld [vmem:[%s1 + $0x2c] sm:$0xf]
      %v2346 = vld [vmem:[%s1 + $0x30] sm:$0xf]
      %v2347 = vld [vmem:[%s1 + $0x34] sm:$0xf]
      %v2348 = vld [vmem:[%s1 + $0x38] sm:$0xf]
      %v2349 = vld [vmem:[%s1 + $0x3c] sm:$0xf]
      %v2350 = vld [vmem:[#allocation2 + $0x107] sm:$0xff]
      %v2351 = vld [vmem:[#allocation2 + $0x10f] sm:$0xff]
      %v2352 = vpack.c.bf16 %v2351, %v2350
      %v2353 = vld [vmem:[%s555] sm:$0xf]
      %v2354 = vld [vmem:[%s555 + $0x4] sm:$0xf]
      %v2355 = vld [vmem:[%s555 + $0x8] sm:$0xf]
      %v2356 = vld [vmem:[%s555 + $0xc] sm:$0xf]
      %v2357 = vld [vmem:[%s555 + $0x10] sm:$0xf]
      %v2358 = vld [vmem:[%s555 + $0x14] sm:$0xf]
      %v2359 = vld [vmem:[%s555 + $0x18] sm:$0xf]
      %v2360 = vld [vmem:[%s555 + $0x1c] sm:$0xf]
      %v2361 = vld [vmem:[%s555 + $0x20] sm:$0xf]
      %v2362 = vld [vmem:[%s555 + $0x24] sm:$0xf]
      %v2363 = vld [vmem:[%s555 + $0x28] sm:$0xf]
      %v2364 = vld [vmem:[%s555 + $0x2c] sm:$0xf]
      %v2365 = vld [vmem:[%s555 + $0x30] sm:$0xf]
      %v2366 = vld [vmem:[%s555 + $0x34] sm:$0xf]
      %v2367 = vld [vmem:[%s555 + $0x38] sm:$0xf]
      %v2368 = vld [vmem:[%s555 + $0x3c] sm:$0xf]
      %v2385 = vunpack.c.l.b16 %v2353
      %v2386 = vunpack.c.l.b16 %v2354
      %v2387 = vunpack.c.l.b16 %v2355
      %v2388 = vunpack.c.l.b16 %v2356
      %v2389 = vunpack.c.l.b16 %v2357
      %v2390 = vunpack.c.l.b16 %v2358
      %v2391 = vunpack.c.l.b16 %v2359
      %v2392 = vunpack.c.l.b16 %v2360
      %v2393 = vunpack.c.l.b16 %v2361
      %v2394 = vunpack.c.l.b16 %v2362
      %v2395 = vunpack.c.l.b16 %v2363
      %v2396 = vunpack.c.l.b16 %v2364
      %v2397 = vunpack.c.l.b16 %v2365
      %v2398 = vunpack.c.l.b16 %v2366
      %v2399 = vunpack.c.l.b16 %v2367
      %v2400 = vunpack.c.l.b16 %v2368
      %v2401 = vpack.c.b16 %v2386, %v2385
      %v2402 = vpack.c.b16 %v2388, %v2387
      %v2403 = vpack.c.b16 %v2390, %v2389
      %v2404 = vpack.c.b16 %v2392, %v2391
      %v2405 = vpack.c.b16 %v2394, %v2393
      %v2406 = vpack.c.b16 %v2396, %v2395
      %v2407 = vpack.c.b16 %v2398, %v2397
      %v2408 = vpack.c.b16 %v2400, %v2399
      %2417 = vmatprep.subr.bf16.mxu0 0
      %2418 = vmatpush1.bf16.msra.mxu0 %v2408
      %2419 = vmatprep.subr.bf16.mxu0 0
      %2420 = vmatpush1.bf16.msra.mxu0 %v2407
      %2421 = vmatprep.subr.bf16.mxu0 0
      %2422 = vmatpush1.bf16.msra.mxu0 %v2406
      %2423 = vmatprep.subr.bf16.mxu0 0
      %2424 = vmatpush1.bf16.msra.mxu0 %v2405
      %2425 = vmatprep.subr.bf16.mxu0 0
      %2426 = vmatpush1.bf16.msra.mxu0 %v2404
      %2427 = vmatprep.subr.bf16.mxu0 0
      %2428 = vmatpush1.bf16.msra.mxu0 %v2403
      %2429 = vmatprep.subr.bf16.mxu0 0
      %2430 = vmatpush1.bf16.msra.mxu0 %v2402
      %2431 = vmatprep.subr.bf16.mxu0 0
      %2432 = vmatpush1.bf16.msra.mxu0 %v2401
      %2433 = vmatprep.subr.bf16.mxu0 0
      %2434 = vmatpush2.bf16.msra.mxu0 0
      %2435 = vmatprep.subr.bf16.mxu0 0
      %2436 = vmatpush2.bf16.msra.mxu0 0
      %2437 = vmatprep.subr.bf16.mxu0 0
      %2438 = vmatpush2.bf16.msra.mxu0 0
      %2439 = vmatprep.subr.bf16.mxu0 0
      %2440 = vmatpush2.bf16.msra.mxu0 0
      %2441 = vmatprep.subr.bf16.mxu0 0
      %2442 = vmatpush2.bf16.msra.mxu0 0
      %2443 = vmatprep.subr.bf16.mxu0 0
      %2444 = vmatpush2.bf16.msra.mxu0 0
      %2445 = vmatprep.subr.bf16.mxu0 0
      %2446 = vmatpush2.bf16.msra.mxu0 0
      %2447 = vmatprep.subr.bf16.mxu0 0
      %2448 = vmatpush2.bf16.msra.mxu0 0
      %2449 = vmatprep.mubr.bf16.mxu0 0
      %2450 = vmatmul.mubr.bf16.gmra.mxu0 %v2327
      %v2451 = vpop.f32.mrf.mxu0
      %v2452 = vadd.f32 0.0, %v2451
      %v2453 = vpop.f32.mrf.mxu0
      %v2454 = vpop.f32.mrf.mxu0
      %v2455 = vadd.f32 0.0, %v2454
      %v2456 = vpop.f32.mrf.mxu0
      %2457 = vmatprep.mubr.bf16.mxu0 0
      %2458 = vmatmul.mubr.bf16.gmra.mxu0 %v2328
      %v2459 = vpop.f32.mrf.mxu0
      %v2460 = vadd.f32 0.0, %v2459
      %v2461 = vpop.f32.mrf.mxu0
      %v2462 = vpop.f32.mrf.mxu0
      %v2463 = vadd.f32 0.0, %v2462
      %v2464 = vpop.f32.mrf.mxu0
      %2465 = vmatprep.mubr.bf16.mxu0 0
      %2466 = vmatmul.mubr.bf16.gmra.mxu0 %v2329
      %v2467 = vpop.f32.mrf.mxu0
      %v2468 = vadd.f32 0.0, %v2467
      %v2469 = vpop.f32.mrf.mxu0
      %v2470 = vpop.f32.mrf.mxu0
      %v2471 = vadd.f32 0.0, %v2470
      %v2472 = vpop.f32.mrf.mxu0
      %2473 = vmatprep.mubr.bf16.mxu0 0
      %2474 = vmatmul.mubr.bf16.gmra.mxu0 %v2330
      %v2475 = vpop.f32.mrf.mxu0
      %v2476 = vadd.f32 0.0, %v2475
      %v2477 = vpop.f32.mrf.mxu0
      %v2478 = vpop.f32.mrf.mxu0
      %v2479 = vadd.f32 0.0, %v2478
      %v2480 = vpop.f32.mrf.mxu0
      %2481 = vmatprep.mubr.bf16.mxu0 0
      %2482 = vmatmul.mubr.bf16.gmra.mxu0 %v2331
      %v2483 = vpop.f32.mrf.mxu0
      %v2484 = vadd.f32 0.0, %v2483
      %v2485 = vpop.f32.mrf.mxu0
      %v2486 = vpop.f32.mrf.mxu0
      %v2487 = vadd.f32 0.0, %v2486
      %v2488 = vpop.f32.mrf.mxu0
      %2489 = vmatprep.mubr.bf16.mxu0 0
      %2490 = vmatmul.mubr.bf16.gmra.mxu0 %v2332
      %v2491 = vpop.f32.mrf.mxu0
      %v2492 = vadd.f32 0.0, %v2491
      %v2493 = vpop.f32.mrf.mxu0
      %v2494 = vpop.f32.mrf.mxu0
      %v2495 = vadd.f32 0.0, %v2494
      %v2496 = vpop.f32.mrf.mxu0
      %2497 = vmatprep.mubr.bf16.mxu0 0
      %2498 = vmatmul.mubr.bf16.gmra.mxu0 %v2333
      %v2499 = vpop.f32.mrf.mxu0
      %v2500 = vadd.f32 0.0, %v2499
      %v2501 = vpop.f32.mrf.mxu0
      %v2502 = vpop.f32.mrf.mxu0
      %v2503 = vadd.f32 0.0, %v2502
      %v2504 = vpop.f32.mrf.mxu0
      %2505 = vmatprep.mubr.bf16.mxu0 0
      %2506 = vmatmul.mubr.bf16.gmra.mxu0 %v2352
      %v2507 = vpop.f32.mrf.mxu0
      %v2508 = vadd.f32 0.0, %v2507
      %v2509 = vpop.f32.mrf.mxu0
      %v2510 = vpop.f32.mrf.mxu0
      %v2511 = vadd.f32 0.0, %v2510
      %v2512 = vpop.f32.mrf.mxu0
      %2513 = vdwg.mxu0
      %v2530 = vunpack.c.l.b16 %v2334
      %v2531 = vunpack.c.l.b16 %v2335
      %v2532 = vunpack.c.l.b16 %v2336
      %v2533 = vunpack.c.l.b16 %v2337
      %v2534 = vunpack.c.l.b16 %v2338
      %v2535 = vunpack.c.l.b16 %v2339
      %v2536 = vunpack.c.l.b16 %v2340
      %v2537 = vunpack.c.l.b16 %v2341
      %v2538 = vunpack.c.l.b16 %v2342
      %v2539 = vunpack.c.l.b16 %v2343
      %v2540 = vunpack.c.l.b16 %v2344
      %v2541 = vunpack.c.l.b16 %v2345
      %v2542 = vunpack.c.l.b16 %v2346
      %v2543 = vunpack.c.l.b16 %v2347
      %v2544 = vunpack.c.l.b16 %v2348
      %v2545 = vunpack.c.l.b16 %v2349
      %v2546 = vpack.c.b16 %v2531, %v2530
      %v2547 = vpack.c.b16 %v2533, %v2532
      %v2548 = vpack.c.b16 %v2535, %v2534
      %v2549 = vpack.c.b16 %v2537, %v2536
      %v2550 = vpack.c.b16 %v2539, %v2538
      %v2551 = vpack.c.b16 %v2541, %v2540
      %v2552 = vpack.c.b16 %v2543, %v2542
      %v2553 = vpack.c.b16 %v2545, %v2544
      %2562 = vmatprep.subr.bf16.mxu0 0
      %2563 = vmatpush1.bf16.msra.mxu0 %v2553
      %2564 = vmatprep.subr.bf16.mxu0 0
      %2565 = vmatpush1.bf16.msra.mxu0 %v2552
      %2566 = vmatprep.subr.bf16.mxu0 0
      %2567 = vmatpush1.bf16.msra.mxu0 %v2551
      %2568 = vmatprep.subr.bf16.mxu0 0
      %2569 = vmatpush1.bf16.msra.mxu0 %v2550
      %2570 = vmatprep.subr.bf16.mxu0 0
      %2571 = vmatpush1.bf16.msra.mxu0 %v2549
      %2572 = vmatprep.subr.bf16.mxu0 0
      %2573 = vmatpush1.bf16.msra.mxu0 %v2548
      %2574 = vmatprep.subr.bf16.mxu0 0
      %2575 = vmatpush1.bf16.msra.mxu0 %v2547
      %2576 = vmatprep.subr.bf16.mxu0 0
      %2577 = vmatpush1.bf16.msra.mxu0 %v2546
      %2578 = vmatprep.subr.bf16.mxu0 0
      %2579 = vmatpush2.bf16.msra.mxu0 0
      %2580 = vmatprep.subr.bf16.mxu0 0
      %2581 = vmatpush2.bf16.msra.mxu0 0
      %2582 = vmatprep.subr.bf16.mxu0 0
      %2583 = vmatpush2.bf16.msra.mxu0 0
      %2584 = vmatprep.subr.bf16.mxu0 0
      %2585 = vmatpush2.bf16.msra.mxu0 0
      %2586 = vmatprep.subr.bf16.mxu0 0
      %2587 = vmatpush2.bf16.msra.mxu0 0
      %2588 = vmatprep.subr.bf16.mxu0 0
      %2589 = vmatpush2.bf16.msra.mxu0 0
      %2590 = vmatprep.subr.bf16.mxu0 0
      %2591 = vmatpush2.bf16.msra.mxu0 0
      %2592 = vmatprep.subr.bf16.mxu0 0
      %2593 = vmatpush2.bf16.msra.mxu0 0
      %2594 = vmatprep.mubr.bf16.mxu0 0
      %2595 = vmatmul.mubr.bf16.gmra.mxu0 %v2326
      %v2596 = vpop.f32.mrf.mxu0
      %v2597 = vadd.f32 %v2452, %v2596
      %v2598 = vpop.f32.mrf.mxu0
      %v2599 = vpop.f32.mrf.mxu0
      %v2600 = vadd.f32 %v2455, %v2599
      %v2601 = vpop.f32.mrf.mxu0
      %2602 = vmatprep.mubr.bf16.mxu0 0
      %2603 = vmatmul.mubr.bf16.gmra.mxu0 %v2327
      %v2604 = vpop.f32.mrf.mxu0
      %v2605 = vadd.f32 %v2460, %v2604
      %v2606 = vpop.f32.mrf.mxu0
      %v2607 = vpop.f32.mrf.mxu0
      %v2608 = vadd.f32 %v2463, %v2607
      %v2609 = vpop.f32.mrf.mxu0
      %2610 = vmatprep.mubr.bf16.mxu0 0
      %2611 = vmatmul.mubr.bf16.gmra.mxu0 %v2328
      %v2612 = vpop.f32.mrf.mxu0
      %v2613 = vadd.f32 %v2468, %v2612
      %v2614 = vpop.f32.mrf.mxu0
      %v2615 = vpop.f32.mrf.mxu0
      %v2616 = vadd.f32 %v2471, %v2615
      %v2617 = vpop.f32.mrf.mxu0
      %2618 = vmatprep.mubr.bf16.mxu0 0
      %2619 = vmatmul.mubr.bf16.gmra.mxu0 %v2329
      %v2620 = vpop.f32.mrf.mxu0
      %v2621 = vadd.f32 %v2476, %v2620
      %v2622 = vpop.f32.mrf.mxu0
      %v2623 = vpop.f32.mrf.mxu0
      %v2624 = vadd.f32 %v2479, %v2623
      %v2625 = vpop.f32.mrf.mxu0
      %2626 = vmatprep.mubr.bf16.mxu0 0
      %2627 = vmatmul.mubr.bf16.gmra.mxu0 %v2330
      %v2628 = vpop.f32.mrf.mxu0
      %v2629 = vadd.f32 %v2484, %v2628
      %v2630 = vpop.f32.mrf.mxu0
      %v2631 = vpop.f32.mrf.mxu0
      %v2632 = vadd.f32 %v2487, %v2631
      %v2633 = vpop.f32.mrf.mxu0
      %2634 = vmatprep.mubr.bf16.mxu0 0
      %2635 = vmatmul.mubr.bf16.gmra.mxu0 %v2331
      %v2636 = vpop.f32.mrf.mxu0
      %v2637 = vadd.f32 %v2492, %v2636
      %v2638 = vpop.f32.mrf.mxu0
      %v2639 = vpop.f32.mrf.mxu0
      %v2640 = vadd.f32 %v2495, %v2639
      %v2641 = vpop.f32.mrf.mxu0
      %2642 = vmatprep.mubr.bf16.mxu0 0
      %2643 = vmatmul.mubr.bf16.gmra.mxu0 %v2332
      %v2644 = vpop.f32.mrf.mxu0
      %v2645 = vadd.f32 %v2500, %v2644
      %v2646 = vpop.f32.mrf.mxu0
      %v2647 = vpop.f32.mrf.mxu0
      %v2648 = vadd.f32 %v2503, %v2647
      %v2649 = vpop.f32.mrf.mxu0
      %2650 = vmatprep.mubr.bf16.mxu0 0
      %2651 = vmatmul.mubr.bf16.gmra.mxu0 %v2333
      %v2652 = vpop.f32.mrf.mxu0
      %v2653 = vadd.f32 %v2508, %v2652
      %v2654 = vpop.f32.mrf.mxu0
      %v2655 = vpop.f32.mrf.mxu0
      %v2656 = vadd.f32 %v2511, %v2655
      %v2657 = vpop.f32.mrf.mxu0
      %2658 = vdwg.mxu0
      %v2659 = vld [vmem:[#allocation2 + $0xa7] sm:$0xff]
      %v2660 = vld [vmem:[#allocation2 + $0xaf] sm:$0xff]
      %v2661 = vld [vmem:[#allocation2 + $0xb7] sm:$0xff]
      %v2662 = vld [vmem:[#allocation2 + $0xbf] sm:$0xff]
      %v2663 = vld [vmem:[#allocation2 + $0xc7] sm:$0xff]
      %v2664 = vld [vmem:[#allocation2 + $0xcf] sm:$0xff]
      %v2665 = vld [vmem:[#allocation2 + $0xd7] sm:$0xff]
      %v2666 = vld [vmem:[#allocation2 + $0xdf] sm:$0xff]
      %v2667 = vld [vmem:[#allocation2 + $0xe7] sm:$0xff]
      %v2668 = vld [vmem:[#allocation2 + $0xef] sm:$0xff]
      %v2669 = vld [vmem:[#allocation2 + $0xf7] sm:$0xff]
      %v2670 = vld [vmem:[#allocation2 + $0xff] sm:$0xff]
      %v2671 = vld [vmem:[#allocation2 + $0x107] sm:$0xff]
      %v2672 = vld [vmem:[#allocation2 + $0x10f] sm:$0xff]
      %v2673 = vld [vmem:[#allocation2 + $0x117] sm:$0xff]
      %v2674 = vld [vmem:[#allocation2 + $0x11f] sm:$0xff]
      %v2675 = vpack.c.bf16 %v2660, %v2659
      %v2676 = vpack.c.bf16 %v2662, %v2661
      %v2677 = vpack.c.bf16 %v2664, %v2663
      %v2678 = vpack.c.bf16 %v2666, %v2665
      %v2679 = vpack.c.bf16 %v2668, %v2667
      %v2680 = vpack.c.bf16 %v2670, %v2669
      %v2681 = vpack.c.bf16 %v2672, %v2671
      %v2682 = vpack.c.bf16 %v2674, %v2673
      %v2683 = vld [vmem:[%s886] sm:$0xf]
      %v2684 = vld [vmem:[%s886 + $0x4] sm:$0xf]
      %v2685 = vld [vmem:[%s886 + $0x8] sm:$0xf]
      %v2686 = vld [vmem:[%s886 + $0xc] sm:$0xf]
      %v2687 = vld [vmem:[%s886 + $0x10] sm:$0xf]
      %v2688 = vld [vmem:[%s886 + $0x14] sm:$0xf]
      %v2689 = vld [vmem:[%s886 + $0x18] sm:$0xf]
      %v2690 = vld [vmem:[%s886 + $0x1c] sm:$0xf]
      %v2691 = vld [vmem:[%s886 + $0x20] sm:$0xf]
      %v2692 = vld [vmem:[%s886 + $0x24] sm:$0xf]
      %v2693 = vld [vmem:[%s886 + $0x28] sm:$0xf]
      %v2694 = vld [vmem:[%s886 + $0x2c] sm:$0xf]
      %v2695 = vld [vmem:[%s886 + $0x30] sm:$0xf]
      %v2696 = vld [vmem:[%s886 + $0x34] sm:$0xf]
      %v2697 = vld [vmem:[%s886 + $0x38] sm:$0xf]
      %v2698 = vld [vmem:[%s886 + $0x3c] sm:$0xf]
      %v2715 = vunpack.c.l.b16 %v2683
      %v2716 = vunpack.c.l.b16 %v2684
      %v2717 = vunpack.c.l.b16 %v2685
      %v2718 = vunpack.c.l.b16 %v2686
      %v2719 = vunpack.c.l.b16 %v2687
      %v2720 = vunpack.c.l.b16 %v2688
      %v2721 = vunpack.c.l.b16 %v2689
      %v2722 = vunpack.c.l.b16 %v2690
      %v2723 = vunpack.c.l.b16 %v2691
      %v2724 = vunpack.c.l.b16 %v2692
      %v2725 = vunpack.c.l.b16 %v2693
      %v2726 = vunpack.c.l.b16 %v2694
      %v2727 = vunpack.c.l.b16 %v2695
      %v2728 = vunpack.c.l.b16 %v2696
      %v2729 = vunpack.c.l.b16 %v2697
      %v2730 = vunpack.c.l.b16 %v2698
      %v2731 = vpack.c.b16 %v2716, %v2715
      %v2732 = vpack.c.b16 %v2718, %v2717
      %v2733 = vpack.c.b16 %v2720, %v2719
      %v2734 = vpack.c.b16 %v2722, %v2721
      %v2735 = vpack.c.b16 %v2724, %v2723
      %v2736 = vpack.c.b16 %v2726, %v2725
      %v2737 = vpack.c.b16 %v2728, %v2727
      %v2738 = vpack.c.b16 %v2730, %v2729
      %2747 = vmatprep.subr.bf16.mxu0 0
      %2748 = vmatpush1.bf16.msra.mxu0 %v2738
      %2749 = vmatprep.subr.bf16.mxu0 0
      %2750 = vmatpush1.bf16.msra.mxu0 %v2737
      %2751 = vmatprep.subr.bf16.mxu0 0
      %2752 = vmatpush1.bf16.msra.mxu0 %v2736
      %2753 = vmatprep.subr.bf16.mxu0 0
      %2754 = vmatpush1.bf16.msra.mxu0 %v2735
      %2755 = vmatprep.subr.bf16.mxu0 0
      %2756 = vmatpush1.bf16.msra.mxu0 %v2734
      %2757 = vmatprep.subr.bf16.mxu0 0
      %2758 = vmatpush1.bf16.msra.mxu0 %v2733
      %2759 = vmatprep.subr.bf16.mxu0 0
      %2760 = vmatpush1.bf16.msra.mxu0 %v2732
      %2761 = vmatprep.subr.bf16.mxu0 0
      %2762 = vmatpush1.bf16.msra.mxu0 %v2731
      %2763 = vmatprep.subr.bf16.mxu0 0
      %2764 = vmatpush2.bf16.msra.mxu0 0
      %2765 = vmatprep.subr.bf16.mxu0 0
      %2766 = vmatpush2.bf16.msra.mxu0 0
      %2767 = vmatprep.subr.bf16.mxu0 0
      %2768 = vmatpush2.bf16.msra.mxu0 0
      %2769 = vmatprep.subr.bf16.mxu0 0
      %2770 = vmatpush2.bf16.msra.mxu0 0
      %2771 = vmatprep.subr.bf16.mxu0 0
      %2772 = vmatpush2.bf16.msra.mxu0 0
      %2773 = vmatprep.subr.bf16.mxu0 0
      %2774 = vmatpush2.bf16.msra.mxu0 0
      %2775 = vmatprep.subr.bf16.mxu0 0
      %2776 = vmatpush2.bf16.msra.mxu0 0
      %2777 = vmatprep.subr.bf16.mxu0 0
      %2778 = vmatpush2.bf16.msra.mxu0 0
      %2779 = vmatprep.mubr.bf16.mxu0 0
      %2780 = vmatmul.mubr.bf16.gmra.mxu0 %v2675
      %v2781 = vpop.f32.mrf.mxu0
      %v2782 = vadd.f32 0.0, %v2781
      %v2783 = vpop.f32.mrf.mxu0
      %v2784 = vpop.f32.mrf.mxu0
      %v2785 = vadd.f32 0.0, %v2784
      %v2786 = vpop.f32.mrf.mxu0
      %2787 = vmatprep.mubr.bf16.mxu0 0
      %2788 = vmatmul.mubr.bf16.gmra.mxu0 %v2676
      %v2789 = vpop.f32.mrf.mxu0
      %v2790 = vadd.f32 0.0, %v2789
      %v2791 = vpop.f32.mrf.mxu0
      %v2792 = vpop.f32.mrf.mxu0
      %v2793 = vadd.f32 0.0, %v2792
      %v2794 = vpop.f32.mrf.mxu0
      %2795 = vmatprep.mubr.bf16.mxu0 0
      %2796 = vmatmul.mubr.bf16.gmra.mxu0 %v2677
      %v2797 = vpop.f32.mrf.mxu0
      %v2798 = vadd.f32 0.0, %v2797
      %v2799 = vpop.f32.mrf.mxu0
      %v2800 = vpop.f32.mrf.mxu0
      %v2801 = vadd.f32 0.0, %v2800
      %v2802 = vpop.f32.mrf.mxu0
      %2803 = vmatprep.mubr.bf16.mxu0 0
      %2804 = vmatmul.mubr.bf16.gmra.mxu0 %v2678
      %v2805 = vpop.f32.mrf.mxu0
      %v2806 = vadd.f32 0.0, %v2805
      %v2807 = vpop.f32.mrf.mxu0
      %v2808 = vpop.f32.mrf.mxu0
      %v2809 = vadd.f32 0.0, %v2808
      %v2810 = vpop.f32.mrf.mxu0
      %2811 = vmatprep.mubr.bf16.mxu0 0
      %2812 = vmatmul.mubr.bf16.gmra.mxu0 %v2679
      %v2813 = vpop.f32.mrf.mxu0
      %v2814 = vadd.f32 0.0, %v2813
      %v2815 = vpop.f32.mrf.mxu0
      %v2816 = vpop.f32.mrf.mxu0
      %v2817 = vadd.f32 0.0, %v2816
      %v2818 = vpop.f32.mrf.mxu0
      %2819 = vmatprep.mubr.bf16.mxu0 0
      %2820 = vmatmul.mubr.bf16.gmra.mxu0 %v2680
      %v2821 = vpop.f32.mrf.mxu0
      %v2822 = vadd.f32 0.0, %v2821
      %v2823 = vpop.f32.mrf.mxu0
      %v2824 = vpop.f32.mrf.mxu0
      %v2825 = vadd.f32 0.0, %v2824
      %v2826 = vpop.f32.mrf.mxu0
      %2827 = vmatprep.mubr.bf16.mxu0 0
      %2828 = vmatmul.mubr.bf16.gmra.mxu0 %v2681
      %v2829 = vpop.f32.mrf.mxu0
      %v2830 = vadd.f32 0.0, %v2829
      %v2831 = vpop.f32.mrf.mxu0
      %v2832 = vpop.f32.mrf.mxu0
      %v2833 = vadd.f32 0.0, %v2832
      %v2834 = vpop.f32.mrf.mxu0
      %2835 = vmatprep.mubr.bf16.mxu0 0
      %2836 = vmatmul.mubr.bf16.gmra.mxu0 %v2682
      %v2837 = vpop.f32.mrf.mxu0
      %v2838 = vadd.f32 0.0, %v2837
      %v2839 = vpop.f32.mrf.mxu0
      %v2840 = vpop.f32.mrf.mxu0
      %v2841 = vadd.f32 0.0, %v2840
      %v2842 = vpop.f32.mrf.mxu0
      %2843 = vdwg.mxu0
      %v2844 = vadd.f32 %v2597, %v2782
      %v2845 = vadd.f32 %v2600, %v2785
      %v2846 = vadd.f32 %v2605, %v2790
      %v2847 = vadd.f32 %v2608, %v2793
      %v2848 = vadd.f32 %v2613, %v2798
      %v2849 = vadd.f32 %v2616, %v2801
      %v2850 = vadd.f32 %v2621, %v2806
      %v2851 = vadd.f32 %v2624, %v2809
      %v2852 = vadd.f32 %v2629, %v2814
      %v2853 = vadd.f32 %v2632, %v2817
      %v2854 = vadd.f32 %v2637, %v2822
      %v2855 = vadd.f32 %v2640, %v2825
      %v2856 = vadd.f32 %v2645, %v2830
      %v2857 = vadd.f32 %v2648, %v2833
      %v2858 = vadd.f32 %v2653, %v2838
      %v2859 = vadd.f32 %v2656, %v2841
      %v2860 = vld [vmem:[#allocation2 + $0x88] sm:$0xff]
      %v2861 = vld [vmem:[#allocation2 + $0x90] sm:$0xff]
      %v2862 = vld [vmem:[#allocation2 + $0x98] sm:$0xff]
      %v2863 = vld [vmem:[#allocation2 + $0xa0] sm:$0xff]
      %v2864 = vld [vmem:[#allocation2 + $0xa8] sm:$0xff]
      %v2865 = vld [vmem:[#allocation2 + $0xb0] sm:$0xff]
      %v2866 = vld [vmem:[#allocation2 + $0xb8] sm:$0xff]
      %v2867 = vld [vmem:[#allocation2 + $0xc0] sm:$0xff]
      %v2868 = vld [vmem:[#allocation2 + $0xc8] sm:$0xff]
      %v2869 = vld [vmem:[#allocation2 + $0xd0] sm:$0xff]
      %v2870 = vld [vmem:[#allocation2 + $0xd8] sm:$0xff]
      %v2871 = vld [vmem:[#allocation2 + $0xe0] sm:$0xff]
      %v2872 = vld [vmem:[#allocation2 + $0xe8] sm:$0xff]
      %v2873 = vld [vmem:[#allocation2 + $0xf0] sm:$0xff]
      %v2874 = vld [vmem:[#allocation2 + $0xf8] sm:$0xff]
      %v2875 = vld [vmem:[#allocation2 + $0x100] sm:$0xff]
      %v2876 = vpack.c.bf16 %v2861, %v2860
      %v2877 = vpack.c.bf16 %v2863, %v2862
      %v2878 = vpack.c.bf16 %v2865, %v2864
      %v2879 = vpack.c.bf16 %v2867, %v2866
      %v2880 = vpack.c.bf16 %v2869, %v2868
      %v2881 = vpack.c.bf16 %v2871, %v2870
      %v2882 = vpack.c.bf16 %v2873, %v2872
      %v2883 = vpack.c.bf16 %v2875, %v2874
      %v2884 = vld [vmem:[%s1088] sm:$0xf]
      %v2885 = vld [vmem:[%s1088 + $0x4] sm:$0xf]
      %v2886 = vld [vmem:[%s1088 + $0x8] sm:$0xf]
      %v2887 = vld [vmem:[%s1088 + $0xc] sm:$0xf]
      %v2888 = vld [vmem:[%s1088 + $0x10] sm:$0xf]
      %v2889 = vld [vmem:[%s1088 + $0x14] sm:$0xf]
      %v2890 = vld [vmem:[%s1088 + $0x18] sm:$0xf]
      %v2891 = vld [vmem:[%s1088 + $0x1c] sm:$0xf]
      %v2892 = vld [vmem:[%s1088 + $0x20] sm:$0xf]
      %v2893 = vld [vmem:[%s1088 + $0x24] sm:$0xf]
      %v2894 = vld [vmem:[%s1088 + $0x28] sm:$0xf]
      %v2895 = vld [vmem:[%s1088 + $0x2c] sm:$0xf]
      %v2896 = vld [vmem:[%s1088 + $0x30] sm:$0xf]
      %v2897 = vld [vmem:[%s1088 + $0x34] sm:$0xf]
      %v2898 = vld [vmem:[%s1088 + $0x38] sm:$0xf]
      %v2899 = vld [vmem:[%s1088 + $0x3c] sm:$0xf]
      %v2900 = vld [vmem:[#allocation2 + $0x108] sm:$0xff]
      %v2901 = vld [vmem:[#allocation2 + $0x110] sm:$0xff]
      %v2902 = vpack.c.bf16 %v2901, %v2900
      %v2903 = vld [vmem:[%s1108] sm:$0xf]
      %v2904 = vld [vmem:[%s1108 + $0x4] sm:$0xf]
      %v2905 = vld [vmem:[%s1108 + $0x8] sm:$0xf]
      %v2906 = vld [vmem:[%s1108 + $0xc] sm:$0xf]
      %v2907 = vld [vmem:[%s1108 + $0x10] sm:$0xf]
      %v2908 = vld [vmem:[%s1108 + $0x14] sm:$0xf]
      %v2909 = vld [vmem:[%s1108 + $0x18] sm:$0xf]
      %v2910 = vld [vmem:[%s1108 + $0x1c] sm:$0xf]
      %v2911 = vld [vmem:[%s1108 + $0x20] sm:$0xf]
      %v2912 = vld [vmem:[%s1108 + $0x24] sm:$0xf]
      %v2913 = vld [vmem:[%s1108 + $0x28] sm:$0xf]
      %v2914 = vld [vmem:[%s1108 + $0x2c] sm:$0xf]
      %v2915 = vld [vmem:[%s1108 + $0x30] sm:$0xf]
      %v2916 = vld [vmem:[%s1108 + $0x34] sm:$0xf]
      %v2917 = vld [vmem:[%s1108 + $0x38] sm:$0xf]
      %v2918 = vld [vmem:[%s1108 + $0x3c] sm:$0xf]
      %v2935 = vunpack.c.l.b16 %v2903
      %v2936 = vunpack.c.l.b16 %v2904
      %v2937 = vunpack.c.l.b16 %v2905
      %v2938 = vunpack.c.l.b16 %v2906
      %v2939 = vunpack.c.l.b16 %v2907
      %v2940 = vunpack.c.l.b16 %v2908
      %v2941 = vunpack.c.l.b16 %v2909
      %v2942 = vunpack.c.l.b16 %v2910
      %v2943 = vunpack.c.l.b16 %v2911
      %v2944 = vunpack.c.l.b16 %v2912
      %v2945 = vunpack.c.l.b16 %v2913
      %v2946 = vunpack.c.l.b16 %v2914
      %v2947 = vunpack.c.l.b16 %v2915
      %v2948 = vunpack.c.l.b16 %v2916
      %v2949 = vunpack.c.l.b16 %v2917
      %v2950 = vunpack.c.l.b16 %v2918
      %v2951 = vpack.c.b16 %v2936, %v2935
      %v2952 = vpack.c.b16 %v2938, %v2937
      %v2953 = vpack.c.b16 %v2940, %v2939
      %v2954 = vpack.c.b16 %v2942, %v2941
      %v2955 = vpack.c.b16 %v2944, %v2943
      %v2956 = vpack.c.b16 %v2946, %v2945
      %v2957 = vpack.c.b16 %v2948, %v2947
      %v2958 = vpack.c.b16 %v2950, %v2949
      %2967 = vmatprep.subr.bf16.mxu0 0
      %2968 = vmatpush1.bf16.msra.mxu0 %v2958
      %2969 = vmatprep.subr.bf16.mxu0 0
      %2970 = vmatpush1.bf16.msra.mxu0 %v2957
      %2971 = vmatprep.subr.bf16.mxu0 0
      %2972 = vmatpush1.bf16.msra.mxu0 %v2956
      %2973 = vmatprep.subr.bf16.mxu0 0
      %2974 = vmatpush1.bf16.msra.mxu0 %v2955
      %2975 = vmatprep.subr.bf16.mxu0 0
      %2976 = vmatpush1.bf16.msra.mxu0 %v2954
      %2977 = vmatprep.subr.bf16.mxu0 0
      %2978 = vmatpush1.bf16.msra.mxu0 %v2953
      %2979 = vmatprep.subr.bf16.mxu0 0
      %2980 = vmatpush1.bf16.msra.mxu0 %v2952
      %2981 = vmatprep.subr.bf16.mxu0 0
      %2982 = vmatpush1.bf16.msra.mxu0 %v2951
      %2983 = vmatprep.subr.bf16.mxu0 0
      %2984 = vmatpush2.bf16.msra.mxu0 0
      %2985 = vmatprep.subr.bf16.mxu0 0
      %2986 = vmatpush2.bf16.msra.mxu0 0
      %2987 = vmatprep.subr.bf16.mxu0 0
      %2988 = vmatpush2.bf16.msra.mxu0 0
      %2989 = vmatprep.subr.bf16.mxu0 0
      %2990 = vmatpush2.bf16.msra.mxu0 0
      %2991 = vmatprep.subr.bf16.mxu0 0
      %2992 = vmatpush2.bf16.msra.mxu0 0
      %2993 = vmatprep.subr.bf16.mxu0 0
      %2994 = vmatpush2.bf16.msra.mxu0 0
      %2995 = vmatprep.subr.bf16.mxu0 0
      %2996 = vmatpush2.bf16.msra.mxu0 0
      %2997 = vmatprep.subr.bf16.mxu0 0
      %2998 = vmatpush2.bf16.msra.mxu0 0
      %2999 = vmatprep.mubr.bf16.mxu0 0
      %3000 = vmatmul.mubr.bf16.gmra.mxu0 %v2877
      %v3001 = vpop.f32.mrf.mxu0
      %v3002 = vadd.f32 0.0, %v3001
      %v3003 = vpop.f32.mrf.mxu0
      %v3004 = vpop.f32.mrf.mxu0
      %v3005 = vadd.f32 0.0, %v3004
      %v3006 = vpop.f32.mrf.mxu0
      %3007 = vmatprep.mubr.bf16.mxu0 0
      %3008 = vmatmul.mubr.bf16.gmra.mxu0 %v2878
      %v3009 = vpop.f32.mrf.mxu0
      %v3010 = vadd.f32 0.0, %v3009
      %v3011 = vpop.f32.mrf.mxu0
      %v3012 = vpop.f32.mrf.mxu0
      %v3013 = vadd.f32 0.0, %v3012
      %v3014 = vpop.f32.mrf.mxu0
      %3015 = vmatprep.mubr.bf16.mxu0 0
      %3016 = vmatmul.mubr.bf16.gmra.mxu0 %v2879
      %v3017 = vpop.f32.mrf.mxu0
      %v3018 = vadd.f32 0.0, %v3017
      %v3019 = vpop.f32.mrf.mxu0
      %v3020 = vpop.f32.mrf.mxu0
      %v3021 = vadd.f32 0.0, %v3020
      %v3022 = vpop.f32.mrf.mxu0
      %3023 = vmatprep.mubr.bf16.mxu0 0
      %3024 = vmatmul.mubr.bf16.gmra.mxu0 %v2880
      %v3025 = vpop.f32.mrf.mxu0
      %v3026 = vadd.f32 0.0, %v3025
      %v3027 = vpop.f32.mrf.mxu0
      %v3028 = vpop.f32.mrf.mxu0
      %v3029 = vadd.f32 0.0, %v3028
      %v3030 = vpop.f32.mrf.mxu0
      %3031 = vmatprep.mubr.bf16.mxu0 0
      %3032 = vmatmul.mubr.bf16.gmra.mxu0 %v2881
      %v3033 = vpop.f32.mrf.mxu0
      %v3034 = vadd.f32 0.0, %v3033
      %v3035 = vpop.f32.mrf.mxu0
      %v3036 = vpop.f32.mrf.mxu0
      %v3037 = vadd.f32 0.0, %v3036
      %v3038 = vpop.f32.mrf.mxu0
      %3039 = vmatprep.mubr.bf16.mxu0 0
      %3040 = vmatmul.mubr.bf16.gmra.mxu0 %v2882
      %v3041 = vpop.f32.mrf.mxu0
      %v3042 = vadd.f32 0.0, %v3041
      %v3043 = vpop.f32.mrf.mxu0
      %v3044 = vpop.f32.mrf.mxu0
      %v3045 = vadd.f32 0.0, %v3044
      %v3046 = vpop.f32.mrf.mxu0
      %3047 = vmatprep.mubr.bf16.mxu0 0
      %3048 = vmatmul.mubr.bf16.gmra.mxu0 %v2883
      %v3049 = vpop.f32.mrf.mxu0
      %v3050 = vadd.f32 0.0, %v3049
      %v3051 = vpop.f32.mrf.mxu0
      %v3052 = vpop.f32.mrf.mxu0
      %v3053 = vadd.f32 0.0, %v3052
      %v3054 = vpop.f32.mrf.mxu0
      %3055 = vmatprep.mubr.bf16.mxu0 0
      %3056 = vmatmul.mubr.bf16.gmra.mxu0 %v2902
      %v3057 = vpop.f32.mrf.mxu0
      %v3058 = vadd.f32 0.0, %v3057
      %v3059 = vpop.f32.mrf.mxu0
      %v3060 = vpop.f32.mrf.mxu0
      %v3061 = vadd.f32 0.0, %v3060
      %v3062 = vpop.f32.mrf.mxu0
      %3063 = vdwg.mxu0
      %v3080 = vunpack.c.l.b16 %v2884
      %v3081 = vunpack.c.l.b16 %v2885
      %v3082 = vunpack.c.l.b16 %v2886
      %v3083 = vunpack.c.l.b16 %v2887
      %v3084 = vunpack.c.l.b16 %v2888
      %v3085 = vunpack.c.l.b16 %v2889
      %v3086 = vunpack.c.l.b16 %v2890
      %v3087 = vunpack.c.l.b16 %v2891
      %v3088 = vunpack.c.l.b16 %v2892
      %v3089 = vunpack.c.l.b16 %v2893
      %v3090 = vunpack.c.l.b16 %v2894
      %v3091 = vunpack.c.l.b16 %v2895
      %v3092 = vunpack.c.l.b16 %v2896
      %v3093 = vunpack.c.l.b16 %v2897
      %v3094 = vunpack.c.l.b16 %v2898
      %v3095 = vunpack.c.l.b16 %v2899
      %v3096 = vpack.c.b16 %v3081, %v3080
      %v3097 = vpack.c.b16 %v3083, %v3082
      %v3098 = vpack.c.b16 %v3085, %v3084
      %v3099 = vpack.c.b16 %v3087, %v3086
      %v3100 = vpack.c.b16 %v3089, %v3088
      %v3101 = vpack.c.b16 %v3091, %v3090
      %v3102 = vpack.c.b16 %v3093, %v3092
      %v3103 = vpack.c.b16 %v3095, %v3094
      %3112 = vmatprep.subr.bf16.mxu0 0
      %3113 = vmatpush1.bf16.msra.mxu0 %v3103
      %3114 = vmatprep.subr.bf16.mxu0 0
      %3115 = vmatpush1.bf16.msra.mxu0 %v3102
      %3116 = vmatprep.subr.bf16.mxu0 0
      %3117 = vmatpush1.bf16.msra.mxu0 %v3101
      %3118 = vmatprep.subr.bf16.mxu0 0
      %3119 = vmatpush1.bf16.msra.mxu0 %v3100
      %3120 = vmatprep.subr.bf16.mxu0 0
      %3121 = vmatpush1.bf16.msra.mxu0 %v3099
      %3122 = vmatprep.subr.bf16.mxu0 0
      %3123 = vmatpush1.bf16.msra.mxu0 %v3098
      %3124 = vmatprep.subr.bf16.mxu0 0
      %3125 = vmatpush1.bf16.msra.mxu0 %v3097
      %3126 = vmatprep.subr.bf16.mxu0 0
      %3127 = vmatpush1.bf16.msra.mxu0 %v3096
      %3128 = vmatprep.subr.bf16.mxu0 0
      %3129 = vmatpush2.bf16.msra.mxu0 0
      %3130 = vmatprep.subr.bf16.mxu0 0
      %3131 = vmatpush2.bf16.msra.mxu0 0
      %3132 = vmatprep.subr.bf16.mxu0 0
      %3133 = vmatpush2.bf16.msra.mxu0 0
      %3134 = vmatprep.subr.bf16.mxu0 0
      %3135 = vmatpush2.bf16.msra.mxu0 0
      %3136 = vmatprep.subr.bf16.mxu0 0
      %3137 = vmatpush2.bf16.msra.mxu0 0
      %3138 = vmatprep.subr.bf16.mxu0 0
      %3139 = vmatpush2.bf16.msra.mxu0 0
      %3140 = vmatprep.subr.bf16.mxu0 0
      %3141 = vmatpush2.bf16.msra.mxu0 0
      %3142 = vmatprep.subr.bf16.mxu0 0
      %3143 = vmatpush2.bf16.msra.mxu0 0
      %3144 = vmatprep.mubr.bf16.mxu0 0
      %3145 = vmatmul.mubr.bf16.gmra.mxu0 %v2876
      %v3146 = vpop.f32.mrf.mxu0
      %v3147 = vadd.f32 %v3002, %v3146
      %v3148 = vpop.f32.mrf.mxu0
      %v3149 = vpop.f32.mrf.mxu0
      %v3150 = vadd.f32 %v3005, %v3149
      %v3151 = vpop.f32.mrf.mxu0
      %3152 = vmatprep.mubr.bf16.mxu0 0
      %3153 = vmatmul.mubr.bf16.gmra.mxu0 %v2877
      %v3154 = vpop.f32.mrf.mxu0
      %v3155 = vadd.f32 %v3010, %v3154
      %v3156 = vpop.f32.mrf.mxu0
      %v3157 = vpop.f32.mrf.mxu0
      %v3158 = vadd.f32 %v3013, %v3157
      %v3159 = vpop.f32.mrf.mxu0
      %3160 = vmatprep.mubr.bf16.mxu0 0
      %3161 = vmatmul.mubr.bf16.gmra.mxu0 %v2878
      %v3162 = vpop.f32.mrf.mxu0
      %v3163 = vadd.f32 %v3018, %v3162
      %v3164 = vpop.f32.mrf.mxu0
      %v3165 = vpop.f32.mrf.mxu0
      %v3166 = vadd.f32 %v3021, %v3165
      %v3167 = vpop.f32.mrf.mxu0
      %3168 = vmatprep.mubr.bf16.mxu0 0
      %3169 = vmatmul.mubr.bf16.gmra.mxu0 %v2879
      %v3170 = vpop.f32.mrf.mxu0
      %v3171 = vadd.f32 %v3026, %v3170
      %v3172 = vpop.f32.mrf.mxu0
      %v3173 = vpop.f32.mrf.mxu0
      %v3174 = vadd.f32 %v3029, %v3173
      %v3175 = vpop.f32.mrf.mxu0
      %3176 = vmatprep.mubr.bf16.mxu0 0
      %3177 = vmatmul.mubr.bf16.gmra.mxu0 %v2880
      %v3178 = vpop.f32.mrf.mxu0
      %v3179 = vadd.f32 %v3034, %v3178
      %v3180 = vpop.f32.mrf.mxu0
      %v3181 = vpop.f32.mrf.mxu0
      %v3182 = vadd.f32 %v3037, %v3181
      %v3183 = vpop.f32.mrf.mxu0
      %3184 = vmatprep.mubr.bf16.mxu0 0
      %3185 = vmatmul.mubr.bf16.gmra.mxu0 %v2881
      %v3186 = vpop.f32.mrf.mxu0
      %v3187 = vadd.f32 %v3042, %v3186
      %v3188 = vpop.f32.mrf.mxu0
      %v3189 = vpop.f32.mrf.mxu0
      %v3190 = vadd.f32 %v3045, %v3189
      %v3191 = vpop.f32.mrf.mxu0
      %3192 = vmatprep.mubr.bf16.mxu0 0
      %3193 = vmatmul.mubr.bf16.gmra.mxu0 %v2882
      %v3194 = vpop.f32.mrf.mxu0
      %v3195 = vadd.f32 %v3050, %v3194
      %v3196 = vpop.f32.mrf.mxu0
      %v3197 = vpop.f32.mrf.mxu0
      %v3198 = vadd.f32 %v3053, %v3197
      %v3199 = vpop.f32.mrf.mxu0
      %3200 = vmatprep.mubr.bf16.mxu0 0
      %3201 = vmatmul.mubr.bf16.gmra.mxu0 %v2883
      %v3202 = vpop.f32.mrf.mxu0
      %v3203 = vadd.f32 %v3058, %v3202
      %v3204 = vpop.f32.mrf.mxu0
      %v3205 = vpop.f32.mrf.mxu0
      %v3206 = vadd.f32 %v3061, %v3205
      %v3207 = vpop.f32.mrf.mxu0
      %3208 = vdwg.mxu0
      %v3209 = vld [vmem:[#allocation2 + $0xa8] sm:$0xff]
      %v3210 = vld [vmem:[#allocation2 + $0xb0] sm:$0xff]
      %v3211 = vld [vmem:[#allocation2 + $0xb8] sm:$0xff]
      %v3212 = vld [vmem:[#allocation2 + $0xc0] sm:$0xff]
      %v3213 = vld [vmem:[#allocation2 + $0xc8] sm:$0xff]
      %v3214 = vld [vmem:[#allocation2 + $0xd0] sm:$0xff]
      %v3215 = vld [vmem:[#allocation2 + $0xd8] sm:$0xff]
      %v3216 = vld [vmem:[#allocation2 + $0xe0] sm:$0xff]
      %v3217 = vld [vmem:[#allocation2 + $0xe8] sm:$0xff]
      %v3218 = vld [vmem:[#allocation2 + $0xf0] sm:$0xff]
      %v3219 = vld [vmem:[#allocation2 + $0xf8] sm:$0xff]
      %v3220 = vld [vmem:[#allocation2 + $0x100] sm:$0xff]
      %v3221 = vld [vmem:[#allocation2 + $0x108] sm:$0xff]
      %v3222 = vld [vmem:[#allocation2 + $0x110] sm:$0xff]
      %v3223 = vld [vmem:[#allocation2 + $0x118] sm:$0xff]
      %v3224 = vld [vmem:[#allocation2 + $0x120] sm:$0xff]
      %v3225 = vpack.c.bf16 %v3210, %v3209
      %v3226 = vpack.c.bf16 %v3212, %v3211
      %v3227 = vpack.c.bf16 %v3214, %v3213
      %v3228 = vpack.c.bf16 %v3216, %v3215
      %v3229 = vpack.c.bf16 %v3218, %v3217
      %v3230 = vpack.c.bf16 %v3220, %v3219
      %v3231 = vpack.c.bf16 %v3222, %v3221
      %v3232 = vpack.c.bf16 %v3224, %v3223
      %v3233 = vld [vmem:[%s1439] sm:$0xf]
      %v3234 = vld [vmem:[%s1439 + $0x4] sm:$0xf]
      %v3235 = vld [vmem:[%s1439 + $0x8] sm:$0xf]
      %v3236 = vld [vmem:[%s1439 + $0xc] sm:$0xf]
      %v3237 = vld [vmem:[%s1439 + $0x10] sm:$0xf]
      %v3238 = vld [vmem:[%s1439 + $0x14] sm:$0xf]
      %v3239 = vld [vmem:[%s1439 + $0x18] sm:$0xf]
      %v3240 = vld [vmem:[%s1439 + $0x1c] sm:$0xf]
      %v3241 = vld [vmem:[%s1439 + $0x20] sm:$0xf]
      %v3242 = vld [vmem:[%s1439 + $0x24] sm:$0xf]
      %v3243 = vld [vmem:[%s1439 + $0x28] sm:$0xf]
      %v3244 = vld [vmem:[%s1439 + $0x2c] sm:$0xf]
      %v3245 = vld [vmem:[%s1439 + $0x30] sm:$0xf]
      %v3246 = vld [vmem:[%s1439 + $0x34] sm:$0xf]
      %v3247 = vld [vmem:[%s1439 + $0x38] sm:$0xf]
      %v3248 = vld [vmem:[%s1439 + $0x3c] sm:$0xf]
      %v3265 = vunpack.c.l.b16 %v3233
      %v3266 = vunpack.c.l.b16 %v3234
      %v3267 = vunpack.c.l.b16 %v3235
      %v3268 = vunpack.c.l.b16 %v3236
      %v3269 = vunpack.c.l.b16 %v3237
      %v3270 = vunpack.c.l.b16 %v3238
      %v3271 = vunpack.c.l.b16 %v3239
      %v3272 = vunpack.c.l.b16 %v3240
      %v3273 = vunpack.c.l.b16 %v3241
      %v3274 = vunpack.c.l.b16 %v3242
      %v3275 = vunpack.c.l.b16 %v3243
      %v3276 = vunpack.c.l.b16 %v3244
      %v3277 = vunpack.c.l.b16 %v3245
      %v3278 = vunpack.c.l.b16 %v3246
      %v3279 = vunpack.c.l.b16 %v3247
      %v3280 = vunpack.c.l.b16 %v3248
      %v3281 = vpack.c.b16 %v3266, %v3265
      %v3282 = vpack.c.b16 %v3268, %v3267
      %v3283 = vpack.c.b16 %v3270, %v3269
      %v3284 = vpack.c.b16 %v3272, %v3271
      %v3285 = vpack.c.b16 %v3274, %v3273
      %v3286 = vpack.c.b16 %v3276, %v3275
      %v3287 = vpack.c.b16 %v3278, %v3277
      %v3288 = vpack.c.b16 %v3280, %v3279
      %3297 = vmatprep.subr.bf16.mxu0 0
      %3298 = vmatpush1.bf16.msra.mxu0 %v3288
      %3299 = vmatprep.subr.bf16.mxu0 0
      %3300 = vmatpush1.bf16.msra.mxu0 %v3287
      %3301 = vmatprep.subr.bf16.mxu0 0
      %3302 = vmatpush1.bf16.msra.mxu0 %v3286
      %3303 = vmatprep.subr.bf16.mxu0 0
      %3304 = vmatpush1.bf16.msra.mxu0 %v3285
      %3305 = vmatprep.subr.bf16.mxu0 0
      %3306 = vmatpush1.bf16.msra.mxu0 %v3284
      %3307 = vmatprep.subr.bf16.mxu0 0
      %3308 = vmatpush1.bf16.msra.mxu0 %v3283
      %3309 = vmatprep.subr.bf16.mxu0 0
      %3310 = vmatpush1.bf16.msra.mxu0 %v3282
      %3311 = vmatprep.subr.bf16.mxu0 0
      %3312 = vmatpush1.bf16.msra.mxu0 %v3281
      %3313 = vmatprep.subr.bf16.mxu0 0
      %3314 = vmatpush2.bf16.msra.mxu0 0
      %3315 = vmatprep.subr.bf16.mxu0 0
      %3316 = vmatpush2.bf16.msra.mxu0 0
      %3317 = vmatprep.subr.bf16.mxu0 0
      %3318 = vmatpush2.bf16.msra.mxu0 0
      %3319 = vmatprep.subr.bf16.mxu0 0
      %3320 = vmatpush2.bf16.msra.mxu0 0
      %3321 = vmatprep.subr.bf16.mxu0 0
      %3322 = vmatpush2.bf16.msra.mxu0 0
      %3323 = vmatprep.subr.bf16.mxu0 0
      %3324 = vmatpush2.bf16.msra.mxu0 0
      %3325 = vmatprep.subr.bf16.mxu0 0
      %3326 = vmatpush2.bf16.msra.mxu0 0
      %3327 = vmatprep.subr.bf16.mxu0 0
      %3328 = vmatpush2.bf16.msra.mxu0 0
      %3329 = vmatprep.mubr.bf16.mxu0 0
      %3330 = vmatmul.mubr.bf16.gmra.mxu0 %v3225
      %v3331 = vpop.f32.mrf.mxu0
      %v3332 = vadd.f32 0.0, %v3331
      %v3333 = vpop.f32.mrf.mxu0
      %v3334 = vpop.f32.mrf.mxu0
      %v3335 = vadd.f32 0.0, %v3334
      %v3336 = vpop.f32.mrf.mxu0
      %3337 = vmatprep.mubr.bf16.mxu0 0
      %3338 = vmatmul.mubr.bf16.gmra.mxu0 %v3226
      %v3339 = vpop.f32.mrf.mxu0
      %v3340 = vadd.f32 0.0, %v3339
      %v3341 = vpop.f32.mrf.mxu0
      %v3342 = vpop.f32.mrf.mxu0
      %v3343 = vadd.f32 0.0, %v3342
      %v3344 = vpop.f32.mrf.mxu0
      %3345 = vmatprep.mubr.bf16.mxu0 0
      %3346 = vmatmul.mubr.bf16.gmra.mxu0 %v3227
      %v3347 = vpop.f32.mrf.mxu0
      %v3348 = vadd.f32 0.0, %v3347
      %v3349 = vpop.f32.mrf.mxu0
      %v3350 = vpop.f32.mrf.mxu0
      %v3351 = vadd.f32 0.0, %v3350
      %v3352 = vpop.f32.mrf.mxu0
      %3353 = vmatprep.mubr.bf16.mxu0 0
      %3354 = vmatmul.mubr.bf16.gmra.mxu0 %v3228
      %v3355 = vpop.f32.mrf.mxu0
      %v3356 = vadd.f32 0.0, %v3355
      %v3357 = vpop.f32.mrf.mxu0
      %v3358 = vpop.f32.mrf.mxu0
      %v3359 = vadd.f32 0.0, %v3358
      %v3360 = vpop.f32.mrf.mxu0
      %3361 = vmatprep.mubr.bf16.mxu0 0
      %3362 = vmatmul.mubr.bf16.gmra.mxu0 %v3229
      %v3363 = vpop.f32.mrf.mxu0
      %v3364 = vadd.f32 0.0, %v3363
      %v3365 = vpop.f32.mrf.mxu0
      %v3366 = vpop.f32.mrf.mxu0
      %v3367 = vadd.f32 0.0, %v3366
      %v3368 = vpop.f32.mrf.mxu0
      %3369 = vmatprep.mubr.bf16.mxu0 0
      %3370 = vmatmul.mubr.bf16.gmra.mxu0 %v3230
      %v3371 = vpop.f32.mrf.mxu0
      %v3372 = vadd.f32 0.0, %v3371
      %v3373 = vpop.f32.mrf.mxu0
      %v3374 = vpop.f32.mrf.mxu0
      %v3375 = vadd.f32 0.0, %v3374
      %v3376 = vpop.f32.mrf.mxu0
      %3377 = vmatprep.mubr.bf16.mxu0 0
      %3378 = vmatmul.mubr.bf16.gmra.mxu0 %v3231
      %v3379 = vpop.f32.mrf.mxu0
      %v3380 = vadd.f32 0.0, %v3379
      %v3381 = vpop.f32.mrf.mxu0
      %v3382 = vpop.f32.mrf.mxu0
      %v3383 = vadd.f32 0.0, %v3382
      %v3384 = vpop.f32.mrf.mxu0
      %3385 = vmatprep.mubr.bf16.mxu0 0
      %3386 = vmatmul.mubr.bf16.gmra.mxu0 %v3232
      %v3387 = vpop.f32.mrf.mxu0
      %v3388 = vadd.f32 0.0, %v3387
      %v3389 = vpop.f32.mrf.mxu0
      %v3390 = vpop.f32.mrf.mxu0
      %v3391 = vadd.f32 0.0, %v3390
      %v3392 = vpop.f32.mrf.mxu0
      %3393 = vdwg.mxu0
      %v3394 = vadd.f32 %v3147, %v3332
      %v3395 = vadd.f32 %v3150, %v3335
      %v3396 = vadd.f32 %v3155, %v3340
      %v3397 = vadd.f32 %v3158, %v3343
      %v3398 = vadd.f32 %v3163, %v3348
      %v3399 = vadd.f32 %v3166, %v3351
      %v3400 = vadd.f32 %v3171, %v3356
      %v3401 = vadd.f32 %v3174, %v3359
      %v3402 = vadd.f32 %v3179, %v3364
      %v3403 = vadd.f32 %v3182, %v3367
      %v3404 = vadd.f32 %v3187, %v3372
      %v3405 = vadd.f32 %v3190, %v3375
      %v3406 = vadd.f32 %v3195, %v3380
      %v3407 = vadd.f32 %v3198, %v3383
      %v3408 = vadd.f32 %v3203, %v3388
      %v3409 = vadd.f32 %v3206, %v3391
      %v3410 = vld [vmem:[#allocation2 + $0x89] sm:$0xff]
      %v3411 = vld [vmem:[#allocation2 + $0x91] sm:$0xff]
      %v3412 = vld [vmem:[#allocation2 + $0x99] sm:$0xff]
      %v3413 = vld [vmem:[#allocation2 + $0xa1] sm:$0xff]
      %v3414 = vld [vmem:[#allocation2 + $0xa9] sm:$0xff]
      %v3415 = vld [vmem:[#allocation2 + $0xb1] sm:$0xff]
      %v3416 = vld [vmem:[#allocation2 + $0xb9] sm:$0xff]
      %v3417 = vld [vmem:[#allocation2 + $0xc1] sm:$0xff]
      %v3418 = vld [vmem:[#allocation2 + $0xc9] sm:$0xff]
      %v3419 = vld [vmem:[#allocation2 + $0xd1] sm:$0xff]
      %v3420 = vld [vmem:[#allocation2 + $0xd9] sm:$0xff]
      %v3421 = vld [vmem:[#allocation2 + $0xe1] sm:$0xff]
      %v3422 = vld [vmem:[#allocation2 + $0xe9] sm:$0xff]
      %v3423 = vld [vmem:[#allocation2 + $0xf1] sm:$0xff]
      %v3424 = vld [vmem:[#allocation2 + $0xf9] sm:$0xff]
      %v3425 = vld [vmem:[#allocation2 + $0x101] sm:$0xff]
      %v3426 = vpack.c.bf16 %v3411, %v3410
      %v3427 = vpack.c.bf16 %v3413, %v3412
      %v3428 = vpack.c.bf16 %v3415, %v3414
      %v3429 = vpack.c.bf16 %v3417, %v3416
      %v3430 = vpack.c.bf16 %v3419, %v3418
      %v3431 = vpack.c.bf16 %v3421, %v3420
      %v3432 = vpack.c.bf16 %v3423, %v3422
      %v3433 = vpack.c.bf16 %v3425, %v3424
      %v3434 = vld [vmem:[%s1641] sm:$0xf]
      %v3435 = vld [vmem:[%s1641 + $0x4] sm:$0xf]
      %v3436 = vld [vmem:[%s1641 + $0x8] sm:$0xf]
      %v3437 = vld [vmem:[%s1641 + $0xc] sm:$0xf]
      %v3438 = vld [vmem:[%s1641 + $0x10] sm:$0xf]
      %v3439 = vld [vmem:[%s1641 + $0x14] sm:$0xf]
      %v3440 = vld [vmem:[%s1641 + $0x18] sm:$0xf]
      %v3441 = vld [vmem:[%s1641 + $0x1c] sm:$0xf]
      %v3442 = vld [vmem:[%s1641 + $0x20] sm:$0xf]
      %v3443 = vld [vmem:[%s1641 + $0x24] sm:$0xf]
      %v3444 = vld [vmem:[%s1641 + $0x28] sm:$0xf]
      %v3445 = vld [vmem:[%s1641 + $0x2c] sm:$0xf]
      %v3446 = vld [vmem:[%s1641 + $0x30] sm:$0xf]
      %v3447 = vld [vmem:[%s1641 + $0x34] sm:$0xf]
      %v3448 = vld [vmem:[%s1641 + $0x38] sm:$0xf]
      %v3449 = vld [vmem:[%s1641 + $0x3c] sm:$0xf]
      %v3450 = vld [vmem:[#allocation2 + $0x109] sm:$0xff]
      %v3451 = vld [vmem:[#allocation2 + $0x111] sm:$0xff]
      %v3452 = vpack.c.bf16 %v3451, %v3450
      %v3453 = vld [vmem:[%s1661] sm:$0xf]
      %v3454 = vld [vmem:[%s1661 + $0x4] sm:$0xf]
      %v3455 = vld [vmem:[%s1661 + $0x8] sm:$0xf]
      %v3456 = vld [vmem:[%s1661 + $0xc] sm:$0xf]
      %v3457 = vld [vmem:[%s1661 + $0x10] sm:$0xf]
      %v3458 = vld [vmem:[%s1661 + $0x14] sm:$0xf]
      %v3459 = vld [vmem:[%s1661 + $0x18] sm:$0xf]
      %v3460 = vld [vmem:[%s1661 + $0x1c] sm:$0xf]
      %v3461 = vld [vmem:[%s1661 + $0x20] sm:$0xf]
      %v3462 = vld [vmem:[%s1661 + $0x24] sm:$0xf]
      %v3463 = vld [vmem:[%s1661 + $0x28] sm:$0xf]
      %v3464 = vld [vmem:[%s1661 + $0x2c] sm:$0xf]
      %v3465 = vld [vmem:[%s1661 + $0x30] sm:$0xf]
      %v3466 = vld [vmem:[%s1661 + $0x34] sm:$0xf]
      %v3467 = vld [vmem:[%s1661 + $0x38] sm:$0xf]
      %v3468 = vld [vmem:[%s1661 + $0x3c] sm:$0xf]
      %v3485 = vunpack.c.l.b16 %v3453
      %v3486 = vunpack.c.l.b16 %v3454
      %v3487 = vunpack.c.l.b16 %v3455
      %v3488 = vunpack.c.l.b16 %v3456
      %v3489 = vunpack.c.l.b16 %v3457
      %v3490 = vunpack.c.l.b16 %v3458
      %v3491 = vunpack.c.l.b16 %v3459
      %v3492 = vunpack.c.l.b16 %v3460
      %v3493 = vunpack.c.l.b16 %v3461
      %v3494 = vunpack.c.l.b16 %v3462
      %v3495 = vunpack.c.l.b16 %v3463
      %v3496 = vunpack.c.l.b16 %v3464
      %v3497 = vunpack.c.l.b16 %v3465
      %v3498 = vunpack.c.l.b16 %v3466
      %v3499 = vunpack.c.l.b16 %v3467
      %v3500 = vunpack.c.l.b16 %v3468
      %v3501 = vpack.c.b16 %v3486, %v3485
      %v3502 = vpack.c.b16 %v3488, %v3487
      %v3503 = vpack.c.b16 %v3490, %v3489
      %v3504 = vpack.c.b16 %v3492, %v3491
      %v3505 = vpack.c.b16 %v3494, %v3493
      %v3506 = vpack.c.b16 %v3496, %v3495
      %v3507 = vpack.c.b16 %v3498, %v3497
      %v3508 = vpack.c.b16 %v3500, %v3499
      %3517 = vmatprep.subr.bf16.mxu0 0
      %3518 = vmatpush1.bf16.msra.mxu0 %v3508
      %3519 = vmatprep.subr.bf16.mxu0 0
      %3520 = vmatpush1.bf16.msra.mxu0 %v3507
      %3521 = vmatprep.subr.bf16.mxu0 0
      %3522 = vmatpush1.bf16.msra.mxu0 %v3506
      %3523 = vmatprep.subr.bf16.mxu0 0
      %3524 = vmatpush1.bf16.msra.mxu0 %v3505
      %3525 = vmatprep.subr.bf16.mxu0 0
      %3526 = vmatpush1.bf16.msra.mxu0 %v3504
      %3527 = vmatprep.subr.bf16.mxu0 0
      %3528 = vmatpush1.bf16.msra.mxu0 %v3503
      %3529 = vmatprep.subr.bf16.mxu0 0
      %3530 = vmatpush1.bf16.msra.mxu0 %v3502
      %3531 = vmatprep.subr.bf16.mxu0 0
      %3532 = vmatpush1.bf16.msra.mxu0 %v3501
      %3533 = vmatprep.subr.bf16.mxu0 0
      %3534 = vmatpush2.bf16.msra.mxu0 0
      %3535 = vmatprep.subr.bf16.mxu0 0
      %3536 = vmatpush2.bf16.msra.mxu0 0
      %3537 = vmatprep.subr.bf16.mxu0 0
      %3538 = vmatpush2.bf16.msra.mxu0 0
      %3539 = vmatprep.subr.bf16.mxu0 0
      %3540 = vmatpush2.bf16.msra.mxu0 0
      %3541 = vmatprep.subr.bf16.mxu0 0
      %3542 = vmatpush2.bf16.msra.mxu0 0
      %3543 = vmatprep.subr.bf16.mxu0 0
      %3544 = vmatpush2.bf16.msra.mxu0 0
      %3545 = vmatprep.subr.bf16.mxu0 0
      %3546 = vmatpush2.bf16.msra.mxu0 0
      %3547 = vmatprep.subr.bf16.mxu0 0
      %3548 = vmatpush2.bf16.msra.mxu0 0
      %3549 = vmatprep.mubr.bf16.mxu0 0
      %3550 = vmatmul.mubr.bf16.gmra.mxu0 %v3427
      %v3551 = vpop.f32.mrf.mxu0
      %v3552 = vadd.f32 0.0, %v3551
      %v3553 = vpop.f32.mrf.mxu0
      %v3554 = vpop.f32.mrf.mxu0
      %v3555 = vadd.f32 0.0, %v3554
      %v3556 = vpop.f32.mrf.mxu0
      %3557 = vmatprep.mubr.bf16.mxu0 0
      %3558 = vmatmul.mubr.bf16.gmra.mxu0 %v3428
      %v3559 = vpop.f32.mrf.mxu0
      %v3560 = vadd.f32 0.0, %v3559
      %v3561 = vpop.f32.mrf.mxu0
      %v3562 = vpop.f32.mrf.mxu0
      %v3563 = vadd.f32 0.0, %v3562
      %v3564 = vpop.f32.mrf.mxu0
      %3565 = vmatprep.mubr.bf16.mxu0 0
      %3566 = vmatmul.mubr.bf16.gmra.mxu0 %v3429
      %v3567 = vpop.f32.mrf.mxu0
      %v3568 = vadd.f32 0.0, %v3567
      %v3569 = vpop.f32.mrf.mxu0
      %v3570 = vpop.f32.mrf.mxu0
      %v3571 = vadd.f32 0.0, %v3570
      %v3572 = vpop.f32.mrf.mxu0
      %3573 = vmatprep.mubr.bf16.mxu0 0
      %3574 = vmatmul.mubr.bf16.gmra.mxu0 %v3430
      %v3575 = vpop.f32.mrf.mxu0
      %v3576 = vadd.f32 0.0, %v3575
      %v3577 = vpop.f32.mrf.mxu0
      %v3578 = vpop.f32.mrf.mxu0
      %v3579 = vadd.f32 0.0, %v3578
      %v3580 = vpop.f32.mrf.mxu0
      %3581 = vmatprep.mubr.bf16.mxu0 0
      %3582 = vmatmul.mubr.bf16.gmra.mxu0 %v3431
      %v3583 = vpop.f32.mrf.mxu0
      %v3584 = vadd.f32 0.0, %v3583
      %v3585 = vpop.f32.mrf.mxu0
      %v3586 = vpop.f32.mrf.mxu0
      %v3587 = vadd.f32 0.0, %v3586
      %v3588 = vpop.f32.mrf.mxu0
      %3589 = vmatprep.mubr.bf16.mxu0 0
      %3590 = vmatmul.mubr.bf16.gmra.mxu0 %v3432
      %v3591 = vpop.f32.mrf.mxu0
      %v3592 = vadd.f32 0.0, %v3591
      %v3593 = vpop.f32.mrf.mxu0
      %v3594 = vpop.f32.mrf.mxu0
      %v3595 = vadd.f32 0.0, %v3594
      %v3596 = vpop.f32.mrf.mxu0
      %3597 = vmatprep.mubr.bf16.mxu0 0
      %3598 = vmatmul.mubr.bf16.gmra.mxu0 %v3433
      %v3599 = vpop.f32.mrf.mxu0
      %v3600 = vadd.f32 0.0, %v3599
      %v3601 = vpop.f32.mrf.mxu0
      %v3602 = vpop.f32.mrf.mxu0
      %v3603 = vadd.f32 0.0, %v3602
      %v3604 = vpop.f32.mrf.mxu0
      %3605 = vmatprep.mubr.bf16.mxu0 0
      %3606 = vmatmul.mubr.bf16.gmra.mxu0 %v3452
      %v3607 = vpop.f32.mrf.mxu0
      %v3608 = vadd.f32 0.0, %v3607
      %v3609 = vpop.f32.mrf.mxu0
      %v3610 = vpop.f32.mrf.mxu0
      %v3611 = vadd.f32 0.0, %v3610
      %v3612 = vpop.f32.mrf.mxu0
      %3613 = vdwg.mxu0
      %v3630 = vunpack.c.l.b16 %v3434
      %v3631 = vunpack.c.l.b16 %v3435
      %v3632 = vunpack.c.l.b16 %v3436
      %v3633 = vunpack.c.l.b16 %v3437
      %v3634 = vunpack.c.l.b16 %v3438
      %v3635 = vunpack.c.l.b16 %v3439
      %v3636 = vunpack.c.l.b16 %v3440
      %v3637 = vunpack.c.l.b16 %v3441
      %v3638 = vunpack.c.l.b16 %v3442
      %v3639 = vunpack.c.l.b16 %v3443
      %v3640 = vunpack.c.l.b16 %v3444
      %v3641 = vunpack.c.l.b16 %v3445
      %v3642 = vunpack.c.l.b16 %v3446
      %v3643 = vunpack.c.l.b16 %v3447
      %v3644 = vunpack.c.l.b16 %v3448
      %v3645 = vunpack.c.l.b16 %v3449
      %v3646 = vpack.c.b16 %v3631, %v3630
      %v3647 = vpack.c.b16 %v3633, %v3632
      %v3648 = vpack.c.b16 %v3635, %v3634
      %v3649 = vpack.c.b16 %v3637, %v3636
      %v3650 = vpack.c.b16 %v3639, %v3638
      %v3651 = vpack.c.b16 %v3641, %v3640
      %v3652 = vpack.c.b16 %v3643, %v3642
      %v3653 = vpack.c.b16 %v3645, %v3644
      %3662 = vmatprep.subr.bf16.mxu0 0
      %3663 = vmatpush1.bf16.msra.mxu0 %v3653
      %3664 = vmatprep.subr.bf16.mxu0 0
      %3665 = vmatpush1.bf16.msra.mxu0 %v3652
      %3666 = vmatprep.subr.bf16.mxu0 0
      %3667 = vmatpush1.bf16.msra.mxu0 %v3651
      %3668 = vmatprep.subr.bf16.mxu0 0
      %3669 = vmatpush1.bf16.msra.mxu0 %v3650
      %3670 = vmatprep.subr.bf16.mxu0 0
      %3671 = vmatpush1.bf16.msra.mxu0 %v3649
      %3672 = vmatprep.subr.bf16.mxu0 0
      %3673 = vmatpush1.bf16.msra.mxu0 %v3648
      %3674 = vmatprep.subr.bf16.mxu0 0
      %3675 = vmatpush1.bf16.msra.mxu0 %v3647
      %3676 = vmatprep.subr.bf16.mxu0 0
      %3677 = vmatpush1.bf16.msra.mxu0 %v3646
      %3678 = vmatprep.subr.bf16.mxu0 0
      %3679 = vmatpush2.bf16.msra.mxu0 0
      %3680 = vmatprep.subr.bf16.mxu0 0
      %3681 = vmatpush2.bf16.msra.mxu0 0
      %3682 = vmatprep.subr.bf16.mxu0 0
      %3683 = vmatpush2.bf16.msra.mxu0 0
      %3684 = vmatprep.subr.bf16.mxu0 0
      %3685 = vmatpush2.bf16.msra.mxu0 0
      %3686 = vmatprep.subr.bf16.mxu0 0
      %3687 = vmatpush2.bf16.msra.mxu0 0
      %3688 = vmatprep.subr.bf16.mxu0 0
      %3689 = vmatpush2.bf16.msra.mxu0 0
      %3690 = vmatprep.subr.bf16.mxu0 0
      %3691 = vmatpush2.bf16.msra.mxu0 0
      %3692 = vmatprep.subr.bf16.mxu0 0
      %3693 = vmatpush2.bf16.msra.mxu0 0
      %3694 = vmatprep.mubr.bf16.mxu0 0
      %3695 = vmatmul.mubr.bf16.gmra.mxu0 %v3426
      %v3696 = vpop.f32.mrf.mxu0
      %v3697 = vadd.f32 %v3552, %v3696
      %v3698 = vpop.f32.mrf.mxu0
      %v3699 = vpop.f32.mrf.mxu0
      %v3700 = vadd.f32 %v3555, %v3699
      %v3701 = vpop.f32.mrf.mxu0
      %3702 = vmatprep.mubr.bf16.mxu0 0
      %3703 = vmatmul.mubr.bf16.gmra.mxu0 %v3427
      %v3704 = vpop.f32.mrf.mxu0
      %v3705 = vadd.f32 %v3560, %v3704
      %v3706 = vpop.f32.mrf.mxu0
      %v3707 = vpop.f32.mrf.mxu0
      %v3708 = vadd.f32 %v3563, %v3707
      %v3709 = vpop.f32.mrf.mxu0
      %3710 = vmatprep.mubr.bf16.mxu0 0
      %3711 = vmatmul.mubr.bf16.gmra.mxu0 %v3428
      %v3712 = vpop.f32.mrf.mxu0
      %v3713 = vadd.f32 %v3568, %v3712
      %v3714 = vpop.f32.mrf.mxu0
      %v3715 = vpop.f32.mrf.mxu0
      %v3716 = vadd.f32 %v3571, %v3715
      %v3717 = vpop.f32.mrf.mxu0
      %3718 = vmatprep.mubr.bf16.mxu0 0
      %3719 = vmatmul.mubr.bf16.gmra.mxu0 %v3429
      %v3720 = vpop.f32.mrf.mxu0
      %v3721 = vadd.f32 %v3576, %v3720
      %v3722 = vpop.f32.mrf.mxu0
      %v3723 = vpop.f32.mrf.mxu0
      %v3724 = vadd.f32 %v3579, %v3723
      %v3725 = vpop.f32.mrf.mxu0
      %3726 = vmatprep.mubr.bf16.mxu0 0
      %3727 = vmatmul.mubr.bf16.gmra.mxu0 %v3430
      %v3728 = vpop.f32.mrf.mxu0
      %v3729 = vadd.f32 %v3584, %v3728
      %v3730 = vpop.f32.mrf.mxu0
      %v3731 = vpop.f32.mrf.mxu0
      %v3732 = vadd.f32 %v3587, %v3731
      %v3733 = vpop.f32.mrf.mxu0
      %3734 = vmatprep.mubr.bf16.mxu0 0
      %3735 = vmatmul.mubr.bf16.gmra.mxu0 %v3431
      %v3736 = vpop.f32.mrf.mxu0
      %v3737 = vadd.f32 %v3592, %v3736
      %v3738 = vpop.f32.mrf.mxu0
      %v3739 = vpop.f32.mrf.mxu0
      %v3740 = vadd.f32 %v3595, %v3739
      %v3741 = vpop.f32.mrf.mxu0
      %3742 = vmatprep.mubr.bf16.mxu0 0
      %3743 = vmatmul.mubr.bf16.gmra.mxu0 %v3432
      %v3744 = vpop.f32.mrf.mxu0
      %v3745 = vadd.f32 %v3600, %v3744
      %v3746 = vpop.f32.mrf.mxu0
      %v3747 = vpop.f32.mrf.mxu0
      %v3748 = vadd.f32 %v3603, %v3747
      %v3749 = vpop.f32.mrf.mxu0
      %3750 = vmatprep.mubr.bf16.mxu0 0
      %3751 = vmatmul.mubr.bf16.gmra.mxu0 %v3433
      %v3752 = vpop.f32.mrf.mxu0
      %v3753 = vadd.f32 %v3608, %v3752
      %v3754 = vpop.f32.mrf.mxu0
      %v3755 = vpop.f32.mrf.mxu0
      %v3756 = vadd.f32 %v3611, %v3755
      %v3757 = vpop.f32.mrf.mxu0
      %3758 = vdwg.mxu0
      %v3759 = vld [vmem:[#allocation2 + $0xa9] sm:$0xff]
      %v3760 = vld [vmem:[#allocation2 + $0xb1] sm:$0xff]
      %v3761 = vld [vmem:[#allocation2 + $0xb9] sm:$0xff]
      %v3762 = vld [vmem:[#allocation2 + $0xc1] sm:$0xff]
      %v3763 = vld [vmem:[#allocation2 + $0xc9] sm:$0xff]
      %v3764 = vld [vmem:[#allocation2 + $0xd1] sm:$0xff]
      %v3765 = vld [vmem:[#allocation2 + $0xd9] sm:$0xff]
      %v3766 = vld [vmem:[#allocation2 + $0xe1] sm:$0xff]
      %v3767 = vld [vmem:[#allocation2 + $0xe9] sm:$0xff]
      %v3768 = vld [vmem:[#allocation2 + $0xf1] sm:$0xff]
      %v3769 = vld [vmem:[#allocation2 + $0xf9] sm:$0xff]
      %v3770 = vld [vmem:[#allocation2 + $0x101] sm:$0xff]
      %v3771 = vld [vmem:[#allocation2 + $0x109] sm:$0xff]
      %v3772 = vld [vmem:[#allocation2 + $0x111] sm:$0xff]
      %v3773 = vld [vmem:[#allocation2 + $0x119] sm:$0xff]
      %v3774 = vld [vmem:[#allocation2 + $0x121] sm:$0xff]
      %v3775 = vpack.c.bf16 %v3760, %v3759
      %v3776 = vpack.c.bf16 %v3762, %v3761
      %v3777 = vpack.c.bf16 %v3764, %v3763
      %v3778 = vpack.c.bf16 %v3766, %v3765
      %v3779 = vpack.c.bf16 %v3768, %v3767
      %v3780 = vpack.c.bf16 %v3770, %v3769
      %v3781 = vpack.c.bf16 %v3772, %v3771
      %v3782 = vpack.c.bf16 %v3774, %v3773
      %v3783 = vld [vmem:[%s1992] sm:$0xf]
      %v3784 = vld [vmem:[%s1992 + $0x4] sm:$0xf]
      %v3785 = vld [vmem:[%s1992 + $0x8] sm:$0xf]
      %v3786 = vld [vmem:[%s1992 + $0xc] sm:$0xf]
      %v3787 = vld [vmem:[%s1992 + $0x10] sm:$0xf]
      %v3788 = vld [vmem:[%s1992 + $0x14] sm:$0xf]
      %v3789 = vld [vmem:[%s1992 + $0x18] sm:$0xf]
      %v3790 = vld [vmem:[%s1992 + $0x1c] sm:$0xf]
      %v3791 = vld [vmem:[%s1992 + $0x20] sm:$0xf]
      %v3792 = vld [vmem:[%s1992 + $0x24] sm:$0xf]
      %v3793 = vld [vmem:[%s1992 + $0x28] sm:$0xf]
      %v3794 = vld [vmem:[%s1992 + $0x2c] sm:$0xf]
      %v3795 = vld [vmem:[%s1992 + $0x30] sm:$0xf]
      %v3796 = vld [vmem:[%s1992 + $0x34] sm:$0xf]
      %v3797 = vld [vmem:[%s1992 + $0x38] sm:$0xf]
      %v3798 = vld [vmem:[%s1992 + $0x3c] sm:$0xf]
      %v3815 = vunpack.c.l.b16 %v3783
      %v3816 = vunpack.c.l.b16 %v3784
      %v3817 = vunpack.c.l.b16 %v3785
      %v3818 = vunpack.c.l.b16 %v3786
      %v3819 = vunpack.c.l.b16 %v3787
      %v3820 = vunpack.c.l.b16 %v3788
      %v3821 = vunpack.c.l.b16 %v3789
      %v3822 = vunpack.c.l.b16 %v3790
      %v3823 = vunpack.c.l.b16 %v3791
      %v3824 = vunpack.c.l.b16 %v3792
      %v3825 = vunpack.c.l.b16 %v3793
      %v3826 = vunpack.c.l.b16 %v3794
      %v3827 = vunpack.c.l.b16 %v3795
      %v3828 = vunpack.c.l.b16 %v3796
      %v3829 = vunpack.c.l.b16 %v3797
      %v3830 = vunpack.c.l.b16 %v3798
      %v3831 = vpack.c.b16 %v3816, %v3815
      %v3832 = vpack.c.b16 %v3818, %v3817
      %v3833 = vpack.c.b16 %v3820, %v3819
      %v3834 = vpack.c.b16 %v3822, %v3821
      %v3835 = vpack.c.b16 %v3824, %v3823
      %v3836 = vpack.c.b16 %v3826, %v3825
      %v3837 = vpack.c.b16 %v3828, %v3827
      %v3838 = vpack.c.b16 %v3830, %v3829
      %3847 = vmatprep.subr.bf16.mxu0 0
      %3848 = vmatpush1.bf16.msra.mxu0 %v3838
      %3849 = vmatprep.subr.bf16.mxu0 0
      %3850 = vmatpush1.bf16.msra.mxu0 %v3837
      %3851 = vmatprep.subr.bf16.mxu0 0
      %3852 = vmatpush1.bf16.msra.mxu0 %v3836
      %3853 = vmatprep.subr.bf16.mxu0 0
      %3854 = vmatpush1.bf16.msra.mxu0 %v3835
      %3855 = vmatprep.subr.bf16.mxu0 0
      %3856 = vmatpush1.bf16.msra.mxu0 %v3834
      %3857 = vmatprep.subr.bf16.mxu0 0
      %3858 = vmatpush1.bf16.msra.mxu0 %v3833
      %3859 = vmatprep.subr.bf16.mxu0 0
      %3860 = vmatpush1.bf16.msra.mxu0 %v3832
      %3861 = vmatprep.subr.bf16.mxu0 0
      %3862 = vmatpush1.bf16.msra.mxu0 %v3831
      %3863 = vmatprep.subr.bf16.mxu0 0
      %3864 = vmatpush2.bf16.msra.mxu0 0
      %3865 = vmatprep.subr.bf16.mxu0 0
      %3866 = vmatpush2.bf16.msra.mxu0 0
      %3867 = vmatprep.subr.bf16.mxu0 0
      %3868 = vmatpush2.bf16.msra.mxu0 0
      %3869 = vmatprep.subr.bf16.mxu0 0
      %3870 = vmatpush2.bf16.msra.mxu0 0
      %3871 = vmatprep.subr.bf16.mxu0 0
      %3872 = vmatpush2.bf16.msra.mxu0 0
      %3873 = vmatprep.subr.bf16.mxu0 0
      %3874 = vmatpush2.bf16.msra.mxu0 0
      %3875 = vmatprep.subr.bf16.mxu0 0
      %3876 = vmatpush2.bf16.msra.mxu0 0
      %3877 = vmatprep.subr.bf16.mxu0 0
      %3878 = vmatpush2.bf16.msra.mxu0 0
      %3879 = vmatprep.mubr.bf16.mxu0 0
      %3880 = vmatmul.mubr.bf16.gmra.mxu0 %v3775
      %v3881 = vpop.f32.mrf.mxu0
      %v3882 = vadd.f32 0.0, %v3881
      %v3883 = vpop.f32.mrf.mxu0
      %v3884 = vpop.f32.mrf.mxu0
      %v3885 = vadd.f32 0.0, %v3884
      %v3886 = vpop.f32.mrf.mxu0
      %3887 = vmatprep.mubr.bf16.mxu0 0
      %3888 = vmatmul.mubr.bf16.gmra.mxu0 %v3776
      %v3889 = vpop.f32.mrf.mxu0
      %v3890 = vadd.f32 0.0, %v3889
      %v3891 = vpop.f32.mrf.mxu0
      %v3892 = vpop.f32.mrf.mxu0
      %v3893 = vadd.f32 0.0, %v3892
      %v3894 = vpop.f32.mrf.mxu0
      %3895 = vmatprep.mubr.bf16.mxu0 0
      %3896 = vmatmul.mubr.bf16.gmra.mxu0 %v3777
      %v3897 = vpop.f32.mrf.mxu0
      %v3898 = vadd.f32 0.0, %v3897
      %v3899 = vpop.f32.mrf.mxu0
      %v3900 = vpop.f32.mrf.mxu0
      %v3901 = vadd.f32 0.0, %v3900
      %v3902 = vpop.f32.mrf.mxu0
      %3903 = vmatprep.mubr.bf16.mxu0 0
      %3904 = vmatmul.mubr.bf16.gmra.mxu0 %v3778
      %v3905 = vpop.f32.mrf.mxu0
      %v3906 = vadd.f32 0.0, %v3905
      %v3907 = vpop.f32.mrf.mxu0
      %v3908 = vpop.f32.mrf.mxu0
      %v3909 = vadd.f32 0.0, %v3908
      %v3910 = vpop.f32.mrf.mxu0
      %3911 = vmatprep.mubr.bf16.mxu0 0
      %3912 = vmatmul.mubr.bf16.gmra.mxu0 %v3779
      %v3913 = vpop.f32.mrf.mxu0
      %v3914 = vadd.f32 0.0, %v3913
      %v3915 = vpop.f32.mrf.mxu0
      %v3916 = vpop.f32.mrf.mxu0
      %v3917 = vadd.f32 0.0, %v3916
      %v3918 = vpop.f32.mrf.mxu0
      %3919 = vmatprep.mubr.bf16.mxu0 0
      %3920 = vmatmul.mubr.bf16.gmra.mxu0 %v3780
      %v3921 = vpop.f32.mrf.mxu0
      %v3922 = vadd.f32 0.0, %v3921
      %v3923 = vpop.f32.mrf.mxu0
      %v3924 = vpop.f32.mrf.mxu0
      %v3925 = vadd.f32 0.0, %v3924
      %v3926 = vpop.f32.mrf.mxu0
      %3927 = vmatprep.mubr.bf16.mxu0 0
      %3928 = vmatmul.mubr.bf16.gmra.mxu0 %v3781
      %v3929 = vpop.f32.mrf.mxu0
      %v3930 = vadd.f32 0.0, %v3929
      %v3931 = vpop.f32.mrf.mxu0
      %v3932 = vpop.f32.mrf.mxu0
      %v3933 = vadd.f32 0.0, %v3932
      %v3934 = vpop.f32.mrf.mxu0
      %3935 = vmatprep.mubr.bf16.mxu0 0
      %3936 = vmatmul.mubr.bf16.gmra.mxu0 %v3782
      %v3937 = vpop.f32.mrf.mxu0
      %v3938 = vadd.f32 0.0, %v3937
      %v3939 = vpop.f32.mrf.mxu0
      %v3940 = vpop.f32.mrf.mxu0
      %v3941 = vadd.f32 0.0, %v3940
      %v3942 = vpop.f32.mrf.mxu0
      %3943 = vdwg.mxu0
      %v3944 = vadd.f32 %v3697, %v3882
      %v3945 = vadd.f32 %v3700, %v3885
      %v3946 = vadd.f32 %v3705, %v3890
      %v3947 = vadd.f32 %v3708, %v3893
      %v3948 = vadd.f32 %v3713, %v3898
      %v3949 = vadd.f32 %v3716, %v3901
      %v3950 = vadd.f32 %v3721, %v3906
      %v3951 = vadd.f32 %v3724, %v3909
      %v3952 = vadd.f32 %v3729, %v3914
      %v3953 = vadd.f32 %v3732, %v3917
      %v3954 = vadd.f32 %v3737, %v3922
      %v3955 = vadd.f32 %v3740, %v3925
      %v3956 = vadd.f32 %v3745, %v3930
      %v3957 = vadd.f32 %v3748, %v3933
      %v3958 = vadd.f32 %v3753, %v3938
      %v3959 = vadd.f32 %v3756, %v3941
      %v3960 = vsel %vm478, %v2844, 0.0
      %v3961 = vsel %vm479, %v2845, 0.0
      %v3962 = vsel %vm480, %v2846, 0.0
      %v3963 = vsel %vm481, %v2847, 0.0
      %v3964 = vsel %vm482, %v2848, 0.0
      %v3965 = vsel %vm483, %v2849, 0.0
      %v3966 = vsel %vm484, %v2850, 0.0
      %v3967 = vsel %vm485, %v2851, 0.0
      %v3968 = vsel %vm486, %v2852, 0.0
      %v3969 = vsel %vm487, %v2853, 0.0
      %v3970 = vsel %vm488, %v2854, 0.0
      %v3971 = vsel %vm489, %v2855, 0.0
      %v3972 = vsel %vm490, %v2856, 0.0
      %v3973 = vsel %vm491, %v2857, 0.0
      %v3974 = vsel %vm492, %v2858, 0.0
      %v3975 = vsel %vm493, %v2859, 0.0
      %v3976 = vadd.f32 %v3960, %v3394
      %v3977 = vadd.f32 %v3961, %v3395
      %v3978 = vadd.f32 %v3962, %v3396
      %v3979 = vadd.f32 %v3963, %v3397
      %v3980 = vadd.f32 %v3964, %v3398
      %v3981 = vadd.f32 %v3965, %v3399
      %v3982 = vadd.f32 %v3966, %v3400
      %v3983 = vadd.f32 %v3967, %v3401
      %v3984 = vadd.f32 %v3968, %v3402
      %v3985 = vadd.f32 %v3969, %v3403
      %v3986 = vadd.f32 %v3970, %v3404
      %v3987 = vadd.f32 %v3971, %v3405
      %v3988 = vadd.f32 %v3972, %v3406
      %v3989 = vadd.f32 %v3973, %v3407
      %v3990 = vadd.f32 %v3974, %v3408
      %v3991 = vadd.f32 %v3975, %v3409
      %v3992 = vsel %vm494, %v3944, 0.0
      %v3993 = vsel %vm495, %v3945, 0.0
      %v3994 = vsel %vm496, %v3946, 0.0
      %v3995 = vsel %vm497, %v3947, 0.0
      %v3996 = vsel %vm498, %v3948, 0.0
      %v3997 = vsel %vm499, %v3949, 0.0
      %v3998 = vsel %vm500, %v3950, 0.0
      %v3999 = vsel %vm501, %v3951, 0.0
      %v4000 = vsel %vm502, %v3952, 0.0
      %v4001 = vsel %vm503, %v3953, 0.0
      %v4002 = vsel %vm504, %v3954, 0.0
      %v4003 = vsel %vm505, %v3955, 0.0
      %v4004 = vsel %vm506, %v3956, 0.0
      %v4005 = vsel %vm507, %v3957, 0.0
      %v4006 = vsel %vm508, %v3958, 0.0
      %v4007 = vsel %vm509, %v3959, 0.0
      %v4008 = vadd.f32 %v3976, %v3992
      %v4009 = vadd.f32 %v3977, %v3993
      %v4010 = vadd.f32 %v3978, %v3994
      %v4011 = vadd.f32 %v3979, %v3995
      %v4012 = vadd.f32 %v3980, %v3996
      %v4013 = vadd.f32 %v3981, %v3997
      %v4014 = vadd.f32 %v3982, %v3998
      %v4015 = vadd.f32 %v3983, %v3999
      %v4016 = vadd.f32 %v3984, %v4000
      %v4017 = vadd.f32 %v3985, %v4001
      %v4018 = vadd.f32 %v3986, %v4002
      %v4019 = vadd.f32 %v3987, %v4003
      %v4020 = vadd.f32 %v3988, %v4004
      %v4021 = vadd.f32 %v3989, %v4005
      %v4022 = vadd.f32 %v3990, %v4006
      %v4023 = vadd.f32 %v3991, %v4007
      %v4024 = vmul.f32 %v4008, %v2238
      %v4025 = vmul.f32 %v4009, %v2238
      %v4026 = vmul.f32 %v4010, %v2238
      %v4027 = vmul.f32 %v4011, %v2238
      %v4028 = vmul.f32 %v4012, %v2238
      %v4029 = vmul.f32 %v4013, %v2238
      %v4030 = vmul.f32 %v4014, %v2238
      %v4031 = vmul.f32 %v4015, %v2238
      %v4032 = vmul.f32 %v4016, %v2238
      %v4033 = vmul.f32 %v4017, %v2238
      %v4034 = vmul.f32 %v4018, %v2238
      %v4035 = vmul.f32 %v4019, %v2238
      %v4036 = vmul.f32 %v4020, %v2238
      %v4037 = vmul.f32 %v4021, %v2238
      %v4038 = vmul.f32 %v4022, %v2238
      %v4039 = vmul.f32 %v4023, %v2238
      %v4040 = vadd.f32 %v4024, %v2260
      %v4041 = vadd.f32 %v4025, %v2260
      %v4042 = vadd.f32 %v4026, %v2260
      %v4043 = vadd.f32 %v4027, %v2260
      %v4044 = vadd.f32 %v4028, %v2260
      %v4045 = vadd.f32 %v4029, %v2260
      %v4046 = vadd.f32 %v4030, %v2260
      %v4047 = vadd.f32 %v4031, %v2260
      %v4048 = vadd.f32 %v4032, %v2260
      %v4049 = vadd.f32 %v4033, %v2260
      %v4050 = vadd.f32 %v4034, %v2260
      %v4051 = vadd.f32 %v4035, %v2260
      %v4052 = vadd.f32 %v4036, %v2260
      %v4053 = vadd.f32 %v4037, %v2260
      %v4054 = vadd.f32 %v4038, %v2260
      %v4055 = vadd.f32 %v4039, %v2260
      %v4056 = vmax.f32 %v4040, 0.0
      %v4057 = vmax.f32 %v4041, 0.0
      %v4058 = vmax.f32 %v4042, 0.0
      %v4059 = vmax.f32 %v4043, 0.0
      %v4060 = vmax.f32 %v4044, 0.0
      %v4061 = vmax.f32 %v4045, 0.0
      %v4062 = vmax.f32 %v4046, 0.0
      %v4063 = vmax.f32 %v4047, 0.0
      %v4064 = vmax.f32 %v4048, 0.0
      %v4065 = vmax.f32 %v4049, 0.0
      %v4066 = vmax.f32 %v4050, 0.0
      %v4067 = vmax.f32 %v4051, 0.0
      %v4068 = vmax.f32 %v4052, 0.0
      %v4069 = vmax.f32 %v4053, 0.0
      %v4070 = vmax.f32 %v4054, 0.0
      %v4071 = vmax.f32 %v4055, 0.0
      %4072 = vst [vmem:[%s197 + $0x80] sm:$0xff] %v4056
      %4073 = vst [vmem:[%s197 + $0x88] sm:$0xff] %v4057
      %4074 = vst [vmem:[%s197 + $0x90] sm:$0xff] %v4058
      %4075 = vst [vmem:[%s197 + $0x98] sm:$0xff] %v4059
      %4076 = vst [vmem:[%s197 + $0xa0] sm:$0xff] %v4060
      %4077 = vst [vmem:[%s197 + $0xa8] sm:$0xff] %v4061
      %4078 = vst [vmem:[%s197 + $0xb0] sm:$0xff] %v4062
      %4079 = vst [vmem:[%s197 + $0xb8] sm:$0xff] %v4063
      %4080 = vst [vmem:[%s197 + $0xc0] sm:$0xff] %v4064
      %4081 = vst [vmem:[%s197 + $0xc8] sm:$0xff] %v4065
      %4082 = vst [vmem:[%s197 + $0xd0] sm:$0xff] %v4066
      %4083 = vst [vmem:[%s197 + $0xd8] sm:$0xff] %v4067
      %4084 = vst [vmem:[%s197 + $0xe0] sm:$0xff] %v4068
      %4085 = vst [vmem:[%s197 + $0xe8] sm:$0xff] %v4069
      %4086 = vst [vmem:[%s197 + $0xf0] sm:$0xff] %v4070
      %4087 = vst [vmem:[%s197 + $0xf8] sm:$0xff] %v4071
      %p4088 = scmp.lt.s32.totalorder %s15, 1
      %s4089 = scalar_select %p4088, %s15, 1
      %s4090 = smul.addr %s4089, 32
      %s4091 = smul.addr %s4090, 8
      %s4092 = scalar_lea.vmem %s4, %s4091
      // Predicated region
      $region37: #{bottleneck_forward.4} parent=35 // pred_check
        %p4093 = pneg %p122
      $region38: #{bottleneck_forward.4} parent=35 // pred_check_branch
        %4095 = sbr.rel (%p4093) target = $region40
      $region39: #{bottleneck_forward.4} parent=35 // pred_region
        _
      $region40: #{bottleneck_forward.4} parent=35 // pred_fallthru
        _
    $region36: #{bottleneck_forward.4} parent=5 // pred_fallthru
      _
    %p4096 = scmp.le.s32.totalorder 2, %s10
    // Predicated region
    $region41: #{bottleneck_forward.4} parent=5 // pred_check
      %p4097 = pneg %p4096
    $region42: #{bottleneck_forward.4} parent=5 // pred_check_branch
      %4099 = sbr.rel (%p4097) target = $region44
    $region43: #{bottleneck_forward.4} parent=5 // pred_region
      %s4100 = ssub.s32 %s10, 2
      // Predicated region
      $region45: #{bottleneck_forward.4} parent=43 // pred_check
        %p4101 = pneg %p128
      $region46: #{bottleneck_forward.4} parent=43 // pred_check_branch
        %4103 = sbr.rel (%p4101) target = $region48
      $region47: #{bottleneck_forward.4} parent=43 // pred_region
        %p4104 = scmp.lt.s32.totalorder %s16, 1
        %s4105 = scalar_select %p4104, %s16, 1
        %s4106 = smul.addr %s4105, 32
        %s4107 = smul.addr %s4106, 8
        %s4108 = scalar_lea.vmem %s4, %s4107
      $region48: #{bottleneck_forward.4} parent=43 // pred_fallthru
        _
    $region44: #{bottleneck_forward.4} parent=5 // pred_fallthru
      _
  $region6: #{bottleneck_forward.4} parent=0 // loop_footer
    %s14 = sadd.s32 1, %s10
  $region7: #{bottleneck_forward.4} parent=0 // loop_footer_branch
    %9 = sbr.rel target = $region3
  $region8: #{bottleneck_forward.4} parent=0 // loop_exit
    _

</llo_original>
